<compile_context>
chip_gen: v6e
topology: v6e:2x2x1
jax: 0.10.0
libtpu: 0.0.40
codegen_flags: <defaults>
</compile_context>

<pallas_src>
import functools

import jax
import jax.numpy as jnp
from jax.experimental import pallas as pl
from jax.experimental.pallas import tpu as pltpu


# ----------------------------------------------------------------------------
# Tiled linear kernel:  y = x @ W_t + b   with W_t already stored as (in, out).
# ----------------------------------------------------------------------------
def _linear_kernel(x_ref, w_ref, b_ref, o_ref, acc_ref):
    k = pl.program_id(2)

    @pl.when(k == 0)
    def _():
        acc_ref[...] = jnp.zeros_like(acc_ref)

    acc_ref[...] += jnp.dot(
        x_ref[...], w_ref[...], preferred_element_type=jnp.float32
    )

    @pl.when(k == pl.num_programs(2) - 1)
    def _():
        o_ref[...] = acc_ref[...] + b_ref[...]


def _pick_tile(dim, target):
    """Largest legal tile: full dim if small, else a 128-multiple dividing dim."""
    if dim <= target:
        return dim
    t = (target // 128) * 128
    while t >= 128:
        if dim % t == 0:
            return t
        t -= 128
    return dim


def linear(x, w_t, b):
    """x: (M, K), w_t: (K, N) pre-transposed, b: (N,) -> (M, N) float32."""
    M, K = x.shape
    N = w_t.shape[1]
    tm = _pick_tile(M, 256)
    tn = _pick_tile(N, 256)
    tk = _pick_tile(K, 512)
    grid = (M // tm, N // tn, K // tk)
    return pl.pallas_call(
        _linear_kernel,
        out_shape=jax.ShapeDtypeStruct((M, N), jnp.float32),
        grid=grid,
        in_specs=[
            pl.BlockSpec((tm, tk), lambda i, j, k: (i, k)),
            pl.BlockSpec((tk, tn), lambda i, j, k: (k, j)),
            pl.BlockSpec((1, tn), lambda i, j, k: (0, j)),
        ],
        out_specs=pl.BlockSpec((tm, tn), lambda i, j, k: (i, j)),
        scratch_shapes=[pltpu.VMEM((tm, tn), jnp.float32)],
        compiler_params=pltpu.CompilerParams(
            dimension_semantics=("parallel", "parallel", "arbitrary")
        ),
    )(x, w_t, b.reshape(1, N))


# ----------------------------------------------------------------------------
# Multi-layer GRU kernel (PyTorch nn.GRU semantics, gate order r, z, n).
#
# Layer-0 input gates (gi0_r/z/n, biases already folded in) are precomputed
# outside.  Per grid step the kernel processes a (bb, Tb, H) time block with a
# statically unrolled loop; the per-layer hidden state persists in VMEM
# scratch across the (sequential / 'arbitrary') time-block axis.
# ----------------------------------------------------------------------------
def _make_gru_kernel(num_layers, hidden_size, time_block):
    L, H, Tb = num_layers, hidden_size, time_block
    f32 = jnp.float32

    def kernel(*refs):
        gi0_r_ref, gi0_z_ref, gi0_n_ref, h0_ref = refs[0:4]
        idx = 4
        w_ih = refs[idx:idx + (L - 1)]; idx += L - 1   # (3, H, H) per layer 1..L-1
        w_hh = refs[idx:idx + L]; idx += L             # (3, H, H) per layer
        b_ih = refs[idx:idx + (L - 1)]; idx += L - 1   # (3, 1, H) per layer 1..L-1
        b_hh = refs[idx:idx + L]; idx += L             # (3, 1, H) per layer
        o_ref = refs[idx]; idx += 1                    # (bb, Tb, H)
        h_scr = refs[idx]                              # (L, bb, H) scratch

        t_blk = pl.program_id(1)

        # NOTE: correct only because the time-block axis is 'arbitrary'
        # (sequential); h_scr persists across grid steps and is re-seeded at
        # the first time block of each batch block.
        @pl.when(t_blk == 0)
        def _():
            for layer in range(L):
                h_scr[layer] = h0_ref[:, layer, :]

        # Hoist all weight / bias loads out of the time loop (once per grid
        # step); gate selection is a leading-axis index, no lane slicing.
        whh = [(w_hh[l][0], w_hh[l][1], w_hh[l][2]) for l in range(L)]
        bhh = [(b_hh[l][0], b_hh[l][1], b_hh[l][2]) for l in range(L)]
        wih = [(w_ih[l][0], w_ih[l][1], w_ih[l][2]) for l in range(L - 1)]
        bih = [(b_ih[l][0], b_ih[l][1], b_ih[l][2]) for l in range(L - 1)]

        h_state = [h_scr[layer] for layer in range(L)]

        for tt in range(Tb):
            # layer 0: input gates were precomputed (include b_ih0 already)
            gi_r = gi0_r_ref[:, tt, :]
            gi_z = gi0_z_ref[:, tt, :]
            gi_n = gi0_n_ref[:, tt, :]
            x = None
            for layer in range(L):
                h_prev = h_state[layer]
                if layer > 0:
                    wr, wz, wn = wih[layer - 1]
                    br, bz, bn = bih[layer - 1]
                    gi_r = jnp.dot(x, wr, preferred_element_type=f32) + br
                    gi_z = jnp.dot(x, wz, preferred_element_type=f32) + bz
                    gi_n = jnp.dot(x, wn, preferred_element_type=f32) + bn
                hr, hz, hn = whh[layer]
                cr, cz, cn = bhh[layer]
                gh_r = jnp.dot(h_prev, hr, preferred_element_type=f32) + cr
                gh_z = jnp.dot(h_prev, hz, preferred_element_type=f32) + cz
                gh_n = jnp.dot(h_prev, hn, preferred_element_type=f32) + cn
                r = jax.nn.sigmoid(gi_r + gh_r)
                zg = jax.nn.sigmoid(gi_z + gh_z)
                n = jnp.tanh(gi_n + r * gh_n)
                h_new = (1.0 - zg) * n + zg * h_prev
                h_state[layer] = h_new
                x = h_new
            o_ref[:, tt, :] = x   # top-layer output for this time step

        # carry state to next time block
        for layer in range(L):
            h_scr[layer] = h_state[layer]

    return kernel


def gru_forward(gi0_r, gi0_z, gi0_n, h0_blh, w_ih_g, w_hh_g, b_ih_g, b_hh_g,
                *, num_layers, hidden_size):
    B, T, H = gi0_r.shape
    L = num_layers
    assert H == hidden_size

    # time-block size: must be a multiple of 8 or equal to T (TPU block rule)
    if T % 16 == 0:
        Tb = 16
    elif T % 8 == 0:
        Tb = 8
    else:
        Tb = T
    bb = B   # whole batch per block; keep a 'parallel' batch axis for v7x

    grid = (B // bb, T // Tb)
    tmap = lambda b, t: (b, t, 0)
    wmap = lambda b, t: (0, 0, 0)

    in_specs = [
        pl.BlockSpec((bb, Tb, H), tmap),                  # gi0_r
        pl.BlockSpec((bb, Tb, H), tmap),                  # gi0_z
        pl.BlockSpec((bb, Tb, H), tmap),                  # gi0_n
        pl.BlockSpec((bb, L, H), lambda b, t: (b, 0, 0)), # h0 (batch-major)
    ]
    args = [gi0_r, gi0_z, gi0_n, h0_blh]
    for w in w_ih_g:
        in_specs.append(pl.BlockSpec(w.shape, wmap)); args.append(w)
    for w in w_hh_g:
        in_specs.append(pl.BlockSpec(w.shape, wmap)); args.append(w)
    for bg in b_ih_g:
        in_specs.append(pl.BlockSpec(bg.shape, wmap)); args.append(bg)
    for bg in b_hh_g:
        in_specs.append(pl.BlockSpec(bg.shape, wmap)); args.append(bg)

    return pl.pallas_call(
        _make_gru_kernel(L, H, Tb),
        out_shape=jax.ShapeDtypeStruct((B, T, H), jnp.float32),
        grid=grid,
        in_specs=in_specs,
        out_specs=pl.BlockSpec((bb, Tb, H), tmap),
        scratch_shapes=[pltpu.VMEM((L, bb, H), jnp.float32)],
        compiler_params=pltpu.CompilerParams(
            dimension_semantics=("parallel", "arbitrary")
        ),
    )(*args)


# ----------------------------------------------------------------------------
# Decoder forward (teacher-forcing branch).
# ----------------------------------------------------------------------------
def decoder_forward(params, z, actual_input, *, num_layers, hidden_size):
    B = z.shape[0]
    T = actual_input.shape[1]
    L, H = num_layers, hidden_size

    # Pre-transpose weights once at trace time (PyTorch stores (out, in)).
    l2h_wt = params["l2h_w"].T                    # (latent, L*H)
    out_wt = params["out_w"].T                    # (H, V)

    # latent -> hidden: (B, L*H) -> (B, L, H); consumed batch-major by the GRU
    # kernel (no transpose to (L, B, H) needed).
    hidden = linear(z, l2h_wt, params["l2h_b"]).reshape(B, L, H)

    # shift-right teacher forcing input: prepend start token (id=1), drop last
    start = jnp.full((B, 1), 1, dtype=actual_input.dtype)
    tokens = jnp.concatenate([start, actual_input[:, :-1]], axis=1)      # (B, T)

    # embedding lookup (glue, plain JAX gather)
    emb = jnp.take(params["emb"], tokens, axis=0).astype(jnp.float32)    # (B, T, E)

    # Precompute layer-0 input gates for ALL time steps as one big matmul.
    w_ih0_t = params["gru_w_ih"][0].T                                    # (E, 3H)
    gi0 = linear(emb.reshape(B * T, -1), w_ih0_t, params["gru_b_ih"][0]) # (B*T, 3H)
    gi0 = gi0.reshape(B, T, 3, H)
    gi0_r = gi0[:, :, 0, :]
    gi0_z = gi0[:, :, 1, :]
    gi0_n = gi0[:, :, 2, :]

    # Per-gate, pre-transposed recurrent weights: (3H, in) -> (3, in, H).
    def split_gates_w(w):
        return jnp.stack([w[:H].T, w[H:2 * H].T, w[2 * H:].T], axis=0)

    def split_gates_b(b):
        return jnp.stack([b[:H], b[H:2 * H], b[2 * H:]], axis=0).reshape(3, 1, H)

    w_hh_g = [split_gates_w(w) for w in params["gru_w_hh"]]
    b_hh_g = [split_gates_b(b) for b in params["gru_b_hh"]]
    w_ih_g = [split_gates_w(w) for w in params["gru_w_ih"][1:]]
    b_ih_g = [split_gates_b(b) for b in params["gru_b_ih"][1:]]

    # GRU over the sequence, batch-major in and out.
    out_bth = gru_forward(gi0_r, gi0_z, gi0_n, hidden,
                          w_ih_g, w_hh_g, b_ih_g, b_hh_g,
                          num_layers=L, hidden_size=H)                   # (B, T, H)

    # output projection: (B*T, H) -> (B*T, V) -> (B, T, V)
    V = params["out_w"].shape[0]
    logits = linear(out_bth.reshape(B * T, H), out_wt, params["out_b"])
    logits = logits.reshape(B, T, V)

    generated_sequence = None  # TODO(synk): free-running multinomial sampling branch not implemented
    return logits, generated_sequence


# ----------------------------------------------------------------------------
# Pure-JAX reference (mirrors nn.GRU / nn.Linear semantics) for validation.
# ----------------------------------------------------------------------------
def _reference_forward(params, z, actual_input, *, num_layers, hidden_size):
    B = z.shape[0]
    T = actual_input.shape[1]
    L, H = num_layers, hidden_size
    hidden = z @ params["l2h_w"].T + params["l2h_b"]
    h = hidden.reshape(B, L, H).transpose(1, 0, 2)
    start = jnp.full((B, 1), 1, dtype=actual_input.dtype)
    tokens = jnp.concatenate([start, actual_input[:, :-1]], axis=1)
    emb = jnp.take(params["emb"], tokens, axis=0).astype(jnp.float32)
    hs = [h[l] for l in range(L)]
    outs = []
    for t in range(T):
        x = emb[:, t, :]
        for l in range(L):
            gi = x @ params["gru_w_ih"][l].T + params["gru_b_ih"][l]
            gh = hs[l] @ params["gru_w_hh"][l].T + params["gru_b_hh"][l]
            r = jax.nn.sigmoid(gi[:, :H] + gh[:, :H])
            zg = jax.nn.sigmoid(gi[:, H:2 * H] + gh[:, H:2 * H])
            n = jnp.tanh(gi[:, 2 * H:] + r * gh[:, 2 * H:])
            hs[l] = (1.0 - zg) * n + zg * hs[l]
            x = hs[l]
        outs.append(x)
    out = jnp.stack(outs, axis=1)
    return out @ params["out_w"].T + params["out_b"]


# ----------------------------------------------------------------------------
# Deterministic parameter init (synthetic, mirrors the module's shapes).
# ----------------------------------------------------------------------------
def init_params(key, vocab_size, embedding_dim, hidden_size, num_layers,
                latent_dim=1024):
    keys = jax.random.split(key, 6 + 4 * num_layers)
    s = 0.1
    params = {
        "l2h_w": s * jax.random.normal(keys[0], (hidden_size * num_layers, latent_dim), jnp.float32),
        "l2h_b": s * jax.random.normal(keys[1], (hidden_size * num_layers,), jnp.float32),
        "emb":   s * jax.random.normal(keys[2], (vocab_size, embedding_dim), jnp.float32),
        "out_w": s * jax.random.normal(keys[3], (vocab_size, hidden_size), jnp.float32),
        "out_b": s * jax.random.normal(keys[4], (vocab_size,), jnp.float32),
        "gru_w_ih": [], "gru_w_hh": [], "gru_b_ih": [], "gru_b_hh": [],
    }
    kidx = 6
    for layer in range(num_layers):
        in_dim = embedding_dim if layer == 0 else hidden_size
        params["gru_w_ih"].append(
            s * jax.random.normal(keys[kidx + 0], (3 * hidden_size, in_dim), jnp.float32))
        params["gru_w_hh"].append(
            s * jax.random.normal(keys[kidx + 1], (3 * hidden_size, hidden_size), jnp.float32))
        params["gru_b_ih"].append(
            s * jax.random.normal(keys[kidx + 2], (3 * hidden_size,), jnp.float32))
        params["gru_b_hh"].append(
            s * jax.random.normal(keys[kidx + 3], (3 * hidden_size,), jnp.float32))
        kidx += 4
    return params


if __name__ == "__main__":
    # Small shapes consistent with the module's forward pass.
    batch = 2
    vocab_size = 24
    embedding_dim = 16
    hidden_size = 32
    num_layers = 2
    max_length = 8     # sequence length for teacher forcing
    latent_dim = 1024  # fixed in the module

    key = jax.random.PRNGKey(0)
    k_param, k_z, k_tok = jax.random.split(key, 3)

    params = init_params(k_param, vocab_size, embedding_dim, hidden_size,
                         num_layers, latent_dim)

    z = jax.random.normal(k_z, (batch, latent_dim), jnp.float32)
    actual_input = jax.random.randint(
        k_tok, (batch, max_length), 0, vocab_size, dtype=jnp.int32)

    fwd = jax.jit(functools.partial(
        decoder_forward, num_layers=num_layers, hidden_size=hidden_size))

    logits, generated = fwd(params, z, actual_input)
    logits = jax.block_until_ready(logits)
    assert logits.shape == (batch, max_length, vocab_size)

    # Validate against the pure-JAX reference.
    ref = _reference_forward(params, z, actual_input,
                             num_layers=num_layers, hidden_size=hidden_size)
    err = float(jnp.max(jnp.abs(logits - ref)))
    assert err < 1e-3, f"kernel/reference mismatch: max abs err = {err}"

    print("KERNEL_OK")
</pallas_src>

<mosaic_0001>
module attributes {stable_mosaic.version = 11 : i64} {
  func.func @_linear_kernel(%arg0: i32, %arg1: i32, %arg2: i32, %arg3: memref<2x512xf32, #tpu.memory_space<vmem>>, %arg4: memref<512x64xf32, #tpu.memory_space<vmem>>, %arg5: memref<1x64xf32, #tpu.memory_space<vmem>>, %arg6: memref<2x64xf32, #tpu.memory_space<vmem>>, %arg7: memref<2x64xf32, #tpu.memory_space<vmem>>) attributes {dimension_semantics = [#tpu.dimension_semantics<parallel>, #tpu.dimension_semantics<parallel>, #tpu.dimension_semantics<arbitrary>], iteration_bounds = array<i64: 1, 1, 2>, scalar_prefetch = 0 : i64, scratch_operands = 1 : i64, tpu.core_type = #tpu.core_type<tc>, window_params = [{transform_indices = @transform_0, window_bounds = array<i64: 2, 512>}, {transform_indices = @transform_1, window_bounds = array<i64: 512, 64>}, {transform_indices = @transform_2, window_bounds = array<i64: 1, 64>}, {transform_indices = @transform_3, window_bounds = array<i64: 2, 64>}]} {
    %c0_i32 = arith.constant 0 : i32
    %0 = arith.cmpi eq, %arg2, %c0_i32 : i32
    %1 = arith.extui %0 : i1 to i32
    %c0_i32_0 = arith.constant 0 : i32
    %2 = arith.cmpi ne, %1, %c0_i32_0 : i32
    scf.if %2 {
      %cst_9 = arith.constant 0.000000e+00 : f32
      %12 = vector.broadcast %cst_9 : f32 to vector<2x64xf32>
      %c0_10 = arith.constant 0 : index
      %c0_11 = arith.constant 0 : index
      %13 = vector.load %arg7[%c0_10, %c0_11] : memref<2x64xf32, #tpu.memory_space<vmem>>, vector<2x64xf32>
      tpu.vector_store %arg7[%c0_10, %c0_11], %12 {strides = array<i32>} : memref<2x64xf32, #tpu.memory_space<vmem>>, vector<2x64xf32>,
    } else {
    }
    %c0 = arith.constant 0 : index
    %c0_1 = arith.constant 0 : index
    %3 = vector.load %arg7[%c0, %c0_1] : memref<2x64xf32, #tpu.memory_space<vmem>>, vector<2x64xf32>
    %c0_2 = arith.constant 0 : index
    %c0_3 = arith.constant 0 : index
    %4 = vector.load %arg3[%c0_2, %c0_3] : memref<2x512xf32, #tpu.memory_space<vmem>>, vector<2x512xf32>
    %c0_4 = arith.constant 0 : index
    %c0_5 = arith.constant 0 : index
    %5 = vector.load %arg4[%c0_4, %c0_5] : memref<512x64xf32, #tpu.memory_space<vmem>>, vector<512x64xf32>
    %cst = arith.constant dense<0.000000e+00> : vector<2x64xf32>
    %6 = tpu.matmul %4, %5, %cst {dimension_numbers = #tpu.dot_dimension_numbers<[1], [0], [0], [1], [0, 0, 1, 1], [], []>} : vector<2x512xf32>, vector<512x64xf32>, vector<2x64xf32> -> vector<2x64xf32>
    %7 = arith.addf %3, %6 : vector<2x64xf32>
    %c0_6 = arith.constant 0 : index
    %c0_7 = arith.constant 0 : index
    %8 = vector.load %arg7[%c0_6, %c0_7] : memref<2x64xf32, #tpu.memory_space<vmem>>, vector<2x64xf32>
    tpu.vector_store %arg7[%c0_6, %c0_7], %7 {strides = array<i32>} : memref<2x64xf32, #tpu.memory_space<vmem>>, vector<2x64xf32>,
    %c1_i32 = arith.constant 1 : i32
    %9 = arith.cmpi eq, %arg2, %c1_i32 : i32
    %10 = arith.extui %9 : i1 to i32
    %c0_i32_8 = arith.constant 0 : i32
    %11 = arith.cmpi ne, %10, %c0_i32_8 : i32
    scf.if %11 {
      %c0_9 = arith.constant 0 : index
      %c0_10 = arith.constant 0 : index
      %12 = vector.load %arg7[%c0_9, %c0_10] : memref<2x64xf32, #tpu.memory_space<vmem>>, vector<2x64xf32>
      %c0_11 = arith.constant 0 : index
      %c0_12 = arith.constant 0 : index
      %13 = vector.load %arg5[%c0_11, %c0_12] : memref<1x64xf32, #tpu.memory_space<vmem>>, vector<1x64xf32>
      %14 = vector.broadcast %13 : vector<1x64xf32> to vector<2x64xf32>
      %15 = arith.addf %12, %14 : vector<2x64xf32>
      %c0_13 = arith.constant 0 : index
      %c0_14 = arith.constant 0 : index
      %16 = vector.load %arg6[%c0_13, %c0_14] : memref<2x64xf32, #tpu.memory_space<vmem>>, vector<2x64xf32>
      tpu.vector_store %arg6[%c0_13, %c0_14], %15 {strides = array<i32>} : memref<2x64xf32, #tpu.memory_space<vmem>>, vector<2x64xf32>,
    } else {
    }
    return
  }
  func.func @transform_0(%arg0: i32, %arg1: i32, %arg2: i32) -> (i32, i32) {
    %c0_i32 = arith.constant 0 : i32
    return %arg0, %arg2 : i32, i32
  }
  func.func @transform_1(%arg0: i32, %arg1: i32, %arg2: i32) -> (i32, i32) {
    %c0_i32 = arith.constant 0 : i32
    return %arg2, %arg1 : i32, i32
  }
  func.func @transform_2(%arg0: i32, %arg1: i32, %arg2: i32) -> (i32, i32) {
    %c0_i32 = arith.constant 0 : i32
    %c0_i32_0 = arith.constant 0 : i32
    return %c0_i32, %arg1 : i32, i32
  }
  func.func @transform_3(%arg0: i32, %arg1: i32, %arg2: i32) -> (i32, i32) {
    %c0_i32 = arith.constant 0 : i32
    return %arg0, %arg1 : i32, i32
  }
}

module attributes {stable_mosaic.version = 11 : i64} {
  func.func @_linear_kernel(%arg0: i32, %arg1: i32, %arg2: i32, %arg3: memref<16x16xf32, #tpu.memory_space<vmem>>, %arg4: memref<16x96xf32, #tpu.memory_space<vmem>>, %arg5: memref<1x96xf32, #tpu.memory_space<vmem>>, %arg6: memref<16x96xf32, #tpu.memory_space<vmem>>, %arg7: memref<16x96xf32, #tpu.memory_space<vmem>>) attributes {dimension_semantics = [#tpu.dimension_semantics<parallel>, #tpu.dimension_semantics<parallel>, #tpu.dimension_semantics<arbitrary>], iteration_bounds = array<i64: 1, 1, 1>, scalar_prefetch = 0 : i64, scratch_operands = 1 : i64, tpu.core_type = #tpu.core_type<tc>, window_params = [{transform_indices = @transform_0, window_bounds = array<i64: 16, 16>}, {transform_indices = @transform_1, window_bounds = array<i64: 16, 96>}, {transform_indices = @transform_2, window_bounds = array<i64: 1, 96>}, {transform_indices = @transform_3, window_bounds = array<i64: 16, 96>}]} {
    %c0_i32 = arith.constant 0 : i32
    %0 = arith.cmpi eq, %arg2, %c0_i32 : i32
    %1 = arith.extui %0 : i1 to i32
    %c0_i32_0 = arith.constant 0 : i32
    %2 = arith.cmpi ne, %1, %c0_i32_0 : i32
    scf.if %2 {
      %cst_10 = arith.constant 0.000000e+00 : f32
      %12 = vector.broadcast %cst_10 : f32 to vector<16x96xf32>
      %c0_11 = arith.constant 0 : index
      %c0_12 = arith.constant 0 : index
      %13 = vector.load %arg7[%c0_11, %c0_12] : memref<16x96xf32, #tpu.memory_space<vmem>>, vector<16x96xf32>
      tpu.vector_store %arg7[%c0_11, %c0_12], %12 {strides = array<i32>} : memref<16x96xf32, #tpu.memory_space<vmem>>, vector<16x96xf32>,
    } else {
    }
    %c0 = arith.constant 0 : index
    %c0_1 = arith.constant 0 : index
    %3 = vector.load %arg7[%c0, %c0_1] : memref<16x96xf32, #tpu.memory_space<vmem>>, vector<16x96xf32>
    %c0_2 = arith.constant 0 : index
    %c0_3 = arith.constant 0 : index
    %4 = vector.load %arg3[%c0_2, %c0_3] : memref<16x16xf32, #tpu.memory_space<vmem>>, vector<16x16xf32>
    %c0_4 = arith.constant 0 : index
    %c0_5 = arith.constant 0 : index
    %5 = vector.load %arg4[%c0_4, %c0_5] : memref<16x96xf32, #tpu.memory_space<vmem>>, vector<16x96xf32>
    %cst = arith.constant dense<0.000000e+00> : vector<16x96xf32>
    %6 = tpu.matmul %4, %5, %cst {dimension_numbers = #tpu.dot_dimension_numbers<[1], [0], [0], [1], [0, 0, 1, 1], [], []>} : vector<16x16xf32>, vector<16x96xf32>, vector<16x96xf32> -> vector<16x96xf32>
    %7 = arith.addf %3, %6 : vector<16x96xf32>
    %c0_6 = arith.constant 0 : index
    %c0_7 = arith.constant 0 : index
    %8 = vector.load %arg7[%c0_6, %c0_7] : memref<16x96xf32, #tpu.memory_space<vmem>>, vector<16x96xf32>
    tpu.vector_store %arg7[%c0_6, %c0_7], %7 {strides = array<i32>} : memref<16x96xf32, #tpu.memory_space<vmem>>, vector<16x96xf32>,
    %c0_i32_8 = arith.constant 0 : i32
    %9 = arith.cmpi eq, %arg2, %c0_i32_8 : i32
    %10 = arith.extui %9 : i1 to i32
    %c0_i32_9 = arith.constant 0 : i32
    %11 = arith.cmpi ne, %10, %c0_i32_9 : i32
    scf.if %11 {
      %c0_10 = arith.constant 0 : index
      %c0_11 = arith.constant 0 : index
      %12 = vector.load %arg7[%c0_10, %c0_11] : memref<16x96xf32, #tpu.memory_space<vmem>>, vector<16x96xf32>
      %c0_12 = arith.constant 0 : index
      %c0_13 = arith.constant 0 : index
      %13 = vector.load %arg5[%c0_12, %c0_13] : memref<1x96xf32, #tpu.memory_space<vmem>>, vector<1x96xf32>
      %14 = vector.broadcast %13 : vector<1x96xf32> to vector<16x96xf32>
      %15 = arith.addf %12, %14 : vector<16x96xf32>
      %c0_14 = arith.constant 0 : index
      %c0_15 = arith.constant 0 : index
      %16 = vector.load %arg6[%c0_14, %c0_15] : memref<16x96xf32, #tpu.memory_space<vmem>>, vector<16x96xf32>
      tpu.vector_store %arg6[%c0_14, %c0_15], %15 {strides = array<i32>} : memref<16x96xf32, #tpu.memory_space<vmem>>, vector<16x96xf32>,
    } else {
    }
    return
  }
  func.func @transform_0(%arg0: i32, %arg1: i32, %arg2: i32) -> (i32, i32) {
    %c0_i32 = arith.constant 0 : i32
    return %arg0, %arg2 : i32, i32
  }
  func.func @transform_1(%arg0: i32, %arg1: i32, %arg2: i32) -> (i32, i32) {
    %c0_i32 = arith.constant 0 : i32
    return %arg2, %arg1 : i32, i32
  }
  func.func @transform_2(%arg0: i32, %arg1: i32, %arg2: i32) -> (i32, i32) {
    %c0_i32 = arith.constant 0 : i32
    %c0_i32_0 = arith.constant 0 : i32
    return %c0_i32, %arg1 : i32, i32
  }
  func.func @transform_3(%arg0: i32, %arg1: i32, %arg2: i32) -> (i32, i32) {
    %c0_i32 = arith.constant 0 : i32
    return %arg0, %arg1 : i32, i32
  }
}

module attributes {stable_mosaic.version = 11 : i64} {
  func.func @_linear_kernel(%arg0: i32, %arg1: i32, %arg2: i32, %arg3: memref<16x32xf32, #tpu.memory_space<vmem>>, %arg4: memref<32x24xf32, #tpu.memory_space<vmem>>, %arg5: memref<1x24xf32, #tpu.memory_space<vmem>>, %arg6: memref<16x24xf32, #tpu.memory_space<vmem>>, %arg7: memref<16x24xf32, #tpu.memory_space<vmem>>) attributes {dimension_semantics = [#tpu.dimension_semantics<parallel>, #tpu.dimension_semantics<parallel>, #tpu.dimension_semantics<arbitrary>], iteration_bounds = array<i64: 1, 1, 1>, scalar_prefetch = 0 : i64, scratch_operands = 1 : i64, tpu.core_type = #tpu.core_type<tc>, window_params = [{transform_indices = @transform_0, window_bounds = array<i64: 16, 32>}, {transform_indices = @transform_1, window_bounds = array<i64: 32, 24>}, {transform_indices = @transform_2, window_bounds = array<i64: 1, 24>}, {transform_indices = @transform_3, window_bounds = array<i64: 16, 24>}]} {
    %c0_i32 = arith.constant 0 : i32
    %0 = arith.cmpi eq, %arg2, %c0_i32 : i32
    %1 = arith.extui %0 : i1 to i32
    %c0_i32_0 = arith.constant 0 : i32
    %2 = arith.cmpi ne, %1, %c0_i32_0 : i32
    scf.if %2 {
      %cst_10 = arith.constant 0.000000e+00 : f32
      %12 = vector.broadcast %cst_10 : f32 to vector<16x24xf32>
      %c0_11 = arith.constant 0 : index
      %c0_12 = arith.constant 0 : index
      %13 = vector.load %arg7[%c0_11, %c0_12] : memref<16x24xf32, #tpu.memory_space<vmem>>, vector<16x24xf32>
      tpu.vector_store %arg7[%c0_11, %c0_12], %12 {strides = array<i32>} : memref<16x24xf32, #tpu.memory_space<vmem>>, vector<16x24xf32>,
    } else {
    }
    %c0 = arith.constant 0 : index
    %c0_1 = arith.constant 0 : index
    %3 = vector.load %arg7[%c0, %c0_1] : memref<16x24xf32, #tpu.memory_space<vmem>>, vector<16x24xf32>
    %c0_2 = arith.constant 0 : index
    %c0_3 = arith.constant 0 : index
    %4 = vector.load %arg3[%c0_2, %c0_3] : memref<16x32xf32, #tpu.memory_space<vmem>>, vector<16x32xf32>
    %c0_4 = arith.constant 0 : index
    %c0_5 = arith.constant 0 : index
    %5 = vector.load %arg4[%c0_4, %c0_5] : memref<32x24xf32, #tpu.memory_space<vmem>>, vector<32x24xf32>
    %cst = arith.constant dense<0.000000e+00> : vector<16x24xf32>
    %6 = tpu.matmul %4, %5, %cst {dimension_numbers = #tpu.dot_dimension_numbers<[1], [0], [0], [1], [0, 0, 1, 1], [], []>} : vector<16x32xf32>, vector<32x24xf32>, vector<16x24xf32> -> vector<16x24xf32>
    %7 = arith.addf %3, %6 : vector<16x24xf32>
    %c0_6 = arith.constant 0 : index
    %c0_7 = arith.constant 0 : index
    %8 = vector.load %arg7[%c0_6, %c0_7] : memref<16x24xf32, #tpu.memory_space<vmem>>, vector<16x24xf32>
    tpu.vector_store %arg7[%c0_6, %c0_7], %7 {strides = array<i32>} : memref<16x24xf32, #tpu.memory_space<vmem>>, vector<16x24xf32>,
    %c0_i32_8 = arith.constant 0 : i32
    %9 = arith.cmpi eq, %arg2, %c0_i32_8 : i32
    %10 = arith.extui %9 : i1 to i32
    %c0_i32_9 = arith.constant 0 : i32
    %11 = arith.cmpi ne, %10, %c0_i32_9 : i32
    scf.if %11 {
      %c0_10 = arith.constant 0 : index
      %c0_11 = arith.constant 0 : index
      %12 = vector.load %arg7[%c0_10, %c0_11] : memref<16x24xf32, #tpu.memory_space<vmem>>, vector<16x24xf32>
      %c0_12 = arith.constant 0 : index
      %c0_13 = arith.constant 0 : index
      %13 = vector.load %arg5[%c0_12, %c0_13] : memref<1x24xf32, #tpu.memory_space<vmem>>, vector<1x24xf32>
      %14 = vector.broadcast %13 : vector<1x24xf32> to vector<16x24xf32>
      %15 = arith.addf %12, %14 : vector<16x24xf32>
      %c0_14 = arith.constant 0 : index
      %c0_15 = arith.constant 0 : index
      %16 = vector.load %arg6[%c0_14, %c0_15] : memref<16x24xf32, #tpu.memory_space<vmem>>, vector<16x24xf32>
      tpu.vector_store %arg6[%c0_14, %c0_15], %15 {strides = array<i32>} : memref<16x24xf32, #tpu.memory_space<vmem>>, vector<16x24xf32>,
    } else {
    }
    return
  }
  func.func @transform_0(%arg0: i32, %arg1: i32, %arg2: i32) -> (i32, i32) {
    %c0_i32 = arith.constant 0 : i32
    return %arg0, %arg2 : i32, i32
  }
  func.func @transform_1(%arg0: i32, %arg1: i32, %arg2: i32) -> (i32, i32) {
    %c0_i32 = arith.constant 0 : i32
    return %arg2, %arg1 : i32, i32
  }
  func.func @transform_2(%arg0: i32, %arg1: i32, %arg2: i32) -> (i32, i32) {
    %c0_i32 = arith.constant 0 : i32
    %c0_i32_0 = arith.constant 0 : i32
    return %c0_i32, %arg1 : i32, i32
  }
  func.func @transform_3(%arg0: i32, %arg1: i32, %arg2: i32) -> (i32, i32) {
    %c0_i32 = arith.constant 0 : i32
    return %arg0, %arg1 : i32, i32
  }
}

module attributes {stable_mosaic.version = 11 : i64} {
  func.func @kernel(%arg0: i32, %arg1: i32, %arg2: memref<2x8x32xf32, #tpu.memory_space<vmem>>, %arg3: memref<2x8x32xf32, #tpu.memory_space<vmem>>, %arg4: memref<2x8x32xf32, #tpu.memory_space<vmem>>, %arg5: memref<2x2x32xf32, #tpu.memory_space<vmem>>, %arg6: memref<3x32x32xf32, #tpu.memory_space<vmem>>, %arg7: memref<3x32x32xf32, #tpu.memory_space<vmem>>, %arg8: memref<3x32x32xf32, #tpu.memory_space<vmem>>, %arg9: memref<3x1x32xf32, #tpu.memory_space<vmem>>, %arg10: memref<3x1x32xf32, #tpu.memory_space<vmem>>, %arg11: memref<3x1x32xf32, #tpu.memory_space<vmem>>, %arg12: memref<2x8x32xf32, #tpu.memory_space<vmem>>, %arg13: memref<2x2x32xf32, #tpu.memory_space<vmem>>) attributes {dimension_semantics = [#tpu.dimension_semantics<parallel>, #tpu.dimension_semantics<arbitrary>], iteration_bounds = array<i64: 1, 1>, scalar_prefetch = 0 : i64, scratch_operands = 1 : i64, tpu.core_type = #tpu.core_type<tc>, window_params = [{transform_indices = @transform_0, window_bounds = array<i64: 2, 8, 32>}, {transform_indices = @transform_1, window_bounds = array<i64: 2, 8, 32>}, {transform_indices = @transform_2, window_bounds = array<i64: 2, 8, 32>}, {transform_indices = @transform_3, window_bounds = array<i64: 2, 2, 32>}, {pipeline_mode = #tpu.pipeline_mode<synchronous>, transform_indices = @transform_4, window_bounds = array<i64: 3, 32, 32>}, {pipeline_mode = #tpu.pipeline_mode<synchronous>, transform_indices = @transform_5, window_bounds = array<i64: 3, 32, 32>}, {pipeline_mode = #tpu.pipeline_mode<synchronous>, transform_indices = @transform_6, window_bounds = array<i64: 3, 32, 32>}, {pipeline_mode = #tpu.pipeline_mode<synchronous>, transform_indices = @transform_7, window_bounds = array<i64: 3, 1, 32>}, {pipeline_mode = #tpu.pipeline_mode<synchronous>, transform_indices = @transform_8, window_bounds = array<i64: 3, 1, 32>}, {pipeline_mode = #tpu.pipeline_mode<synchronous>, transform_indices = @transform_9, window_bounds = array<i64: 3, 1, 32>}, {transform_indices = @transform_10, window_bounds = array<i64: 2, 8, 32>}]} {
    %c0_i32 = arith.constant 0 : i32
    %0 = arith.cmpi eq, %arg1, %c0_i32 : i32
    %1 = arith.extui %0 : i1 to i32
    %c0_i32_0 = arith.constant 0 : i32
    %2 = arith.cmpi ne, %1, %c0_i32_0 : i32
    scf.if %2 {
      %c0_274 = arith.constant 0 : index
      %c0_275 = arith.constant 0 : index
      %c0_276 = arith.constant 0 : index
      %657 = vector.load %arg5[%c0_274, %c0_275, %c0_276] : memref<2x2x32xf32, #tpu.memory_space<vmem>>, vector<2x1x32xf32>
      %658 = vector.shape_cast %657 : vector<2x1x32xf32> to vector<2x32xf32>
      %c0_277 = arith.constant 0 : index
      %c0_278 = arith.constant 0 : index
      %c0_279 = arith.constant 0 : index
      %659 = vector.load %arg13[%c0_277, %c0_278, %c0_279] : memref<2x2x32xf32, #tpu.memory_space<vmem>>, vector<1x2x32xf32>
      %660 = vector.shape_cast %659 : vector<1x2x32xf32> to vector<2x32xf32>
      %661 = vector.shape_cast %658 : vector<2x32xf32> to vector<1x2x32xf32>
      tpu.vector_store %arg13[%c0_277, %c0_278, %c0_279], %661 {strides = array<i32>} : memref<2x2x32xf32, #tpu.memory_space<vmem>>, vector<1x2x32xf32>,
      %c0_280 = arith.constant 0 : index
      %c1_281 = arith.constant 1 : index
      %c0_282 = arith.constant 0 : index
      %662 = vector.load %arg5[%c0_280, %c1_281, %c0_282] : memref<2x2x32xf32, #tpu.memory_space<vmem>>, vector<2x1x32xf32>
      %663 = vector.shape_cast %662 : vector<2x1x32xf32> to vector<2x32xf32>
      %c1_283 = arith.constant 1 : index
      %c0_284 = arith.constant 0 : index
      %c0_285 = arith.constant 0 : index
      %664 = vector.load %arg13[%c1_283, %c0_284, %c0_285] : memref<2x2x32xf32, #tpu.memory_space<vmem>>, vector<1x2x32xf32>
      %665 = vector.shape_cast %664 : vector<1x2x32xf32> to vector<2x32xf32>
      %666 = vector.shape_cast %663 : vector<2x32xf32> to vector<1x2x32xf32>
      tpu.vector_store %arg13[%c1_283, %c0_284, %c0_285], %666 {strides = array<i32>} : memref<2x2x32xf32, #tpu.memory_space<vmem>>, vector<1x2x32xf32>,
    } else {
    }
    %c0 = arith.constant 0 : index
    %c0_1 = arith.constant 0 : index
    %c0_2 = arith.constant 0 : index
    %3 = vector.load %arg7[%c0, %c0_1, %c0_2] : memref<3x32x32xf32, #tpu.memory_space<vmem>>, vector<1x32x32xf32>
    %4 = vector.shape_cast %3 : vector<1x32x32xf32> to vector<32x32xf32>
    %c1 = arith.constant 1 : index
    %c0_3 = arith.constant 0 : index
    %c0_4 = arith.constant 0 : index
    %5 = vector.load %arg7[%c1, %c0_3, %c0_4] : memref<3x32x32xf32, #tpu.memory_space<vmem>>, vector<1x32x32xf32>
    %6 = vector.shape_cast %5 : vector<1x32x32xf32> to vector<32x32xf32>
    %c2 = arith.constant 2 : index
    %c0_5 = arith.constant 0 : index
    %c0_6 = arith.constant 0 : index
    %7 = vector.load %arg7[%c2, %c0_5, %c0_6] : memref<3x32x32xf32, #tpu.memory_space<vmem>>, vector<1x32x32xf32>
    %8 = vector.shape_cast %7 : vector<1x32x32xf32> to vector<32x32xf32>
    %c0_7 = arith.constant 0 : index
    %c0_8 = arith.constant 0 : index
    %c0_9 = arith.constant 0 : index
    %9 = vector.load %arg8[%c0_7, %c0_8, %c0_9] : memref<3x32x32xf32, #tpu.memory_space<vmem>>, vector<1x32x32xf32>
    %10 = vector.shape_cast %9 : vector<1x32x32xf32> to vector<32x32xf32>
    %c1_10 = arith.constant 1 : index
    %c0_11 = arith.constant 0 : index
    %c0_12 = arith.constant 0 : index
    %11 = vector.load %arg8[%c1_10, %c0_11, %c0_12] : memref<3x32x32xf32, #tpu.memory_space<vmem>>, vector<1x32x32xf32>
    %12 = vector.shape_cast %11 : vector<1x32x32xf32> to vector<32x32xf32>
    %c2_13 = arith.constant 2 : index
    %c0_14 = arith.constant 0 : index
    %c0_15 = arith.constant 0 : index
    %13 = vector.load %arg8[%c2_13, %c0_14, %c0_15] : memref<3x32x32xf32, #tpu.memory_space<vmem>>, vector<1x32x32xf32>
    %14 = vector.shape_cast %13 : vector<1x32x32xf32> to vector<32x32xf32>
    %c0_16 = arith.constant 0 : index
    %c0_17 = arith.constant 0 : index
    %c0_18 = arith.constant 0 : index
    %15 = vector.load %arg10[%c0_16, %c0_17, %c0_18] : memref<3x1x32xf32, #tpu.memory_space<vmem>>, vector<1x1x32xf32>
    %16 = vector.shape_cast %15 : vector<1x1x32xf32> to vector<1x32xf32>
    %c1_19 = arith.constant 1 : index
    %c0_20 = arith.constant 0 : index
    %c0_21 = arith.constant 0 : index
    %17 = vector.load %arg10[%c1_19, %c0_20, %c0_21] : memref<3x1x32xf32, #tpu.memory_space<vmem>>, vector<1x1x32xf32>
    %18 = vector.shape_cast %17 : vector<1x1x32xf32> to vector<1x32xf32>
    %c2_22 = arith.constant 2 : index
    %c0_23 = arith.constant 0 : index
    %c0_24 = arith.constant 0 : index
    %19 = vector.load %arg10[%c2_22, %c0_23, %c0_24] : memref<3x1x32xf32, #tpu.memory_space<vmem>>, vector<1x1x32xf32>
    %20 = vector.shape_cast %19 : vector<1x1x32xf32> to vector<1x32xf32>
    %c0_25 = arith.constant 0 : index
    %c0_26 = arith.constant 0 : index
    %c0_27 = arith.constant 0 : index
    %21 = vector.load %arg11[%c0_25, %c0_26, %c0_27] : memref<3x1x32xf32, #tpu.memory_space<vmem>>, vector<1x1x32xf32>
    %22 = vector.shape_cast %21 : vector<1x1x32xf32> to vector<1x32xf32>
    %c1_28 = arith.constant 1 : index
    %c0_29 = arith.constant 0 : index
    %c0_30 = arith.constant 0 : index
    %23 = vector.load %arg11[%c1_28, %c0_29, %c0_30] : memref<3x1x32xf32, #tpu.memory_space<vmem>>, vector<1x1x32xf32>
    %24 = vector.shape_cast %23 : vector<1x1x32xf32> to vector<1x32xf32>
    %c2_31 = arith.constant 2 : index
    %c0_32 = arith.constant 0 : index
    %c0_33 = arith.constant 0 : index
    %25 = vector.load %arg11[%c2_31, %c0_32, %c0_33] : memref<3x1x32xf32, #tpu.memory_space<vmem>>, vector<1x1x32xf32>
    %26 = vector.shape_cast %25 : vector<1x1x32xf32> to vector<1x32xf32>
    %c0_34 = arith.constant 0 : index
    %c0_35 = arith.constant 0 : index
    %c0_36 = arith.constant 0 : index
    %27 = vector.load %arg6[%c0_34, %c0_35, %c0_36] : memref<3x32x32xf32, #tpu.memory_space<vmem>>, vector<1x32x32xf32>
    %28 = vector.shape_cast %27 : vector<1x32x32xf32> to vector<32x32xf32>
    %c1_37 = arith.constant 1 : index
    %c0_38 = arith.constant 0 : index
    %c0_39 = arith.constant 0 : index
    %29 = vector.load %arg6[%c1_37, %c0_38, %c0_39] : memref<3x32x32xf32, #tpu.memory_space<vmem>>, vector<1x32x32xf32>
    %30 = vector.shape_cast %29 : vector<1x32x32xf32> to vector<32x32xf32>
    %c2_40 = arith.constant 2 : index
    %c0_41 = arith.constant 0 : index
    %c0_42 = arith.constant 0 : index
    %31 = vector.load %arg6[%c2_40, %c0_41, %c0_42] : memref<3x32x32xf32, #tpu.memory_space<vmem>>, vector<1x32x32xf32>
    %32 = vector.shape_cast %31 : vector<1x32x32xf32> to vector<32x32xf32>
    %c0_43 = arith.constant 0 : index
    %c0_44 = arith.constant 0 : index
    %c0_45 = arith.constant 0 : index
    %33 = vector.load %arg9[%c0_43, %c0_44, %c0_45] : memref<3x1x32xf32, #tpu.memory_space<vmem>>, vector<1x1x32xf32>
    %34 = vector.shape_cast %33 : vector<1x1x32xf32> to vector<1x32xf32>
    %c1_46 = arith.constant 1 : index
    %c0_47 = arith.constant 0 : index
    %c0_48 = arith.constant 0 : index
    %35 = vector.load %arg9[%c1_46, %c0_47, %c0_48] : memref<3x1x32xf32, #tpu.memory_space<vmem>>, vector<1x1x32xf32>
    %36 = vector.shape_cast %35 : vector<1x1x32xf32> to vector<1x32xf32>
    %c2_49 = arith.constant 2 : index
    %c0_50 = arith.constant 0 : index
    %c0_51 = arith.constant 0 : index
    %37 = vector.load %arg9[%c2_49, %c0_50, %c0_51] : memref<3x1x32xf32, #tpu.memory_space<vmem>>, vector<1x1x32xf32>
    %38 = vector.shape_cast %37 : vector<1x1x32xf32> to vector<1x32xf32>
    %c0_52 = arith.constant 0 : index
    %c0_53 = arith.constant 0 : index
    %c0_54 = arith.constant 0 : index
    %39 = vector.load %arg13[%c0_52, %c0_53, %c0_54] : memref<2x2x32xf32, #tpu.memory_space<vmem>>, vector<1x2x32xf32>
    %40 = vector.shape_cast %39 : vector<1x2x32xf32> to vector<2x32xf32>
    %c1_55 = arith.constant 1 : index
    %c0_56 = arith.constant 0 : index
    %c0_57 = arith.constant 0 : index
    %41 = vector.load %arg13[%c1_55, %c0_56, %c0_57] : memref<2x2x32xf32, #tpu.memory_space<vmem>>, vector<1x2x32xf32>
    %42 = vector.shape_cast %41 : vector<1x2x32xf32> to vector<2x32xf32>
    %c0_58 = arith.constant 0 : index
    %c0_59 = arith.constant 0 : index
    %c0_60 = arith.constant 0 : index
    %43 = vector.load %arg2[%c0_58, %c0_59, %c0_60] : memref<2x8x32xf32, #tpu.memory_space<vmem>>, vector<2x1x32xf32>
    %44 = vector.shape_cast %43 : vector<2x1x32xf32> to vector<2x32xf32>
    %c0_61 = arith.constant 0 : index
    %c0_62 = arith.constant 0 : index
    %c0_63 = arith.constant 0 : index
    %45 = vector.load %arg3[%c0_61, %c0_62, %c0_63] : memref<2x8x32xf32, #tpu.memory_space<vmem>>, vector<2x1x32xf32>
    %46 = vector.shape_cast %45 : vector<2x1x32xf32> to vector<2x32xf32>
    %c0_64 = arith.constant 0 : index
    %c0_65 = arith.constant 0 : index
    %c0_66 = arith.constant 0 : index
    %47 = vector.load %arg4[%c0_64, %c0_65, %c0_66] : memref<2x8x32xf32, #tpu.memory_space<vmem>>, vector<2x1x32xf32>
    %48 = vector.shape_cast %47 : vector<2x1x32xf32> to vector<2x32xf32>
    %cst = arith.constant dense<0.000000e+00> : vector<2x32xf32>
    %49 = tpu.matmul %40, %4, %cst {dimension_numbers = #tpu.dot_dimension_numbers<[1], [0], [0], [1], [0, 0, 1, 1], [], []>} : vector<2x32xf32>, vector<32x32xf32>, vector<2x32xf32> -> vector<2x32xf32>
    %50 = vector.broadcast %16 : vector<1x32xf32> to vector<2x32xf32>
    %51 = arith.addf %49, %50 : vector<2x32xf32>
    %cst_67 = arith.constant dense<0.000000e+00> : vector<2x32xf32>
    %52 = tpu.matmul %40, %6, %cst_67 {dimension_numbers = #tpu.dot_dimension_numbers<[1], [0], [0], [1], [0, 0, 1, 1], [], []>} : vector<2x32xf32>, vector<32x32xf32>, vector<2x32xf32> -> vector<2x32xf32>
    %53 = vector.broadcast %18 : vector<1x32xf32> to vector<2x32xf32>
    %54 = arith.addf %52, %53 : vector<2x32xf32>
    %cst_68 = arith.constant dense<0.000000e+00> : vector<2x32xf32>
    %55 = tpu.matmul %40, %8, %cst_68 {dimension_numbers = #tpu.dot_dimension_numbers<[1], [0], [0], [1], [0, 0, 1, 1], [], []>} : vector<2x32xf32>, vector<32x32xf32>, vector<2x32xf32> -> vector<2x32xf32>
    %56 = vector.broadcast %20 : vector<1x32xf32> to vector<2x32xf32>
    %57 = arith.addf %55, %56 : vector<2x32xf32>
    %58 = arith.addf %44, %51 : vector<2x32xf32>
    %59 = arith.negf %58 : vector<2x32xf32>
    %60 = math.exp %59 : vector<2x32xf32>
    %cst_69 = arith.constant 1.000000e+00 : f32
    %61 = vector.broadcast %cst_69 : f32 to vector<2x32xf32>
    %62 = arith.addf %61, %60 : vector<2x32xf32>
    %63 = arith.divf %61, %62 : vector<2x32xf32>
    %64 = arith.addf %46, %54 : vector<2x32xf32>
    %65 = arith.negf %64 : vector<2x32xf32>
    %66 = math.exp %65 : vector<2x32xf32>
    %cst_70 = arith.constant 1.000000e+00 : f32
    %67 = vector.broadcast %cst_70 : f32 to vector<2x32xf32>
    %68 = arith.addf %67, %66 : vector<2x32xf32>
    %69 = arith.divf %67, %68 : vector<2x32xf32>
    %70 = arith.mulf %63, %57 : vector<2x32xf32>
    %71 = arith.addf %48, %70 : vector<2x32xf32>
    %72 = math.tanh %71 : vector<2x32xf32>
    %cst_71 = arith.constant 1.000000e+00 : f32
    %73 = vector.broadcast %cst_71 : f32 to vector<2x32xf32>
    %74 = arith.subf %73, %69 : vector<2x32xf32>
    %75 = arith.mulf %74, %72 : vector<2x32xf32>
    %76 = arith.mulf %69, %40 : vector<2x32xf32>
    %77 = arith.addf %75, %76 : vector<2x32xf32>
    %cst_72 = arith.constant dense<0.000000e+00> : vector<2x32xf32>
    %78 = tpu.matmul %77, %28, %cst_72 {dimension_numbers = #tpu.dot_dimension_numbers<[1], [0], [0], [1], [0, 0, 1, 1], [], []>} : vector<2x32xf32>, vector<32x32xf32>, vector<2x32xf32> -> vector<2x32xf32>
    %79 = vector.broadcast %34 : vector<1x32xf32> to vector<2x32xf32>
    %80 = arith.addf %78, %79 : vector<2x32xf32>
    %cst_73 = arith.constant dense<0.000000e+00> : vector<2x32xf32>
    %81 = tpu.matmul %77, %30, %cst_73 {dimension_numbers = #tpu.dot_dimension_numbers<[1], [0], [0], [1], [0, 0, 1, 1], [], []>} : vector<2x32xf32>, vector<32x32xf32>, vector<2x32xf32> -> vector<2x32xf32>
    %82 = vector.broadcast %36 : vector<1x32xf32> to vector<2x32xf32>
    %83 = arith.addf %81, %82 : vector<2x32xf32>
    %cst_74 = arith.constant dense<0.000000e+00> : vector<2x32xf32>
    %84 = tpu.matmul %77, %32, %cst_74 {dimension_numbers = #tpu.dot_dimension_numbers<[1], [0], [0], [1], [0, 0, 1, 1], [], []>} : vector<2x32xf32>, vector<32x32xf32>, vector<2x32xf32> -> vector<2x32xf32>
    %85 = vector.broadcast %38 : vector<1x32xf32> to vector<2x32xf32>
    %86 = arith.addf %84, %85 : vector<2x32xf32>
    %cst_75 = arith.constant dense<0.000000e+00> : vector<2x32xf32>
    %87 = tpu.matmul %42, %10, %cst_75 {dimension_numbers = #tpu.dot_dimension_numbers<[1], [0], [0], [1], [0, 0, 1, 1], [], []>} : vector<2x32xf32>, vector<32x32xf32>, vector<2x32xf32> -> vector<2x32xf32>
    %88 = vector.broadcast %22 : vector<1x32xf32> to vector<2x32xf32>
    %89 = arith.addf %87, %88 : vector<2x32xf32>
    %cst_76 = arith.constant dense<0.000000e+00> : vector<2x32xf32>
    %90 = tpu.matmul %42, %12, %cst_76 {dimension_numbers = #tpu.dot_dimension_numbers<[1], [0], [0], [1], [0, 0, 1, 1], [], []>} : vector<2x32xf32>, vector<32x32xf32>, vector<2x32xf32> -> vector<2x32xf32>
    %91 = vector.broadcast %24 : vector<1x32xf32> to vector<2x32xf32>
    %92 = arith.addf %90, %91 : vector<2x32xf32>
    %cst_77 = arith.constant dense<0.000000e+00> : vector<2x32xf32>
    %93 = tpu.matmul %42, %14, %cst_77 {dimension_numbers = #tpu.dot_dimension_numbers<[1], [0], [0], [1], [0, 0, 1, 1], [], []>} : vector<2x32xf32>, vector<32x32xf32>, vector<2x32xf32> -> vector<2x32xf32>
    %94 = vector.broadcast %26 : vector<1x32xf32> to vector<2x32xf32>
    %95 = arith.addf %93, %94 : vector<2x32xf32>
    %96 = arith.addf %80, %89 : vector<2x32xf32>
    %97 = arith.negf %96 : vector<2x32xf32>
    %98 = math.exp %97 : vector<2x32xf32>
    %cst_78 = arith.constant 1.000000e+00 : f32
    %99 = vector.broadcast %cst_78 : f32 to vector<2x32xf32>
    %100 = arith.addf %99, %98 : vector<2x32xf32>
    %101 = arith.divf %99, %100 : vector<2x32xf32>
    %102 = arith.addf %83, %92 : vector<2x32xf32>
    %103 = arith.negf %102 : vector<2x32xf32>
    %104 = math.exp %103 : vector<2x32xf32>
    %cst_79 = arith.constant 1.000000e+00 : f32
    %105 = vector.broadcast %cst_79 : f32 to vector<2x32xf32>
    %106 = arith.addf %105, %104 : vector<2x32xf32>
    %107 = arith.divf %105, %106 : vector<2x32xf32>
    %108 = arith.mulf %101, %95 : vector<2x32xf32>
    %109 = arith.addf %86, %108 : vector<2x32xf32>
    %110 = math.tanh %109 : vector<2x32xf32>
    %cst_80 = arith.constant 1.000000e+00 : f32
    %111 = vector.broadcast %cst_80 : f32 to vector<2x32xf32>
    %112 = arith.subf %111, %107 : vector<2x32xf32>
    %113 = arith.mulf %112, %110 : vector<2x32xf32>
    %114 = arith.mulf %107, %42 : vector<2x32xf32>
    %115 = arith.addf %113, %114 : vector<2x32xf32>
    %c0_81 = arith.constant 0 : index
    %c0_82 = arith.constant 0 : index
    %c0_83 = arith.constant 0 : index
    %116 = vector.load %arg12[%c0_81, %c0_82, %c0_83] : memref<2x8x32xf32, #tpu.memory_space<vmem>>, vector<2x1x32xf32>
    %117 = vector.shape_cast %116 : vector<2x1x32xf32> to vector<2x32xf32>
    %118 = vector.shape_cast %115 : vector<2x32xf32> to vector<2x1x32xf32>
    tpu.vector_store %arg12[%c0_81, %c0_82, %c0_83], %118 {strides = array<i32>} : memref<2x8x32xf32, #tpu.memory_space<vmem>>, vector<2x1x32xf32>,
    %c0_84 = arith.constant 0 : index
    %c1_85 = arith.constant 1 : index
    %c0_86 = arith.constant 0 : index
    %119 = vector.load %arg2[%c0_84, %c1_85, %c0_86] : memref<2x8x32xf32, #tpu.memory_space<vmem>>, vector<2x1x32xf32>
    %120 = vector.shape_cast %119 : vector<2x1x32xf32> to vector<2x32xf32>
    %c0_87 = arith.constant 0 : index
    %c1_88 = arith.constant 1 : index
    %c0_89 = arith.constant 0 : index
    %121 = vector.load %arg3[%c0_87, %c1_88, %c0_89] : memref<2x8x32xf32, #tpu.memory_space<vmem>>, vector<2x1x32xf32>
    %122 = vector.shape_cast %121 : vector<2x1x32xf32> to vector<2x32xf32>
    %c0_90 = arith.constant 0 : index
    %c1_91 = arith.constant 1 : index
    %c0_92 = arith.constant 0 : index
    %123 = vector.load %arg4[%c0_90, %c1_91, %c0_92] : memref<2x8x32xf32, #tpu.memory_space<vmem>>, vector<2x1x32xf32>
    %124 = vector.shape_cast %123 : vector<2x1x32xf32> to vector<2x32xf32>
    %cst_93 = arith.constant dense<0.000000e+00> : vector<2x32xf32>
    %125 = tpu.matmul %77, %4, %cst_93 {dimension_numbers = #tpu.dot_dimension_numbers<[1], [0], [0], [1], [0, 0, 1, 1], [], []>} : vector<2x32xf32>, vector<32x32xf32>, vector<2x32xf32> -> vector<2x32xf32>
    %126 = vector.broadcast %16 : vector<1x32xf32> to vector<2x32xf32>
    %127 = arith.addf %125, %126 : vector<2x32xf32>
    %cst_94 = arith.constant dense<0.000000e+00> : vector<2x32xf32>
    %128 = tpu.matmul %77, %6, %cst_94 {dimension_numbers = #tpu.dot_dimension_numbers<[1], [0], [0], [1], [0, 0, 1, 1], [], []>} : vector<2x32xf32>, vector<32x32xf32>, vector<2x32xf32> -> vector<2x32xf32>
    %129 = vector.broadcast %18 : vector<1x32xf32> to vector<2x32xf32>
    %130 = arith.addf %128, %129 : vector<2x32xf32>
    %cst_95 = arith.constant dense<0.000000e+00> : vector<2x32xf32>
    %131 = tpu.matmul %77, %8, %cst_95 {dimension_numbers = #tpu.dot_dimension_numbers<[1], [0], [0], [1], [0, 0, 1, 1], [], []>} : vector<2x32xf32>, vector<32x32xf32>, vector<2x32xf32> -> vector<2x32xf32>
    %132 = vector.broadcast %20 : vector<1x32xf32> to vector<2x32xf32>
    %133 = arith.addf %131, %132 : vector<2x32xf32>
    %134 = arith.addf %120, %127 : vector<2x32xf32>
    %135 = arith.negf %134 : vector<2x32xf32>
    %136 = math.exp %135 : vector<2x32xf32>
    %cst_96 = arith.constant 1.000000e+00 : f32
    %137 = vector.broadcast %cst_96 : f32 to vector<2x32xf32>
    %138 = arith.addf %137, %136 : vector<2x32xf32>
    %139 = arith.divf %137, %138 : vector<2x32xf32>
    %140 = arith.addf %122, %130 : vector<2x32xf32>
    %141 = arith.negf %140 : vector<2x32xf32>
    %142 = math.exp %141 : vector<2x32xf32>
    %cst_97 = arith.constant 1.000000e+00 : f32
    %143 = vector.broadcast %cst_97 : f32 to vector<2x32xf32>
    %144 = arith.addf %143, %142 : vector<2x32xf32>
    %145 = arith.divf %143, %144 : vector<2x32xf32>
    %146 = arith.mulf %139, %133 : vector<2x32xf32>
    %147 = arith.addf %124, %146 : vector<2x32xf32>
    %148 = math.tanh %147 : vector<2x32xf32>
    %cst_98 = arith.constant 1.000000e+00 : f32
    %149 = vector.broadcast %cst_98 : f32 to vector<2x32xf32>
    %150 = arith.subf %149, %145 : vector<2x32xf32>
    %151 = arith.mulf %150, %148 : vector<2x32xf32>
    %152 = arith.mulf %145, %77 : vector<2x32xf32>
    %153 = arith.addf %151, %152 : vector<2x32xf32>
    %cst_99 = arith.constant dense<0.000000e+00> : vector<2x32xf32>
    %154 = tpu.matmul %153, %28, %cst_99 {dimension_numbers = #tpu.dot_dimension_numbers<[1], [0], [0], [1], [0, 0, 1, 1], [], []>} : vector<2x32xf32>, vector<32x32xf32>, vector<2x32xf32> -> vector<2x32xf32>
    %155 = vector.broadcast %34 : vector<1x32xf32> to vector<2x32xf32>
    %156 = arith.addf %154, %155 : vector<2x32xf32>
    %cst_100 = arith.constant dense<0.000000e+00> : vector<2x32xf32>
    %157 = tpu.matmul %153, %30, %cst_100 {dimension_numbers = #tpu.dot_dimension_numbers<[1], [0], [0], [1], [0, 0, 1, 1], [], []>} : vector<2x32xf32>, vector<32x32xf32>, vector<2x32xf32> -> vector<2x32xf32>
    %158 = vector.broadcast %36 : vector<1x32xf32> to vector<2x32xf32>
    %159 = arith.addf %157, %158 : vector<2x32xf32>
    %cst_101 = arith.constant dense<0.000000e+00> : vector<2x32xf32>
    %160 = tpu.matmul %153, %32, %cst_101 {dimension_numbers = #tpu.dot_dimension_numbers<[1], [0], [0], [1], [0, 0, 1, 1], [], []>} : vector<2x32xf32>, vector<32x32xf32>, vector<2x32xf32> -> vector<2x32xf32>
    %161 = vector.broadcast %38 : vector<1x32xf32> to vector<2x32xf32>
    %162 = arith.addf %160, %161 : vector<2x32xf32>
    %cst_102 = arith.constant dense<0.000000e+00> : vector<2x32xf32>
    %163 = tpu.matmul %115, %10, %cst_102 {dimension_numbers = #tpu.dot_dimension_numbers<[1], [0], [0], [1], [0, 0, 1, 1], [], []>} : vector<2x32xf32>, vector<32x32xf32>, vector<2x32xf32> -> vector<2x32xf32>
    %164 = vector.broadcast %22 : vector<1x32xf32> to vector<2x32xf32>
    %165 = arith.addf %163, %164 : vector<2x32xf32>
    %cst_103 = arith.constant dense<0.000000e+00> : vector<2x32xf32>
    %166 = tpu.matmul %115, %12, %cst_103 {dimension_numbers = #tpu.dot_dimension_numbers<[1], [0], [0], [1], [0, 0, 1, 1], [], []>} : vector<2x32xf32>, vector<32x32xf32>, vector<2x32xf32> -> vector<2x32xf32>
    %167 = vector.broadcast %24 : vector<1x32xf32> to vector<2x32xf32>
    %168 = arith.addf %166, %167 : vector<2x32xf32>
    %cst_104 = arith.constant dense<0.000000e+00> : vector<2x32xf32>
    %169 = tpu.matmul %115, %14, %cst_104 {dimension_numbers = #tpu.dot_dimension_numbers<[1], [0], [0], [1], [0, 0, 1, 1], [], []>} : vector<2x32xf32>, vector<32x32xf32>, vector<2x32xf32> -> vector<2x32xf32>
    %170 = vector.broadcast %26 : vector<1x32xf32> to vector<2x32xf32>
    %171 = arith.addf %169, %170 : vector<2x32xf32>
    %172 = arith.addf %156, %165 : vector<2x32xf32>
    %173 = arith.negf %172 : vector<2x32xf32>
    %174 = math.exp %173 : vector<2x32xf32>
    %cst_105 = arith.constant 1.000000e+00 : f32
    %175 = vector.broadcast %cst_105 : f32 to vector<2x32xf32>
    %176 = arith.addf %175, %174 : vector<2x32xf32>
    %177 = arith.divf %175, %176 : vector<2x32xf32>
    %178 = arith.addf %159, %168 : vector<2x32xf32>
    %179 = arith.negf %178 : vector<2x32xf32>
    %180 = math.exp %179 : vector<2x32xf32>
    %cst_106 = arith.constant 1.000000e+00 : f32
    %181 = vector.broadcast %cst_106 : f32 to vector<2x32xf32>
    %182 = arith.addf %181, %180 : vector<2x32xf32>
    %183 = arith.divf %181, %182 : vector<2x32xf32>
    %184 = arith.mulf %177, %171 : vector<2x32xf32>
    %185 = arith.addf %162, %184 : vector<2x32xf32>
    %186 = math.tanh %185 : vector<2x32xf32>
    %cst_107 = arith.constant 1.000000e+00 : f32
    %187 = vector.broadcast %cst_107 : f32 to vector<2x32xf32>
    %188 = arith.subf %187, %183 : vector<2x32xf32>
    %189 = arith.mulf %188, %186 : vector<2x32xf32>
    %190 = arith.mulf %183, %115 : vector<2x32xf32>
    %191 = arith.addf %189, %190 : vector<2x32xf32>
    %c0_108 = arith.constant 0 : index
    %c1_109 = arith.constant 1 : index
    %c0_110 = arith.constant 0 : index
    %192 = vector.load %arg12[%c0_108, %c1_109, %c0_110] : memref<2x8x32xf32, #tpu.memory_space<vmem>>, vector<2x1x32xf32>
    %193 = vector.shape_cast %192 : vector<2x1x32xf32> to vector<2x32xf32>
    %194 = vector.shape_cast %191 : vector<2x32xf32> to vector<2x1x32xf32>
    tpu.vector_store %arg12[%c0_108, %c1_109, %c0_110], %194 {strides = array<i32>} : memref<2x8x32xf32, #tpu.memory_space<vmem>>, vector<2x1x32xf32>,
    %c0_111 = arith.constant 0 : index
    %c2_112 = arith.constant 2 : index
    %c0_113 = arith.constant 0 : index
    %195 = vector.load %arg2[%c0_111, %c2_112, %c0_113] : memref<2x8x32xf32, #tpu.memory_space<vmem>>, vector<2x1x32xf32>
    %196 = vector.shape_cast %195 : vector<2x1x32xf32> to vector<2x32xf32>
    %c0_114 = arith.constant 0 : index
    %c2_115 = arith.constant 2 : index
    %c0_116 = arith.constant 0 : index
    %197 = vector.load %arg3[%c0_114, %c2_115, %c0_116] : memref<2x8x32xf32, #tpu.memory_space<vmem>>, vector<2x1x32xf32>
    %198 = vector.shape_cast %197 : vector<2x1x32xf32> to vector<2x32xf32>
    %c0_117 = arith.constant 0 : index
    %c2_118 = arith.constant 2 : index
    %c0_119 = arith.constant 0 : index
    %199 = vector.load %arg4[%c0_117, %c2_118, %c0_119] : memref<2x8x32xf32, #tpu.memory_space<vmem>>, vector<2x1x32xf32>
    %200 = vector.shape_cast %199 : vector<2x1x32xf32> to vector<2x32xf32>
    %cst_120 = arith.constant dense<0.000000e+00> : vector<2x32xf32>
    %201 = tpu.matmul %153, %4, %cst_120 {dimension_numbers = #tpu.dot_dimension_numbers<[1], [0], [0], [1], [0, 0, 1, 1], [], []>} : vector<2x32xf32>, vector<32x32xf32>, vector<2x32xf32> -> vector<2x32xf32>
    %202 = vector.broadcast %16 : vector<1x32xf32> to vector<2x32xf32>
    %203 = arith.addf %201, %202 : vector<2x32xf32>
    %cst_121 = arith.constant dense<0.000000e+00> : vector<2x32xf32>
    %204 = tpu.matmul %153, %6, %cst_121 {dimension_numbers = #tpu.dot_dimension_numbers<[1], [0], [0], [1], [0, 0, 1, 1], [], []>} : vector<2x32xf32>, vector<32x32xf32>, vector<2x32xf32> -> vector<2x32xf32>
    %205 = vector.broadcast %18 : vector<1x32xf32> to vector<2x32xf32>
    %206 = arith.addf %204, %205 : vector<2x32xf32>
    %cst_122 = arith.constant dense<0.000000e+00> : vector<2x32xf32>
    %207 = tpu.matmul %153, %8, %cst_122 {dimension_numbers = #tpu.dot_dimension_numbers<[1], [0], [0], [1], [0, 0, 1, 1], [], []>} : vector<2x32xf32>, vector<32x32xf32>, vector<2x32xf32> -> vector<2x32xf32>
    %208 = vector.broadcast %20 : vector<1x32xf32> to vector<2x32xf32>
    %209 = arith.addf %207, %208 : vector<2x32xf32>
    %210 = arith.addf %196, %203 : vector<2x32xf32>
    %211 = arith.negf %210 : vector<2x32xf32>
    %212 = math.exp %211 : vector<2x32xf32>
    %cst_123 = arith.constant 1.000000e+00 : f32
    %213 = vector.broadcast %cst_123 : f32 to vector<2x32xf32>
    %214 = arith.addf %213, %212 : vector<2x32xf32>
    %215 = arith.divf %213, %214 : vector<2x32xf32>
    %216 = arith.addf %198, %206 : vector<2x32xf32>
    %217 = arith.negf %216 : vector<2x32xf32>
    %218 = math.exp %217 : vector<2x32xf32>
    %cst_124 = arith.constant 1.000000e+00 : f32
    %219 = vector.broadcast %cst_124 : f32 to vector<2x32xf32>
    %220 = arith.addf %219, %218 : vector<2x32xf32>
    %221 = arith.divf %219, %220 : vector<2x32xf32>
    %222 = arith.mulf %215, %209 : vector<2x32xf32>
    %223 = arith.addf %200, %222 : vector<2x32xf32>
    %224 = math.tanh %223 : vector<2x32xf32>
    %cst_125 = arith.constant 1.000000e+00 : f32
    %225 = vector.broadcast %cst_125 : f32 to vector<2x32xf32>
    %226 = arith.subf %225, %221 : vector<2x32xf32>
    %227 = arith.mulf %226, %224 : vector<2x32xf32>
    %228 = arith.mulf %221, %153 : vector<2x32xf32>
    %229 = arith.addf %227, %228 : vector<2x32xf32>
    %cst_126 = arith.constant dense<0.000000e+00> : vector<2x32xf32>
    %230 = tpu.matmul %229, %28, %cst_126 {dimension_numbers = #tpu.dot_dimension_numbers<[1], [0], [0], [1], [0, 0, 1, 1], [], []>} : vector<2x32xf32>, vector<32x32xf32>, vector<2x32xf32> -> vector<2x32xf32>
    %231 = vector.broadcast %34 : vector<1x32xf32> to vector<2x32xf32>
    %232 = arith.addf %230, %231 : vector<2x32xf32>
    %cst_127 = arith.constant dense<0.000000e+00> : vector<2x32xf32>
    %233 = tpu.matmul %229, %30, %cst_127 {dimension_numbers = #tpu.dot_dimension_numbers<[1], [0], [0], [1], [0, 0, 1, 1], [], []>} : vector<2x32xf32>, vector<32x32xf32>, vector<2x32xf32> -> vector<2x32xf32>
    %234 = vector.broadcast %36 : vector<1x32xf32> to vector<2x32xf32>
    %235 = arith.addf %233, %234 : vector<2x32xf32>
    %cst_128 = arith.constant dense<0.000000e+00> : vector<2x32xf32>
    %236 = tpu.matmul %229, %32, %cst_128 {dimension_numbers = #tpu.dot_dimension_numbers<[1], [0], [0], [1], [0, 0, 1, 1], [], []>} : vector<2x32xf32>, vector<32x32xf32>, vector<2x32xf32> -> vector<2x32xf32>
    %237 = vector.broadcast %38 : vector<1x32xf32> to vector<2x32xf32>
    %238 = arith.addf %236, %237 : vector<2x32xf32>
    %cst_129 = arith.constant dense<0.000000e+00> : vector<2x32xf32>
    %239 = tpu.matmul %191, %10, %cst_129 {dimension_numbers = #tpu.dot_dimension_numbers<[1], [0], [0], [1], [0, 0, 1, 1], [], []>} : vector<2x32xf32>, vector<32x32xf32>, vector<2x32xf32> -> vector<2x32xf32>
    %240 = vector.broadcast %22 : vector<1x32xf32> to vector<2x32xf32>
    %241 = arith.addf %239, %240 : vector<2x32xf32>
    %cst_130 = arith.constant dense<0.000000e+00> : vector<2x32xf32>
    %242 = tpu.matmul %191, %12, %cst_130 {dimension_numbers = #tpu.dot_dimension_numbers<[1], [0], [0], [1], [0, 0, 1, 1], [], []>} : vector<2x32xf32>, vector<32x32xf32>, vector<2x32xf32> -> vector<2x32xf32>
    %243 = vector.broadcast %24 : vector<1x32xf32> to vector<2x32xf32>
    %244 = arith.addf %242, %243 : vector<2x32xf32>
    %cst_131 = arith.constant dense<0.000000e+00> : vector<2x32xf32>
    %245 = tpu.matmul %191, %14, %cst_131 {dimension_numbers = #tpu.dot_dimension_numbers<[1], [0], [0], [1], [0, 0, 1, 1], [], []>} : vector<2x32xf32>, vector<32x32xf32>, vector<2x32xf32> -> vector<2x32xf32>
    %246 = vector.broadcast %26 : vector<1x32xf32> to vector<2x32xf32>
    %247 = arith.addf %245, %246 : vector<2x32xf32>
    %248 = arith.addf %232, %241 : vector<2x32xf32>
    %249 = arith.negf %248 : vector<2x32xf32>
    %250 = math.exp %249 : vector<2x32xf32>
    %cst_132 = arith.constant 1.000000e+00 : f32
    %251 = vector.broadcast %cst_132 : f32 to vector<2x32xf32>
    %252 = arith.addf %251, %250 : vector<2x32xf32>
    %253 = arith.divf %251, %252 : vector<2x32xf32>
    %254 = arith.addf %235, %244 : vector<2x32xf32>
    %255 = arith.negf %254 : vector<2x32xf32>
    %256 = math.exp %255 : vector<2x32xf32>
    %cst_133 = arith.constant 1.000000e+00 : f32
    %257 = vector.broadcast %cst_133 : f32 to vector<2x32xf32>
    %258 = arith.addf %257, %256 : vector<2x32xf32>
    %259 = arith.divf %257, %258 : vector<2x32xf32>
    %260 = arith.mulf %253, %247 : vector<2x32xf32>
    %261 = arith.addf %238, %260 : vector<2x32xf32>
    %262 = math.tanh %261 : vector<2x32xf32>
    %cst_134 = arith.constant 1.000000e+00 : f32
    %263 = vector.broadcast %cst_134 : f32 to vector<2x32xf32>
    %264 = arith.subf %263, %259 : vector<2x32xf32>
    %265 = arith.mulf %264, %262 : vector<2x32xf32>
    %266 = arith.mulf %259, %191 : vector<2x32xf32>
    %267 = arith.addf %265, %266 : vector<2x32xf32>
    %c0_135 = arith.constant 0 : index
    %c2_136 = arith.constant 2 : index
    %c0_137 = arith.constant 0 : index
    %268 = vector.load %arg12[%c0_135, %c2_136, %c0_137] : memref<2x8x32xf32, #tpu.memory_space<vmem>>, vector<2x1x32xf32>
    %269 = vector.shape_cast %268 : vector<2x1x32xf32> to vector<2x32xf32>
    %270 = vector.shape_cast %267 : vector<2x32xf32> to vector<2x1x32xf32>
    tpu.vector_store %arg12[%c0_135, %c2_136, %c0_137], %270 {strides = array<i32>} : memref<2x8x32xf32, #tpu.memory_space<vmem>>, vector<2x1x32xf32>,
    %c0_138 = arith.constant 0 : index
    %c3 = arith.constant 3 : index
    %c0_139 = arith.constant 0 : index
    %271 = vector.load %arg2[%c0_138, %c3, %c0_139] : memref<2x8x32xf32, #tpu.memory_space<vmem>>, vector<2x1x32xf32>
    %272 = vector.shape_cast %271 : vector<2x1x32xf32> to vector<2x32xf32>
    %c0_140 = arith.constant 0 : index
    %c3_141 = arith.constant 3 : index
    %c0_142 = arith.constant 0 : index
    %273 = vector.load %arg3[%c0_140, %c3_141, %c0_142] : memref<2x8x32xf32, #tpu.memory_space<vmem>>, vector<2x1x32xf32>
    %274 = vector.shape_cast %273 : vector<2x1x32xf32> to vector<2x32xf32>
    %c0_143 = arith.constant 0 : index
    %c3_144 = arith.constant 3 : index
    %c0_145 = arith.constant 0 : index
    %275 = vector.load %arg4[%c0_143, %c3_144, %c0_145] : memref<2x8x32xf32, #tpu.memory_space<vmem>>, vector<2x1x32xf32>
    %276 = vector.shape_cast %275 : vector<2x1x32xf32> to vector<2x32xf32>
    %cst_146 = arith.constant dense<0.000000e+00> : vector<2x32xf32>
    %277 = tpu.matmul %229, %4, %cst_146 {dimension_numbers = #tpu.dot_dimension_numbers<[1], [0], [0], [1], [0, 0, 1, 1], [], []>} : vector<2x32xf32>, vector<32x32xf32>, vector<2x32xf32> -> vector<2x32xf32>
    %278 = vector.broadcast %16 : vector<1x32xf32> to vector<2x32xf32>
    %279 = arith.addf %277, %278 : vector<2x32xf32>
    %cst_147 = arith.constant dense<0.000000e+00> : vector<2x32xf32>
    %280 = tpu.matmul %229, %6, %cst_147 {dimension_numbers = #tpu.dot_dimension_numbers<[1], [0], [0], [1], [0, 0, 1, 1], [], []>} : vector<2x32xf32>, vector<32x32xf32>, vector<2x32xf32> -> vector<2x32xf32>
    %281 = vector.broadcast %18 : vector<1x32xf32> to vector<2x32xf32>
    %282 = arith.addf %280, %281 : vector<2x32xf32>
    %cst_148 = arith.constant dense<0.000000e+00> : vector<2x32xf32>
    %283 = tpu.matmul %229, %8, %cst_148 {dimension_numbers = #tpu.dot_dimension_numbers<[1], [0], [0], [1], [0, 0, 1, 1], [], []>} : vector<2x32xf32>, vector<32x32xf32>, vector<2x32xf32> -> vector<2x32xf32>
    %284 = vector.broadcast %20 : vector<1x32xf32> to vector<2x32xf32>
    %285 = arith.addf %283, %284 : vector<2x32xf32>
    %286 = arith.addf %272, %279 : vector<2x32xf32>
    %287 = arith.negf %286 : vector<2x32xf32>
    %288 = math.exp %287 : vector<2x32xf32>
    %cst_149 = arith.constant 1.000000e+00 : f32
    %289 = vector.broadcast %cst_149 : f32 to vector<2x32xf32>
    %290 = arith.addf %289, %288 : vector<2x32xf32>
    %291 = arith.divf %289, %290 : vector<2x32xf32>
    %292 = arith.addf %274, %282 : vector<2x32xf32>
    %293 = arith.negf %292 : vector<2x32xf32>
    %294 = math.exp %293 : vector<2x32xf32>
    %cst_150 = arith.constant 1.000000e+00 : f32
    %295 = vector.broadcast %cst_150 : f32 to vector<2x32xf32>
    %296 = arith.addf %295, %294 : vector<2x32xf32>
    %297 = arith.divf %295, %296 : vector<2x32xf32>
    %298 = arith.mulf %291, %285 : vector<2x32xf32>
    %299 = arith.addf %276, %298 : vector<2x32xf32>
    %300 = math.tanh %299 : vector<2x32xf32>
    %cst_151 = arith.constant 1.000000e+00 : f32
    %301 = vector.broadcast %cst_151 : f32 to vector<2x32xf32>
    %302 = arith.subf %301, %297 : vector<2x32xf32>
    %303 = arith.mulf %302, %300 : vector<2x32xf32>
    %304 = arith.mulf %297, %229 : vector<2x32xf32>
    %305 = arith.addf %303, %304 : vector<2x32xf32>
    %cst_152 = arith.constant dense<0.000000e+00> : vector<2x32xf32>
    %306 = tpu.matmul %305, %28, %cst_152 {dimension_numbers = #tpu.dot_dimension_numbers<[1], [0], [0], [1], [0, 0, 1, 1], [], []>} : vector<2x32xf32>, vector<32x32xf32>, vector<2x32xf32> -> vector<2x32xf32>
    %307 = vector.broadcast %34 : vector<1x32xf32> to vector<2x32xf32>
    %308 = arith.addf %306, %307 : vector<2x32xf32>
    %cst_153 = arith.constant dense<0.000000e+00> : vector<2x32xf32>
    %309 = tpu.matmul %305, %30, %cst_153 {dimension_numbers = #tpu.dot_dimension_numbers<[1], [0], [0], [1], [0, 0, 1, 1], [], []>} : vector<2x32xf32>, vector<32x32xf32>, vector<2x32xf32> -> vector<2x32xf32>
    %310 = vector.broadcast %36 : vector<1x32xf32> to vector<2x32xf32>
    %311 = arith.addf %309, %310 : vector<2x32xf32>
    %cst_154 = arith.constant dense<0.000000e+00> : vector<2x32xf32>
    %312 = tpu.matmul %305, %32, %cst_154 {dimension_numbers = #tpu.dot_dimension_numbers<[1], [0], [0], [1], [0, 0, 1, 1], [], []>} : vector<2x32xf32>, vector<32x32xf32>, vector<2x32xf32> -> vector<2x32xf32>
    %313 = vector.broadcast %38 : vector<1x32xf32> to vector<2x32xf32>
    %314 = arith.addf %312, %313 : vector<2x32xf32>
    %cst_155 = arith.constant dense<0.000000e+00> : vector<2x32xf32>
    %315 = tpu.matmul %267, %10, %cst_155 {dimension_numbers = #tpu.dot_dimension_numbers<[1], [0], [0], [1], [0, 0, 1, 1], [], []>} : vector<2x32xf32>, vector<32x32xf32>, vector<2x32xf32> -> vector<2x32xf32>
    %316 = vector.broadcast %22 : vector<1x32xf32> to vector<2x32xf32>
    %317 = arith.addf %315, %316 : vector<2x32xf32>
    %cst_156 = arith.constant dense<0.000000e+00> : vector<2x32xf32>
    %318 = tpu.matmul %267, %12, %cst_156 {dimension_numbers = #tpu.dot_dimension_numbers<[1], [0], [0], [1], [0, 0, 1, 1], [], []>} : vector<2x32xf32>, vector<32x32xf32>, vector<2x32xf32> -> vector<2x32xf32>
    %319 = vector.broadcast %24 : vector<1x32xf32> to vector<2x32xf32>
    %320 = arith.addf %318, %319 : vector<2x32xf32>
    %cst_157 = arith.constant dense<0.000000e+00> : vector<2x32xf32>
    %321 = tpu.matmul %267, %14, %cst_157 {dimension_numbers = #tpu.dot_dimension_numbers<[1], [0], [0], [1], [0, 0, 1, 1], [], []>} : vector<2x32xf32>, vector<32x32xf32>, vector<2x32xf32> -> vector<2x32xf32>
    %322 = vector.broadcast %26 : vector<1x32xf32> to vector<2x32xf32>
    %323 = arith.addf %321, %322 : vector<2x32xf32>
    %324 = arith.addf %308, %317 : vector<2x32xf32>
    %325 = arith.negf %324 : vector<2x32xf32>
    %326 = math.exp %325 : vector<2x32xf32>
    %cst_158 = arith.constant 1.000000e+00 : f32
    %327 = vector.broadcast %cst_158 : f32 to vector<2x32xf32>
    %328 = arith.addf %327, %326 : vector<2x32xf32>
    %329 = arith.divf %327, %328 : vector<2x32xf32>
    %330 = arith.addf %311, %320 : vector<2x32xf32>
    %331 = arith.negf %330 : vector<2x32xf32>
    %332 = math.exp %331 : vector<2x32xf32>
    %cst_159 = arith.constant 1.000000e+00 : f32
    %333 = vector.broadcast %cst_159 : f32 to vector<2x32xf32>
    %334 = arith.addf %333, %332 : vector<2x32xf32>
    %335 = arith.divf %333, %334 : vector<2x32xf32>
    %336 = arith.mulf %329, %323 : vector<2x32xf32>
    %337 = arith.addf %314, %336 : vector<2x32xf32>
    %338 = math.tanh %337 : vector<2x32xf32>
    %cst_160 = arith.constant 1.000000e+00 : f32
    %339 = vector.broadcast %cst_160 : f32 to vector<2x32xf32>
    %340 = arith.subf %339, %335 : vector<2x32xf32>
    %341 = arith.mulf %340, %338 : vector<2x32xf32>
    %342 = arith.mulf %335, %267 : vector<2x32xf32>
    %343 = arith.addf %341, %342 : vector<2x32xf32>
    %c0_161 = arith.constant 0 : index
    %c3_162 = arith.constant 3 : index
    %c0_163 = arith.constant 0 : index
    %344 = vector.load %arg12[%c0_161, %c3_162, %c0_163] : memref<2x8x32xf32, #tpu.memory_space<vmem>>, vector<2x1x32xf32>
    %345 = vector.shape_cast %344 : vector<2x1x32xf32> to vector<2x32xf32>
    %346 = vector.shape_cast %343 : vector<2x32xf32> to vector<2x1x32xf32>
    tpu.vector_store %arg12[%c0_161, %c3_162, %c0_163], %346 {strides = array<i32>} : memref<2x8x32xf32, #tpu.memory_space<vmem>>, vector<2x1x32xf32>,
    %c0_164 = arith.constant 0 : index
    %c4 = arith.constant 4 : index
    %c0_165 = arith.constant 0 : index
    %347 = vector.load %arg2[%c0_164, %c4, %c0_165] : memref<2x8x32xf32, #tpu.memory_space<vmem>>, vector<2x1x32xf32>
    %348 = vector.shape_cast %347 : vector<2x1x32xf32> to vector<2x32xf32>
    %c0_166 = arith.constant 0 : index
    %c4_167 = arith.constant 4 : index
    %c0_168 = arith.constant 0 : index
    %349 = vector.load %arg3[%c0_166, %c4_167, %c0_168] : memref<2x8x32xf32, #tpu.memory_space<vmem>>, vector<2x1x32xf32>
    %350 = vector.shape_cast %349 : vector<2x1x32xf32> to vector<2x32xf32>
    %c0_169 = arith.constant 0 : index
    %c4_170 = arith.constant 4 : index
    %c0_171 = arith.constant 0 : index
    %351 = vector.load %arg4[%c0_169, %c4_170, %c0_171] : memref<2x8x32xf32, #tpu.memory_space<vmem>>, vector<2x1x32xf32>
    %352 = vector.shape_cast %351 : vector<2x1x32xf32> to vector<2x32xf32>
    %cst_172 = arith.constant dense<0.000000e+00> : vector<2x32xf32>
    %353 = tpu.matmul %305, %4, %cst_172 {dimension_numbers = #tpu.dot_dimension_numbers<[1], [0], [0], [1], [0, 0, 1, 1], [], []>} : vector<2x32xf32>, vector<32x32xf32>, vector<2x32xf32> -> vector<2x32xf32>
    %354 = vector.broadcast %16 : vector<1x32xf32> to vector<2x32xf32>
    %355 = arith.addf %353, %354 : vector<2x32xf32>
    %cst_173 = arith.constant dense<0.000000e+00> : vector<2x32xf32>
    %356 = tpu.matmul %305, %6, %cst_173 {dimension_numbers = #tpu.dot_dimension_numbers<[1], [0], [0], [1], [0, 0, 1, 1], [], []>} : vector<2x32xf32>, vector<32x32xf32>, vector<2x32xf32> -> vector<2x32xf32>
    %357 = vector.broadcast %18 : vector<1x32xf32> to vector<2x32xf32>
    %358 = arith.addf %356, %357 : vector<2x32xf32>
    %cst_174 = arith.constant dense<0.000000e+00> : vector<2x32xf32>
    %359 = tpu.matmul %305, %8, %cst_174 {dimension_numbers = #tpu.dot_dimension_numbers<[1], [0], [0], [1], [0, 0, 1, 1], [], []>} : vector<2x32xf32>, vector<32x32xf32>, vector<2x32xf32> -> vector<2x32xf32>
    %360 = vector.broadcast %20 : vector<1x32xf32> to vector<2x32xf32>
    %361 = arith.addf %359, %360 : vector<2x32xf32>
    %362 = arith.addf %348, %355 : vector<2x32xf32>
    %363 = arith.negf %362 : vector<2x32xf32>
    %364 = math.exp %363 : vector<2x32xf32>
    %cst_175 = arith.constant 1.000000e+00 : f32
    %365 = vector.broadcast %cst_175 : f32 to vector<2x32xf32>
    %366 = arith.addf %365, %364 : vector<2x32xf32>
    %367 = arith.divf %365, %366 : vector<2x32xf32>
    %368 = arith.addf %350, %358 : vector<2x32xf32>
    %369 = arith.negf %368 : vector<2x32xf32>
    %370 = math.exp %369 : vector<2x32xf32>
    %cst_176 = arith.constant 1.000000e+00 : f32
    %371 = vector.broadcast %cst_176 : f32 to vector<2x32xf32>
    %372 = arith.addf %371, %370 : vector<2x32xf32>
    %373 = arith.divf %371, %372 : vector<2x32xf32>
    %374 = arith.mulf %367, %361 : vector<2x32xf32>
    %375 = arith.addf %352, %374 : vector<2x32xf32>
    %376 = math.tanh %375 : vector<2x32xf32>
    %cst_177 = arith.constant 1.000000e+00 : f32
    %377 = vector.broadcast %cst_177 : f32 to vector<2x32xf32>
    %378 = arith.subf %377, %373 : vector<2x32xf32>
    %379 = arith.mulf %378, %376 : vector<2x32xf32>
    %380 = arith.mulf %373, %305 : vector<2x32xf32>
    %381 = arith.addf %379, %380 : vector<2x32xf32>
    %cst_178 = arith.constant dense<0.000000e+00> : vector<2x32xf32>
    %382 = tpu.matmul %381, %28, %cst_178 {dimension_numbers = #tpu.dot_dimension_numbers<[1], [0], [0], [1], [0, 0, 1, 1], [], []>} : vector<2x32xf32>, vector<32x32xf32>, vector<2x32xf32> -> vector<2x32xf32>
    %383 = vector.broadcast %34 : vector<1x32xf32> to vector<2x32xf32>
    %384 = arith.addf %382, %383 : vector<2x32xf32>
    %cst_179 = arith.constant dense<0.000000e+00> : vector<2x32xf32>
    %385 = tpu.matmul %381, %30, %cst_179 {dimension_numbers = #tpu.dot_dimension_numbers<[1], [0], [0], [1], [0, 0, 1, 1], [], []>} : vector<2x32xf32>, vector<32x32xf32>, vector<2x32xf32> -> vector<2x32xf32>
    %386 = vector.broadcast %36 : vector<1x32xf32> to vector<2x32xf32>
    %387 = arith.addf %385, %386 : vector<2x32xf32>
    %cst_180 = arith.constant dense<0.000000e+00> : vector<2x32xf32>
    %388 = tpu.matmul %381, %32, %cst_180 {dimension_numbers = #tpu.dot_dimension_numbers<[1], [0], [0], [1], [0, 0, 1, 1], [], []>} : vector<2x32xf32>, vector<32x32xf32>, vector<2x32xf32> -> vector<2x32xf32>
    %389 = vector.broadcast %38 : vector<1x32xf32> to vector<2x32xf32>
    %390 = arith.addf %388, %389 : vector<2x32xf32>
    %cst_181 = arith.constant dense<0.000000e+00> : vector<2x32xf32>
    %391 = tpu.matmul %343, %10, %cst_181 {dimension_numbers = #tpu.dot_dimension_numbers<[1], [0], [0], [1], [0, 0, 1, 1], [], []>} : vector<2x32xf32>, vector<32x32xf32>, vector<2x32xf32> -> vector<2x32xf32>
    %392 = vector.broadcast %22 : vector<1x32xf32> to vector<2x32xf32>
    %393 = arith.addf %391, %392 : vector<2x32xf32>
    %cst_182 = arith.constant dense<0.000000e+00> : vector<2x32xf32>
    %394 = tpu.matmul %343, %12, %cst_182 {dimension_numbers = #tpu.dot_dimension_numbers<[1], [0], [0], [1], [0, 0, 1, 1], [], []>} : vector<2x32xf32>, vector<32x32xf32>, vector<2x32xf32> -> vector<2x32xf32>
    %395 = vector.broadcast %24 : vector<1x32xf32> to vector<2x32xf32>
    %396 = arith.addf %394, %395 : vector<2x32xf32>
    %cst_183 = arith.constant dense<0.000000e+00> : vector<2x32xf32>
    %397 = tpu.matmul %343, %14, %cst_183 {dimension_numbers = #tpu.dot_dimension_numbers<[1], [0], [0], [1], [0, 0, 1, 1], [], []>} : vector<2x32xf32>, vector<32x32xf32>, vector<2x32xf32> -> vector<2x32xf32>
    %398 = vector.broadcast %26 : vector<1x32xf32> to vector<2x32xf32>
    %399 = arith.addf %397, %398 : vector<2x32xf32>
    %400 = arith.addf %384, %393 : vector<2x32xf32>
    %401 = arith.negf %400 : vector<2x32xf32>
    %402 = math.exp %401 : vector<2x32xf32>
    %cst_184 = arith.constant 1.000000e+00 : f32
    %403 = vector.broadcast %cst_184 : f32 to vector<2x32xf32>
    %404 = arith.addf %403, %402 : vector<2x32xf32>
    %405 = arith.divf %403, %404 : vector<2x32xf32>
    %406 = arith.addf %387, %396 : vector<2x32xf32>
    %407 = arith.negf %406 : vector<2x32xf32>
    %408 = math.exp %407 : vector<2x32xf32>
    %cst_185 = arith.constant 1.000000e+00 : f32
    %409 = vector.broadcast %cst_185 : f32 to vector<2x32xf32>
    %410 = arith.addf %409, %408 : vector<2x32xf32>
    %411 = arith.divf %409, %410 : vector<2x32xf32>
    %412 = arith.mulf %405, %399 : vector<2x32xf32>
    %413 = arith.addf %390, %412 : vector<2x32xf32>
    %414 = math.tanh %413 : vector<2x32xf32>
    %cst_186 = arith.constant 1.000000e+00 : f32
    %415 = vector.broadcast %cst_186 : f32 to vector<2x32xf32>
    %416 = arith.subf %415, %411 : vector<2x32xf32>
    %417 = arith.mulf %416, %414 : vector<2x32xf32>
    %418 = arith.mulf %411, %343 : vector<2x32xf32>
    %419 = arith.addf %417, %418 : vector<2x32xf32>
    %c0_187 = arith.constant 0 : index
    %c4_188 = arith.constant 4 : index
    %c0_189 = arith.constant 0 : index
    %420 = vector.load %arg12[%c0_187, %c4_188, %c0_189] : memref<2x8x32xf32, #tpu.memory_space<vmem>>, vector<2x1x32xf32>
    %421 = vector.shape_cast %420 : vector<2x1x32xf32> to vector<2x32xf32>
    %422 = vector.shape_cast %419 : vector<2x32xf32> to vector<2x1x32xf32>
    tpu.vector_store %arg12[%c0_187, %c4_188, %c0_189], %422 {strides = array<i32>} : memref<2x8x32xf32, #tpu.memory_space<vmem>>, vector<2x1x32xf32>,
    %c0_190 = arith.constant 0 : index
    %c5 = arith.constant 5 : index
    %c0_191 = arith.constant 0 : index
    %423 = vector.load %arg2[%c0_190, %c5, %c0_191] : memref<2x8x32xf32, #tpu.memory_space<vmem>>, vector<2x1x32xf32>
    %424 = vector.shape_cast %423 : vector<2x1x32xf32> to vector<2x32xf32>
    %c0_192 = arith.constant 0 : index
    %c5_193 = arith.constant 5 : index
    %c0_194 = arith.constant 0 : index
    %425 = vector.load %arg3[%c0_192, %c5_193, %c0_194] : memref<2x8x32xf32, #tpu.memory_space<vmem>>, vector<2x1x32xf32>
    %426 = vector.shape_cast %425 : vector<2x1x32xf32> to vector<2x32xf32>
    %c0_195 = arith.constant 0 : index
    %c5_196 = arith.constant 5 : index
    %c0_197 = arith.constant 0 : index
    %427 = vector.load %arg4[%c0_195, %c5_196, %c0_197] : memref<2x8x32xf32, #tpu.memory_space<vmem>>, vector<2x1x32xf32>
    %428 = vector.shape_cast %427 : vector<2x1x32xf32> to vector<2x32xf32>
    %cst_198 = arith.constant dense<0.000000e+00> : vector<2x32xf32>
    %429 = tpu.matmul %381, %4, %cst_198 {dimension_numbers = #tpu.dot_dimension_numbers<[1], [0], [0], [1], [0, 0, 1, 1], [], []>} : vector<2x32xf32>, vector<32x32xf32>, vector<2x32xf32> -> vector<2x32xf32>
    %430 = vector.broadcast %16 : vector<1x32xf32> to vector<2x32xf32>
    %431 = arith.addf %429, %430 : vector<2x32xf32>
    %cst_199 = arith.constant dense<0.000000e+00> : vector<2x32xf32>
    %432 = tpu.matmul %381, %6, %cst_199 {dimension_numbers = #tpu.dot_dimension_numbers<[1], [0], [0], [1], [0, 0, 1, 1], [], []>} : vector<2x32xf32>, vector<32x32xf32>, vector<2x32xf32> -> vector<2x32xf32>
    %433 = vector.broadcast %18 : vector<1x32xf32> to vector<2x32xf32>
    %434 = arith.addf %432, %433 : vector<2x32xf32>
    %cst_200 = arith.constant dense<0.000000e+00> : vector<2x32xf32>
    %435 = tpu.matmul %381, %8, %cst_200 {dimension_numbers = #tpu.dot_dimension_numbers<[1], [0], [0], [1], [0, 0, 1, 1], [], []>} : vector<2x32xf32>, vector<32x32xf32>, vector<2x32xf32> -> vector<2x32xf32>
    %436 = vector.broadcast %20 : vector<1x32xf32> to vector<2x32xf32>
    %437 = arith.addf %435, %436 : vector<2x32xf32>
    %438 = arith.addf %424, %431 : vector<2x32xf32>
    %439 = arith.negf %438 : vector<2x32xf32>
    %440 = math.exp %439 : vector<2x32xf32>
    %cst_201 = arith.constant 1.000000e+00 : f32
    %441 = vector.broadcast %cst_201 : f32 to vector<2x32xf32>
    %442 = arith.addf %441, %440 : vector<2x32xf32>
    %443 = arith.divf %441, %442 : vector<2x32xf32>
    %444 = arith.addf %426, %434 : vector<2x32xf32>
    %445 = arith.negf %444 : vector<2x32xf32>
    %446 = math.exp %445 : vector<2x32xf32>
    %cst_202 = arith.constant 1.000000e+00 : f32
    %447 = vector.broadcast %cst_202 : f32 to vector<2x32xf32>
    %448 = arith.addf %447, %446 : vector<2x32xf32>
    %449 = arith.divf %447, %448 : vector<2x32xf32>
    %450 = arith.mulf %443, %437 : vector<2x32xf32>
    %451 = arith.addf %428, %450 : vector<2x32xf32>
    %452 = math.tanh %451 : vector<2x32xf32>
    %cst_203 = arith.constant 1.000000e+00 : f32
    %453 = vector.broadcast %cst_203 : f32 to vector<2x32xf32>
    %454 = arith.subf %453, %449 : vector<2x32xf32>
    %455 = arith.mulf %454, %452 : vector<2x32xf32>
    %456 = arith.mulf %449, %381 : vector<2x32xf32>
    %457 = arith.addf %455, %456 : vector<2x32xf32>
    %cst_204 = arith.constant dense<0.000000e+00> : vector<2x32xf32>
    %458 = tpu.matmul %457, %28, %cst_204 {dimension_numbers = #tpu.dot_dimension_numbers<[1], [0], [0], [1], [0, 0, 1, 1], [], []>} : vector<2x32xf32>, vector<32x32xf32>, vector<2x32xf32> -> vector<2x32xf32>
    %459 = vector.broadcast %34 : vector<1x32xf32> to vector<2x32xf32>
    %460 = arith.addf %458, %459 : vector<2x32xf32>
    %cst_205 = arith.constant dense<0.000000e+00> : vector<2x32xf32>
    %461 = tpu.matmul %457, %30, %cst_205 {dimension_numbers = #tpu.dot_dimension_numbers<[1], [0], [0], [1], [0, 0, 1, 1], [], []>} : vector<2x32xf32>, vector<32x32xf32>, vector<2x32xf32> -> vector<2x32xf32>
    %462 = vector.broadcast %36 : vector<1x32xf32> to vector<2x32xf32>
    %463 = arith.addf %461, %462 : vector<2x32xf32>
    %cst_206 = arith.constant dense<0.000000e+00> : vector<2x32xf32>
    %464 = tpu.matmul %457, %32, %cst_206 {dimension_numbers = #tpu.dot_dimension_numbers<[1], [0], [0], [1], [0, 0, 1, 1], [], []>} : vector<2x32xf32>, vector<32x32xf32>, vector<2x32xf32> -> vector<2x32xf32>
    %465 = vector.broadcast %38 : vector<1x32xf32> to vector<2x32xf32>
    %466 = arith.addf %464, %465 : vector<2x32xf32>
    %cst_207 = arith.constant dense<0.000000e+00> : vector<2x32xf32>
    %467 = tpu.matmul %419, %10, %cst_207 {dimension_numbers = #tpu.dot_dimension_numbers<[1], [0], [0], [1], [0, 0, 1, 1], [], []>} : vector<2x32xf32>, vector<32x32xf32>, vector<2x32xf32> -> vector<2x32xf32>
    %468 = vector.broadcast %22 : vector<1x32xf32> to vector<2x32xf32>
    %469 = arith.addf %467, %468 : vector<2x32xf32>
    %cst_208 = arith.constant dense<0.000000e+00> : vector<2x32xf32>
    %470 = tpu.matmul %419, %12, %cst_208 {dimension_numbers = #tpu.dot_dimension_numbers<[1], [0], [0], [1], [0, 0, 1, 1], [], []>} : vector<2x32xf32>, vector<32x32xf32>, vector<2x32xf32> -> vector<2x32xf32>
    %471 = vector.broadcast %24 : vector<1x32xf32> to vector<2x32xf32>
    %472 = arith.addf %470, %471 : vector<2x32xf32>
    %cst_209 = arith.constant dense<0.000000e+00> : vector<2x32xf32>
    %473 = tpu.matmul %419, %14, %cst_209 {dimension_numbers = #tpu.dot_dimension_numbers<[1], [0], [0], [1], [0, 0, 1, 1], [], []>} : vector<2x32xf32>, vector<32x32xf32>, vector<2x32xf32> -> vector<2x32xf32>
    %474 = vector.broadcast %26 : vector<1x32xf32> to vector<2x32xf32>
    %475 = arith.addf %473, %474 : vector<2x32xf32>
    %476 = arith.addf %460, %469 : vector<2x32xf32>
    %477 = arith.negf %476 : vector<2x32xf32>
    %478 = math.exp %477 : vector<2x32xf32>
    %cst_210 = arith.constant 1.000000e+00 : f32
    %479 = vector.broadcast %cst_210 : f32 to vector<2x32xf32>
    %480 = arith.addf %479, %478 : vector<2x32xf32>
    %481 = arith.divf %479, %480 : vector<2x32xf32>
    %482 = arith.addf %463, %472 : vector<2x32xf32>
    %483 = arith.negf %482 : vector<2x32xf32>
    %484 = math.exp %483 : vector<2x32xf32>
    %cst_211 = arith.constant 1.000000e+00 : f32
    %485 = vector.broadcast %cst_211 : f32 to vector<2x32xf32>
    %486 = arith.addf %485, %484 : vector<2x32xf32>
    %487 = arith.divf %485, %486 : vector<2x32xf32>
    %488 = arith.mulf %481, %475 : vector<2x32xf32>
    %489 = arith.addf %466, %488 : vector<2x32xf32>
    %490 = math.tanh %489 : vector<2x32xf32>
    %cst_212 = arith.constant 1.000000e+00 : f32
    %491 = vector.broadcast %cst_212 : f32 to vector<2x32xf32>
    %492 = arith.subf %491, %487 : vector<2x32xf32>
    %493 = arith.mulf %492, %490 : vector<2x32xf32>
    %494 = arith.mulf %487, %419 : vector<2x32xf32>
    %495 = arith.addf %493, %494 : vector<2x32xf32>
    %c0_213 = arith.constant 0 : index
    %c5_214 = arith.constant 5 : index
    %c0_215 = arith.constant 0 : index
    %496 = vector.load %arg12[%c0_213, %c5_214, %c0_215] : memref<2x8x32xf32, #tpu.memory_space<vmem>>, vector<2x1x32xf32>
    %497 = vector.shape_cast %496 : vector<2x1x32xf32> to vector<2x32xf32>
    %498 = vector.shape_cast %495 : vector<2x32xf32> to vector<2x1x32xf32>
    tpu.vector_store %arg12[%c0_213, %c5_214, %c0_215], %498 {strides = array<i32>} : memref<2x8x32xf32, #tpu.memory_space<vmem>>, vector<2x1x32xf32>,
    %c0_216 = arith.constant 0 : index
    %c6 = arith.constant 6 : index
    %c0_217 = arith.constant 0 : index
    %499 = vector.load %arg2[%c0_216, %c6, %c0_217] : memref<2x8x32xf32, #tpu.memory_space<vmem>>, vector<2x1x32xf32>
    %500 = vector.shape_cast %499 : vector<2x1x32xf32> to vector<2x32xf32>
    %c0_218 = arith.constant 0 : index
    %c6_219 = arith.constant 6 : index
    %c0_220 = arith.constant 0 : index
    %501 = vector.load %arg3[%c0_218, %c6_219, %c0_220] : memref<2x8x32xf32, #tpu.memory_space<vmem>>, vector<2x1x32xf32>
    %502 = vector.shape_cast %501 : vector<2x1x32xf32> to vector<2x32xf32>
    %c0_221 = arith.constant 0 : index
    %c6_222 = arith.constant 6 : index
    %c0_223 = arith.constant 0 : index
    %503 = vector.load %arg4[%c0_221, %c6_222, %c0_223] : memref<2x8x32xf32, #tpu.memory_space<vmem>>, vector<2x1x32xf32>
    %504 = vector.shape_cast %503 : vector<2x1x32xf32> to vector<2x32xf32>
    %cst_224 = arith.constant dense<0.000000e+00> : vector<2x32xf32>
    %505 = tpu.matmul %457, %4, %cst_224 {dimension_numbers = #tpu.dot_dimension_numbers<[1], [0], [0], [1], [0, 0, 1, 1], [], []>} : vector<2x32xf32>, vector<32x32xf32>, vector<2x32xf32> -> vector<2x32xf32>
    %506 = vector.broadcast %16 : vector<1x32xf32> to vector<2x32xf32>
    %507 = arith.addf %505, %506 : vector<2x32xf32>
    %cst_225 = arith.constant dense<0.000000e+00> : vector<2x32xf32>
    %508 = tpu.matmul %457, %6, %cst_225 {dimension_numbers = #tpu.dot_dimension_numbers<[1], [0], [0], [1], [0, 0, 1, 1], [], []>} : vector<2x32xf32>, vector<32x32xf32>, vector<2x32xf32> -> vector<2x32xf32>
    %509 = vector.broadcast %18 : vector<1x32xf32> to vector<2x32xf32>
    %510 = arith.addf %508, %509 : vector<2x32xf32>
    %cst_226 = arith.constant dense<0.000000e+00> : vector<2x32xf32>
    %511 = tpu.matmul %457, %8, %cst_226 {dimension_numbers = #tpu.dot_dimension_numbers<[1], [0], [0], [1], [0, 0, 1, 1], [], []>} : vector<2x32xf32>, vector<32x32xf32>, vector<2x32xf32> -> vector<2x32xf32>
    %512 = vector.broadcast %20 : vector<1x32xf32> to vector<2x32xf32>
    %513 = arith.addf %511, %512 : vector<2x32xf32>
    %514 = arith.addf %500, %507 : vector<2x32xf32>
    %515 = arith.negf %514 : vector<2x32xf32>
    %516 = math.exp %515 : vector<2x32xf32>
    %cst_227 = arith.constant 1.000000e+00 : f32
    %517 = vector.broadcast %cst_227 : f32 to vector<2x32xf32>
    %518 = arith.addf %517, %516 : vector<2x32xf32>
    %519 = arith.divf %517, %518 : vector<2x32xf32>
    %520 = arith.addf %502, %510 : vector<2x32xf32>
    %521 = arith.negf %520 : vector<2x32xf32>
    %522 = math.exp %521 : vector<2x32xf32>
    %cst_228 = arith.constant 1.000000e+00 : f32
    %523 = vector.broadcast %cst_228 : f32 to vector<2x32xf32>
    %524 = arith.addf %523, %522 : vector<2x32xf32>
    %525 = arith.divf %523, %524 : vector<2x32xf32>
    %526 = arith.mulf %519, %513 : vector<2x32xf32>
    %527 = arith.addf %504, %526 : vector<2x32xf32>
    %528 = math.tanh %527 : vector<2x32xf32>
    %cst_229 = arith.constant 1.000000e+00 : f32
    %529 = vector.broadcast %cst_229 : f32 to vector<2x32xf32>
    %530 = arith.subf %529, %525 : vector<2x32xf32>
    %531 = arith.mulf %530, %528 : vector<2x32xf32>
    %532 = arith.mulf %525, %457 : vector<2x32xf32>
    %533 = arith.addf %531, %532 : vector<2x32xf32>
    %cst_230 = arith.constant dense<0.000000e+00> : vector<2x32xf32>
    %534 = tpu.matmul %533, %28, %cst_230 {dimension_numbers = #tpu.dot_dimension_numbers<[1], [0], [0], [1], [0, 0, 1, 1], [], []>} : vector<2x32xf32>, vector<32x32xf32>, vector<2x32xf32> -> vector<2x32xf32>
    %535 = vector.broadcast %34 : vector<1x32xf32> to vector<2x32xf32>
    %536 = arith.addf %534, %535 : vector<2x32xf32>
    %cst_231 = arith.constant dense<0.000000e+00> : vector<2x32xf32>
    %537 = tpu.matmul %533, %30, %cst_231 {dimension_numbers = #tpu.dot_dimension_numbers<[1], [0], [0], [1], [0, 0, 1, 1], [], []>} : vector<2x32xf32>, vector<32x32xf32>, vector<2x32xf32> -> vector<2x32xf32>
    %538 = vector.broadcast %36 : vector<1x32xf32> to vector<2x32xf32>
    %539 = arith.addf %537, %538 : vector<2x32xf32>
    %cst_232 = arith.constant dense<0.000000e+00> : vector<2x32xf32>
    %540 = tpu.matmul %533, %32, %cst_232 {dimension_numbers = #tpu.dot_dimension_numbers<[1], [0], [0], [1], [0, 0, 1, 1], [], []>} : vector<2x32xf32>, vector<32x32xf32>, vector<2x32xf32> -> vector<2x32xf32>
    %541 = vector.broadcast %38 : vector<1x32xf32> to vector<2x32xf32>
    %542 = arith.addf %540, %541 : vector<2x32xf32>
    %cst_233 = arith.constant dense<0.000000e+00> : vector<2x32xf32>
    %543 = tpu.matmul %495, %10, %cst_233 {dimension_numbers = #tpu.dot_dimension_numbers<[1], [0], [0], [1], [0, 0, 1, 1], [], []>} : vector<2x32xf32>, vector<32x32xf32>, vector<2x32xf32> -> vector<2x32xf32>
    %544 = vector.broadcast %22 : vector<1x32xf32> to vector<2x32xf32>
    %545 = arith.addf %543, %544 : vector<2x32xf32>
    %cst_234 = arith.constant dense<0.000000e+00> : vector<2x32xf32>
    %546 = tpu.matmul %495, %12, %cst_234 {dimension_numbers = #tpu.dot_dimension_numbers<[1], [0], [0], [1], [0, 0, 1, 1], [], []>} : vector<2x32xf32>, vector<32x32xf32>, vector<2x32xf32> -> vector<2x32xf32>
    %547 = vector.broadcast %24 : vector<1x32xf32> to vector<2x32xf32>
    %548 = arith.addf %546, %547 : vector<2x32xf32>
    %cst_235 = arith.constant dense<0.000000e+00> : vector<2x32xf32>
    %549 = tpu.matmul %495, %14, %cst_235 {dimension_numbers = #tpu.dot_dimension_numbers<[1], [0], [0], [1], [0, 0, 1, 1], [], []>} : vector<2x32xf32>, vector<32x32xf32>, vector<2x32xf32> -> vector<2x32xf32>
    %550 = vector.broadcast %26 : vector<1x32xf32> to vector<2x32xf32>
    %551 = arith.addf %549, %550 : vector<2x32xf32>
    %552 = arith.addf %536, %545 : vector<2x32xf32>
    %553 = arith.negf %552 : vector<2x32xf32>
    %554 = math.exp %553 : vector<2x32xf32>
    %cst_236 = arith.constant 1.000000e+00 : f32
    %555 = vector.broadcast %cst_236 : f32 to vector<2x32xf32>
    %556 = arith.addf %555, %554 : vector<2x32xf32>
    %557 = arith.divf %555, %556 : vector<2x32xf32>
    %558 = arith.addf %539, %548 : vector<2x32xf32>
    %559 = arith.negf %558 : vector<2x32xf32>
    %560 = math.exp %559 : vector<2x32xf32>
    %cst_237 = arith.constant 1.000000e+00 : f32
    %561 = vector.broadcast %cst_237 : f32 to vector<2x32xf32>
    %562 = arith.addf %561, %560 : vector<2x32xf32>
    %563 = arith.divf %561, %562 : vector<2x32xf32>
    %564 = arith.mulf %557, %551 : vector<2x32xf32>
    %565 = arith.addf %542, %564 : vector<2x32xf32>
    %566 = math.tanh %565 : vector<2x32xf32>
    %cst_238 = arith.constant 1.000000e+00 : f32
    %567 = vector.broadcast %cst_238 : f32 to vector<2x32xf32>
    %568 = arith.subf %567, %563 : vector<2x32xf32>
    %569 = arith.mulf %568, %566 : vector<2x32xf32>
    %570 = arith.mulf %563, %495 : vector<2x32xf32>
    %571 = arith.addf %569, %570 : vector<2x32xf32>
    %c0_239 = arith.constant 0 : index
    %c6_240 = arith.constant 6 : index
    %c0_241 = arith.constant 0 : index
    %572 = vector.load %arg12[%c0_239, %c6_240, %c0_241] : memref<2x8x32xf32, #tpu.memory_space<vmem>>, vector<2x1x32xf32>
    %573 = vector.shape_cast %572 : vector<2x1x32xf32> to vector<2x32xf32>
    %574 = vector.shape_cast %571 : vector<2x32xf32> to vector<2x1x32xf32>
    tpu.vector_store %arg12[%c0_239, %c6_240, %c0_241], %574 {strides = array<i32>} : memref<2x8x32xf32, #tpu.memory_space<vmem>>, vector<2x1x32xf32>,
    %c0_242 = arith.constant 0 : index
    %c7 = arith.constant 7 : index
    %c0_243 = arith.constant 0 : index
    %575 = vector.load %arg2[%c0_242, %c7, %c0_243] : memref<2x8x32xf32, #tpu.memory_space<vmem>>, vector<2x1x32xf32>
    %576 = vector.shape_cast %575 : vector<2x1x32xf32> to vector<2x32xf32>
    %c0_244 = arith.constant 0 : index
    %c7_245 = arith.constant 7 : index
    %c0_246 = arith.constant 0 : index
    %577 = vector.load %arg3[%c0_244, %c7_245, %c0_246] : memref<2x8x32xf32, #tpu.memory_space<vmem>>, vector<2x1x32xf32>
    %578 = vector.shape_cast %577 : vector<2x1x32xf32> to vector<2x32xf32>
    %c0_247 = arith.constant 0 : index
    %c7_248 = arith.constant 7 : index
    %c0_249 = arith.constant 0 : index
    %579 = vector.load %arg4[%c0_247, %c7_248, %c0_249] : memref<2x8x32xf32, #tpu.memory_space<vmem>>, vector<2x1x32xf32>
    %580 = vector.shape_cast %579 : vector<2x1x32xf32> to vector<2x32xf32>
    %cst_250 = arith.constant dense<0.000000e+00> : vector<2x32xf32>
    %581 = tpu.matmul %533, %4, %cst_250 {dimension_numbers = #tpu.dot_dimension_numbers<[1], [0], [0], [1], [0, 0, 1, 1], [], []>} : vector<2x32xf32>, vector<32x32xf32>, vector<2x32xf32> -> vector<2x32xf32>
    %582 = vector.broadcast %16 : vector<1x32xf32> to vector<2x32xf32>
    %583 = arith.addf %581, %582 : vector<2x32xf32>
    %cst_251 = arith.constant dense<0.000000e+00> : vector<2x32xf32>
    %584 = tpu.matmul %533, %6, %cst_251 {dimension_numbers = #tpu.dot_dimension_numbers<[1], [0], [0], [1], [0, 0, 1, 1], [], []>} : vector<2x32xf32>, vector<32x32xf32>, vector<2x32xf32> -> vector<2x32xf32>
    %585 = vector.broadcast %18 : vector<1x32xf32> to vector<2x32xf32>
    %586 = arith.addf %584, %585 : vector<2x32xf32>
    %cst_252 = arith.constant dense<0.000000e+00> : vector<2x32xf32>
    %587 = tpu.matmul %533, %8, %cst_252 {dimension_numbers = #tpu.dot_dimension_numbers<[1], [0], [0], [1], [0, 0, 1, 1], [], []>} : vector<2x32xf32>, vector<32x32xf32>, vector<2x32xf32> -> vector<2x32xf32>
    %588 = vector.broadcast %20 : vector<1x32xf32> to vector<2x32xf32>
    %589 = arith.addf %587, %588 : vector<2x32xf32>
    %590 = arith.addf %576, %583 : vector<2x32xf32>
    %591 = arith.negf %590 : vector<2x32xf32>
    %592 = math.exp %591 : vector<2x32xf32>
    %cst_253 = arith.constant 1.000000e+00 : f32
    %593 = vector.broadcast %cst_253 : f32 to vector<2x32xf32>
    %594 = arith.addf %593, %592 : vector<2x32xf32>
    %595 = arith.divf %593, %594 : vector<2x32xf32>
    %596 = arith.addf %578, %586 : vector<2x32xf32>
    %597 = arith.negf %596 : vector<2x32xf32>
    %598 = math.exp %597 : vector<2x32xf32>
    %cst_254 = arith.constant 1.000000e+00 : f32
    %599 = vector.broadcast %cst_254 : f32 to vector<2x32xf32>
    %600 = arith.addf %599, %598 : vector<2x32xf32>
    %601 = arith.divf %599, %600 : vector<2x32xf32>
    %602 = arith.mulf %595, %589 : vector<2x32xf32>
    %603 = arith.addf %580, %602 : vector<2x32xf32>
    %604 = math.tanh %603 : vector<2x32xf32>
    %cst_255 = arith.constant 1.000000e+00 : f32
    %605 = vector.broadcast %cst_255 : f32 to vector<2x32xf32>
    %606 = arith.subf %605, %601 : vector<2x32xf32>
    %607 = arith.mulf %606, %604 : vector<2x32xf32>
    %608 = arith.mulf %601, %533 : vector<2x32xf32>
    %609 = arith.addf %607, %608 : vector<2x32xf32>
    %cst_256 = arith.constant dense<0.000000e+00> : vector<2x32xf32>
    %610 = tpu.matmul %609, %28, %cst_256 {dimension_numbers = #tpu.dot_dimension_numbers<[1], [0], [0], [1], [0, 0, 1, 1], [], []>} : vector<2x32xf32>, vector<32x32xf32>, vector<2x32xf32> -> vector<2x32xf32>
    %611 = vector.broadcast %34 : vector<1x32xf32> to vector<2x32xf32>
    %612 = arith.addf %610, %611 : vector<2x32xf32>
    %cst_257 = arith.constant dense<0.000000e+00> : vector<2x32xf32>
    %613 = tpu.matmul %609, %30, %cst_257 {dimension_numbers = #tpu.dot_dimension_numbers<[1], [0], [0], [1], [0, 0, 1, 1], [], []>} : vector<2x32xf32>, vector<32x32xf32>, vector<2x32xf32> -> vector<2x32xf32>
    %614 = vector.broadcast %36 : vector<1x32xf32> to vector<2x32xf32>
    %615 = arith.addf %613, %614 : vector<2x32xf32>
    %cst_258 = arith.constant dense<0.000000e+00> : vector<2x32xf32>
    %616 = tpu.matmul %609, %32, %cst_258 {dimension_numbers = #tpu.dot_dimension_numbers<[1], [0], [0], [1], [0, 0, 1, 1], [], []>} : vector<2x32xf32>, vector<32x32xf32>, vector<2x32xf32> -> vector<2x32xf32>
    %617 = vector.broadcast %38 : vector<1x32xf32> to vector<2x32xf32>
    %618 = arith.addf %616, %617 : vector<2x32xf32>
    %cst_259 = arith.constant dense<0.000000e+00> : vector<2x32xf32>
    %619 = tpu.matmul %571, %10, %cst_259 {dimension_numbers = #tpu.dot_dimension_numbers<[1], [0], [0], [1], [0, 0, 1, 1], [], []>} : vector<2x32xf32>, vector<32x32xf32>, vector<2x32xf32> -> vector<2x32xf32>
    %620 = vector.broadcast %22 : vector<1x32xf32> to vector<2x32xf32>
    %621 = arith.addf %619, %620 : vector<2x32xf32>
    %cst_260 = arith.constant dense<0.000000e+00> : vector<2x32xf32>
    %622 = tpu.matmul %571, %12, %cst_260 {dimension_numbers = #tpu.dot_dimension_numbers<[1], [0], [0], [1], [0, 0, 1, 1], [], []>} : vector<2x32xf32>, vector<32x32xf32>, vector<2x32xf32> -> vector<2x32xf32>
    %623 = vector.broadcast %24 : vector<1x32xf32> to vector<2x32xf32>
    %624 = arith.addf %622, %623 : vector<2x32xf32>
    %cst_261 = arith.constant dense<0.000000e+00> : vector<2x32xf32>
    %625 = tpu.matmul %571, %14, %cst_261 {dimension_numbers = #tpu.dot_dimension_numbers<[1], [0], [0], [1], [0, 0, 1, 1], [], []>} : vector<2x32xf32>, vector<32x32xf32>, vector<2x32xf32> -> vector<2x32xf32>
    %626 = vector.broadcast %26 : vector<1x32xf32> to vector<2x32xf32>
    %627 = arith.addf %625, %626 : vector<2x32xf32>
    %628 = arith.addf %612, %621 : vector<2x32xf32>
    %629 = arith.negf %628 : vector<2x32xf32>
    %630 = math.exp %629 : vector<2x32xf32>
    %cst_262 = arith.constant 1.000000e+00 : f32
    %631 = vector.broadcast %cst_262 : f32 to vector<2x32xf32>
    %632 = arith.addf %631, %630 : vector<2x32xf32>
    %633 = arith.divf %631, %632 : vector<2x32xf32>
    %634 = arith.addf %615, %624 : vector<2x32xf32>
    %635 = arith.negf %634 : vector<2x32xf32>
    %636 = math.exp %635 : vector<2x32xf32>
    %cst_263 = arith.constant 1.000000e+00 : f32
    %637 = vector.broadcast %cst_263 : f32 to vector<2x32xf32>
    %638 = arith.addf %637, %636 : vector<2x32xf32>
    %639 = arith.divf %637, %638 : vector<2x32xf32>
    %640 = arith.mulf %633, %627 : vector<2x32xf32>
    %641 = arith.addf %618, %640 : vector<2x32xf32>
    %642 = math.tanh %641 : vector<2x32xf32>
    %cst_264 = arith.constant 1.000000e+00 : f32
    %643 = vector.broadcast %cst_264 : f32 to vector<2x32xf32>
    %644 = arith.subf %643, %639 : vector<2x32xf32>
    %645 = arith.mulf %644, %642 : vector<2x32xf32>
    %646 = arith.mulf %639, %571 : vector<2x32xf32>
    %647 = arith.addf %645, %646 : vector<2x32xf32>
    %c0_265 = arith.constant 0 : index
    %c7_266 = arith.constant 7 : index
    %c0_267 = arith.constant 0 : index
    %648 = vector.load %arg12[%c0_265, %c7_266, %c0_267] : memref<2x8x32xf32, #tpu.memory_space<vmem>>, vector<2x1x32xf32>
    %649 = vector.shape_cast %648 : vector<2x1x32xf32> to vector<2x32xf32>
    %650 = vector.shape_cast %647 : vector<2x32xf32> to vector<2x1x32xf32>
    tpu.vector_store %arg12[%c0_265, %c7_266, %c0_267], %650 {strides = array<i32>} : memref<2x8x32xf32, #tpu.memory_space<vmem>>, vector<2x1x32xf32>,
    %c0_268 = arith.constant 0 : index
    %c0_269 = arith.constant 0 : index
    %c0_270 = arith.constant 0 : index
    %651 = vector.load %arg13[%c0_268, %c0_269, %c0_270] : memref<2x2x32xf32, #tpu.memory_space<vmem>>, vector<1x2x32xf32>
    %652 = vector.shape_cast %651 : vector<1x2x32xf32> to vector<2x32xf32>
    %653 = vector.shape_cast %609 : vector<2x32xf32> to vector<1x2x32xf32>
    tpu.vector_store %arg13[%c0_268, %c0_269, %c0_270], %653 {strides = array<i32>} : memref<2x2x32xf32, #tpu.memory_space<vmem>>, vector<1x2x32xf32>,
    %c1_271 = arith.constant 1 : index
    %c0_272 = arith.constant 0 : index
    %c0_273 = arith.constant 0 : index
    %654 = vector.load %arg13[%c1_271, %c0_272, %c0_273] : memref<2x2x32xf32, #tpu.memory_space<vmem>>, vector<1x2x32xf32>
    %655 = vector.shape_cast %654 : vector<1x2x32xf32> to vector<2x32xf32>
    %656 = vector.shape_cast %647 : vector<2x32xf32> to vector<1x2x32xf32>
    tpu.vector_store %arg13[%c1_271, %c0_272, %c0_273], %656 {strides = array<i32>} : memref<2x2x32xf32, #tpu.memory_space<vmem>>, vector<1x2x32xf32>,
    return
  }
  func.func @transform_0(%arg0: i32, %arg1: i32) -> (i32, i32, i32) {
    %c0_i32 = arith.constant 0 : i32
    %c0_i32_0 = arith.constant 0 : i32
    return %arg0, %arg1, %c0_i32 : i32, i32, i32
  }
  func.func @transform_1(%arg0: i32, %arg1: i32) -> (i32, i32, i32) {
    %c0_i32 = arith.constant 0 : i32
    %c0_i32_0 = arith.constant 0 : i32
    return %arg0, %arg1, %c0_i32 : i32, i32, i32
  }
  func.func @transform_2(%arg0: i32, %arg1: i32) -> (i32, i32, i32) {
    %c0_i32 = arith.constant 0 : i32
    %c0_i32_0 = arith.constant 0 : i32
    return %arg0, %arg1, %c0_i32 : i32, i32, i32
  }
  func.func @transform_3(%arg0: i32, %arg1: i32) -> (i32, i32, i32) {
    %c0_i32 = arith.constant 0 : i32
    %c0_i32_0 = arith.constant 0 : i32
    %c0_i32_1 = arith.constant 0 : i32
    return %arg0, %c0_i32, %c0_i32_0 : i32, i32, i32
  }
  func.func @transform_4(%arg0: i32, %arg1: i32) -> (i32, i32, i32) {
    %c0_i32 = arith.constant 0 : i32
    %c0_i32_0 = arith.constant 0 : i32
    %c0_i32_1 = arith.constant 0 : i32
    %c0_i32_2 = arith.constant 0 : i32
    return %c0_i32, %c0_i32_0, %c0_i32_1 : i32, i32, i32
  }
  func.func @transform_5(%arg0: i32, %arg1: i32) -> (i32, i32, i32) {
    %c0_i32 = arith.constant 0 : i32
    %c0_i32_0 = arith.constant 0 : i32
    %c0_i32_1 = arith.constant 0 : i32
    %c0_i32_2 = arith.constant 0 : i32
    return %c0_i32, %c0_i32_0, %c0_i32_1 : i32, i32, i32
  }
  func.func @transform_6(%arg0: i32, %arg1: i32) -> (i32, i32, i32) {
    %c0_i32 = arith.constant 0 : i32
    %c0_i32_0 = arith.constant 0 : i32
    %c0_i32_1 = arith.constant 0 : i32
    %c0_i32_2 = arith.constant 0 : i32
    return %c0_i32, %c0_i32_0, %c0_i32_1 : i32, i32, i32
  }
  func.func @transform_7(%arg0: i32, %arg1: i32) -> (i32, i32, i32) {
    %c0_i32 = arith.constant 0 : i32
    %c0_i32_0 = arith.constant 0 : i32
    %c0_i32_1 = arith.constant 0 : i32
    %c0_i32_2 = arith.constant 0 : i32
    return %c0_i32, %c0_i32_0, %c0_i32_1 : i32, i32, i32
  }
  func.func @transform_8(%arg0: i32, %arg1: i32) -> (i32, i32, i32) {
    %c0_i32 = arith.constant 0 : i32
    %c0_i32_0 = arith.constant 0 : i32
    %c0_i32_1 = arith.constant 0 : i32
    %c0_i32_2 = arith.constant 0 : i32
    return %c0_i32, %c0_i32_0, %c0_i32_1 : i32, i32, i32
  }
  func.func @transform_9(%arg0: i32, %arg1: i32) -> (i32, i32, i32) {
    %c0_i32 = arith.constant 0 : i32
    %c0_i32_0 = arith.constant 0 : i32
    %c0_i32_1 = arith.constant 0 : i32
    %c0_i32_2 = arith.constant 0 : i32
    return %c0_i32, %c0_i32_0, %c0_i32_1 : i32, i32, i32
  }
  func.func @transform_10(%arg0: i32, %arg1: i32) -> (i32, i32, i32) {
    %c0_i32 = arith.constant 0 : i32
    %c0_i32_0 = arith.constant 0 : i32
    return %arg0, %arg1, %c0_i32 : i32, i32, i32
  }
}

</mosaic_0001>

<llo_original>
// kernel: decoder_forward.5
$region0: #{decoder_forward.5}
  #allocation0 [shape = 'u32[]', space=smem, size = 0x4, offset = 0x4, fixed_abs, tag = 'smem constant byte address 0x4 - core index']
  #allocation1 [shape = 'u32[144,128]{1,0:T(1,128)}', space=vmem, size = 0x12000, scoped, tag = 'internal scratch']
  #allocation2 [shape = 'f32[16,96]{1,0:T(8,128)}', space=vmem, size = 0x2000, scoped, tag = 'scratch operand']
  %s0 = inlined_call_operand.vmem [shape: f32[16,16], index: 0, kind: input, shape index: {}]
  %s1 = inlined_call_operand.vmem [shape: f32[16,96], index: 1, kind: input, shape index: {}]
  %s2 = inlined_call_operand.vmem [shape: f32[1,96], index: 2, kind: input, shape index: {}]
  %s3 = inlined_call_operand.vmem [shape: f32[16,96], index: 3, kind: output, shape index: {}]
  %s4 = sld [smem:[#allocation0]]
  $region30: #{decoder_forward.5} parent=0
    _
  %s6 = ssub.s32 1, %s4
  %s7 = scalar_select 0, %s6, %s4
  // Predicated region
  $region2: #{decoder_forward.5} parent=0 // pred_check
    _
  $region3: #{decoder_forward.5} parent=0 // pred_check_branch
    %9 = sbr.rel (0) target = $region5
  $region4: #{decoder_forward.5} parent=0 // pred_region
    _
  $region5: #{decoder_forward.5} parent=0 // pred_fallthru
    _
  // Predicated region
  $region6: #{decoder_forward.5} parent=0 // pred_check
    _
  $region7: #{decoder_forward.5} parent=0 // pred_check_branch
    %11 = sbr.rel (0) target = $region9
  $region8: #{decoder_forward.5} parent=0 // pred_region
    _
  $region9: #{decoder_forward.5} parent=0 // pred_fallthru
    _
  // Predicated region
  $region10: #{decoder_forward.5} parent=0 // pred_check
    _
  $region11: #{decoder_forward.5} parent=0 // pred_check_branch
    %13 = sbr.rel (0) target = $region13
  $region12: #{decoder_forward.5} parent=0 // pred_region
    _
  $region13: #{decoder_forward.5} parent=0 // pred_fallthru
    _
  %p14 = scmp.eq.s32.totalorder 0, 0
  // Predicated region
  $region14: #{decoder_forward.5} parent=0 // pred_check
    %p15 = pneg %p14
  $region15: #{decoder_forward.5} parent=0 // pred_check_branch
    %17 = sbr.rel (%p15) target = $region17
  $region16: #{decoder_forward.5} parent=0 // pred_region
    %vm18 = vcmask 785408
    %19 = vst.msk [vmem:[#allocation2] sm:$0xff] %vm18, 0.0
    %20 = vst.msk [vmem:[#allocation2 + $0x8] sm:$0xff] %vm18, 0.0
  $region17: #{decoder_forward.5} parent=0 // pred_fallthru
    _
  %v21 = vld [vmem:[#allocation2] sm:$0xff]
  %v22 = vld [vmem:[#allocation2 + $0x8] sm:$0xff]
  %v23 = vld [vmem:[%s0] sm:$0xff]
  %v24 = vld [vmem:[%s0 + $0x8] sm:$0xff]
  %v25 = vld [vmem:[%s1] sm:$0xff]
  %v26 = vld [vmem:[%s1 + $0x8] sm:$0xff]
  %vm27 = vcmask 130048
  %v29 = vsel %vm27, %v23, 0
  %v32 = vsel %vm27, %v24, 0
  %34 = vmatprep.subr.mxu0 0.0
  %35 = vmatpush1.msra.mxu0 0.0
  %36 = vmatprep.subr.mxu0 0.0
  %37 = vmatpush1.msra.mxu0 0.0
  %38 = vmatprep.subr.mxu0 0.0
  %39 = vmatpush1.msra.mxu0 0.0
  %40 = vmatprep.subr.mxu0 0.0
  %41 = vmatpush1.msra.mxu0 0.0
  %42 = vmatprep.subr.mxu0 0.0
  %43 = vmatpush1.msra.mxu0 0.0
  %44 = vmatprep.subr.mxu0 0.0
  %45 = vmatpush1.msra.mxu0 0.0
  %46 = vmatprep.subr.mxu0 0.0
  %47 = vmatpush1.msra.mxu0 0.0
  %48 = vmatprep.subr.mxu0 0.0
  %49 = vmatpush1.msra.mxu0 0.0
  %50 = vmatprep.subr.mxu0 0.0
  %51 = vmatpush1.msra.mxu0 0.0
  %52 = vmatprep.subr.mxu0 0.0
  %53 = vmatpush1.msra.mxu0 0.0
  %54 = vmatprep.subr.mxu0 0.0
  %55 = vmatpush1.msra.mxu0 0.0
  %56 = vmatprep.subr.mxu0 0.0
  %57 = vmatpush1.msra.mxu0 0.0
  %58 = vmatprep.subr.mxu0 0.0
  %59 = vmatpush1.msra.mxu0 0.0
  %60 = vmatprep.subr.mxu0 0.0
  %61 = vmatpush1.msra.mxu0 0.0
  %62 = vmatprep.subr.mxu0 0.0
  %63 = vmatpush1.msra.mxu0 %v26
  %64 = vmatprep.subr.mxu0 0.0
  %65 = vmatpush1.msra.mxu0 %v25
  %66 = vmatprep.subr.mxu0 0.0
  %67 = vmatpush2.msra.mxu0 0.0
  %68 = vmatprep.subr.mxu0 0.0
  %69 = vmatpush2.msra.mxu0 0.0
  %70 = vmatprep.subr.mxu0 0.0
  %71 = vmatpush2.msra.mxu0 0.0
  %72 = vmatprep.subr.mxu0 0.0
  %73 = vmatpush2.msra.mxu0 0.0
  %74 = vmatprep.subr.mxu0 0.0
  %75 = vmatpush2.msra.mxu0 0.0
  %76 = vmatprep.subr.mxu0 0.0
  %77 = vmatpush2.msra.mxu0 0.0
  %78 = vmatprep.subr.mxu0 0.0
  %79 = vmatpush2.msra.mxu0 0.0
  %80 = vmatprep.subr.mxu0 0.0
  %81 = vmatpush2.msra.mxu0 0.0
  %82 = vmatprep.subr.mxu0 0.0
  %83 = vmatpush2.msra.mxu0 0.0
  %84 = vmatprep.subr.mxu0 0.0
  %85 = vmatpush2.msra.mxu0 0.0
  %86 = vmatprep.subr.mxu0 0.0
  %87 = vmatpush2.msra.mxu0 0.0
  %88 = vmatprep.subr.mxu0 0.0
  %89 = vmatpush2.msra.mxu0 0.0
  %90 = vmatprep.subr.mxu0 0.0
  %91 = vmatpush2.msra.mxu0 0.0
  %92 = vmatprep.subr.mxu0 0.0
  %93 = vmatpush2.msra.mxu0 0.0
  %94 = vmatprep.subr.mxu0 0.0
  %95 = vmatpush2.msra.mxu0 0.0
  %96 = vmatprep.subr.mxu0 0.0
  %97 = vmatpush2.msra.mxu0 0.0
  %98 = vmatprep.mubr.f32.mxu0 0.0
  %99 = vmatmul.mubr.f32.gmra.mxu0 %v29
  %v100 = vpop.f32.mrf.mxu0
  %v101 = vadd.f32 0.0, %v100
  %v102 = vpop.f32.mrf.mxu0
  %103 = vmatprep.mubr.f32.mxu0 0.0
  %104 = vmatmul.mubr.f32.gmra.mxu0 %v32
  %v105 = vpop.f32.mrf.mxu0
  %v106 = vadd.f32 0.0, %v105
  %v107 = vpop.f32.mrf.mxu0
  %108 = vdwg.mxu0
  %v109 = vadd.f32 %v21, %v101
  %v110 = vadd.f32 %v22, %v106
  %vm111 = vcmask 785408
  %112 = vst.msk [vmem:[#allocation2] sm:$0xff] %vm111, %v109
  %113 = vst.msk [vmem:[#allocation2 + $0x8] sm:$0xff] %vm111, %v110
  // Predicated region
  $region18: #{decoder_forward.5} parent=0 // pred_check
    %p114 = pneg %p14
  $region19: #{decoder_forward.5} parent=0 // pred_check_branch
    %116 = sbr.rel (%p114) target = $region21
  $region20: #{decoder_forward.5} parent=0 // pred_region
    %v117 = vld [vmem:[#allocation2] sm:$0xff]
    %v118 = vld [vmem:[#allocation2 + $0x8] sm:$0xff]
    %v119 = vld [vmem:[%s2] sm:$0x1]
    %v121 = vlaneseq
    %v122 = vshrl.u32 %v121, 7
    %v123 = vsub.s32 0, %v122
    %v124 = vrot.slane %v119, %v123
    %v126 = vadd.f32 %v117, %v124
    %v127 = vadd.f32 %v118, %v124
    %128 = vst.msk [vmem:[%s3] sm:$0xff] %vm111, %v126
    %129 = vst.msk [vmem:[%s3 + $0x8] sm:$0xff] %vm111, %v127
  $region21: #{decoder_forward.5} parent=0 // pred_fallthru
    _
  // Predicated region
  $region22: #{decoder_forward.5} parent=0 // pred_check
    _
  $region23: #{decoder_forward.5} parent=0 // pred_check_branch
    %131 = sbr.rel (0) target = $region25
  $region24: #{decoder_forward.5} parent=0 // pred_region
    _
  $region25: #{decoder_forward.5} parent=0 // pred_fallthru
    _
  // Predicated region
  $region26: #{decoder_forward.5} parent=0 // pred_check
    _
  $region27: #{decoder_forward.5} parent=0 // pred_check_branch
    %133 = sbr.rel (0) target = $region29
  $region28: #{decoder_forward.5} parent=0 // pred_region
    _
  $region29: #{decoder_forward.5} parent=0 // pred_fallthru
    _

// kernel: decoder_forward.4
$region0: #{decoder_forward.4}
  #allocation0 [shape = 'u32[]', space=smem, size = 0x4, offset = 0x4, fixed_abs, tag = 'smem constant byte address 0x4 - core index']
  #allocation1 [shape = 'u32[144,128]{1,0:T(1,128)}', space=vmem, size = 0x12000, scoped, tag = 'internal scratch']
  #allocation2 [shape = 'f32[2,64]{1,0:T(2,128)}', space=vmem, size = 0x400, scoped, tag = 'scratch operand']
  %s0 = inlined_call_operand.vmem [shape: f32[2,1024], index: 0, kind: input, shape index: {}]
  %s1 = inlined_call_operand.vmem [shape: f32[1024,64], index: 1, kind: input, shape index: {}]
  %s2 = inlined_call_operand.vmem [shape: f32[1,64], index: 2, kind: input, shape index: {}]
  %s3 = inlined_call_operand.vmem [shape: f32[2,64], index: 3, kind: output, shape index: {}]
  %s4 = sld [smem:[#allocation0]]
  $region53: #{decoder_forward.4} parent=0
    _
  %s6 = ssub.s32 1, %s4
  %s7 = scalar_select 0, %s6, %s4
  loop: start=0, step=1, limit=4
  $region2: #{decoder_forward.4} parent=0 // loop_pre_header
    _
  $region3: #{decoder_forward.4} parent=0 // loop_header
    %s9 = sphi 0, %s13
    %p10 = scmp.ge.s32.totalorder %s9, 4
    %s16 = sphi 0, %s35
    %s17 = sphi 0, %s31
    %s18 = sphi 0, %s27
    %s19 = sphi 0, %s16
    %s20 = sphi 0, %s17
    %s21 = sphi 0, %s18
    %s22 = sphi 0, %s19
    %s23 = sphi 0, %s20
    %s24 = sphi 0, %s21
    %s40 = sphi 0, %s42
    %s43 = sphi 0, %s40
    %s44 = sphi 0, %s43
    %s60 = sphi 0, %s44
    %s68 = sphi 0, %s70
    %s71 = sphi 0, %s68
    %s72 = sphi 0, %s71
    %s88 = sphi 0, %s72
    %s94 = sphi 0, %s96
    %s97 = sphi 0, %s94
    %s98 = sphi 0, %s97
    %s114 = sphi 0, %s98
    %s122 = sphi 0, %s124
    %s125 = sphi 0, %s122
    %s126 = sphi 0, %s125
    %s142 = sphi 0, %s126
  $region4: #{decoder_forward.4} parent=0 // loop_header_branch
    %12 = sbr.rel (%p10) target = $region8
  $region5: #{decoder_forward.4} parent=0 // loop_body
    %s14 = ssub.s32 %s9, 1
    %s15 = ssub.s32 %s9, 2
    %s25 = sadd.s32 1, %s18
    %p26 = scmp.ge.s32.totalorder %s25, 2
    %s27 = scalar_select %p26, 0, %s25
    %s28 = sadd.s32 1, %s17
    %s29 = scalar_select %p26, %s28, %s17
    %p30 = scmp.ge.s32.totalorder %s29, 1
    %s31 = scalar_select %p30, 0, %s29
    %s32 = sadd.s32 1, %s16
    %s33 = scalar_select %p30, %s32, %s16
    %p34 = scmp.ge.s32.totalorder %s33, 1
    %s35 = scalar_select %p34, 0, %s33
    %s36 = ssub.s32 %s16, %s35
    %s37 = ssub.s32 %s18, %s27
    %s38 = sor.u32 %s36, %s37
    %p39 = scmp.eq.s32.totalorder %s38, 0
    %s41 = sadd.s32 %s40, 1
    %s42 = scalar_select %p39, %s40, %s41
    %p45 = pneg %p39
    %p46 = scmp.eq.s32.totalorder %s9, 1
    %p47 = por %p45, %p46
    %p48 = scmp.ne.s32.totalorder %s40, %s43
    %p49 = scmp.eq.s32.totalorder %s9, 0
    %p50 = por %p48, %p49
    %p51 = scmp.ne.s32.totalorder %s40, %s43
    %p52 = scmp.eq.s32.totalorder %s14, 1
    %p53 = por %p51, %p52
    %p54 = scmp.ne.s32.totalorder %s43, %s44
    %p55 = scmp.eq.s32.totalorder %s14, 0
    %p56 = por %p54, %p55
    %p57 = scmp.ne.s32.totalorder %s43, %s44
    %p58 = scmp.eq.s32.totalorder %s15, 1
    %p59 = por %p57, %p58
    %p61 = scmp.ne.s32.totalorder %s44, %s60
    %p62 = scmp.eq.s32.totalorder %s15, 0
    %p63 = por %p61, %p62
    %s64 = ssub.s32 %s18, %s27
    %s65 = ssub.s32 %s17, %s31
    %s66 = sor.u32 %s64, %s65
    %p67 = scmp.eq.s32.totalorder %s66, 0
    %s69 = sadd.s32 %s68, 1
    %s70 = scalar_select %p67, %s68, %s69
    %p73 = pneg %p67
    %p74 = scmp.eq.s32.totalorder %s9, 1
    %p75 = por %p73, %p74
    %p76 = scmp.ne.s32.totalorder %s68, %s71
    %p77 = scmp.eq.s32.totalorder %s9, 0
    %p78 = por %p76, %p77
    %p79 = scmp.ne.s32.totalorder %s68, %s71
    %p80 = scmp.eq.s32.totalorder %s14, 1
    %p81 = por %p79, %p80
    %p82 = scmp.ne.s32.totalorder %s71, %s72
    %p83 = scmp.eq.s32.totalorder %s14, 0
    %p84 = por %p82, %p83
    %p85 = scmp.ne.s32.totalorder %s71, %s72
    %p86 = scmp.eq.s32.totalorder %s15, 1
    %p87 = por %p85, %p86
    %p89 = scmp.ne.s32.totalorder %s72, %s88
    %p90 = scmp.eq.s32.totalorder %s15, 0
    %p91 = por %p89, %p90
    %s92 = ssub.s32 %s17, %s31
    %p93 = scmp.eq.s32.totalorder %s92, 0
    %s95 = sadd.s32 %s94, 1
    %s96 = scalar_select %p93, %s94, %s95
    %p99 = pneg %p93
    %p100 = scmp.eq.s32.totalorder %s9, 1
    %p101 = por %p99, %p100
    %p102 = scmp.ne.s32.totalorder %s94, %s97
    %p103 = scmp.eq.s32.totalorder %s9, 0
    %p104 = por %p102, %p103
    %p105 = scmp.ne.s32.totalorder %s94, %s97
    %p106 = scmp.eq.s32.totalorder %s14, 1
    %p107 = por %p105, %p106
    %p108 = scmp.ne.s32.totalorder %s97, %s98
    %p109 = scmp.eq.s32.totalorder %s14, 0
    %p110 = por %p108, %p109
    %p111 = scmp.ne.s32.totalorder %s97, %s98
    %p112 = scmp.eq.s32.totalorder %s15, 1
    %p113 = por %p111, %p112
    %p115 = scmp.ne.s32.totalorder %s98, %s114
    %p116 = scmp.eq.s32.totalorder %s15, 0
    %p117 = por %p115, %p116
    %s118 = ssub.s32 %s16, %s35
    %s119 = ssub.s32 %s17, %s31
    %s120 = sor.u32 %s118, %s119
    %p121 = scmp.eq.s32.totalorder %s120, 0
    %s123 = sadd.s32 %s122, 1
    %s124 = scalar_select %p121, %s122, %s123
    %p127 = pneg %p121
    %p128 = scmp.eq.s32.totalorder %s9, 1
    %p129 = por %p127, %p128
    %p130 = scmp.ne.s32.totalorder %s122, %s125
    %p131 = scmp.eq.s32.totalorder %s9, 0
    %p132 = por %p130, %p131
    %p133 = scmp.ne.s32.totalorder %s122, %s125
    %p134 = scmp.eq.s32.totalorder %s14, 1
    %p135 = por %p133, %p134
    %p136 = scmp.ne.s32.totalorder %s125, %s126
    %p137 = scmp.eq.s32.totalorder %s14, 0
    %p138 = por %p136, %p137
    %p139 = scmp.ne.s32.totalorder %s125, %s126
    %p140 = scmp.eq.s32.totalorder %s15, 1
    %p141 = por %p139, %p140
    %p143 = scmp.ne.s32.totalorder %s126, %s142
    %p144 = scmp.eq.s32.totalorder %s15, 0
    %p145 = por %p143, %p144
    %p146 = scmp.le.s32.totalorder 1, %s9
    %p147 = scmp.lt.s32.totalorder %s9, 3
    %p148 = pnand %p146, %p147
    %p149 = pneg %p148
    // Predicated region
    $region9: #{decoder_forward.4} parent=5 // pred_check
      _
    $region10: #{decoder_forward.4} parent=5 // pred_check_branch
      %151 = sbr.rel (%p148) target = $region12
    $region11: #{decoder_forward.4} parent=5 // pred_region
      %s152 = ssub.s32 %s9, 1
      // Predicated region
      $region13: #{decoder_forward.4} parent=11 // pred_check
        %p153 = pneg %p110
      $region14: #{decoder_forward.4} parent=11 // pred_check_branch
        %155 = sbr.rel (%p153) target = $region16
      $region15: #{decoder_forward.4} parent=11 // pred_region
        %p156 = scmp.lt.s32.totalorder %s20, 0
        %s157 = scalar_select %p156, %s20, 0
        %s158 = scalar_lea.vmem %s2, %s157
      $region16: #{decoder_forward.4} parent=11 // pred_fallthru
        _
    $region12: #{decoder_forward.4} parent=5 // pred_fallthru
      _
    %p159 = scmp.lt.s32.totalorder %s9, 2
    // Predicated region
    $region17: #{decoder_forward.4} parent=5 // pred_check
      %p160 = pneg %p159
    $region18: #{decoder_forward.4} parent=5 // pred_check_branch
      %162 = sbr.rel (%p160) target = $region20
    $region19: #{decoder_forward.4} parent=5 // pred_region
      // Predicated region
      $region21: #{decoder_forward.4} parent=19 // pred_check
        %p163 = pneg %p50
      $region22: #{decoder_forward.4} parent=19 // pred_check_branch
        %165 = sbr.rel (%p163) target = $region24
      $region23: #{decoder_forward.4} parent=19 // pred_region
        %s166 = smul.u32 4, %s18
        %p167 = scmp.lt.s32.totalorder %s16, 0
        %s168 = scalar_select %p167, %s16, 0
        %p169 = scmp.lt.s32.totalorder %s166, 7
        %s170 = scalar_select %p169, %s166, 7
        %s171 = smul.addr %s168, 8
        %s172 = sadd.s32 %s170, %s171
        %s173 = smul.addr %s172, 2
        %s174 = scalar_lea.vmem %s0, %s173
        %s175 = smul.u32 4, %s18
      $region24: #{decoder_forward.4} parent=19 // pred_fallthru
        _
      // Predicated region
      $region25: #{decoder_forward.4} parent=19 // pred_check
        %p176 = pneg %p78
      $region26: #{decoder_forward.4} parent=19 // pred_check_branch
        %178 = sbr.rel (%p176) target = $region28
      $region27: #{decoder_forward.4} parent=19 // pred_region
        %s179 = smul.u32 64, %s18
        %p180 = scmp.lt.s32.totalorder %s179, 127
        %s181 = scalar_select %p180, %s179, 127
        %p182 = scmp.lt.s32.totalorder %s17, 0
        %s183 = scalar_select %p182, %s17, 0
        %s184 = sadd.s32 %s183, %s181
        %s185 = smul.addr %s184, 8
        %s186 = scalar_lea.vmem %s1, %s185
        %s187 = smul.u32 64, %s18
      $region28: #{decoder_forward.4} parent=19 // pred_fallthru
        _
    $region20: #{decoder_forward.4} parent=5 // pred_fallthru
      _
    %p188 = scmp.le.s32.totalorder 1, %s9
    %p189 = scmp.lt.s32.totalorder %s9, 3
    %p190 = pnand %p188, %p189
    %p191 = pneg %p190
    // Predicated region
    $region29: #{decoder_forward.4} parent=5 // pred_check
      _
    $region30: #{decoder_forward.4} parent=5 // pred_check_branch
      %193 = sbr.rel (%p190) target = $region32
    $region31: #{decoder_forward.4} parent=5 // pred_region
      %s194 = ssub.s32 %s9, 1
      %s195 = smul.u32 4, %s21
      %p196 = scmp.lt.s32.totalorder %s19, 0
      %s197 = scalar_select %p196, %s19, 0
      %p198 = scmp.lt.s32.totalorder %s195, 7
      %s199 = scalar_select %p198, %s195, 7
      %s200 = smul.addr %s197, 8
      %s201 = sadd.s32 %s199, %s200
      %s202 = smul.addr %s201, 2
      %s203 = scalar_lea.vmem %s0, %s202
      %p204 = pneg %p56
      %p205 = pneg %p53
      %s206 = smul.u32 64, %s21
      %p207 = scmp.lt.s32.totalorder %s206, 127
      %s208 = scalar_select %p207, %s206, 127
      %p209 = scmp.lt.s32.totalorder %s20, 0
      %s210 = scalar_select %p209, %s20, 0
      %s211 = sadd.s32 %s210, %s208
      %s212 = smul.addr %s211, 8
      %s213 = scalar_lea.vmem %s1, %s212
      %p214 = pneg %p84
      %p215 = pneg %p81
      %p216 = scmp.lt.s32.totalorder %s20, 0
      %s217 = scalar_select %p216, %s20, 0
      %s218 = scalar_lea.vmem %s2, %s217
      %p219 = pneg %p110
      %p220 = pneg %p107
      %p221 = pneg %p138
      %p222 = pneg %p135
      %p223 = scmp.lt.s32.totalorder %s19, 0
      %s224 = scalar_select %p223, %s19, 0
      %p225 = scmp.lt.s32.totalorder %s20, 0
      %s226 = scalar_select %p225, %s20, 0
      %s227 = sadd.s32 %s226, %s224
      %s228 = smul.addr %s227, 2
      %s229 = scalar_lea.vmem %s3, %s228
      %s230 = smul.u32 4, %s21
      %p231 = scmp.lt.s32.totalorder %s19, 0
      %s232 = scalar_select %p231, %s19, 0
      %p233 = scmp.lt.s32.totalorder %s230, 7
      %s234 = scalar_select %p233, %s230, 7
      %s235 = smul.addr %s232, 8
      %s236 = sadd.s32 %s234, %s235
      %s237 = smul.addr %s236, 2
      %s238 = scalar_lea.vmem %s0, %s237
      %s239 = smul.u32 4, %s21
      %s240 = smul.u32 64, %s21
      %p241 = scmp.lt.s32.totalorder %s240, 127
      %s242 = scalar_select %p241, %s240, 127
      %p243 = scmp.lt.s32.totalorder %s20, 0
      %s244 = scalar_select %p243, %s20, 0
      %s245 = sadd.s32 %s244, %s242
      %s246 = smul.addr %s245, 8
      %s247 = scalar_lea.vmem %s1, %s246
      %s248 = smul.u32 64, %s21
      %p249 = scmp.lt.s32.totalorder %s20, 0
      %s250 = scalar_select %p249, %s20, 0
      %s251 = scalar_lea.vmem %s2, %s250
      %p252 = scmp.lt.s32.totalorder %s19, 0
      %s253 = scalar_select %p252, %s19, 0
      %p254 = scmp.lt.s32.totalorder %s20, 0
      %s255 = scalar_select %p254, %s20, 0
      %s256 = sadd.s32 %s255, %s253
      %s257 = smul.addr %s256, 2
      %s258 = scalar_lea.vmem %s3, %s257
      %p259 = scmp.eq.s32.totalorder %s21, 0
      // Predicated region
      $region33: #{decoder_forward.4} parent=31 // pred_check
        %p260 = pneg %p259
      $region34: #{decoder_forward.4} parent=31 // pred_check_branch
        %262 = sbr.rel (%p260) target = $region36
      $region35: #{decoder_forward.4} parent=31 // pred_region
        %vm263 = vcmask 517120
        %264 = vst.msk [vmem:[#allocation2] sm:$0x3] %vm263, 0.0
      $region36: #{decoder_forward.4} parent=31 // pred_fallthru
        _
      %v265 = vld [vmem:[#allocation2] sm:$0x3]
      %v266 = vld [vmem:[%s238] sm:$0xff]
      %v267 = vld [vmem:[%s247] sm:$0xff]
      %v268 = vld [vmem:[%s247 + $0x8] sm:$0xff]
      %v269 = vld [vmem:[%s247 + $0x10] sm:$0xff]
      %v270 = vld [vmem:[%s247 + $0x18] sm:$0xff]
      %v271 = vld [vmem:[%s247 + $0x20] sm:$0xff]
      %v272 = vld [vmem:[%s247 + $0x28] sm:$0xff]
      %v273 = vld [vmem:[%s247 + $0x30] sm:$0xff]
      %v274 = vld [vmem:[%s247 + $0x38] sm:$0xff]
      %v275 = vld [vmem:[%s247 + $0x40] sm:$0xff]
      %v276 = vld [vmem:[%s247 + $0x48] sm:$0xff]
      %v277 = vld [vmem:[%s247 + $0x50] sm:$0xff]
      %v278 = vld [vmem:[%s247 + $0x58] sm:$0xff]
      %v279 = vld [vmem:[%s247 + $0x60] sm:$0xff]
      %v280 = vld [vmem:[%s247 + $0x68] sm:$0xff]
      %v281 = vld [vmem:[%s247 + $0x70] sm:$0xff]
      %v282 = vld [vmem:[%s247 + $0x78] sm:$0xff]
      %v283 = vld [vmem:[%s247 + $0x80] sm:$0xff]
      %v284 = vld [vmem:[%s247 + $0x88] sm:$0xff]
      %v285 = vld [vmem:[%s247 + $0x90] sm:$0xff]
      %v286 = vld [vmem:[%s247 + $0x98] sm:$0xff]
      %v287 = vld [vmem:[%s247 + $0xa0] sm:$0xff]
      %v288 = vld [vmem:[%s247 + $0xa8] sm:$0xff]
      %v289 = vld [vmem:[%s247 + $0xb0] sm:$0xff]
      %v290 = vld [vmem:[%s247 + $0xb8] sm:$0xff]
      %v291 = vld [vmem:[%s247 + $0xc0] sm:$0xff]
      %v292 = vld [vmem:[%s247 + $0xc8] sm:$0xff]
      %v293 = vld [vmem:[%s247 + $0xd0] sm:$0xff]
      %v294 = vld [vmem:[%s247 + $0xd8] sm:$0xff]
      %v295 = vld [vmem:[%s247 + $0xe0] sm:$0xff]
      %v296 = vld [vmem:[%s247 + $0xe8] sm:$0xff]
      %v297 = vld [vmem:[%s247 + $0xf0] sm:$0xff]
      %v298 = vld [vmem:[%s247 + $0xf8] sm:$0xff]
      %v299 = vld [vmem:[%s247 + $0x100] sm:$0xff]
      %v300 = vld [vmem:[%s247 + $0x108] sm:$0xff]
      %v301 = vld [vmem:[%s247 + $0x110] sm:$0xff]
      %v302 = vld [vmem:[%s247 + $0x118] sm:$0xff]
      %v303 = vld [vmem:[%s247 + $0x120] sm:$0xff]
      %v304 = vld [vmem:[%s247 + $0x128] sm:$0xff]
      %v305 = vld [vmem:[%s247 + $0x130] sm:$0xff]
      %v306 = vld [vmem:[%s247 + $0x138] sm:$0xff]
      %v307 = vld [vmem:[%s247 + $0x140] sm:$0xff]
      %v308 = vld [vmem:[%s247 + $0x148] sm:$0xff]
      %v309 = vld [vmem:[%s247 + $0x150] sm:$0xff]
      %v310 = vld [vmem:[%s247 + $0x158] sm:$0xff]
      %v311 = vld [vmem:[%s247 + $0x160] sm:$0xff]
      %v312 = vld [vmem:[%s247 + $0x168] sm:$0xff]
      %v313 = vld [vmem:[%s247 + $0x170] sm:$0xff]
      %v314 = vld [vmem:[%s247 + $0x178] sm:$0xff]
      %v315 = vld [vmem:[%s247 + $0x180] sm:$0xff]
      %v316 = vld [vmem:[%s247 + $0x188] sm:$0xff]
      %v317 = vld [vmem:[%s247 + $0x190] sm:$0xff]
      %v318 = vld [vmem:[%s247 + $0x198] sm:$0xff]
      %v319 = vld [vmem:[%s247 + $0x1a0] sm:$0xff]
      %v320 = vld [vmem:[%s247 + $0x1a8] sm:$0xff]
      %v321 = vld [vmem:[%s247 + $0x1b0] sm:$0xff]
      %v322 = vld [vmem:[%s247 + $0x1b8] sm:$0xff]
      %v323 = vld [vmem:[%s247 + $0x1c0] sm:$0xff]
      %v324 = vld [vmem:[%s247 + $0x1c8] sm:$0xff]
      %v325 = vld [vmem:[%s247 + $0x1d0] sm:$0xff]
      %v326 = vld [vmem:[%s247 + $0x1d8] sm:$0xff]
      %v327 = vld [vmem:[%s247 + $0x1e0] sm:$0xff]
      %v328 = vld [vmem:[%s247 + $0x1e8] sm:$0xff]
      %v329 = vld [vmem:[%s247 + $0x1f0] sm:$0xff]
      %v330 = vld [vmem:[%s247 + $0x1f8] sm:$0xff]
      %v332 = vcombine.high %v266, %v266
      %v334 = vunpack.c.l.s4 1983009808
      %v335 = vunpack.c.0.s8 %v334
      %v336 = vlaneseq
      %v337 = vshrl.u32 %v336, 7
      %v338 = vsub.s32 %v335, %v337
      %v339 = vrot.slane %v266, %v338
      %v341 = vunpack.c.l.s4 1983009808
      %v342 = vunpack.c.0.s8 %v341
      %v343 = vlaneseq
      %v344 = vshrl.u32 %v343, 7
      %v345 = vsub.s32 %v342, %v344
      %v346 = vrot.slane %v332, %v345
      %v347 = vcombine.high %v339, %v339
      %v348 = vcombine.high %v346, %v346
      %353 = vmatprep.subr.mxu0 0.0
      %354 = vmatpush1.msra.mxu0 %v282
      %355 = vmatprep.subr.mxu0 0.0
      %356 = vmatpush1.msra.mxu0 %v281
      %357 = vmatprep.subr.mxu0 0.0
      %358 = vmatpush1.msra.mxu0 %v280
      %359 = vmatprep.subr.mxu0 0.0
      %360 = vmatpush1.msra.mxu0 %v279
      %361 = vmatprep.subr.mxu0 0.0
      %362 = vmatpush1.msra.mxu0 %v278
      %363 = vmatprep.subr.mxu0 0.0
      %364 = vmatpush1.msra.mxu0 %v277
      %365 = vmatprep.subr.mxu0 0.0
      %366 = vmatpush1.msra.mxu0 %v276
      %367 = vmatprep.subr.mxu0 0.0
      %368 = vmatpush1.msra.mxu0 %v275
      %369 = vmatprep.subr.mxu0 0.0
      %370 = vmatpush1.msra.mxu0 %v274
      %371 = vmatprep.subr.mxu0 0.0
      %372 = vmatpush1.msra.mxu0 %v273
      %373 = vmatprep.subr.mxu0 0.0
      %374 = vmatpush1.msra.mxu0 %v272
      %375 = vmatprep.subr.mxu0 0.0
      %376 = vmatpush1.msra.mxu0 %v271
      %377 = vmatprep.subr.mxu0 0.0
      %378 = vmatpush1.msra.mxu0 %v270
      %379 = vmatprep.subr.mxu0 0.0
      %380 = vmatpush1.msra.mxu0 %v269
      %381 = vmatprep.subr.mxu0 0.0
      %382 = vmatpush1.msra.mxu0 %v268
      %383 = vmatprep.subr.mxu0 0.0
      %384 = vmatpush1.msra.mxu0 %v267
      %385 = vmatprep.subr.mxu0 0.0
      %386 = vmatpush2.msra.mxu0 %v298
      %387 = vmatprep.subr.mxu0 0.0
      %388 = vmatpush2.msra.mxu0 %v297
      %389 = vmatprep.subr.mxu0 0.0
      %390 = vmatpush2.msra.mxu0 %v296
      %391 = vmatprep.subr.mxu0 0.0
      %392 = vmatpush2.msra.mxu0 %v295
      %393 = vmatprep.subr.mxu0 0.0
      %394 = vmatpush2.msra.mxu0 %v294
      %395 = vmatprep.subr.mxu0 0.0
      %396 = vmatpush2.msra.mxu0 %v293
      %397 = vmatprep.subr.mxu0 0.0
      %398 = vmatpush2.msra.mxu0 %v292
      %399 = vmatprep.subr.mxu0 0.0
      %400 = vmatpush2.msra.mxu0 %v291
      %401 = vmatprep.subr.mxu0 0.0
      %402 = vmatpush2.msra.mxu0 %v290
      %403 = vmatprep.subr.mxu0 0.0
      %404 = vmatpush2.msra.mxu0 %v289
      %405 = vmatprep.subr.mxu0 0.0
      %406 = vmatpush2.msra.mxu0 %v288
      %407 = vmatprep.subr.mxu0 0.0
      %408 = vmatpush2.msra.mxu0 %v287
      %409 = vmatprep.subr.mxu0 0.0
      %410 = vmatpush2.msra.mxu0 %v286
      %411 = vmatprep.subr.mxu0 0.0
      %412 = vmatpush2.msra.mxu0 %v285
      %413 = vmatprep.subr.mxu0 0.0
      %414 = vmatpush2.msra.mxu0 %v284
      %415 = vmatprep.subr.mxu0 0.0
      %416 = vmatpush2.msra.mxu0 %v283
      %417 = vmatprep.mubr.f32.mxu0 %v347
      %418 = vmatmul.mubr.f32.gmra.mxu0 %v339
      %v419 = vpop.f32.mrf.mxu0
      %v420 = vadd.f32 0.0, %v419
      %v421 = vpop.f32.mrf.mxu0
      %422 = vdwg.mxu0
      %423 = vmatprep.subr.mxu0 0.0
      %424 = vmatpush1.msra.mxu0 %v314
      %425 = vmatprep.subr.mxu0 0.0
      %426 = vmatpush1.msra.mxu0 %v313
      %427 = vmatprep.subr.mxu0 0.0
      %428 = vmatpush1.msra.mxu0 %v312
      %429 = vmatprep.subr.mxu0 0.0
      %430 = vmatpush1.msra.mxu0 %v311
      %431 = vmatprep.subr.mxu0 0.0
      %432 = vmatpush1.msra.mxu0 %v310
      %433 = vmatprep.subr.mxu0 0.0
      %434 = vmatpush1.msra.mxu0 %v309
      %435 = vmatprep.subr.mxu0 0.0
      %436 = vmatpush1.msra.mxu0 %v308
      %437 = vmatprep.subr.mxu0 0.0
      %438 = vmatpush1.msra.mxu0 %v307
      %439 = vmatprep.subr.mxu0 0.0
      %440 = vmatpush1.msra.mxu0 %v306
      %441 = vmatprep.subr.mxu0 0.0
      %442 = vmatpush1.msra.mxu0 %v305
      %443 = vmatprep.subr.mxu0 0.0
      %444 = vmatpush1.msra.mxu0 %v304
      %445 = vmatprep.subr.mxu0 0.0
      %446 = vmatpush1.msra.mxu0 %v303
      %447 = vmatprep.subr.mxu0 0.0
      %448 = vmatpush1.msra.mxu0 %v302
      %449 = vmatprep.subr.mxu0 0.0
      %450 = vmatpush1.msra.mxu0 %v301
      %451 = vmatprep.subr.mxu0 0.0
      %452 = vmatpush1.msra.mxu0 %v300
      %453 = vmatprep.subr.mxu0 0.0
      %454 = vmatpush1.msra.mxu0 %v299
      %455 = vmatprep.subr.mxu0 0.0
      %456 = vmatpush2.msra.mxu0 %v330
      %457 = vmatprep.subr.mxu0 0.0
      %458 = vmatpush2.msra.mxu0 %v329
      %459 = vmatprep.subr.mxu0 0.0
      %460 = vmatpush2.msra.mxu0 %v328
      %461 = vmatprep.subr.mxu0 0.0
      %462 = vmatpush2.msra.mxu0 %v327
      %463 = vmatprep.subr.mxu0 0.0
      %464 = vmatpush2.msra.mxu0 %v326
      %465 = vmatprep.subr.mxu0 0.0
      %466 = vmatpush2.msra.mxu0 %v325
      %467 = vmatprep.subr.mxu0 0.0
      %468 = vmatpush2.msra.mxu0 %v324
      %469 = vmatprep.subr.mxu0 0.0
      %470 = vmatpush2.msra.mxu0 %v323
      %471 = vmatprep.subr.mxu0 0.0
      %472 = vmatpush2.msra.mxu0 %v322
      %473 = vmatprep.subr.mxu0 0.0
      %474 = vmatpush2.msra.mxu0 %v321
      %475 = vmatprep.subr.mxu0 0.0
      %476 = vmatpush2.msra.mxu0 %v320
      %477 = vmatprep.subr.mxu0 0.0
      %478 = vmatpush2.msra.mxu0 %v319
      %479 = vmatprep.subr.mxu0 0.0
      %480 = vmatpush2.msra.mxu0 %v318
      %481 = vmatprep.subr.mxu0 0.0
      %482 = vmatpush2.msra.mxu0 %v317
      %483 = vmatprep.subr.mxu0 0.0
      %484 = vmatpush2.msra.mxu0 %v316
      %485 = vmatprep.subr.mxu0 0.0
      %486 = vmatpush2.msra.mxu0 %v315
      %487 = vmatprep.mubr.f32.mxu0 %v348
      %488 = vmatmul.mubr.f32.gmra.mxu0 %v346
      %v489 = vpop.f32.mrf.mxu0
      %v490 = vadd.f32 %v420, %v489
      %v491 = vpop.f32.mrf.mxu0
      %492 = vdwg.mxu0
      %v493 = vadd.f32 %v265, %v490
      %vm494 = vcmask 517120
      %495 = vst.msk [vmem:[#allocation2] sm:$0x3] %vm494, %v493
      %p496 = scmp.eq.s32.totalorder %s21, 1
      // Predicated region
      $region37: #{decoder_forward.4} parent=31 // pred_check
        %p497 = pneg %p496
      $region38: #{decoder_forward.4} parent=31 // pred_check_branch
        %499 = sbr.rel (%p497) target = $region40
      $region39: #{decoder_forward.4} parent=31 // pred_region
        %v500 = vld [vmem:[#allocation2] sm:$0x3]
        %v501 = vld [vmem:[%s251] sm:$0x1]
        %v503 = vlaneseq
        %v504 = vshrl.u32 %v503, 7
        %v505 = vsub.s32 0, %v504
        %v506 = vrot.slane %v501, %v505
        %v508 = vadd.f32 %v500, %v506
        %509 = vst.msk [vmem:[%s258] sm:$0x3] %vm494, %v508
      $region40: #{decoder_forward.4} parent=31 // pred_fallthru
        _
      %p510 = scmp.lt.s32.totalorder %s19, 0
      %s511 = scalar_select %p510, %s19, 0
      %p512 = scmp.lt.s32.totalorder %s20, 0
      %s513 = scalar_select %p512, %s20, 0
      %s514 = sadd.s32 %s513, %s511
      %s515 = smul.addr %s514, 2
      %s516 = scalar_lea.vmem %s3, %s515
      // Predicated region
      $region41: #{decoder_forward.4} parent=31 // pred_check
        %p517 = pneg %p135
      $region42: #{decoder_forward.4} parent=31 // pred_check_branch
        %519 = sbr.rel (%p517) target = $region44
      $region43: #{decoder_forward.4} parent=31 // pred_region
        _
      $region44: #{decoder_forward.4} parent=31 // pred_fallthru
        _
      // Predicated region
      $region45: #{decoder_forward.4} parent=31 // pred_check
        %p520 = pneg %p135
      $region46: #{decoder_forward.4} parent=31 // pred_check_branch
        %522 = sbr.rel (%p520) target = $region48
      $region47: #{decoder_forward.4} parent=31 // pred_region
        %p523 = scmp.lt.s32.totalorder %s19, 0
        %s524 = scalar_select %p523, %s19, 0
        %p525 = scmp.lt.s32.totalorder %s20, 0
        %s526 = scalar_select %p525, %s20, 0
        %s527 = sadd.s32 %s526, %s524
        %s528 = smul.addr %s527, 2
        %s529 = scalar_lea.vmem %s3, %s528
      $region48: #{decoder_forward.4} parent=31 // pred_fallthru
        _
    $region32: #{decoder_forward.4} parent=5 // pred_fallthru
      _
    %p530 = scmp.le.s32.totalorder 2, %s9
    // Predicated region
    $region49: #{decoder_forward.4} parent=5 // pred_check
      %p531 = pneg %p530
    $region50: #{decoder_forward.4} parent=5 // pred_check_branch
      %533 = sbr.rel (%p531) target = $region52
    $region51: #{decoder_forward.4} parent=5 // pred_region
      %s534 = ssub.s32 %s9, 2
    $region52: #{decoder_forward.4} parent=5 // pred_fallthru
      _
  $region6: #{decoder_forward.4} parent=0 // loop_footer
    %s13 = sadd.s32 1, %s9
  $region7: #{decoder_forward.4} parent=0 // loop_footer_branch
    %8 = sbr.rel target = $region3
  $region8: #{decoder_forward.4} parent=0 // loop_exit
    _

// kernel: decoder_forward.7
$region0: #{decoder_forward.7}
  #allocation0 [shape = 'u32[]', space=smem, size = 0x4, offset = 0x4, fixed_abs, tag = 'smem constant byte address 0x4 - core index']
  #allocation1 [shape = 'u32[144,128]{1,0:T(1,128)}', space=vmem, size = 0x12000, scoped, tag = 'internal scratch']
  #allocation2 [shape = 'f32[16,24]{1,0:T(8,128)}', space=vmem, size = 0x2000, scoped, tag = 'scratch operand']
  %s0 = inlined_call_operand.vmem [shape: f32[16,32], index: 0, kind: input, shape index: {}]
  %s1 = inlined_call_operand.vmem [shape: f32[32,24], index: 1, kind: input, shape index: {}]
  %s2 = inlined_call_operand.vmem [shape: f32[1,24], index: 2, kind: input, shape index: {}]
  %s3 = inlined_call_operand.hbm [shape: f32[16,24], index: 3, kind: output, shape index: {}]
  %s4 = sld [smem:[#allocation0]]
  $region30: #{decoder_forward.7} parent=0
    _
  %s6 = ssub.s32 1, %s4
  %s7 = scalar_select 0, %s6, %s4
  $region1: #{decoder_forward.7} parent=0
    #allocation3 [shape = 'u8[8192]{0}', space=vmem, size = 0x2000, scoped, tag = 'output window, operand 0, single buffered']
    #allocation4 [shape = 's32[1]{0}', space=sflag, size = 0x4, scoped, tag = 'scoped memory for decoder_forward.7']
    %8 = vsyncpa [#allocation4], 0
    // Predicated region
    $region2: #{decoder_forward.7} parent=1 // pred_check
      _
    $region3: #{decoder_forward.7} parent=1 // pred_check_branch
      %10 = sbr.rel (0) target = $region5
    $region4: #{decoder_forward.7} parent=1 // pred_region
      _
    $region5: #{decoder_forward.7} parent=1 // pred_fallthru
      _
    // Predicated region
    $region6: #{decoder_forward.7} parent=1 // pred_check
      _
    $region7: #{decoder_forward.7} parent=1 // pred_check_branch
      %12 = sbr.rel (0) target = $region9
    $region8: #{decoder_forward.7} parent=1 // pred_region
      _
    $region9: #{decoder_forward.7} parent=1 // pred_fallthru
      _
    // Predicated region
    $region10: #{decoder_forward.7} parent=1 // pred_check
      _
    $region11: #{decoder_forward.7} parent=1 // pred_check_branch
      %14 = sbr.rel (0) target = $region13
    $region12: #{decoder_forward.7} parent=1 // pred_region
      _
    $region13: #{decoder_forward.7} parent=1 // pred_fallthru
      _
    %p15 = scmp.eq.s32.totalorder 0, 0
    // Predicated region
    $region14: #{decoder_forward.7} parent=1 // pred_check
      %p16 = pneg %p15
    $region15: #{decoder_forward.7} parent=1 // pred_check_branch
      %18 = sbr.rel (%p16) target = $region17
    $region16: #{decoder_forward.7} parent=1 // pred_region
      %vm19 = vcmask 195584
      %20 = vst.msk [vmem:[#allocation2] sm:$0xff] %vm19, 0.0
      %21 = vst.msk [vmem:[#allocation2 + $0x8] sm:$0xff] %vm19, 0.0
    $region17: #{decoder_forward.7} parent=1 // pred_fallthru
      _
    %v22 = vld [vmem:[#allocation2] sm:$0xff]
    %v23 = vld [vmem:[#allocation2 + $0x8] sm:$0xff]
    %v24 = vld [vmem:[%s0] sm:$0xff]
    %v25 = vld [vmem:[%s0 + $0x8] sm:$0xff]
    %v26 = vld [vmem:[%s1] sm:$0xff]
    %v27 = vld [vmem:[%s1 + $0x8] sm:$0xff]
    %v28 = vld [vmem:[%s1 + $0x10] sm:$0xff]
    %v29 = vld [vmem:[%s1 + $0x18] sm:$0xff]
    %vm30 = vcmask 261120
    %v32 = vsel %vm30, %v24, 0
    %v35 = vsel %vm30, %v25, 0
    %37 = vmatprep.subr.mxu0 0.0
    %38 = vmatpush1.msra.mxu0 0.0
    %39 = vmatprep.subr.mxu0 0.0
    %40 = vmatpush1.msra.mxu0 0.0
    %41 = vmatprep.subr.mxu0 0.0
    %42 = vmatpush1.msra.mxu0 0.0
    %43 = vmatprep.subr.mxu0 0.0
    %44 = vmatpush1.msra.mxu0 0.0
    %45 = vmatprep.subr.mxu0 0.0
    %46 = vmatpush1.msra.mxu0 0.0
    %47 = vmatprep.subr.mxu0 0.0
    %48 = vmatpush1.msra.mxu0 0.0
    %49 = vmatprep.subr.mxu0 0.0
    %50 = vmatpush1.msra.mxu0 0.0
    %51 = vmatprep.subr.mxu0 0.0
    %52 = vmatpush1.msra.mxu0 0.0
    %53 = vmatprep.subr.mxu0 0.0
    %54 = vmatpush1.msra.mxu0 0.0
    %55 = vmatprep.subr.mxu0 0.0
    %56 = vmatpush1.msra.mxu0 0.0
    %57 = vmatprep.subr.mxu0 0.0
    %58 = vmatpush1.msra.mxu0 0.0
    %59 = vmatprep.subr.mxu0 0.0
    %60 = vmatpush1.msra.mxu0 0.0
    %61 = vmatprep.subr.mxu0 0.0
    %62 = vmatpush1.msra.mxu0 %v29
    %63 = vmatprep.subr.mxu0 0.0
    %64 = vmatpush1.msra.mxu0 %v28
    %65 = vmatprep.subr.mxu0 0.0
    %66 = vmatpush1.msra.mxu0 %v27
    %67 = vmatprep.subr.mxu0 0.0
    %68 = vmatpush1.msra.mxu0 %v26
    %69 = vmatprep.subr.mxu0 0.0
    %70 = vmatpush2.msra.mxu0 0.0
    %71 = vmatprep.subr.mxu0 0.0
    %72 = vmatpush2.msra.mxu0 0.0
    %73 = vmatprep.subr.mxu0 0.0
    %74 = vmatpush2.msra.mxu0 0.0
    %75 = vmatprep.subr.mxu0 0.0
    %76 = vmatpush2.msra.mxu0 0.0
    %77 = vmatprep.subr.mxu0 0.0
    %78 = vmatpush2.msra.mxu0 0.0
    %79 = vmatprep.subr.mxu0 0.0
    %80 = vmatpush2.msra.mxu0 0.0
    %81 = vmatprep.subr.mxu0 0.0
    %82 = vmatpush2.msra.mxu0 0.0
    %83 = vmatprep.subr.mxu0 0.0
    %84 = vmatpush2.msra.mxu0 0.0
    %85 = vmatprep.subr.mxu0 0.0
    %86 = vmatpush2.msra.mxu0 0.0
    %87 = vmatprep.subr.mxu0 0.0
    %88 = vmatpush2.msra.mxu0 0.0
    %89 = vmatprep.subr.mxu0 0.0
    %90 = vmatpush2.msra.mxu0 0.0
    %91 = vmatprep.subr.mxu0 0.0
    %92 = vmatpush2.msra.mxu0 0.0
    %93 = vmatprep.subr.mxu0 0.0
    %94 = vmatpush2.msra.mxu0 0.0
    %95 = vmatprep.subr.mxu0 0.0
    %96 = vmatpush2.msra.mxu0 0.0
    %97 = vmatprep.subr.mxu0 0.0
    %98 = vmatpush2.msra.mxu0 0.0
    %99 = vmatprep.subr.mxu0 0.0
    %100 = vmatpush2.msra.mxu0 0.0
    %101 = vmatprep.mubr.f32.mxu0 0.0
    %102 = vmatmul.mubr.f32.gmra.mxu0 %v32
    %v103 = vpop.f32.mrf.mxu0
    %v104 = vadd.f32 0.0, %v103
    %v105 = vpop.f32.mrf.mxu0
    %106 = vmatprep.mubr.f32.mxu0 0.0
    %107 = vmatmul.mubr.f32.gmra.mxu0 %v35
    %v108 = vpop.f32.mrf.mxu0
    %v109 = vadd.f32 0.0, %v108
    %v110 = vpop.f32.mrf.mxu0
    %111 = vdwg.mxu0
    %v112 = vadd.f32 %v22, %v104
    %v113 = vadd.f32 %v23, %v109
    %vm114 = vcmask 195584
    %115 = vst.msk [vmem:[#allocation2] sm:$0xff] %vm114, %v112
    %116 = vst.msk [vmem:[#allocation2 + $0x8] sm:$0xff] %vm114, %v113
    // Predicated region
    $region18: #{decoder_forward.7} parent=1 // pred_check
      %p117 = pneg %p15
    $region19: #{decoder_forward.7} parent=1 // pred_check_branch
      %119 = sbr.rel (%p117) target = $region21
    $region20: #{decoder_forward.7} parent=1 // pred_region
      %v120 = vld [vmem:[#allocation2] sm:$0xff]
      %v121 = vld [vmem:[#allocation2 + $0x8] sm:$0xff]
      %v122 = vld [vmem:[%s2] sm:$0x1]
      %v124 = vlaneseq
      %v125 = vshrl.u32 %v124, 7
      %v126 = vsub.s32 0, %v125
      %v127 = vrot.slane %v122, %v126
      %v129 = vadd.f32 %v120, %v127
      %v130 = vadd.f32 %v121, %v127
      %131 = vst.msk [vmem:[#allocation3] sm:$0xff] %vm114, %v129
      %132 = vst.msk [vmem:[#allocation3 + $0x8] sm:$0xff] %vm114, %v130
    $region21: #{decoder_forward.7} parent=1 // pred_fallthru
      _
    // Predicated region
    $region22: #{decoder_forward.7} parent=1 // pred_check
      _
    $region23: #{decoder_forward.7} parent=1 // pred_check_branch
      %134 = sbr.rel (0) target = $region25
    $region24: #{decoder_forward.7} parent=1 // pred_region
      %s136 = ssub.s32 256, 256
      %137 = vsyncadd [#allocation4], %s136
      %s138 = sshll.u32 [#allocation3], 4
      %s139 = int_to_ptr.vmem [resolvable:$true] %s138
      %144 = dma.vmem_to_hbm [thread:$0]  %s139, 256, %s3, [#allocation4], 128, 128, 8
    $region25: #{decoder_forward.7} parent=1 // pred_fallthru
      _
    // Predicated region
    $region26: #{decoder_forward.7} parent=1 // pred_check
      _
    $region27: #{decoder_forward.7} parent=1 // pred_check_branch
      %146 = sbr.rel (0) target = $region29
    $region28: #{decoder_forward.7} parent=1 // pred_region
      %147 = dma.done [#allocation4], 256
    $region29: #{decoder_forward.7} parent=1 // pred_fallthru
      _
    %148 = vsyncpa [#allocation4], 1

// kernel: decoder_forward.6
$region0: #{decoder_forward.6}
  #allocation0 [shape = 'u32[]', space=smem, size = 0x4, offset = 0x4, fixed_abs, tag = 'smem constant byte address 0x4 - core index']
  #allocation1 [shape = 'u32[144,128]{1,0:T(1,128)}', space=vmem, size = 0x12000, scoped, tag = 'internal scratch']
  #allocation2 [shape = 'f32[2,2,32]{2,1,0:T(2,128)}', space=vmem, size = 0x800, scoped, tag = 'scratch operand']
  %s0 = inlined_call_operand.vmem [shape: f32[2,8,32], index: 0, kind: input, shape index: {}]
  %s1 = inlined_call_operand.vmem [shape: f32[2,8,32], index: 1, kind: input, shape index: {}]
  %s2 = inlined_call_operand.vmem [shape: f32[2,8,32], index: 2, kind: input, shape index: {}]
  %s3 = inlined_call_operand.vmem [shape: f32[2,2,32], index: 3, kind: input, shape index: {}]
  %s4 = inlined_call_operand.vmem [shape: f32[3,32,32], index: 4, kind: input, shape index: {}]
  %s5 = inlined_call_operand.vmem [shape: f32[3,32,32], index: 5, kind: input, shape index: {}]
  %s6 = inlined_call_operand.vmem [shape: f32[3,32,32], index: 6, kind: input, shape index: {}]
  %s7 = inlined_call_operand.vmem [shape: f32[3,1,32], index: 7, kind: input, shape index: {}]
  %s8 = inlined_call_operand.vmem [shape: f32[3,1,32], index: 8, kind: input, shape index: {}]
  %s9 = inlined_call_operand.vmem [shape: f32[3,1,32], index: 9, kind: input, shape index: {}]
  %s10 = inlined_call_operand.vmem [shape: f32[2,8,32], index: 10, kind: output, shape index: {}]
  %s11 = sld [smem:[#allocation0]]
  $region54: #{decoder_forward.6} parent=0
    _
  %s13 = ssub.s32 1, %s11
  %s14 = scalar_select 0, %s13, %s11
  // Predicated region
  $region2: #{decoder_forward.6} parent=0 // pred_check
    _
  $region3: #{decoder_forward.6} parent=0 // pred_check_branch
    %16 = sbr.rel (0) target = $region5
  $region4: #{decoder_forward.6} parent=0 // pred_region
    _
  $region5: #{decoder_forward.6} parent=0 // pred_fallthru
    _
  // Predicated region
  $region6: #{decoder_forward.6} parent=0 // pred_check
    _
  $region7: #{decoder_forward.6} parent=0 // pred_check_branch
    %18 = sbr.rel (0) target = $region9
  $region8: #{decoder_forward.6} parent=0 // pred_region
    _
  $region9: #{decoder_forward.6} parent=0 // pred_fallthru
    _
  // Predicated region
  $region10: #{decoder_forward.6} parent=0 // pred_check
    _
  $region11: #{decoder_forward.6} parent=0 // pred_check_branch
    %20 = sbr.rel (0) target = $region13
  $region12: #{decoder_forward.6} parent=0 // pred_region
    _
  $region13: #{decoder_forward.6} parent=0 // pred_fallthru
    _
  // Predicated region
  $region14: #{decoder_forward.6} parent=0 // pred_check
    _
  $region15: #{decoder_forward.6} parent=0 // pred_check_branch
    %22 = sbr.rel (0) target = $region17
  $region16: #{decoder_forward.6} parent=0 // pred_region
    _
  $region17: #{decoder_forward.6} parent=0 // pred_fallthru
    _
  // Predicated region
  $region18: #{decoder_forward.6} parent=0 // pred_check
    _
  $region19: #{decoder_forward.6} parent=0 // pred_check_branch
    %24 = sbr.rel (0) target = $region21
  $region20: #{decoder_forward.6} parent=0 // pred_region
    _
  $region21: #{decoder_forward.6} parent=0 // pred_fallthru
    _
  // Predicated region
  $region22: #{decoder_forward.6} parent=0 // pred_check
    _
  $region23: #{decoder_forward.6} parent=0 // pred_check_branch
    %26 = sbr.rel (0) target = $region25
  $region24: #{decoder_forward.6} parent=0 // pred_region
    _
  $region25: #{decoder_forward.6} parent=0 // pred_fallthru
    _
  // Predicated region
  $region26: #{decoder_forward.6} parent=0 // pred_check
    _
  $region27: #{decoder_forward.6} parent=0 // pred_check_branch
    %28 = sbr.rel (0) target = $region29
  $region28: #{decoder_forward.6} parent=0 // pred_region
    _
  $region29: #{decoder_forward.6} parent=0 // pred_fallthru
    _
  // Predicated region
  $region30: #{decoder_forward.6} parent=0 // pred_check
    _
  $region31: #{decoder_forward.6} parent=0 // pred_check_branch
    %30 = sbr.rel (0) target = $region33
  $region32: #{decoder_forward.6} parent=0 // pred_region
    _
  $region33: #{decoder_forward.6} parent=0 // pred_fallthru
    _
  // Predicated region
  $region34: #{decoder_forward.6} parent=0 // pred_check
    _
  $region35: #{decoder_forward.6} parent=0 // pred_check_branch
    %32 = sbr.rel (0) target = $region37
  $region36: #{decoder_forward.6} parent=0 // pred_region
    _
  $region37: #{decoder_forward.6} parent=0 // pred_fallthru
    _
  // Predicated region
  $region38: #{decoder_forward.6} parent=0 // pred_check
    _
  $region39: #{decoder_forward.6} parent=0 // pred_check_branch
    %34 = sbr.rel (0) target = $region41
  $region40: #{decoder_forward.6} parent=0 // pred_region
    _
  $region41: #{decoder_forward.6} parent=0 // pred_fallthru
    _
  %p35 = scmp.eq.s32.totalorder 0, 0
  // Predicated region
  $region42: #{decoder_forward.6} parent=0 // pred_check
    %p36 = pneg %p35
  $region43: #{decoder_forward.6} parent=0 // pred_check_branch
    %38 = sbr.rel (%p36) target = $region45
  $region44: #{decoder_forward.6} parent=0 // pred_region
    %v39 = vld [vmem:[%s3] sm:$0x1]
    %v40 = vld [vmem:[%s3 + $0x2] sm:$0x1]
    %v43 = vrot.slane %v40, 7
    %vm44 = vcmask 1041409
    %v45 = vsel %vm44, %v43, %v39
    %vm47 = vcmask 254976
    %48 = vst.msk [vmem:[#allocation2] sm:$0x3] %vm47, %v45
    %v49 = vld [vmem:[%s3 + $0x1] sm:$0x1]
    %v50 = vld [vmem:[%s3 + $0x3] sm:$0x1]
    %v53 = vrot.slane %v50, 7
    %v54 = vsel %vm44, %v53, %v49
    %s56 = scalar_lea.vmem [#allocation2], 2
    %57 = vst.msk [vmem:[%s56] sm:$0x3] %vm47, %v54
  $region45: #{decoder_forward.6} parent=0 // pred_fallthru
    _
  %v58 = vld [vmem:[%s5] sm:$0xff]
  %v59 = vld [vmem:[%s5 + $0x8] sm:$0xff]
  %v60 = vld [vmem:[%s5 + $0x10] sm:$0xff]
  %v61 = vld [vmem:[%s5 + $0x18] sm:$0xff]
  %s62 = scalar_lea.vmem %s5, 32
  %v63 = vld [vmem:[%s62] sm:$0xff]
  %v64 = vld [vmem:[%s62 + $0x8] sm:$0xff]
  %v65 = vld [vmem:[%s62 + $0x10] sm:$0xff]
  %v66 = vld [vmem:[%s62 + $0x18] sm:$0xff]
  %s67 = scalar_lea.vmem %s5, 64
  %v68 = vld [vmem:[%s67] sm:$0xff]
  %v69 = vld [vmem:[%s67 + $0x8] sm:$0xff]
  %v70 = vld [vmem:[%s67 + $0x10] sm:$0xff]
  %v71 = vld [vmem:[%s67 + $0x18] sm:$0xff]
  %v72 = vld [vmem:[%s6] sm:$0xff]
  %v73 = vld [vmem:[%s6 + $0x8] sm:$0xff]
  %v74 = vld [vmem:[%s6 + $0x10] sm:$0xff]
  %v75 = vld [vmem:[%s6 + $0x18] sm:$0xff]
  %s76 = scalar_lea.vmem %s6, 32
  %v77 = vld [vmem:[%s76] sm:$0xff]
  %v78 = vld [vmem:[%s76 + $0x8] sm:$0xff]
  %v79 = vld [vmem:[%s76 + $0x10] sm:$0xff]
  %v80 = vld [vmem:[%s76 + $0x18] sm:$0xff]
  %s81 = scalar_lea.vmem %s6, 64
  %v82 = vld [vmem:[%s81] sm:$0xff]
  %v83 = vld [vmem:[%s81 + $0x8] sm:$0xff]
  %v84 = vld [vmem:[%s81 + $0x10] sm:$0xff]
  %v85 = vld [vmem:[%s81 + $0x18] sm:$0xff]
  %v86 = vld [vmem:[%s8] sm:$0x1]
  %s87 = scalar_lea.vmem %s8, 1
  %v88 = vld [vmem:[%s87] sm:$0x1]
  %s89 = scalar_lea.vmem %s8, 2
  %v90 = vld [vmem:[%s89] sm:$0x1]
  %v91 = vld [vmem:[%s9] sm:$0x1]
  %s92 = scalar_lea.vmem %s9, 1
  %v93 = vld [vmem:[%s92] sm:$0x1]
  %s94 = scalar_lea.vmem %s9, 2
  %v95 = vld [vmem:[%s94] sm:$0x1]
  %v96 = vld [vmem:[%s4] sm:$0xff]
  %v97 = vld [vmem:[%s4 + $0x8] sm:$0xff]
  %v98 = vld [vmem:[%s4 + $0x10] sm:$0xff]
  %v99 = vld [vmem:[%s4 + $0x18] sm:$0xff]
  %s100 = scalar_lea.vmem %s4, 32
  %v101 = vld [vmem:[%s100] sm:$0xff]
  %v102 = vld [vmem:[%s100 + $0x8] sm:$0xff]
  %v103 = vld [vmem:[%s100 + $0x10] sm:$0xff]
  %v104 = vld [vmem:[%s100 + $0x18] sm:$0xff]
  %s105 = scalar_lea.vmem %s4, 64
  %v106 = vld [vmem:[%s105] sm:$0xff]
  %v107 = vld [vmem:[%s105 + $0x8] sm:$0xff]
  %v108 = vld [vmem:[%s105 + $0x10] sm:$0xff]
  %v109 = vld [vmem:[%s105 + $0x18] sm:$0xff]
  %v110 = vld [vmem:[%s7] sm:$0x1]
  %s111 = scalar_lea.vmem %s7, 1
  %v112 = vld [vmem:[%s111] sm:$0x1]
  %s113 = scalar_lea.vmem %s7, 2
  %v114 = vld [vmem:[%s113] sm:$0x1]
  %v115 = vld [vmem:[#allocation2] sm:$0x3]
  %s116 = scalar_lea.vmem [#allocation2], 2
  %v117 = vld [vmem:[%s116] sm:$0x3]
  %v118 = vld [vmem:[%s0] sm:$0x1]
  %v119 = vld [vmem:[%s0 + $0x8] sm:$0x1]
  %v120 = vld [vmem:[%s1] sm:$0x1]
  %v121 = vld [vmem:[%s1 + $0x8] sm:$0x1]
  %v122 = vld [vmem:[%s2] sm:$0x1]
  %v123 = vld [vmem:[%s2 + $0x8] sm:$0x1]
  %v125 = vlaneseq
  %v126 = vshrl.u32 %v125, 7
  %v127 = vsub.s32 0, %v126
  %v128 = vrot.slane %v86, %v127
  %vm130 = vcmask 261120
  %v132 = vsel %vm130, %v115, 0
  %134 = vmatprep.subr.mxu0 0.0
  %135 = vmatpush1.msra.mxu0 0.0
  %136 = vmatprep.subr.mxu0 0.0
  %137 = vmatpush1.msra.mxu0 0.0
  %138 = vmatprep.subr.mxu0 0.0
  %139 = vmatpush1.msra.mxu0 0.0
  %140 = vmatprep.subr.mxu0 0.0
  %141 = vmatpush1.msra.mxu0 0.0
  %142 = vmatprep.subr.mxu0 0.0
  %143 = vmatpush1.msra.mxu0 0.0
  %144 = vmatprep.subr.mxu0 0.0
  %145 = vmatpush1.msra.mxu0 0.0
  %146 = vmatprep.subr.mxu0 0.0
  %147 = vmatpush1.msra.mxu0 0.0
  %148 = vmatprep.subr.mxu0 0.0
  %149 = vmatpush1.msra.mxu0 0.0
  %150 = vmatprep.subr.mxu0 0.0
  %151 = vmatpush1.msra.mxu0 0.0
  %152 = vmatprep.subr.mxu0 0.0
  %153 = vmatpush1.msra.mxu0 0.0
  %154 = vmatprep.subr.mxu0 0.0
  %155 = vmatpush1.msra.mxu0 0.0
  %156 = vmatprep.subr.mxu0 0.0
  %157 = vmatpush1.msra.mxu0 0.0
  %158 = vmatprep.subr.mxu0 0.0
  %159 = vmatpush1.msra.mxu0 %v61
  %160 = vmatprep.subr.mxu0 0.0
  %161 = vmatpush1.msra.mxu0 %v60
  %162 = vmatprep.subr.mxu0 0.0
  %163 = vmatpush1.msra.mxu0 %v59
  %164 = vmatprep.subr.mxu0 0.0
  %165 = vmatpush1.msra.mxu0 %v58
  %166 = vmatprep.subr.mxu0 0.0
  %167 = vmatpush2.msra.mxu0 0.0
  %168 = vmatprep.subr.mxu0 0.0
  %169 = vmatpush2.msra.mxu0 0.0
  %170 = vmatprep.subr.mxu0 0.0
  %171 = vmatpush2.msra.mxu0 0.0
  %172 = vmatprep.subr.mxu0 0.0
  %173 = vmatpush2.msra.mxu0 0.0
  %174 = vmatprep.subr.mxu0 0.0
  %175 = vmatpush2.msra.mxu0 0.0
  %176 = vmatprep.subr.mxu0 0.0
  %177 = vmatpush2.msra.mxu0 0.0
  %178 = vmatprep.subr.mxu0 0.0
  %179 = vmatpush2.msra.mxu0 0.0
  %180 = vmatprep.subr.mxu0 0.0
  %181 = vmatpush2.msra.mxu0 0.0
  %182 = vmatprep.subr.mxu0 0.0
  %183 = vmatpush2.msra.mxu0 0.0
  %184 = vmatprep.subr.mxu0 0.0
  %185 = vmatpush2.msra.mxu0 0.0
  %186 = vmatprep.subr.mxu0 0.0
  %187 = vmatpush2.msra.mxu0 0.0
  %188 = vmatprep.subr.mxu0 0.0
  %189 = vmatpush2.msra.mxu0 0.0
  %190 = vmatprep.subr.mxu0 0.0
  %191 = vmatpush2.msra.mxu0 0.0
  %192 = vmatprep.subr.mxu0 0.0
  %193 = vmatpush2.msra.mxu0 0.0
  %194 = vmatprep.subr.mxu0 0.0
  %195 = vmatpush2.msra.mxu0 0.0
  %196 = vmatprep.subr.mxu0 0.0
  %197 = vmatpush2.msra.mxu0 0.0
  %198 = vmatprep.mubr.f32.mxu0 0.0
  %199 = vmatmul.mubr.f32.gmra.mxu0 %v132
  %v200 = vpop.f32.mrf.mxu0
  %v201 = vadd.f32 %v128, %v200
  %v202 = vpop.f32.mrf.mxu0
  %203 = vdwg.mxu0
  %v205 = vlaneseq
  %v206 = vshrl.u32 %v205, 7
  %v207 = vsub.s32 0, %v206
  %v208 = vrot.slane %v88, %v207
  %210 = vmatprep.subr.mxu0 0.0
  %211 = vmatpush1.msra.mxu0 0.0
  %212 = vmatprep.subr.mxu0 0.0
  %213 = vmatpush1.msra.mxu0 0.0
  %214 = vmatprep.subr.mxu0 0.0
  %215 = vmatpush1.msra.mxu0 0.0
  %216 = vmatprep.subr.mxu0 0.0
  %217 = vmatpush1.msra.mxu0 0.0
  %218 = vmatprep.subr.mxu0 0.0
  %219 = vmatpush1.msra.mxu0 0.0
  %220 = vmatprep.subr.mxu0 0.0
  %221 = vmatpush1.msra.mxu0 0.0
  %222 = vmatprep.subr.mxu0 0.0
  %223 = vmatpush1.msra.mxu0 0.0
  %224 = vmatprep.subr.mxu0 0.0
  %225 = vmatpush1.msra.mxu0 0.0
  %226 = vmatprep.subr.mxu0 0.0
  %227 = vmatpush1.msra.mxu0 0.0
  %228 = vmatprep.subr.mxu0 0.0
  %229 = vmatpush1.msra.mxu0 0.0
  %230 = vmatprep.subr.mxu0 0.0
  %231 = vmatpush1.msra.mxu0 0.0
  %232 = vmatprep.subr.mxu0 0.0
  %233 = vmatpush1.msra.mxu0 0.0
  %234 = vmatprep.subr.mxu0 0.0
  %235 = vmatpush1.msra.mxu0 %v66
  %236 = vmatprep.subr.mxu0 0.0
  %237 = vmatpush1.msra.mxu0 %v65
  %238 = vmatprep.subr.mxu0 0.0
  %239 = vmatpush1.msra.mxu0 %v64
  %240 = vmatprep.subr.mxu0 0.0
  %241 = vmatpush1.msra.mxu0 %v63
  %242 = vmatprep.subr.mxu0 0.0
  %243 = vmatpush2.msra.mxu0 0.0
  %244 = vmatprep.subr.mxu0 0.0
  %245 = vmatpush2.msra.mxu0 0.0
  %246 = vmatprep.subr.mxu0 0.0
  %247 = vmatpush2.msra.mxu0 0.0
  %248 = vmatprep.subr.mxu0 0.0
  %249 = vmatpush2.msra.mxu0 0.0
  %250 = vmatprep.subr.mxu0 0.0
  %251 = vmatpush2.msra.mxu0 0.0
  %252 = vmatprep.subr.mxu0 0.0
  %253 = vmatpush2.msra.mxu0 0.0
  %254 = vmatprep.subr.mxu0 0.0
  %255 = vmatpush2.msra.mxu0 0.0
  %256 = vmatprep.subr.mxu0 0.0
  %257 = vmatpush2.msra.mxu0 0.0
  %258 = vmatprep.subr.mxu0 0.0
  %259 = vmatpush2.msra.mxu0 0.0
  %260 = vmatprep.subr.mxu0 0.0
  %261 = vmatpush2.msra.mxu0 0.0
  %262 = vmatprep.subr.mxu0 0.0
  %263 = vmatpush2.msra.mxu0 0.0
  %264 = vmatprep.subr.mxu0 0.0
  %265 = vmatpush2.msra.mxu0 0.0
  %266 = vmatprep.subr.mxu0 0.0
  %267 = vmatpush2.msra.mxu0 0.0
  %268 = vmatprep.subr.mxu0 0.0
  %269 = vmatpush2.msra.mxu0 0.0
  %270 = vmatprep.subr.mxu0 0.0
  %271 = vmatpush2.msra.mxu0 0.0
  %272 = vmatprep.subr.mxu0 0.0
  %273 = vmatpush2.msra.mxu0 0.0
  %274 = vmatprep.mubr.f32.mxu0 0.0
  %275 = vmatmul.mubr.f32.gmra.mxu0 %v132
  %v276 = vpop.f32.mrf.mxu0
  %v277 = vadd.f32 %v208, %v276
  %v278 = vpop.f32.mrf.mxu0
  %279 = vdwg.mxu0
  %v281 = vlaneseq
  %v282 = vshrl.u32 %v281, 7
  %v283 = vsub.s32 0, %v282
  %v284 = vrot.slane %v90, %v283
  %286 = vmatprep.subr.mxu0 0.0
  %287 = vmatpush1.msra.mxu0 0.0
  %288 = vmatprep.subr.mxu0 0.0
  %289 = vmatpush1.msra.mxu0 0.0
  %290 = vmatprep.subr.mxu0 0.0
  %291 = vmatpush1.msra.mxu0 0.0
  %292 = vmatprep.subr.mxu0 0.0
  %293 = vmatpush1.msra.mxu0 0.0
  %294 = vmatprep.subr.mxu0 0.0
  %295 = vmatpush1.msra.mxu0 0.0
  %296 = vmatprep.subr.mxu0 0.0
  %297 = vmatpush1.msra.mxu0 0.0
  %298 = vmatprep.subr.mxu0 0.0
  %299 = vmatpush1.msra.mxu0 0.0
  %300 = vmatprep.subr.mxu0 0.0
  %301 = vmatpush1.msra.mxu0 0.0
  %302 = vmatprep.subr.mxu0 0.0
  %303 = vmatpush1.msra.mxu0 0.0
  %304 = vmatprep.subr.mxu0 0.0
  %305 = vmatpush1.msra.mxu0 0.0
  %306 = vmatprep.subr.mxu0 0.0
  %307 = vmatpush1.msra.mxu0 0.0
  %308 = vmatprep.subr.mxu0 0.0
  %309 = vmatpush1.msra.mxu0 0.0
  %310 = vmatprep.subr.mxu0 0.0
  %311 = vmatpush1.msra.mxu0 %v71
  %312 = vmatprep.subr.mxu0 0.0
  %313 = vmatpush1.msra.mxu0 %v70
  %314 = vmatprep.subr.mxu0 0.0
  %315 = vmatpush1.msra.mxu0 %v69
  %316 = vmatprep.subr.mxu0 0.0
  %317 = vmatpush1.msra.mxu0 %v68
  %318 = vmatprep.subr.mxu0 0.0
  %319 = vmatpush2.msra.mxu0 0.0
  %320 = vmatprep.subr.mxu0 0.0
  %321 = vmatpush2.msra.mxu0 0.0
  %322 = vmatprep.subr.mxu0 0.0
  %323 = vmatpush2.msra.mxu0 0.0
  %324 = vmatprep.subr.mxu0 0.0
  %325 = vmatpush2.msra.mxu0 0.0
  %326 = vmatprep.subr.mxu0 0.0
  %327 = vmatpush2.msra.mxu0 0.0
  %328 = vmatprep.subr.mxu0 0.0
  %329 = vmatpush2.msra.mxu0 0.0
  %330 = vmatprep.subr.mxu0 0.0
  %331 = vmatpush2.msra.mxu0 0.0
  %332 = vmatprep.subr.mxu0 0.0
  %333 = vmatpush2.msra.mxu0 0.0
  %334 = vmatprep.subr.mxu0 0.0
  %335 = vmatpush2.msra.mxu0 0.0
  %336 = vmatprep.subr.mxu0 0.0
  %337 = vmatpush2.msra.mxu0 0.0
  %338 = vmatprep.subr.mxu0 0.0
  %339 = vmatpush2.msra.mxu0 0.0
  %340 = vmatprep.subr.mxu0 0.0
  %341 = vmatpush2.msra.mxu0 0.0
  %342 = vmatprep.subr.mxu0 0.0
  %343 = vmatpush2.msra.mxu0 0.0
  %344 = vmatprep.subr.mxu0 0.0
  %345 = vmatpush2.msra.mxu0 0.0
  %346 = vmatprep.subr.mxu0 0.0
  %347 = vmatpush2.msra.mxu0 0.0
  %348 = vmatprep.subr.mxu0 0.0
  %349 = vmatpush2.msra.mxu0 0.0
  %350 = vmatprep.mubr.f32.mxu0 0.0
  %351 = vmatmul.mubr.f32.gmra.mxu0 %v132
  %v352 = vpop.f32.mrf.mxu0
  %v353 = vadd.f32 %v284, %v352
  %v354 = vpop.f32.mrf.mxu0
  %355 = vdwg.mxu0
  %v357 = vrot.slane %v201, 1
  %v360 = vadd.f32 %v118, %v201
  %v361 = vadd.f32 %v119, %v357
  %v362 = vxor.u32 %v360, 2147483648
  %v363 = vxor.u32 %v361, 2147483648
  %v364 = vmul.f32 %v362, 1.442695
  %v365 = vpow.pop %v364
  %v366 = vmul.f32 %v363, 1.442695
  %v367 = vpow.pop %v366
  %v368 = vadd.f32 %v365, 1.0
  %v369 = vadd.f32 %v367, 1.0
  %v370 = vrcp.pop %v368
  %v371 = vmul.f32 1.0, %v370
  %v372 = vrcp.pop %v369
  %v373 = vmul.f32 1.0, %v372
  %v375 = vrot.slane %v277, 1
  %v378 = vadd.f32 %v120, %v277
  %v379 = vadd.f32 %v121, %v375
  %v380 = vxor.u32 %v378, 2147483648
  %v381 = vxor.u32 %v379, 2147483648
  %v382 = vmul.f32 %v380, 1.442695
  %v383 = vpow.pop %v382
  %v384 = vmul.f32 %v381, 1.442695
  %v385 = vpow.pop %v384
  %v386 = vadd.f32 %v383, 1.0
  %v387 = vadd.f32 %v385, 1.0
  %v388 = vrcp.pop %v386
  %v389 = vmul.f32 1.0, %v388
  %v390 = vrcp.pop %v387
  %v391 = vmul.f32 1.0, %v390
  %v393 = vrot.slane %v353, 1
  %v396 = vmul.f32 %v371, %v353
  %v397 = vmul.f32 %v373, %v393
  %v398 = vadd.f32 %v122, %v396
  %v399 = vadd.f32 %v123, %v397
  %v400 = vtanh.pop %v398
  %v401 = vtanh.pop %v399
  %v402 = vsub.f32 1.0, %v389
  %v403 = vsub.f32 1.0, %v391
  %v404 = vmul.f32 %v402, %v400
  %v405 = vmul.f32 %v403, %v401
  %v406 = vrot.slane %v115, 1
  %v409 = vmul.f32 %v389, %v115
  %v410 = vmul.f32 %v391, %v406
  %v411 = vadd.f32 %v404, %v409
  %v412 = vadd.f32 %v405, %v410
  %v414 = vlaneseq
  %v415 = vshrl.u32 %v414, 7
  %v416 = vsub.s32 0, %v415
  %v417 = vrot.slane %v110, %v416
  %v421 = vrot.slane %v412, 7
  %vm422 = vcmask 1041409
  %v423 = vsel %vm422, %v421, %v411
  %v424 = vsel %vm130, %v423, 0
  %426 = vmatprep.subr.mxu0 0.0
  %427 = vmatpush1.msra.mxu0 0.0
  %428 = vmatprep.subr.mxu0 0.0
  %429 = vmatpush1.msra.mxu0 0.0
  %430 = vmatprep.subr.mxu0 0.0
  %431 = vmatpush1.msra.mxu0 0.0
  %432 = vmatprep.subr.mxu0 0.0
  %433 = vmatpush1.msra.mxu0 0.0
  %434 = vmatprep.subr.mxu0 0.0
  %435 = vmatpush1.msra.mxu0 0.0
  %436 = vmatprep.subr.mxu0 0.0
  %437 = vmatpush1.msra.mxu0 0.0
  %438 = vmatprep.subr.mxu0 0.0
  %439 = vmatpush1.msra.mxu0 0.0
  %440 = vmatprep.subr.mxu0 0.0
  %441 = vmatpush1.msra.mxu0 0.0
  %442 = vmatprep.subr.mxu0 0.0
  %443 = vmatpush1.msra.mxu0 0.0
  %444 = vmatprep.subr.mxu0 0.0
  %445 = vmatpush1.msra.mxu0 0.0
  %446 = vmatprep.subr.mxu0 0.0
  %447 = vmatpush1.msra.mxu0 0.0
  %448 = vmatprep.subr.mxu0 0.0
  %449 = vmatpush1.msra.mxu0 0.0
  %450 = vmatprep.subr.mxu0 0.0
  %451 = vmatpush1.msra.mxu0 %v99
  %452 = vmatprep.subr.mxu0 0.0
  %453 = vmatpush1.msra.mxu0 %v98
  %454 = vmatprep.subr.mxu0 0.0
  %455 = vmatpush1.msra.mxu0 %v97
  %456 = vmatprep.subr.mxu0 0.0
  %457 = vmatpush1.msra.mxu0 %v96
  %458 = vmatprep.subr.mxu0 0.0
  %459 = vmatpush2.msra.mxu0 0.0
  %460 = vmatprep.subr.mxu0 0.0
  %461 = vmatpush2.msra.mxu0 0.0
  %462 = vmatprep.subr.mxu0 0.0
  %463 = vmatpush2.msra.mxu0 0.0
  %464 = vmatprep.subr.mxu0 0.0
  %465 = vmatpush2.msra.mxu0 0.0
  %466 = vmatprep.subr.mxu0 0.0
  %467 = vmatpush2.msra.mxu0 0.0
  %468 = vmatprep.subr.mxu0 0.0
  %469 = vmatpush2.msra.mxu0 0.0
  %470 = vmatprep.subr.mxu0 0.0
  %471 = vmatpush2.msra.mxu0 0.0
  %472 = vmatprep.subr.mxu0 0.0
  %473 = vmatpush2.msra.mxu0 0.0
  %474 = vmatprep.subr.mxu0 0.0
  %475 = vmatpush2.msra.mxu0 0.0
  %476 = vmatprep.subr.mxu0 0.0
  %477 = vmatpush2.msra.mxu0 0.0
  %478 = vmatprep.subr.mxu0 0.0
  %479 = vmatpush2.msra.mxu0 0.0
  %480 = vmatprep.subr.mxu0 0.0
  %481 = vmatpush2.msra.mxu0 0.0
  %482 = vmatprep.subr.mxu0 0.0
  %483 = vmatpush2.msra.mxu0 0.0
  %484 = vmatprep.subr.mxu0 0.0
  %485 = vmatpush2.msra.mxu0 0.0
  %486 = vmatprep.subr.mxu0 0.0
  %487 = vmatpush2.msra.mxu0 0.0
  %488 = vmatprep.subr.mxu0 0.0
  %489 = vmatpush2.msra.mxu0 0.0
  %490 = vmatprep.mubr.f32.mxu0 0.0
  %491 = vmatmul.mubr.f32.gmra.mxu0 %v424
  %v492 = vpop.f32.mrf.mxu0
  %v493 = vadd.f32 %v417, %v492
  %v494 = vpop.f32.mrf.mxu0
  %495 = vdwg.mxu0
  %v497 = vlaneseq
  %v498 = vshrl.u32 %v497, 7
  %v499 = vsub.s32 0, %v498
  %v500 = vrot.slane %v112, %v499
  %502 = vmatprep.subr.mxu0 0.0
  %503 = vmatpush1.msra.mxu0 0.0
  %504 = vmatprep.subr.mxu0 0.0
  %505 = vmatpush1.msra.mxu0 0.0
  %506 = vmatprep.subr.mxu0 0.0
  %507 = vmatpush1.msra.mxu0 0.0
  %508 = vmatprep.subr.mxu0 0.0
  %509 = vmatpush1.msra.mxu0 0.0
  %510 = vmatprep.subr.mxu0 0.0
  %511 = vmatpush1.msra.mxu0 0.0
  %512 = vmatprep.subr.mxu0 0.0
  %513 = vmatpush1.msra.mxu0 0.0
  %514 = vmatprep.subr.mxu0 0.0
  %515 = vmatpush1.msra.mxu0 0.0
  %516 = vmatprep.subr.mxu0 0.0
  %517 = vmatpush1.msra.mxu0 0.0
  %518 = vmatprep.subr.mxu0 0.0
  %519 = vmatpush1.msra.mxu0 0.0
  %520 = vmatprep.subr.mxu0 0.0
  %521 = vmatpush1.msra.mxu0 0.0
  %522 = vmatprep.subr.mxu0 0.0
  %523 = vmatpush1.msra.mxu0 0.0
  %524 = vmatprep.subr.mxu0 0.0
  %525 = vmatpush1.msra.mxu0 0.0
  %526 = vmatprep.subr.mxu0 0.0
  %527 = vmatpush1.msra.mxu0 %v104
  %528 = vmatprep.subr.mxu0 0.0
  %529 = vmatpush1.msra.mxu0 %v103
  %530 = vmatprep.subr.mxu0 0.0
  %531 = vmatpush1.msra.mxu0 %v102
  %532 = vmatprep.subr.mxu0 0.0
  %533 = vmatpush1.msra.mxu0 %v101
  %534 = vmatprep.subr.mxu0 0.0
  %535 = vmatpush2.msra.mxu0 0.0
  %536 = vmatprep.subr.mxu0 0.0
  %537 = vmatpush2.msra.mxu0 0.0
  %538 = vmatprep.subr.mxu0 0.0
  %539 = vmatpush2.msra.mxu0 0.0
  %540 = vmatprep.subr.mxu0 0.0
  %541 = vmatpush2.msra.mxu0 0.0
  %542 = vmatprep.subr.mxu0 0.0
  %543 = vmatpush2.msra.mxu0 0.0
  %544 = vmatprep.subr.mxu0 0.0
  %545 = vmatpush2.msra.mxu0 0.0
  %546 = vmatprep.subr.mxu0 0.0
  %547 = vmatpush2.msra.mxu0 0.0
  %548 = vmatprep.subr.mxu0 0.0
  %549 = vmatpush2.msra.mxu0 0.0
  %550 = vmatprep.subr.mxu0 0.0
  %551 = vmatpush2.msra.mxu0 0.0
  %552 = vmatprep.subr.mxu0 0.0
  %553 = vmatpush2.msra.mxu0 0.0
  %554 = vmatprep.subr.mxu0 0.0
  %555 = vmatpush2.msra.mxu0 0.0
  %556 = vmatprep.subr.mxu0 0.0
  %557 = vmatpush2.msra.mxu0 0.0
  %558 = vmatprep.subr.mxu0 0.0
  %559 = vmatpush2.msra.mxu0 0.0
  %560 = vmatprep.subr.mxu0 0.0
  %561 = vmatpush2.msra.mxu0 0.0
  %562 = vmatprep.subr.mxu0 0.0
  %563 = vmatpush2.msra.mxu0 0.0
  %564 = vmatprep.subr.mxu0 0.0
  %565 = vmatpush2.msra.mxu0 0.0
  %566 = vmatprep.mubr.f32.mxu0 0.0
  %567 = vmatmul.mubr.f32.gmra.mxu0 %v424
  %v568 = vpop.f32.mrf.mxu0
  %v569 = vadd.f32 %v500, %v568
  %v570 = vpop.f32.mrf.mxu0
  %571 = vdwg.mxu0
  %v573 = vlaneseq
  %v574 = vshrl.u32 %v573, 7
  %v575 = vsub.s32 0, %v574
  %v576 = vrot.slane %v114, %v575
  %578 = vmatprep.subr.mxu0 0.0
  %579 = vmatpush1.msra.mxu0 0.0
  %580 = vmatprep.subr.mxu0 0.0
  %581 = vmatpush1.msra.mxu0 0.0
  %582 = vmatprep.subr.mxu0 0.0
  %583 = vmatpush1.msra.mxu0 0.0
  %584 = vmatprep.subr.mxu0 0.0
  %585 = vmatpush1.msra.mxu0 0.0
  %586 = vmatprep.subr.mxu0 0.0
  %587 = vmatpush1.msra.mxu0 0.0
  %588 = vmatprep.subr.mxu0 0.0
  %589 = vmatpush1.msra.mxu0 0.0
  %590 = vmatprep.subr.mxu0 0.0
  %591 = vmatpush1.msra.mxu0 0.0
  %592 = vmatprep.subr.mxu0 0.0
  %593 = vmatpush1.msra.mxu0 0.0
  %594 = vmatprep.subr.mxu0 0.0
  %595 = vmatpush1.msra.mxu0 0.0
  %596 = vmatprep.subr.mxu0 0.0
  %597 = vmatpush1.msra.mxu0 0.0
  %598 = vmatprep.subr.mxu0 0.0
  %599 = vmatpush1.msra.mxu0 0.0
  %600 = vmatprep.subr.mxu0 0.0
  %601 = vmatpush1.msra.mxu0 0.0
  %602 = vmatprep.subr.mxu0 0.0
  %603 = vmatpush1.msra.mxu0 %v109
  %604 = vmatprep.subr.mxu0 0.0
  %605 = vmatpush1.msra.mxu0 %v108
  %606 = vmatprep.subr.mxu0 0.0
  %607 = vmatpush1.msra.mxu0 %v107
  %608 = vmatprep.subr.mxu0 0.0
  %609 = vmatpush1.msra.mxu0 %v106
  %610 = vmatprep.subr.mxu0 0.0
  %611 = vmatpush2.msra.mxu0 0.0
  %612 = vmatprep.subr.mxu0 0.0
  %613 = vmatpush2.msra.mxu0 0.0
  %614 = vmatprep.subr.mxu0 0.0
  %615 = vmatpush2.msra.mxu0 0.0
  %616 = vmatprep.subr.mxu0 0.0
  %617 = vmatpush2.msra.mxu0 0.0
  %618 = vmatprep.subr.mxu0 0.0
  %619 = vmatpush2.msra.mxu0 0.0
  %620 = vmatprep.subr.mxu0 0.0
  %621 = vmatpush2.msra.mxu0 0.0
  %622 = vmatprep.subr.mxu0 0.0
  %623 = vmatpush2.msra.mxu0 0.0
  %624 = vmatprep.subr.mxu0 0.0
  %625 = vmatpush2.msra.mxu0 0.0
  %626 = vmatprep.subr.mxu0 0.0
  %627 = vmatpush2.msra.mxu0 0.0
  %628 = vmatprep.subr.mxu0 0.0
  %629 = vmatpush2.msra.mxu0 0.0
  %630 = vmatprep.subr.mxu0 0.0
  %631 = vmatpush2.msra.mxu0 0.0
  %632 = vmatprep.subr.mxu0 0.0
  %633 = vmatpush2.msra.mxu0 0.0
  %634 = vmatprep.subr.mxu0 0.0
  %635 = vmatpush2.msra.mxu0 0.0
  %636 = vmatprep.subr.mxu0 0.0
  %637 = vmatpush2.msra.mxu0 0.0
  %638 = vmatprep.subr.mxu0 0.0
  %639 = vmatpush2.msra.mxu0 0.0
  %640 = vmatprep.subr.mxu0 0.0
  %641 = vmatpush2.msra.mxu0 0.0
  %642 = vmatprep.mubr.f32.mxu0 0.0
  %643 = vmatmul.mubr.f32.gmra.mxu0 %v424
  %v644 = vpop.f32.mrf.mxu0
  %v645 = vadd.f32 %v576, %v644
  %v646 = vpop.f32.mrf.mxu0
  %647 = vdwg.mxu0
  %v649 = vlaneseq
  %v650 = vshrl.u32 %v649, 7
  %v651 = vsub.s32 0, %v650
  %v652 = vrot.slane %v91, %v651
  %v655 = vsel %vm130, %v117, 0
  %657 = vmatprep.subr.mxu0 0.0
  %658 = vmatpush1.msra.mxu0 0.0
  %659 = vmatprep.subr.mxu0 0.0
  %660 = vmatpush1.msra.mxu0 0.0
  %661 = vmatprep.subr.mxu0 0.0
  %662 = vmatpush1.msra.mxu0 0.0
  %663 = vmatprep.subr.mxu0 0.0
  %664 = vmatpush1.msra.mxu0 0.0
  %665 = vmatprep.subr.mxu0 0.0
  %666 = vmatpush1.msra.mxu0 0.0
  %667 = vmatprep.subr.mxu0 0.0
  %668 = vmatpush1.msra.mxu0 0.0
  %669 = vmatprep.subr.mxu0 0.0
  %670 = vmatpush1.msra.mxu0 0.0
  %671 = vmatprep.subr.mxu0 0.0
  %672 = vmatpush1.msra.mxu0 0.0
  %673 = vmatprep.subr.mxu0 0.0
  %674 = vmatpush1.msra.mxu0 0.0
  %675 = vmatprep.subr.mxu0 0.0
  %676 = vmatpush1.msra.mxu0 0.0
  %677 = vmatprep.subr.mxu0 0.0
  %678 = vmatpush1.msra.mxu0 0.0
  %679 = vmatprep.subr.mxu0 0.0
  %680 = vmatpush1.msra.mxu0 0.0
  %681 = vmatprep.subr.mxu0 0.0
  %682 = vmatpush1.msra.mxu0 %v75
  %683 = vmatprep.subr.mxu0 0.0
  %684 = vmatpush1.msra.mxu0 %v74
  %685 = vmatprep.subr.mxu0 0.0
  %686 = vmatpush1.msra.mxu0 %v73
  %687 = vmatprep.subr.mxu0 0.0
  %688 = vmatpush1.msra.mxu0 %v72
  %689 = vmatprep.subr.mxu0 0.0
  %690 = vmatpush2.msra.mxu0 0.0
  %691 = vmatprep.subr.mxu0 0.0
  %692 = vmatpush2.msra.mxu0 0.0
  %693 = vmatprep.subr.mxu0 0.0
  %694 = vmatpush2.msra.mxu0 0.0
  %695 = vmatprep.subr.mxu0 0.0
  %696 = vmatpush2.msra.mxu0 0.0
  %697 = vmatprep.subr.mxu0 0.0
  %698 = vmatpush2.msra.mxu0 0.0
  %699 = vmatprep.subr.mxu0 0.0
  %700 = vmatpush2.msra.mxu0 0.0
  %701 = vmatprep.subr.mxu0 0.0
  %702 = vmatpush2.msra.mxu0 0.0
  %703 = vmatprep.subr.mxu0 0.0
  %704 = vmatpush2.msra.mxu0 0.0
  %705 = vmatprep.subr.mxu0 0.0
  %706 = vmatpush2.msra.mxu0 0.0
  %707 = vmatprep.subr.mxu0 0.0
  %708 = vmatpush2.msra.mxu0 0.0
  %709 = vmatprep.subr.mxu0 0.0
  %710 = vmatpush2.msra.mxu0 0.0
  %711 = vmatprep.subr.mxu0 0.0
  %712 = vmatpush2.msra.mxu0 0.0
  %713 = vmatprep.subr.mxu0 0.0
  %714 = vmatpush2.msra.mxu0 0.0
  %715 = vmatprep.subr.mxu0 0.0
  %716 = vmatpush2.msra.mxu0 0.0
  %717 = vmatprep.subr.mxu0 0.0
  %718 = vmatpush2.msra.mxu0 0.0
  %719 = vmatprep.subr.mxu0 0.0
  %720 = vmatpush2.msra.mxu0 0.0
  %721 = vmatprep.mubr.f32.mxu0 0.0
  %722 = vmatmul.mubr.f32.gmra.mxu0 %v655
  %v723 = vpop.f32.mrf.mxu0
  %v724 = vadd.f32 %v652, %v723
  %v725 = vpop.f32.mrf.mxu0
  %726 = vdwg.mxu0
  %v728 = vlaneseq
  %v729 = vshrl.u32 %v728, 7
  %v730 = vsub.s32 0, %v729
  %v731 = vrot.slane %v93, %v730
  %733 = vmatprep.subr.mxu0 0.0
  %734 = vmatpush1.msra.mxu0 0.0
  %735 = vmatprep.subr.mxu0 0.0
  %736 = vmatpush1.msra.mxu0 0.0
  %737 = vmatprep.subr.mxu0 0.0
  %738 = vmatpush1.msra.mxu0 0.0
  %739 = vmatprep.subr.mxu0 0.0
  %740 = vmatpush1.msra.mxu0 0.0
  %741 = vmatprep.subr.mxu0 0.0
  %742 = vmatpush1.msra.mxu0 0.0
  %743 = vmatprep.subr.mxu0 0.0
  %744 = vmatpush1.msra.mxu0 0.0
  %745 = vmatprep.subr.mxu0 0.0
  %746 = vmatpush1.msra.mxu0 0.0
  %747 = vmatprep.subr.mxu0 0.0
  %748 = vmatpush1.msra.mxu0 0.0
  %749 = vmatprep.subr.mxu0 0.0
  %750 = vmatpush1.msra.mxu0 0.0
  %751 = vmatprep.subr.mxu0 0.0
  %752 = vmatpush1.msra.mxu0 0.0
  %753 = vmatprep.subr.mxu0 0.0
  %754 = vmatpush1.msra.mxu0 0.0
  %755 = vmatprep.subr.mxu0 0.0
  %756 = vmatpush1.msra.mxu0 0.0
  %757 = vmatprep.subr.mxu0 0.0
  %758 = vmatpush1.msra.mxu0 %v80
  %759 = vmatprep.subr.mxu0 0.0
  %760 = vmatpush1.msra.mxu0 %v79
  %761 = vmatprep.subr.mxu0 0.0
  %762 = vmatpush1.msra.mxu0 %v78
  %763 = vmatprep.subr.mxu0 0.0
  %764 = vmatpush1.msra.mxu0 %v77
  %765 = vmatprep.subr.mxu0 0.0
  %766 = vmatpush2.msra.mxu0 0.0
  %767 = vmatprep.subr.mxu0 0.0
  %768 = vmatpush2.msra.mxu0 0.0
  %769 = vmatprep.subr.mxu0 0.0
  %770 = vmatpush2.msra.mxu0 0.0
  %771 = vmatprep.subr.mxu0 0.0
  %772 = vmatpush2.msra.mxu0 0.0
  %773 = vmatprep.subr.mxu0 0.0
  %774 = vmatpush2.msra.mxu0 0.0
  %775 = vmatprep.subr.mxu0 0.0
  %776 = vmatpush2.msra.mxu0 0.0
  %777 = vmatprep.subr.mxu0 0.0
  %778 = vmatpush2.msra.mxu0 0.0
  %779 = vmatprep.subr.mxu0 0.0
  %780 = vmatpush2.msra.mxu0 0.0
  %781 = vmatprep.subr.mxu0 0.0
  %782 = vmatpush2.msra.mxu0 0.0
  %783 = vmatprep.subr.mxu0 0.0
  %784 = vmatpush2.msra.mxu0 0.0
  %785 = vmatprep.subr.mxu0 0.0
  %786 = vmatpush2.msra.mxu0 0.0
  %787 = vmatprep.subr.mxu0 0.0
  %788 = vmatpush2.msra.mxu0 0.0
  %789 = vmatprep.subr.mxu0 0.0
  %790 = vmatpush2.msra.mxu0 0.0
  %791 = vmatprep.subr.mxu0 0.0
  %792 = vmatpush2.msra.mxu0 0.0
  %793 = vmatprep.subr.mxu0 0.0
  %794 = vmatpush2.msra.mxu0 0.0
  %795 = vmatprep.subr.mxu0 0.0
  %796 = vmatpush2.msra.mxu0 0.0
  %797 = vmatprep.mubr.f32.mxu0 0.0
  %798 = vmatmul.mubr.f32.gmra.mxu0 %v655
  %v799 = vpop.f32.mrf.mxu0
  %v800 = vadd.f32 %v731, %v799
  %v801 = vpop.f32.mrf.mxu0
  %802 = vdwg.mxu0
  %v804 = vlaneseq
  %v805 = vshrl.u32 %v804, 7
  %v806 = vsub.s32 0, %v805
  %v807 = vrot.slane %v95, %v806
  %809 = vmatprep.subr.mxu0 0.0
  %810 = vmatpush1.msra.mxu0 0.0
  %811 = vmatprep.subr.mxu0 0.0
  %812 = vmatpush1.msra.mxu0 0.0
  %813 = vmatprep.subr.mxu0 0.0
  %814 = vmatpush1.msra.mxu0 0.0
  %815 = vmatprep.subr.mxu0 0.0
  %816 = vmatpush1.msra.mxu0 0.0
  %817 = vmatprep.subr.mxu0 0.0
  %818 = vmatpush1.msra.mxu0 0.0
  %819 = vmatprep.subr.mxu0 0.0
  %820 = vmatpush1.msra.mxu0 0.0
  %821 = vmatprep.subr.mxu0 0.0
  %822 = vmatpush1.msra.mxu0 0.0
  %823 = vmatprep.subr.mxu0 0.0
  %824 = vmatpush1.msra.mxu0 0.0
  %825 = vmatprep.subr.mxu0 0.0
  %826 = vmatpush1.msra.mxu0 0.0
  %827 = vmatprep.subr.mxu0 0.0
  %828 = vmatpush1.msra.mxu0 0.0
  %829 = vmatprep.subr.mxu0 0.0
  %830 = vmatpush1.msra.mxu0 0.0
  %831 = vmatprep.subr.mxu0 0.0
  %832 = vmatpush1.msra.mxu0 0.0
  %833 = vmatprep.subr.mxu0 0.0
  %834 = vmatpush1.msra.mxu0 %v85
  %835 = vmatprep.subr.mxu0 0.0
  %836 = vmatpush1.msra.mxu0 %v84
  %837 = vmatprep.subr.mxu0 0.0
  %838 = vmatpush1.msra.mxu0 %v83
  %839 = vmatprep.subr.mxu0 0.0
  %840 = vmatpush1.msra.mxu0 %v82
  %841 = vmatprep.subr.mxu0 0.0
  %842 = vmatpush2.msra.mxu0 0.0
  %843 = vmatprep.subr.mxu0 0.0
  %844 = vmatpush2.msra.mxu0 0.0
  %845 = vmatprep.subr.mxu0 0.0
  %846 = vmatpush2.msra.mxu0 0.0
  %847 = vmatprep.subr.mxu0 0.0
  %848 = vmatpush2.msra.mxu0 0.0
  %849 = vmatprep.subr.mxu0 0.0
  %850 = vmatpush2.msra.mxu0 0.0
  %851 = vmatprep.subr.mxu0 0.0
  %852 = vmatpush2.msra.mxu0 0.0
  %853 = vmatprep.subr.mxu0 0.0
  %854 = vmatpush2.msra.mxu0 0.0
  %855 = vmatprep.subr.mxu0 0.0
  %856 = vmatpush2.msra.mxu0 0.0
  %857 = vmatprep.subr.mxu0 0.0
  %858 = vmatpush2.msra.mxu0 0.0
  %859 = vmatprep.subr.mxu0 0.0
  %860 = vmatpush2.msra.mxu0 0.0
  %861 = vmatprep.subr.mxu0 0.0
  %862 = vmatpush2.msra.mxu0 0.0
  %863 = vmatprep.subr.mxu0 0.0
  %864 = vmatpush2.msra.mxu0 0.0
  %865 = vmatprep.subr.mxu0 0.0
  %866 = vmatpush2.msra.mxu0 0.0
  %867 = vmatprep.subr.mxu0 0.0
  %868 = vmatpush2.msra.mxu0 0.0
  %869 = vmatprep.subr.mxu0 0.0
  %870 = vmatpush2.msra.mxu0 0.0
  %871 = vmatprep.subr.mxu0 0.0
  %872 = vmatpush2.msra.mxu0 0.0
  %873 = vmatprep.mubr.f32.mxu0 0.0
  %874 = vmatmul.mubr.f32.gmra.mxu0 %v655
  %v875 = vpop.f32.mrf.mxu0
  %v876 = vadd.f32 %v807, %v875
  %v877 = vpop.f32.mrf.mxu0
  %878 = vdwg.mxu0
  %v879 = vadd.f32 %v493, %v724
  %v880 = vxor.u32 %v879, 2147483648
  %v881 = vmul.f32 %v880, 1.442695
  %v882 = vpow.pop %v881
  %v883 = vadd.f32 %v882, 1.0
  %v884 = vrcp.pop %v883
  %v885 = vmul.f32 1.0, %v884
  %v886 = vadd.f32 %v569, %v800
  %v887 = vxor.u32 %v886, 2147483648
  %v888 = vmul.f32 %v887, 1.442695
  %v889 = vpow.pop %v888
  %v890 = vadd.f32 %v889, 1.0
  %v891 = vrcp.pop %v890
  %v892 = vmul.f32 1.0, %v891
  %v893 = vmul.f32 %v885, %v876
  %v894 = vadd.f32 %v645, %v893
  %v895 = vtanh.pop %v894
  %v896 = vsub.f32 1.0, %v892
  %v897 = vmul.f32 %v896, %v895
  %v898 = vmul.f32 %v892, %v117
  %v899 = vadd.f32 %v897, %v898
  %v902 = vunpack.c.l.s4 1966171168
  %v903 = vunpack.c.0.s8 %v902
  %v904 = vlaneseq
  %v905 = vshrl.u32 %v904, 7
  %v906 = vsub.s32 %v903, %v905
  %v907 = vrot.slane %v899, %v906
  %v908 = vcombine.high %v907, %v907
  %v910 = vunpack.c.l.s4 1966171168
  %v911 = vunpack.c.0.s8 %v910
  %v912 = vlaneseq
  %v913 = vshrl.u32 %v912, 7
  %v914 = vsub.s32 %v911, %v913
  %v915 = vrot.slane %v907, %v914
  %v917 = vunpack.c.l.s4 1966171168
  %v918 = vunpack.c.0.s8 %v917
  %v919 = vlaneseq
  %v920 = vshrl.u32 %v919, 7
  %v921 = vsub.s32 %v918, %v920
  %v922 = vrot.slane %v908, %v921
  %vm925 = vcmask 253952
  %926 = vst.msk [vmem:[%s10] sm:$0x1] %vm925, %v915
  %927 = vst.msk [vmem:[%s10 + $0x8] sm:$0x1] %vm925, %v922
  %v928 = vld [vmem:[%s0 + $0x1] sm:$0x1]
  %v929 = vld [vmem:[%s0 + $0x9] sm:$0x1]
  %v930 = vld [vmem:[%s1 + $0x1] sm:$0x1]
  %v931 = vld [vmem:[%s1 + $0x9] sm:$0x1]
  %v932 = vld [vmem:[%s2 + $0x1] sm:$0x1]
  %v933 = vld [vmem:[%s2 + $0x9] sm:$0x1]
  %934 = vmatprep.subr.mxu0 0.0
  %935 = vmatpush1.msra.mxu0 0.0
  %936 = vmatprep.subr.mxu0 0.0
  %937 = vmatpush1.msra.mxu0 0.0
  %938 = vmatprep.subr.mxu0 0.0
  %939 = vmatpush1.msra.mxu0 0.0
  %940 = vmatprep.subr.mxu0 0.0
  %941 = vmatpush1.msra.mxu0 0.0
  %942 = vmatprep.subr.mxu0 0.0
  %943 = vmatpush1.msra.mxu0 0.0
  %944 = vmatprep.subr.mxu0 0.0
  %945 = vmatpush1.msra.mxu0 0.0
  %946 = vmatprep.subr.mxu0 0.0
  %947 = vmatpush1.msra.mxu0 0.0
  %948 = vmatprep.subr.mxu0 0.0
  %949 = vmatpush1.msra.mxu0 0.0
  %950 = vmatprep.subr.mxu0 0.0
  %951 = vmatpush1.msra.mxu0 0.0
  %952 = vmatprep.subr.mxu0 0.0
  %953 = vmatpush1.msra.mxu0 0.0
  %954 = vmatprep.subr.mxu0 0.0
  %955 = vmatpush1.msra.mxu0 0.0
  %956 = vmatprep.subr.mxu0 0.0
  %957 = vmatpush1.msra.mxu0 0.0
  %958 = vmatprep.subr.mxu0 0.0
  %959 = vmatpush1.msra.mxu0 %v61
  %960 = vmatprep.subr.mxu0 0.0
  %961 = vmatpush1.msra.mxu0 %v60
  %962 = vmatprep.subr.mxu0 0.0
  %963 = vmatpush1.msra.mxu0 %v59
  %964 = vmatprep.subr.mxu0 0.0
  %965 = vmatpush1.msra.mxu0 %v58
  %966 = vmatprep.subr.mxu0 0.0
  %967 = vmatpush2.msra.mxu0 0.0
  %968 = vmatprep.subr.mxu0 0.0
  %969 = vmatpush2.msra.mxu0 0.0
  %970 = vmatprep.subr.mxu0 0.0
  %971 = vmatpush2.msra.mxu0 0.0
  %972 = vmatprep.subr.mxu0 0.0
  %973 = vmatpush2.msra.mxu0 0.0
  %974 = vmatprep.subr.mxu0 0.0
  %975 = vmatpush2.msra.mxu0 0.0
  %976 = vmatprep.subr.mxu0 0.0
  %977 = vmatpush2.msra.mxu0 0.0
  %978 = vmatprep.subr.mxu0 0.0
  %979 = vmatpush2.msra.mxu0 0.0
  %980 = vmatprep.subr.mxu0 0.0
  %981 = vmatpush2.msra.mxu0 0.0
  %982 = vmatprep.subr.mxu0 0.0
  %983 = vmatpush2.msra.mxu0 0.0
  %984 = vmatprep.subr.mxu0 0.0
  %985 = vmatpush2.msra.mxu0 0.0
  %986 = vmatprep.subr.mxu0 0.0
  %987 = vmatpush2.msra.mxu0 0.0
  %988 = vmatprep.subr.mxu0 0.0
  %989 = vmatpush2.msra.mxu0 0.0
  %990 = vmatprep.subr.mxu0 0.0
  %991 = vmatpush2.msra.mxu0 0.0
  %992 = vmatprep.subr.mxu0 0.0
  %993 = vmatpush2.msra.mxu0 0.0
  %994 = vmatprep.subr.mxu0 0.0
  %995 = vmatpush2.msra.mxu0 0.0
  %996 = vmatprep.subr.mxu0 0.0
  %997 = vmatpush2.msra.mxu0 0.0
  %998 = vmatprep.mubr.f32.mxu0 0.0
  %999 = vmatmul.mubr.f32.gmra.mxu0 %v424
  %v1000 = vpop.f32.mrf.mxu0
  %v1001 = vadd.f32 %v128, %v1000
  %v1002 = vpop.f32.mrf.mxu0
  %1003 = vdwg.mxu0
  %1004 = vmatprep.subr.mxu0 0.0
  %1005 = vmatpush1.msra.mxu0 0.0
  %1006 = vmatprep.subr.mxu0 0.0
  %1007 = vmatpush1.msra.mxu0 0.0
  %1008 = vmatprep.subr.mxu0 0.0
  %1009 = vmatpush1.msra.mxu0 0.0
  %1010 = vmatprep.subr.mxu0 0.0
  %1011 = vmatpush1.msra.mxu0 0.0
  %1012 = vmatprep.subr.mxu0 0.0
  %1013 = vmatpush1.msra.mxu0 0.0
  %1014 = vmatprep.subr.mxu0 0.0
  %1015 = vmatpush1.msra.mxu0 0.0
  %1016 = vmatprep.subr.mxu0 0.0
  %1017 = vmatpush1.msra.mxu0 0.0
  %1018 = vmatprep.subr.mxu0 0.0
  %1019 = vmatpush1.msra.mxu0 0.0
  %1020 = vmatprep.subr.mxu0 0.0
  %1021 = vmatpush1.msra.mxu0 0.0
  %1022 = vmatprep.subr.mxu0 0.0
  %1023 = vmatpush1.msra.mxu0 0.0
  %1024 = vmatprep.subr.mxu0 0.0
  %1025 = vmatpush1.msra.mxu0 0.0
  %1026 = vmatprep.subr.mxu0 0.0
  %1027 = vmatpush1.msra.mxu0 0.0
  %1028 = vmatprep.subr.mxu0 0.0
  %1029 = vmatpush1.msra.mxu0 %v66
  %1030 = vmatprep.subr.mxu0 0.0
  %1031 = vmatpush1.msra.mxu0 %v65
  %1032 = vmatprep.subr.mxu0 0.0
  %1033 = vmatpush1.msra.mxu0 %v64
  %1034 = vmatprep.subr.mxu0 0.0
  %1035 = vmatpush1.msra.mxu0 %v63
  %1036 = vmatprep.subr.mxu0 0.0
  %1037 = vmatpush2.msra.mxu0 0.0
  %1038 = vmatprep.subr.mxu0 0.0
  %1039 = vmatpush2.msra.mxu0 0.0
  %1040 = vmatprep.subr.mxu0 0.0
  %1041 = vmatpush2.msra.mxu0 0.0
  %1042 = vmatprep.subr.mxu0 0.0
  %1043 = vmatpush2.msra.mxu0 0.0
  %1044 = vmatprep.subr.mxu0 0.0
  %1045 = vmatpush2.msra.mxu0 0.0
  %1046 = vmatprep.subr.mxu0 0.0
  %1047 = vmatpush2.msra.mxu0 0.0
  %1048 = vmatprep.subr.mxu0 0.0
  %1049 = vmatpush2.msra.mxu0 0.0
  %1050 = vmatprep.subr.mxu0 0.0
  %1051 = vmatpush2.msra.mxu0 0.0
  %1052 = vmatprep.subr.mxu0 0.0
  %1053 = vmatpush2.msra.mxu0 0.0
  %1054 = vmatprep.subr.mxu0 0.0
  %1055 = vmatpush2.msra.mxu0 0.0
  %1056 = vmatprep.subr.mxu0 0.0
  %1057 = vmatpush2.msra.mxu0 0.0
  %1058 = vmatprep.subr.mxu0 0.0
  %1059 = vmatpush2.msra.mxu0 0.0
  %1060 = vmatprep.subr.mxu0 0.0
  %1061 = vmatpush2.msra.mxu0 0.0
  %1062 = vmatprep.subr.mxu0 0.0
  %1063 = vmatpush2.msra.mxu0 0.0
  %1064 = vmatprep.subr.mxu0 0.0
  %1065 = vmatpush2.msra.mxu0 0.0
  %1066 = vmatprep.subr.mxu0 0.0
  %1067 = vmatpush2.msra.mxu0 0.0
  %1068 = vmatprep.mubr.f32.mxu0 0.0
  %1069 = vmatmul.mubr.f32.gmra.mxu0 %v424
  %v1070 = vpop.f32.mrf.mxu0
  %v1071 = vadd.f32 %v208, %v1070
  %v1072 = vpop.f32.mrf.mxu0
  %1073 = vdwg.mxu0
  %1074 = vmatprep.subr.mxu0 0.0
  %1075 = vmatpush1.msra.mxu0 0.0
  %1076 = vmatprep.subr.mxu0 0.0
  %1077 = vmatpush1.msra.mxu0 0.0
  %1078 = vmatprep.subr.mxu0 0.0
  %1079 = vmatpush1.msra.mxu0 0.0
  %1080 = vmatprep.subr.mxu0 0.0
  %1081 = vmatpush1.msra.mxu0 0.0
  %1082 = vmatprep.subr.mxu0 0.0
  %1083 = vmatpush1.msra.mxu0 0.0
  %1084 = vmatprep.subr.mxu0 0.0
  %1085 = vmatpush1.msra.mxu0 0.0
  %1086 = vmatprep.subr.mxu0 0.0
  %1087 = vmatpush1.msra.mxu0 0.0
  %1088 = vmatprep.subr.mxu0 0.0
  %1089 = vmatpush1.msra.mxu0 0.0
  %1090 = vmatprep.subr.mxu0 0.0
  %1091 = vmatpush1.msra.mxu0 0.0
  %1092 = vmatprep.subr.mxu0 0.0
  %1093 = vmatpush1.msra.mxu0 0.0
  %1094 = vmatprep.subr.mxu0 0.0
  %1095 = vmatpush1.msra.mxu0 0.0
  %1096 = vmatprep.subr.mxu0 0.0
  %1097 = vmatpush1.msra.mxu0 0.0
  %1098 = vmatprep.subr.mxu0 0.0
  %1099 = vmatpush1.msra.mxu0 %v71
  %1100 = vmatprep.subr.mxu0 0.0
  %1101 = vmatpush1.msra.mxu0 %v70
  %1102 = vmatprep.subr.mxu0 0.0
  %1103 = vmatpush1.msra.mxu0 %v69
  %1104 = vmatprep.subr.mxu0 0.0
  %1105 = vmatpush1.msra.mxu0 %v68
  %1106 = vmatprep.subr.mxu0 0.0
  %1107 = vmatpush2.msra.mxu0 0.0
  %1108 = vmatprep.subr.mxu0 0.0
  %1109 = vmatpush2.msra.mxu0 0.0
  %1110 = vmatprep.subr.mxu0 0.0
  %1111 = vmatpush2.msra.mxu0 0.0
  %1112 = vmatprep.subr.mxu0 0.0
  %1113 = vmatpush2.msra.mxu0 0.0
  %1114 = vmatprep.subr.mxu0 0.0
  %1115 = vmatpush2.msra.mxu0 0.0
  %1116 = vmatprep.subr.mxu0 0.0
  %1117 = vmatpush2.msra.mxu0 0.0
  %1118 = vmatprep.subr.mxu0 0.0
  %1119 = vmatpush2.msra.mxu0 0.0
  %1120 = vmatprep.subr.mxu0 0.0
  %1121 = vmatpush2.msra.mxu0 0.0
  %1122 = vmatprep.subr.mxu0 0.0
  %1123 = vmatpush2.msra.mxu0 0.0
  %1124 = vmatprep.subr.mxu0 0.0
  %1125 = vmatpush2.msra.mxu0 0.0
  %1126 = vmatprep.subr.mxu0 0.0
  %1127 = vmatpush2.msra.mxu0 0.0
  %1128 = vmatprep.subr.mxu0 0.0
  %1129 = vmatpush2.msra.mxu0 0.0
  %1130 = vmatprep.subr.mxu0 0.0
  %1131 = vmatpush2.msra.mxu0 0.0
  %1132 = vmatprep.subr.mxu0 0.0
  %1133 = vmatpush2.msra.mxu0 0.0
  %1134 = vmatprep.subr.mxu0 0.0
  %1135 = vmatpush2.msra.mxu0 0.0
  %1136 = vmatprep.subr.mxu0 0.0
  %1137 = vmatpush2.msra.mxu0 0.0
  %1138 = vmatprep.mubr.f32.mxu0 0.0
  %1139 = vmatmul.mubr.f32.gmra.mxu0 %v424
  %v1140 = vpop.f32.mrf.mxu0
  %v1141 = vadd.f32 %v284, %v1140
  %v1142 = vpop.f32.mrf.mxu0
  %1143 = vdwg.mxu0
  %v1145 = vrot.slane %v1001, 1
  %v1148 = vadd.f32 %v928, %v1001
  %v1149 = vadd.f32 %v929, %v1145
  %v1150 = vxor.u32 %v1148, 2147483648
  %v1151 = vxor.u32 %v1149, 2147483648
  %v1152 = vmul.f32 %v1150, 1.442695
  %v1153 = vpow.pop %v1152
  %v1154 = vmul.f32 %v1151, 1.442695
  %v1155 = vpow.pop %v1154
  %v1156 = vadd.f32 %v1153, 1.0
  %v1157 = vadd.f32 %v1155, 1.0
  %v1158 = vrcp.pop %v1156
  %v1159 = vmul.f32 1.0, %v1158
  %v1160 = vrcp.pop %v1157
  %v1161 = vmul.f32 1.0, %v1160
  %v1163 = vrot.slane %v1071, 1
  %v1166 = vadd.f32 %v930, %v1071
  %v1167 = vadd.f32 %v931, %v1163
  %v1168 = vxor.u32 %v1166, 2147483648
  %v1169 = vxor.u32 %v1167, 2147483648
  %v1170 = vmul.f32 %v1168, 1.442695
  %v1171 = vpow.pop %v1170
  %v1172 = vmul.f32 %v1169, 1.442695
  %v1173 = vpow.pop %v1172
  %v1174 = vadd.f32 %v1171, 1.0
  %v1175 = vadd.f32 %v1173, 1.0
  %v1176 = vrcp.pop %v1174
  %v1177 = vmul.f32 1.0, %v1176
  %v1178 = vrcp.pop %v1175
  %v1179 = vmul.f32 1.0, %v1178
  %v1181 = vrot.slane %v1141, 1
  %v1184 = vmul.f32 %v1159, %v1141
  %v1185 = vmul.f32 %v1161, %v1181
  %v1186 = vadd.f32 %v932, %v1184
  %v1187 = vadd.f32 %v933, %v1185
  %v1188 = vtanh.pop %v1186
  %v1189 = vtanh.pop %v1187
  %v1190 = vsub.f32 1.0, %v1177
  %v1191 = vsub.f32 1.0, %v1179
  %v1192 = vmul.f32 %v1190, %v1188
  %v1193 = vmul.f32 %v1191, %v1189
  %v1194 = vmul.f32 %v1177, %v411
  %v1195 = vmul.f32 %v1179, %v412
  %v1196 = vadd.f32 %v1192, %v1194
  %v1197 = vadd.f32 %v1193, %v1195
  %v1200 = vrot.slane %v1197, 7
  %v1201 = vsel %vm422, %v1200, %v1196
  %v1202 = vsel %vm130, %v1201, 0
  %1204 = vmatprep.subr.mxu0 0.0
  %1205 = vmatpush1.msra.mxu0 0.0
  %1206 = vmatprep.subr.mxu0 0.0
  %1207 = vmatpush1.msra.mxu0 0.0
  %1208 = vmatprep.subr.mxu0 0.0
  %1209 = vmatpush1.msra.mxu0 0.0
  %1210 = vmatprep.subr.mxu0 0.0
  %1211 = vmatpush1.msra.mxu0 0.0
  %1212 = vmatprep.subr.mxu0 0.0
  %1213 = vmatpush1.msra.mxu0 0.0
  %1214 = vmatprep.subr.mxu0 0.0
  %1215 = vmatpush1.msra.mxu0 0.0
  %1216 = vmatprep.subr.mxu0 0.0
  %1217 = vmatpush1.msra.mxu0 0.0
  %1218 = vmatprep.subr.mxu0 0.0
  %1219 = vmatpush1.msra.mxu0 0.0
  %1220 = vmatprep.subr.mxu0 0.0
  %1221 = vmatpush1.msra.mxu0 0.0
  %1222 = vmatprep.subr.mxu0 0.0
  %1223 = vmatpush1.msra.mxu0 0.0
  %1224 = vmatprep.subr.mxu0 0.0
  %1225 = vmatpush1.msra.mxu0 0.0
  %1226 = vmatprep.subr.mxu0 0.0
  %1227 = vmatpush1.msra.mxu0 0.0
  %1228 = vmatprep.subr.mxu0 0.0
  %1229 = vmatpush1.msra.mxu0 %v99
  %1230 = vmatprep.subr.mxu0 0.0
  %1231 = vmatpush1.msra.mxu0 %v98
  %1232 = vmatprep.subr.mxu0 0.0
  %1233 = vmatpush1.msra.mxu0 %v97
  %1234 = vmatprep.subr.mxu0 0.0
  %1235 = vmatpush1.msra.mxu0 %v96
  %1236 = vmatprep.subr.mxu0 0.0
  %1237 = vmatpush2.msra.mxu0 0.0
  %1238 = vmatprep.subr.mxu0 0.0
  %1239 = vmatpush2.msra.mxu0 0.0
  %1240 = vmatprep.subr.mxu0 0.0
  %1241 = vmatpush2.msra.mxu0 0.0
  %1242 = vmatprep.subr.mxu0 0.0
  %1243 = vmatpush2.msra.mxu0 0.0
  %1244 = vmatprep.subr.mxu0 0.0
  %1245 = vmatpush2.msra.mxu0 0.0
  %1246 = vmatprep.subr.mxu0 0.0
  %1247 = vmatpush2.msra.mxu0 0.0
  %1248 = vmatprep.subr.mxu0 0.0
  %1249 = vmatpush2.msra.mxu0 0.0
  %1250 = vmatprep.subr.mxu0 0.0
  %1251 = vmatpush2.msra.mxu0 0.0
  %1252 = vmatprep.subr.mxu0 0.0
  %1253 = vmatpush2.msra.mxu0 0.0
  %1254 = vmatprep.subr.mxu0 0.0
  %1255 = vmatpush2.msra.mxu0 0.0
  %1256 = vmatprep.subr.mxu0 0.0
  %1257 = vmatpush2.msra.mxu0 0.0
  %1258 = vmatprep.subr.mxu0 0.0
  %1259 = vmatpush2.msra.mxu0 0.0
  %1260 = vmatprep.subr.mxu0 0.0
  %1261 = vmatpush2.msra.mxu0 0.0
  %1262 = vmatprep.subr.mxu0 0.0
  %1263 = vmatpush2.msra.mxu0 0.0
  %1264 = vmatprep.subr.mxu0 0.0
  %1265 = vmatpush2.msra.mxu0 0.0
  %1266 = vmatprep.subr.mxu0 0.0
  %1267 = vmatpush2.msra.mxu0 0.0
  %1268 = vmatprep.mubr.f32.mxu0 0.0
  %1269 = vmatmul.mubr.f32.gmra.mxu0 %v1202
  %v1270 = vpop.f32.mrf.mxu0
  %v1271 = vadd.f32 %v417, %v1270
  %v1272 = vpop.f32.mrf.mxu0
  %1273 = vdwg.mxu0
  %1274 = vmatprep.subr.mxu0 0.0
  %1275 = vmatpush1.msra.mxu0 0.0
  %1276 = vmatprep.subr.mxu0 0.0
  %1277 = vmatpush1.msra.mxu0 0.0
  %1278 = vmatprep.subr.mxu0 0.0
  %1279 = vmatpush1.msra.mxu0 0.0
  %1280 = vmatprep.subr.mxu0 0.0
  %1281 = vmatpush1.msra.mxu0 0.0
  %1282 = vmatprep.subr.mxu0 0.0
  %1283 = vmatpush1.msra.mxu0 0.0
  %1284 = vmatprep.subr.mxu0 0.0
  %1285 = vmatpush1.msra.mxu0 0.0
  %1286 = vmatprep.subr.mxu0 0.0
  %1287 = vmatpush1.msra.mxu0 0.0
  %1288 = vmatprep.subr.mxu0 0.0
  %1289 = vmatpush1.msra.mxu0 0.0
  %1290 = vmatprep.subr.mxu0 0.0
  %1291 = vmatpush1.msra.mxu0 0.0
  %1292 = vmatprep.subr.mxu0 0.0
  %1293 = vmatpush1.msra.mxu0 0.0
  %1294 = vmatprep.subr.mxu0 0.0
  %1295 = vmatpush1.msra.mxu0 0.0
  %1296 = vmatprep.subr.mxu0 0.0
  %1297 = vmatpush1.msra.mxu0 0.0
  %1298 = vmatprep.subr.mxu0 0.0
  %1299 = vmatpush1.msra.mxu0 %v104
  %1300 = vmatprep.subr.mxu0 0.0
  %1301 = vmatpush1.msra.mxu0 %v103
  %1302 = vmatprep.subr.mxu0 0.0
  %1303 = vmatpush1.msra.mxu0 %v102
  %1304 = vmatprep.subr.mxu0 0.0
  %1305 = vmatpush1.msra.mxu0 %v101
  %1306 = vmatprep.subr.mxu0 0.0
  %1307 = vmatpush2.msra.mxu0 0.0
  %1308 = vmatprep.subr.mxu0 0.0
  %1309 = vmatpush2.msra.mxu0 0.0
  %1310 = vmatprep.subr.mxu0 0.0
  %1311 = vmatpush2.msra.mxu0 0.0
  %1312 = vmatprep.subr.mxu0 0.0
  %1313 = vmatpush2.msra.mxu0 0.0
  %1314 = vmatprep.subr.mxu0 0.0
  %1315 = vmatpush2.msra.mxu0 0.0
  %1316 = vmatprep.subr.mxu0 0.0
  %1317 = vmatpush2.msra.mxu0 0.0
  %1318 = vmatprep.subr.mxu0 0.0
  %1319 = vmatpush2.msra.mxu0 0.0
  %1320 = vmatprep.subr.mxu0 0.0
  %1321 = vmatpush2.msra.mxu0 0.0
  %1322 = vmatprep.subr.mxu0 0.0
  %1323 = vmatpush2.msra.mxu0 0.0
  %1324 = vmatprep.subr.mxu0 0.0
  %1325 = vmatpush2.msra.mxu0 0.0
  %1326 = vmatprep.subr.mxu0 0.0
  %1327 = vmatpush2.msra.mxu0 0.0
  %1328 = vmatprep.subr.mxu0 0.0
  %1329 = vmatpush2.msra.mxu0 0.0
  %1330 = vmatprep.subr.mxu0 0.0
  %1331 = vmatpush2.msra.mxu0 0.0
  %1332 = vmatprep.subr.mxu0 0.0
  %1333 = vmatpush2.msra.mxu0 0.0
  %1334 = vmatprep.subr.mxu0 0.0
  %1335 = vmatpush2.msra.mxu0 0.0
  %1336 = vmatprep.subr.mxu0 0.0
  %1337 = vmatpush2.msra.mxu0 0.0
  %1338 = vmatprep.mubr.f32.mxu0 0.0
  %1339 = vmatmul.mubr.f32.gmra.mxu0 %v1202
  %v1340 = vpop.f32.mrf.mxu0
  %v1341 = vadd.f32 %v500, %v1340
  %v1342 = vpop.f32.mrf.mxu0
  %1343 = vdwg.mxu0
  %1344 = vmatprep.subr.mxu0 0.0
  %1345 = vmatpush1.msra.mxu0 0.0
  %1346 = vmatprep.subr.mxu0 0.0
  %1347 = vmatpush1.msra.mxu0 0.0
  %1348 = vmatprep.subr.mxu0 0.0
  %1349 = vmatpush1.msra.mxu0 0.0
  %1350 = vmatprep.subr.mxu0 0.0
  %1351 = vmatpush1.msra.mxu0 0.0
  %1352 = vmatprep.subr.mxu0 0.0
  %1353 = vmatpush1.msra.mxu0 0.0
  %1354 = vmatprep.subr.mxu0 0.0
  %1355 = vmatpush1.msra.mxu0 0.0
  %1356 = vmatprep.subr.mxu0 0.0
  %1357 = vmatpush1.msra.mxu0 0.0
  %1358 = vmatprep.subr.mxu0 0.0
  %1359 = vmatpush1.msra.mxu0 0.0
  %1360 = vmatprep.subr.mxu0 0.0
  %1361 = vmatpush1.msra.mxu0 0.0
  %1362 = vmatprep.subr.mxu0 0.0
  %1363 = vmatpush1.msra.mxu0 0.0
  %1364 = vmatprep.subr.mxu0 0.0
  %1365 = vmatpush1.msra.mxu0 0.0
  %1366 = vmatprep.subr.mxu0 0.0
  %1367 = vmatpush1.msra.mxu0 0.0
  %1368 = vmatprep.subr.mxu0 0.0
  %1369 = vmatpush1.msra.mxu0 %v109
  %1370 = vmatprep.subr.mxu0 0.0
  %1371 = vmatpush1.msra.mxu0 %v108
  %1372 = vmatprep.subr.mxu0 0.0
  %1373 = vmatpush1.msra.mxu0 %v107
  %1374 = vmatprep.subr.mxu0 0.0
  %1375 = vmatpush1.msra.mxu0 %v106
  %1376 = vmatprep.subr.mxu0 0.0
  %1377 = vmatpush2.msra.mxu0 0.0
  %1378 = vmatprep.subr.mxu0 0.0
  %1379 = vmatpush2.msra.mxu0 0.0
  %1380 = vmatprep.subr.mxu0 0.0
  %1381 = vmatpush2.msra.mxu0 0.0
  %1382 = vmatprep.subr.mxu0 0.0
  %1383 = vmatpush2.msra.mxu0 0.0
  %1384 = vmatprep.subr.mxu0 0.0
  %1385 = vmatpush2.msra.mxu0 0.0
  %1386 = vmatprep.subr.mxu0 0.0
  %1387 = vmatpush2.msra.mxu0 0.0
  %1388 = vmatprep.subr.mxu0 0.0
  %1389 = vmatpush2.msra.mxu0 0.0
  %1390 = vmatprep.subr.mxu0 0.0
  %1391 = vmatpush2.msra.mxu0 0.0
  %1392 = vmatprep.subr.mxu0 0.0
  %1393 = vmatpush2.msra.mxu0 0.0
  %1394 = vmatprep.subr.mxu0 0.0
  %1395 = vmatpush2.msra.mxu0 0.0
  %1396 = vmatprep.subr.mxu0 0.0
  %1397 = vmatpush2.msra.mxu0 0.0
  %1398 = vmatprep.subr.mxu0 0.0
  %1399 = vmatpush2.msra.mxu0 0.0
  %1400 = vmatprep.subr.mxu0 0.0
  %1401 = vmatpush2.msra.mxu0 0.0
  %1402 = vmatprep.subr.mxu0 0.0
  %1403 = vmatpush2.msra.mxu0 0.0
  %1404 = vmatprep.subr.mxu0 0.0
  %1405 = vmatpush2.msra.mxu0 0.0
  %1406 = vmatprep.subr.mxu0 0.0
  %1407 = vmatpush2.msra.mxu0 0.0
  %1408 = vmatprep.mubr.f32.mxu0 0.0
  %1409 = vmatmul.mubr.f32.gmra.mxu0 %v1202
  %v1410 = vpop.f32.mrf.mxu0
  %v1411 = vadd.f32 %v576, %v1410
  %v1412 = vpop.f32.mrf.mxu0
  %1413 = vdwg.mxu0
  %v1414 = vsel %vm130, %v899, 0
  %1416 = vmatprep.subr.mxu0 0.0
  %1417 = vmatpush1.msra.mxu0 0.0
  %1418 = vmatprep.subr.mxu0 0.0
  %1419 = vmatpush1.msra.mxu0 0.0
  %1420 = vmatprep.subr.mxu0 0.0
  %1421 = vmatpush1.msra.mxu0 0.0
  %1422 = vmatprep.subr.mxu0 0.0
  %1423 = vmatpush1.msra.mxu0 0.0
  %1424 = vmatprep.subr.mxu0 0.0
  %1425 = vmatpush1.msra.mxu0 0.0
  %1426 = vmatprep.subr.mxu0 0.0
  %1427 = vmatpush1.msra.mxu0 0.0
  %1428 = vmatprep.subr.mxu0 0.0
  %1429 = vmatpush1.msra.mxu0 0.0
  %1430 = vmatprep.subr.mxu0 0.0
  %1431 = vmatpush1.msra.mxu0 0.0
  %1432 = vmatprep.subr.mxu0 0.0
  %1433 = vmatpush1.msra.mxu0 0.0
  %1434 = vmatprep.subr.mxu0 0.0
  %1435 = vmatpush1.msra.mxu0 0.0
  %1436 = vmatprep.subr.mxu0 0.0
  %1437 = vmatpush1.msra.mxu0 0.0
  %1438 = vmatprep.subr.mxu0 0.0
  %1439 = vmatpush1.msra.mxu0 0.0
  %1440 = vmatprep.subr.mxu0 0.0
  %1441 = vmatpush1.msra.mxu0 %v75
  %1442 = vmatprep.subr.mxu0 0.0
  %1443 = vmatpush1.msra.mxu0 %v74
  %1444 = vmatprep.subr.mxu0 0.0
  %1445 = vmatpush1.msra.mxu0 %v73
  %1446 = vmatprep.subr.mxu0 0.0
  %1447 = vmatpush1.msra.mxu0 %v72
  %1448 = vmatprep.subr.mxu0 0.0
  %1449 = vmatpush2.msra.mxu0 0.0
  %1450 = vmatprep.subr.mxu0 0.0
  %1451 = vmatpush2.msra.mxu0 0.0
  %1452 = vmatprep.subr.mxu0 0.0
  %1453 = vmatpush2.msra.mxu0 0.0
  %1454 = vmatprep.subr.mxu0 0.0
  %1455 = vmatpush2.msra.mxu0 0.0
  %1456 = vmatprep.subr.mxu0 0.0
  %1457 = vmatpush2.msra.mxu0 0.0
  %1458 = vmatprep.subr.mxu0 0.0
  %1459 = vmatpush2.msra.mxu0 0.0
  %1460 = vmatprep.subr.mxu0 0.0
  %1461 = vmatpush2.msra.mxu0 0.0
  %1462 = vmatprep.subr.mxu0 0.0
  %1463 = vmatpush2.msra.mxu0 0.0
  %1464 = vmatprep.subr.mxu0 0.0
  %1465 = vmatpush2.msra.mxu0 0.0
  %1466 = vmatprep.subr.mxu0 0.0
  %1467 = vmatpush2.msra.mxu0 0.0
  %1468 = vmatprep.subr.mxu0 0.0
  %1469 = vmatpush2.msra.mxu0 0.0
  %1470 = vmatprep.subr.mxu0 0.0
  %1471 = vmatpush2.msra.mxu0 0.0
  %1472 = vmatprep.subr.mxu0 0.0
  %1473 = vmatpush2.msra.mxu0 0.0
  %1474 = vmatprep.subr.mxu0 0.0
  %1475 = vmatpush2.msra.mxu0 0.0
  %1476 = vmatprep.subr.mxu0 0.0
  %1477 = vmatpush2.msra.mxu0 0.0
  %1478 = vmatprep.subr.mxu0 0.0
  %1479 = vmatpush2.msra.mxu0 0.0
  %1480 = vmatprep.mubr.f32.mxu0 0.0
  %1481 = vmatmul.mubr.f32.gmra.mxu0 %v1414
  %v1482 = vpop.f32.mrf.mxu0
  %v1483 = vadd.f32 %v652, %v1482
  %v1484 = vpop.f32.mrf.mxu0
  %1485 = vdwg.mxu0
  %1486 = vmatprep.subr.mxu0 0.0
  %1487 = vmatpush1.msra.mxu0 0.0
  %1488 = vmatprep.subr.mxu0 0.0
  %1489 = vmatpush1.msra.mxu0 0.0
  %1490 = vmatprep.subr.mxu0 0.0
  %1491 = vmatpush1.msra.mxu0 0.0
  %1492 = vmatprep.subr.mxu0 0.0
  %1493 = vmatpush1.msra.mxu0 0.0
  %1494 = vmatprep.subr.mxu0 0.0
  %1495 = vmatpush1.msra.mxu0 0.0
  %1496 = vmatprep.subr.mxu0 0.0
  %1497 = vmatpush1.msra.mxu0 0.0
  %1498 = vmatprep.subr.mxu0 0.0
  %1499 = vmatpush1.msra.mxu0 0.0
  %1500 = vmatprep.subr.mxu0 0.0
  %1501 = vmatpush1.msra.mxu0 0.0
  %1502 = vmatprep.subr.mxu0 0.0
  %1503 = vmatpush1.msra.mxu0 0.0
  %1504 = vmatprep.subr.mxu0 0.0
  %1505 = vmatpush1.msra.mxu0 0.0
  %1506 = vmatprep.subr.mxu0 0.0
  %1507 = vmatpush1.msra.mxu0 0.0
  %1508 = vmatprep.subr.mxu0 0.0
  %1509 = vmatpush1.msra.mxu0 0.0
  %1510 = vmatprep.subr.mxu0 0.0
  %1511 = vmatpush1.msra.mxu0 %v80
  %1512 = vmatprep.subr.mxu0 0.0
  %1513 = vmatpush1.msra.mxu0 %v79
  %1514 = vmatprep.subr.mxu0 0.0
  %1515 = vmatpush1.msra.mxu0 %v78
  %1516 = vmatprep.subr.mxu0 0.0
  %1517 = vmatpush1.msra.mxu0 %v77
  %1518 = vmatprep.subr.mxu0 0.0
  %1519 = vmatpush2.msra.mxu0 0.0
  %1520 = vmatprep.subr.mxu0 0.0
  %1521 = vmatpush2.msra.mxu0 0.0
  %1522 = vmatprep.subr.mxu0 0.0
  %1523 = vmatpush2.msra.mxu0 0.0
  %1524 = vmatprep.subr.mxu0 0.0
  %1525 = vmatpush2.msra.mxu0 0.0
  %1526 = vmatprep.subr.mxu0 0.0
  %1527 = vmatpush2.msra.mxu0 0.0
  %1528 = vmatprep.subr.mxu0 0.0
  %1529 = vmatpush2.msra.mxu0 0.0
  %1530 = vmatprep.subr.mxu0 0.0
  %1531 = vmatpush2.msra.mxu0 0.0
  %1532 = vmatprep.subr.mxu0 0.0
  %1533 = vmatpush2.msra.mxu0 0.0
  %1534 = vmatprep.subr.mxu0 0.0
  %1535 = vmatpush2.msra.mxu0 0.0
  %1536 = vmatprep.subr.mxu0 0.0
  %1537 = vmatpush2.msra.mxu0 0.0
  %1538 = vmatprep.subr.mxu0 0.0
  %1539 = vmatpush2.msra.mxu0 0.0
  %1540 = vmatprep.subr.mxu0 0.0
  %1541 = vmatpush2.msra.mxu0 0.0
  %1542 = vmatprep.subr.mxu0 0.0
  %1543 = vmatpush2.msra.mxu0 0.0
  %1544 = vmatprep.subr.mxu0 0.0
  %1545 = vmatpush2.msra.mxu0 0.0
  %1546 = vmatprep.subr.mxu0 0.0
  %1547 = vmatpush2.msra.mxu0 0.0
  %1548 = vmatprep.subr.mxu0 0.0
  %1549 = vmatpush2.msra.mxu0 0.0
  %1550 = vmatprep.mubr.f32.mxu0 0.0
  %1551 = vmatmul.mubr.f32.gmra.mxu0 %v1414
  %v1552 = vpop.f32.mrf.mxu0
  %v1553 = vadd.f32 %v731, %v1552
  %v1554 = vpop.f32.mrf.mxu0
  %1555 = vdwg.mxu0
  %1556 = vmatprep.subr.mxu0 0.0
  %1557 = vmatpush1.msra.mxu0 0.0
  %1558 = vmatprep.subr.mxu0 0.0
  %1559 = vmatpush1.msra.mxu0 0.0
  %1560 = vmatprep.subr.mxu0 0.0
  %1561 = vmatpush1.msra.mxu0 0.0
  %1562 = vmatprep.subr.mxu0 0.0
  %1563 = vmatpush1.msra.mxu0 0.0
  %1564 = vmatprep.subr.mxu0 0.0
  %1565 = vmatpush1.msra.mxu0 0.0
  %1566 = vmatprep.subr.mxu0 0.0
  %1567 = vmatpush1.msra.mxu0 0.0
  %1568 = vmatprep.subr.mxu0 0.0
  %1569 = vmatpush1.msra.mxu0 0.0
  %1570 = vmatprep.subr.mxu0 0.0
  %1571 = vmatpush1.msra.mxu0 0.0
  %1572 = vmatprep.subr.mxu0 0.0
  %1573 = vmatpush1.msra.mxu0 0.0
  %1574 = vmatprep.subr.mxu0 0.0
  %1575 = vmatpush1.msra.mxu0 0.0
  %1576 = vmatprep.subr.mxu0 0.0
  %1577 = vmatpush1.msra.mxu0 0.0
  %1578 = vmatprep.subr.mxu0 0.0
  %1579 = vmatpush1.msra.mxu0 0.0
  %1580 = vmatprep.subr.mxu0 0.0
  %1581 = vmatpush1.msra.mxu0 %v85
  %1582 = vmatprep.subr.mxu0 0.0
  %1583 = vmatpush1.msra.mxu0 %v84
  %1584 = vmatprep.subr.mxu0 0.0
  %1585 = vmatpush1.msra.mxu0 %v83
  %1586 = vmatprep.subr.mxu0 0.0
  %1587 = vmatpush1.msra.mxu0 %v82
  %1588 = vmatprep.subr.mxu0 0.0
  %1589 = vmatpush2.msra.mxu0 0.0
  %1590 = vmatprep.subr.mxu0 0.0
  %1591 = vmatpush2.msra.mxu0 0.0
  %1592 = vmatprep.subr.mxu0 0.0
  %1593 = vmatpush2.msra.mxu0 0.0
  %1594 = vmatprep.subr.mxu0 0.0
  %1595 = vmatpush2.msra.mxu0 0.0
  %1596 = vmatprep.subr.mxu0 0.0
  %1597 = vmatpush2.msra.mxu0 0.0
  %1598 = vmatprep.subr.mxu0 0.0
  %1599 = vmatpush2.msra.mxu0 0.0
  %1600 = vmatprep.subr.mxu0 0.0
  %1601 = vmatpush2.msra.mxu0 0.0
  %1602 = vmatprep.subr.mxu0 0.0
  %1603 = vmatpush2.msra.mxu0 0.0
  %1604 = vmatprep.subr.mxu0 0.0
  %1605 = vmatpush2.msra.mxu0 0.0
  %1606 = vmatprep.subr.mxu0 0.0
  %1607 = vmatpush2.msra.mxu0 0.0
  %1608 = vmatprep.subr.mxu0 0.0
  %1609 = vmatpush2.msra.mxu0 0.0
  %1610 = vmatprep.subr.mxu0 0.0
  %1611 = vmatpush2.msra.mxu0 0.0
  %1612 = vmatprep.subr.mxu0 0.0
  %1613 = vmatpush2.msra.mxu0 0.0
  %1614 = vmatprep.subr.mxu0 0.0
  %1615 = vmatpush2.msra.mxu0 0.0
  %1616 = vmatprep.subr.mxu0 0.0
  %1617 = vmatpush2.msra.mxu0 0.0
  %1618 = vmatprep.subr.mxu0 0.0
  %1619 = vmatpush2.msra.mxu0 0.0
  %1620 = vmatprep.mubr.f32.mxu0 0.0
  %1621 = vmatmul.mubr.f32.gmra.mxu0 %v1414
  %v1622 = vpop.f32.mrf.mxu0
  %v1623 = vadd.f32 %v807, %v1622
  %v1624 = vpop.f32.mrf.mxu0
  %1625 = vdwg.mxu0
  %v1626 = vadd.f32 %v1271, %v1483
  %v1627 = vxor.u32 %v1626, 2147483648
  %v1628 = vmul.f32 %v1627, 1.442695
  %v1629 = vpow.pop %v1628
  %v1630 = vadd.f32 %v1629, 1.0
  %v1631 = vrcp.pop %v1630
  %v1632 = vmul.f32 1.0, %v1631
  %v1633 = vadd.f32 %v1341, %v1553
  %v1634 = vxor.u32 %v1633, 2147483648
  %v1635 = vmul.f32 %v1634, 1.442695
  %v1636 = vpow.pop %v1635
  %v1637 = vadd.f32 %v1636, 1.0
  %v1638 = vrcp.pop %v1637
  %v1639 = vmul.f32 1.0, %v1638
  %v1640 = vmul.f32 %v1632, %v1623
  %v1641 = vadd.f32 %v1411, %v1640
  %v1642 = vtanh.pop %v1641
  %v1643 = vsub.f32 1.0, %v1639
  %v1644 = vmul.f32 %v1643, %v1642
  %v1645 = vmul.f32 %v1639, %v899
  %v1646 = vadd.f32 %v1644, %v1645
  %v1649 = vunpack.c.l.s4 1966171168
  %v1650 = vunpack.c.0.s8 %v1649
  %v1651 = vlaneseq
  %v1652 = vshrl.u32 %v1651, 7
  %v1653 = vsub.s32 %v1650, %v1652
  %v1654 = vrot.slane %v1646, %v1653
  %v1655 = vcombine.high %v1654, %v1654
  %v1657 = vunpack.c.l.s4 1966171168
  %v1658 = vunpack.c.0.s8 %v1657
  %v1659 = vlaneseq
  %v1660 = vshrl.u32 %v1659, 7
  %v1661 = vsub.s32 %v1658, %v1660
  %v1662 = vrot.slane %v1654, %v1661
  %v1664 = vunpack.c.l.s4 1966171168
  %v1665 = vunpack.c.0.s8 %v1664
  %v1666 = vlaneseq
  %v1667 = vshrl.u32 %v1666, 7
  %v1668 = vsub.s32 %v1665, %v1667
  %v1669 = vrot.slane %v1655, %v1668
  %1672 = vst.msk [vmem:[%s10 + $0x1] sm:$0x1] %vm925, %v1662
  %1673 = vst.msk [vmem:[%s10 + $0x9] sm:$0x1] %vm925, %v1669
  %v1674 = vld [vmem:[%s0 + $0x2] sm:$0x1]
  %v1675 = vld [vmem:[%s0 + $0xa] sm:$0x1]
  %v1676 = vld [vmem:[%s1 + $0x2] sm:$0x1]
  %v1677 = vld [vmem:[%s1 + $0xa] sm:$0x1]
  %v1678 = vld [vmem:[%s2 + $0x2] sm:$0x1]
  %v1679 = vld [vmem:[%s2 + $0xa] sm:$0x1]
  %1680 = vmatprep.subr.mxu0 0.0
  %1681 = vmatpush1.msra.mxu0 0.0
  %1682 = vmatprep.subr.mxu0 0.0
  %1683 = vmatpush1.msra.mxu0 0.0
  %1684 = vmatprep.subr.mxu0 0.0
  %1685 = vmatpush1.msra.mxu0 0.0
  %1686 = vmatprep.subr.mxu0 0.0
  %1687 = vmatpush1.msra.mxu0 0.0
  %1688 = vmatprep.subr.mxu0 0.0
  %1689 = vmatpush1.msra.mxu0 0.0
  %1690 = vmatprep.subr.mxu0 0.0
  %1691 = vmatpush1.msra.mxu0 0.0
  %1692 = vmatprep.subr.mxu0 0.0
  %1693 = vmatpush1.msra.mxu0 0.0
  %1694 = vmatprep.subr.mxu0 0.0
  %1695 = vmatpush1.msra.mxu0 0.0
  %1696 = vmatprep.subr.mxu0 0.0
  %1697 = vmatpush1.msra.mxu0 0.0
  %1698 = vmatprep.subr.mxu0 0.0
  %1699 = vmatpush1.msra.mxu0 0.0
  %1700 = vmatprep.subr.mxu0 0.0
  %1701 = vmatpush1.msra.mxu0 0.0
  %1702 = vmatprep.subr.mxu0 0.0
  %1703 = vmatpush1.msra.mxu0 0.0
  %1704 = vmatprep.subr.mxu0 0.0
  %1705 = vmatpush1.msra.mxu0 %v61
  %1706 = vmatprep.subr.mxu0 0.0
  %1707 = vmatpush1.msra.mxu0 %v60
  %1708 = vmatprep.subr.mxu0 0.0
  %1709 = vmatpush1.msra.mxu0 %v59
  %1710 = vmatprep.subr.mxu0 0.0
  %1711 = vmatpush1.msra.mxu0 %v58
  %1712 = vmatprep.subr.mxu0 0.0
  %1713 = vmatpush2.msra.mxu0 0.0
  %1714 = vmatprep.subr.mxu0 0.0
  %1715 = vmatpush2.msra.mxu0 0.0
  %1716 = vmatprep.subr.mxu0 0.0
  %1717 = vmatpush2.msra.mxu0 0.0
  %1718 = vmatprep.subr.mxu0 0.0
  %1719 = vmatpush2.msra.mxu0 0.0
  %1720 = vmatprep.subr.mxu0 0.0
  %1721 = vmatpush2.msra.mxu0 0.0
  %1722 = vmatprep.subr.mxu0 0.0
  %1723 = vmatpush2.msra.mxu0 0.0
  %1724 = vmatprep.subr.mxu0 0.0
  %1725 = vmatpush2.msra.mxu0 0.0
  %1726 = vmatprep.subr.mxu0 0.0
  %1727 = vmatpush2.msra.mxu0 0.0
  %1728 = vmatprep.subr.mxu0 0.0
  %1729 = vmatpush2.msra.mxu0 0.0
  %1730 = vmatprep.subr.mxu0 0.0
  %1731 = vmatpush2.msra.mxu0 0.0
  %1732 = vmatprep.subr.mxu0 0.0
  %1733 = vmatpush2.msra.mxu0 0.0
  %1734 = vmatprep.subr.mxu0 0.0
  %1735 = vmatpush2.msra.mxu0 0.0
  %1736 = vmatprep.subr.mxu0 0.0
  %1737 = vmatpush2.msra.mxu0 0.0
  %1738 = vmatprep.subr.mxu0 0.0
  %1739 = vmatpush2.msra.mxu0 0.0
  %1740 = vmatprep.subr.mxu0 0.0
  %1741 = vmatpush2.msra.mxu0 0.0
  %1742 = vmatprep.subr.mxu0 0.0
  %1743 = vmatpush2.msra.mxu0 0.0
  %1744 = vmatprep.mubr.f32.mxu0 0.0
  %1745 = vmatmul.mubr.f32.gmra.mxu0 %v1202
  %v1746 = vpop.f32.mrf.mxu0
  %v1747 = vadd.f32 %v128, %v1746
  %v1748 = vpop.f32.mrf.mxu0
  %1749 = vdwg.mxu0
  %1750 = vmatprep.subr.mxu0 0.0
  %1751 = vmatpush1.msra.mxu0 0.0
  %1752 = vmatprep.subr.mxu0 0.0
  %1753 = vmatpush1.msra.mxu0 0.0
  %1754 = vmatprep.subr.mxu0 0.0
  %1755 = vmatpush1.msra.mxu0 0.0
  %1756 = vmatprep.subr.mxu0 0.0
  %1757 = vmatpush1.msra.mxu0 0.0
  %1758 = vmatprep.subr.mxu0 0.0
  %1759 = vmatpush1.msra.mxu0 0.0
  %1760 = vmatprep.subr.mxu0 0.0
  %1761 = vmatpush1.msra.mxu0 0.0
  %1762 = vmatprep.subr.mxu0 0.0
  %1763 = vmatpush1.msra.mxu0 0.0
  %1764 = vmatprep.subr.mxu0 0.0
  %1765 = vmatpush1.msra.mxu0 0.0
  %1766 = vmatprep.subr.mxu0 0.0
  %1767 = vmatpush1.msra.mxu0 0.0
  %1768 = vmatprep.subr.mxu0 0.0
  %1769 = vmatpush1.msra.mxu0 0.0
  %1770 = vmatprep.subr.mxu0 0.0
  %1771 = vmatpush1.msra.mxu0 0.0
  %1772 = vmatprep.subr.mxu0 0.0
  %1773 = vmatpush1.msra.mxu0 0.0
  %1774 = vmatprep.subr.mxu0 0.0
  %1775 = vmatpush1.msra.mxu0 %v66
  %1776 = vmatprep.subr.mxu0 0.0
  %1777 = vmatpush1.msra.mxu0 %v65
  %1778 = vmatprep.subr.mxu0 0.0
  %1779 = vmatpush1.msra.mxu0 %v64
  %1780 = vmatprep.subr.mxu0 0.0
  %1781 = vmatpush1.msra.mxu0 %v63
  %1782 = vmatprep.subr.mxu0 0.0
  %1783 = vmatpush2.msra.mxu0 0.0
  %1784 = vmatprep.subr.mxu0 0.0
  %1785 = vmatpush2.msra.mxu0 0.0
  %1786 = vmatprep.subr.mxu0 0.0
  %1787 = vmatpush2.msra.mxu0 0.0
  %1788 = vmatprep.subr.mxu0 0.0
  %1789 = vmatpush2.msra.mxu0 0.0
  %1790 = vmatprep.subr.mxu0 0.0
  %1791 = vmatpush2.msra.mxu0 0.0
  %1792 = vmatprep.subr.mxu0 0.0
  %1793 = vmatpush2.msra.mxu0 0.0
  %1794 = vmatprep.subr.mxu0 0.0
  %1795 = vmatpush2.msra.mxu0 0.0
  %1796 = vmatprep.subr.mxu0 0.0
  %1797 = vmatpush2.msra.mxu0 0.0
  %1798 = vmatprep.subr.mxu0 0.0
  %1799 = vmatpush2.msra.mxu0 0.0
  %1800 = vmatprep.subr.mxu0 0.0
  %1801 = vmatpush2.msra.mxu0 0.0
  %1802 = vmatprep.subr.mxu0 0.0
  %1803 = vmatpush2.msra.mxu0 0.0
  %1804 = vmatprep.subr.mxu0 0.0
  %1805 = vmatpush2.msra.mxu0 0.0
  %1806 = vmatprep.subr.mxu0 0.0
  %1807 = vmatpush2.msra.mxu0 0.0
  %1808 = vmatprep.subr.mxu0 0.0
  %1809 = vmatpush2.msra.mxu0 0.0
  %1810 = vmatprep.subr.mxu0 0.0
  %1811 = vmatpush2.msra.mxu0 0.0
  %1812 = vmatprep.subr.mxu0 0.0
  %1813 = vmatpush2.msra.mxu0 0.0
  %1814 = vmatprep.mubr.f32.mxu0 0.0
  %1815 = vmatmul.mubr.f32.gmra.mxu0 %v1202
  %v1816 = vpop.f32.mrf.mxu0
  %v1817 = vadd.f32 %v208, %v1816
  %v1818 = vpop.f32.mrf.mxu0
  %1819 = vdwg.mxu0
  %1820 = vmatprep.subr.mxu0 0.0
  %1821 = vmatpush1.msra.mxu0 0.0
  %1822 = vmatprep.subr.mxu0 0.0
  %1823 = vmatpush1.msra.mxu0 0.0
  %1824 = vmatprep.subr.mxu0 0.0
  %1825 = vmatpush1.msra.mxu0 0.0
  %1826 = vmatprep.subr.mxu0 0.0
  %1827 = vmatpush1.msra.mxu0 0.0
  %1828 = vmatprep.subr.mxu0 0.0
  %1829 = vmatpush1.msra.mxu0 0.0
  %1830 = vmatprep.subr.mxu0 0.0
  %1831 = vmatpush1.msra.mxu0 0.0
  %1832 = vmatprep.subr.mxu0 0.0
  %1833 = vmatpush1.msra.mxu0 0.0
  %1834 = vmatprep.subr.mxu0 0.0
  %1835 = vmatpush1.msra.mxu0 0.0
  %1836 = vmatprep.subr.mxu0 0.0
  %1837 = vmatpush1.msra.mxu0 0.0
  %1838 = vmatprep.subr.mxu0 0.0
  %1839 = vmatpush1.msra.mxu0 0.0
  %1840 = vmatprep.subr.mxu0 0.0
  %1841 = vmatpush1.msra.mxu0 0.0
  %1842 = vmatprep.subr.mxu0 0.0
  %1843 = vmatpush1.msra.mxu0 0.0
  %1844 = vmatprep.subr.mxu0 0.0
  %1845 = vmatpush1.msra.mxu0 %v71
  %1846 = vmatprep.subr.mxu0 0.0
  %1847 = vmatpush1.msra.mxu0 %v70
  %1848 = vmatprep.subr.mxu0 0.0
  %1849 = vmatpush1.msra.mxu0 %v69
  %1850 = vmatprep.subr.mxu0 0.0
  %1851 = vmatpush1.msra.mxu0 %v68
  %1852 = vmatprep.subr.mxu0 0.0
  %1853 = vmatpush2.msra.mxu0 0.0
  %1854 = vmatprep.subr.mxu0 0.0
  %1855 = vmatpush2.msra.mxu0 0.0
  %1856 = vmatprep.subr.mxu0 0.0
  %1857 = vmatpush2.msra.mxu0 0.0
  %1858 = vmatprep.subr.mxu0 0.0
  %1859 = vmatpush2.msra.mxu0 0.0
  %1860 = vmatprep.subr.mxu0 0.0
  %1861 = vmatpush2.msra.mxu0 0.0
  %1862 = vmatprep.subr.mxu0 0.0
  %1863 = vmatpush2.msra.mxu0 0.0
  %1864 = vmatprep.subr.mxu0 0.0
  %1865 = vmatpush2.msra.mxu0 0.0
  %1866 = vmatprep.subr.mxu0 0.0
  %1867 = vmatpush2.msra.mxu0 0.0
  %1868 = vmatprep.subr.mxu0 0.0
  %1869 = vmatpush2.msra.mxu0 0.0
  %1870 = vmatprep.subr.mxu0 0.0
  %1871 = vmatpush2.msra.mxu0 0.0
  %1872 = vmatprep.subr.mxu0 0.0
  %1873 = vmatpush2.msra.mxu0 0.0
  %1874 = vmatprep.subr.mxu0 0.0
  %1875 = vmatpush2.msra.mxu0 0.0
  %1876 = vmatprep.subr.mxu0 0.0
  %1877 = vmatpush2.msra.mxu0 0.0
  %1878 = vmatprep.subr.mxu0 0.0
  %1879 = vmatpush2.msra.mxu0 0.0
  %1880 = vmatprep.subr.mxu0 0.0
  %1881 = vmatpush2.msra.mxu0 0.0
  %1882 = vmatprep.subr.mxu0 0.0
  %1883 = vmatpush2.msra.mxu0 0.0
  %1884 = vmatprep.mubr.f32.mxu0 0.0
  %1885 = vmatmul.mubr.f32.gmra.mxu0 %v1202
  %v1886 = vpop.f32.mrf.mxu0
  %v1887 = vadd.f32 %v284, %v1886
  %v1888 = vpop.f32.mrf.mxu0
  %1889 = vdwg.mxu0
  %v1891 = vrot.slane %v1747, 1
  %v1894 = vadd.f32 %v1674, %v1747
  %v1895 = vadd.f32 %v1675, %v1891
  %v1896 = vxor.u32 %v1894, 2147483648
  %v1897 = vxor.u32 %v1895, 2147483648
  %v1898 = vmul.f32 %v1896, 1.442695
  %v1899 = vpow.pop %v1898
  %v1900 = vmul.f32 %v1897, 1.442695
  %v1901 = vpow.pop %v1900
  %v1902 = vadd.f32 %v1899, 1.0
  %v1903 = vadd.f32 %v1901, 1.0
  %v1904 = vrcp.pop %v1902
  %v1905 = vmul.f32 1.0, %v1904
  %v1906 = vrcp.pop %v1903
  %v1907 = vmul.f32 1.0, %v1906
  %v1909 = vrot.slane %v1817, 1
  %v1912 = vadd.f32 %v1676, %v1817
  %v1913 = vadd.f32 %v1677, %v1909
  %v1914 = vxor.u32 %v1912, 2147483648
  %v1915 = vxor.u32 %v1913, 2147483648
  %v1916 = vmul.f32 %v1914, 1.442695
  %v1917 = vpow.pop %v1916
  %v1918 = vmul.f32 %v1915, 1.442695
  %v1919 = vpow.pop %v1918
  %v1920 = vadd.f32 %v1917, 1.0
  %v1921 = vadd.f32 %v1919, 1.0
  %v1922 = vrcp.pop %v1920
  %v1923 = vmul.f32 1.0, %v1922
  %v1924 = vrcp.pop %v1921
  %v1925 = vmul.f32 1.0, %v1924
  %v1927 = vrot.slane %v1887, 1
  %v1930 = vmul.f32 %v1905, %v1887
  %v1931 = vmul.f32 %v1907, %v1927
  %v1932 = vadd.f32 %v1678, %v1930
  %v1933 = vadd.f32 %v1679, %v1931
  %v1934 = vtanh.pop %v1932
  %v1935 = vtanh.pop %v1933
  %v1936 = vsub.f32 1.0, %v1923
  %v1937 = vsub.f32 1.0, %v1925
  %v1938 = vmul.f32 %v1936, %v1934
  %v1939 = vmul.f32 %v1937, %v1935
  %v1940 = vmul.f32 %v1923, %v1196
  %v1941 = vmul.f32 %v1925, %v1197
  %v1942 = vadd.f32 %v1938, %v1940
  %v1943 = vadd.f32 %v1939, %v1941
  %v1946 = vrot.slane %v1943, 7
  %v1947 = vsel %vm422, %v1946, %v1942
  %v1948 = vsel %vm130, %v1947, 0
  %1950 = vmatprep.subr.mxu0 0.0
  %1951 = vmatpush1.msra.mxu0 0.0
  %1952 = vmatprep.subr.mxu0 0.0
  %1953 = vmatpush1.msra.mxu0 0.0
  %1954 = vmatprep.subr.mxu0 0.0
  %1955 = vmatpush1.msra.mxu0 0.0
  %1956 = vmatprep.subr.mxu0 0.0
  %1957 = vmatpush1.msra.mxu0 0.0
  %1958 = vmatprep.subr.mxu0 0.0
  %1959 = vmatpush1.msra.mxu0 0.0
  %1960 = vmatprep.subr.mxu0 0.0
  %1961 = vmatpush1.msra.mxu0 0.0
  %1962 = vmatprep.subr.mxu0 0.0
  %1963 = vmatpush1.msra.mxu0 0.0
  %1964 = vmatprep.subr.mxu0 0.0
  %1965 = vmatpush1.msra.mxu0 0.0
  %1966 = vmatprep.subr.mxu0 0.0
  %1967 = vmatpush1.msra.mxu0 0.0
  %1968 = vmatprep.subr.mxu0 0.0
  %1969 = vmatpush1.msra.mxu0 0.0
  %1970 = vmatprep.subr.mxu0 0.0
  %1971 = vmatpush1.msra.mxu0 0.0
  %1972 = vmatprep.subr.mxu0 0.0
  %1973 = vmatpush1.msra.mxu0 0.0
  %1974 = vmatprep.subr.mxu0 0.0
  %1975 = vmatpush1.msra.mxu0 %v99
  %1976 = vmatprep.subr.mxu0 0.0
  %1977 = vmatpush1.msra.mxu0 %v98
  %1978 = vmatprep.subr.mxu0 0.0
  %1979 = vmatpush1.msra.mxu0 %v97
  %1980 = vmatprep.subr.mxu0 0.0
  %1981 = vmatpush1.msra.mxu0 %v96
  %1982 = vmatprep.subr.mxu0 0.0
  %1983 = vmatpush2.msra.mxu0 0.0
  %1984 = vmatprep.subr.mxu0 0.0
  %1985 = vmatpush2.msra.mxu0 0.0
  %1986 = vmatprep.subr.mxu0 0.0
  %1987 = vmatpush2.msra.mxu0 0.0
  %1988 = vmatprep.subr.mxu0 0.0
  %1989 = vmatpush2.msra.mxu0 0.0
  %1990 = vmatprep.subr.mxu0 0.0
  %1991 = vmatpush2.msra.mxu0 0.0
  %1992 = vmatprep.subr.mxu0 0.0
  %1993 = vmatpush2.msra.mxu0 0.0
  %1994 = vmatprep.subr.mxu0 0.0
  %1995 = vmatpush2.msra.mxu0 0.0
  %1996 = vmatprep.subr.mxu0 0.0
  %1997 = vmatpush2.msra.mxu0 0.0
  %1998 = vmatprep.subr.mxu0 0.0
  %1999 = vmatpush2.msra.mxu0 0.0
  %2000 = vmatprep.subr.mxu0 0.0
  %2001 = vmatpush2.msra.mxu0 0.0
  %2002 = vmatprep.subr.mxu0 0.0
  %2003 = vmatpush2.msra.mxu0 0.0
  %2004 = vmatprep.subr.mxu0 0.0
  %2005 = vmatpush2.msra.mxu0 0.0
  %2006 = vmatprep.subr.mxu0 0.0
  %2007 = vmatpush2.msra.mxu0 0.0
  %2008 = vmatprep.subr.mxu0 0.0
  %2009 = vmatpush2.msra.mxu0 0.0
  %2010 = vmatprep.subr.mxu0 0.0
  %2011 = vmatpush2.msra.mxu0 0.0
  %2012 = vmatprep.subr.mxu0 0.0
  %2013 = vmatpush2.msra.mxu0 0.0
  %2014 = vmatprep.mubr.f32.mxu0 0.0
  %2015 = vmatmul.mubr.f32.gmra.mxu0 %v1948
  %v2016 = vpop.f32.mrf.mxu0
  %v2017 = vadd.f32 %v417, %v2016
  %v2018 = vpop.f32.mrf.mxu0
  %2019 = vdwg.mxu0
  %2020 = vmatprep.subr.mxu0 0.0
  %2021 = vmatpush1.msra.mxu0 0.0
  %2022 = vmatprep.subr.mxu0 0.0
  %2023 = vmatpush1.msra.mxu0 0.0
  %2024 = vmatprep.subr.mxu0 0.0
  %2025 = vmatpush1.msra.mxu0 0.0
  %2026 = vmatprep.subr.mxu0 0.0
  %2027 = vmatpush1.msra.mxu0 0.0
  %2028 = vmatprep.subr.mxu0 0.0
  %2029 = vmatpush1.msra.mxu0 0.0
  %2030 = vmatprep.subr.mxu0 0.0
  %2031 = vmatpush1.msra.mxu0 0.0
  %2032 = vmatprep.subr.mxu0 0.0
  %2033 = vmatpush1.msra.mxu0 0.0
  %2034 = vmatprep.subr.mxu0 0.0
  %2035 = vmatpush1.msra.mxu0 0.0
  %2036 = vmatprep.subr.mxu0 0.0
  %2037 = vmatpush1.msra.mxu0 0.0
  %2038 = vmatprep.subr.mxu0 0.0
  %2039 = vmatpush1.msra.mxu0 0.0
  %2040 = vmatprep.subr.mxu0 0.0
  %2041 = vmatpush1.msra.mxu0 0.0
  %2042 = vmatprep.subr.mxu0 0.0
  %2043 = vmatpush1.msra.mxu0 0.0
  %2044 = vmatprep.subr.mxu0 0.0
  %2045 = vmatpush1.msra.mxu0 %v104
  %2046 = vmatprep.subr.mxu0 0.0
  %2047 = vmatpush1.msra.mxu0 %v103
  %2048 = vmatprep.subr.mxu0 0.0
  %2049 = vmatpush1.msra.mxu0 %v102
  %2050 = vmatprep.subr.mxu0 0.0
  %2051 = vmatpush1.msra.mxu0 %v101
  %2052 = vmatprep.subr.mxu0 0.0
  %2053 = vmatpush2.msra.mxu0 0.0
  %2054 = vmatprep.subr.mxu0 0.0
  %2055 = vmatpush2.msra.mxu0 0.0
  %2056 = vmatprep.subr.mxu0 0.0
  %2057 = vmatpush2.msra.mxu0 0.0
  %2058 = vmatprep.subr.mxu0 0.0
  %2059 = vmatpush2.msra.mxu0 0.0
  %2060 = vmatprep.subr.mxu0 0.0
  %2061 = vmatpush2.msra.mxu0 0.0
  %2062 = vmatprep.subr.mxu0 0.0
  %2063 = vmatpush2.msra.mxu0 0.0
  %2064 = vmatprep.subr.mxu0 0.0
  %2065 = vmatpush2.msra.mxu0 0.0
  %2066 = vmatprep.subr.mxu0 0.0
  %2067 = vmatpush2.msra.mxu0 0.0
  %2068 = vmatprep.subr.mxu0 0.0
  %2069 = vmatpush2.msra.mxu0 0.0
  %2070 = vmatprep.subr.mxu0 0.0
  %2071 = vmatpush2.msra.mxu0 0.0
  %2072 = vmatprep.subr.mxu0 0.0
  %2073 = vmatpush2.msra.mxu0 0.0
  %2074 = vmatprep.subr.mxu0 0.0
  %2075 = vmatpush2.msra.mxu0 0.0
  %2076 = vmatprep.subr.mxu0 0.0
  %2077 = vmatpush2.msra.mxu0 0.0
  %2078 = vmatprep.subr.mxu0 0.0
  %2079 = vmatpush2.msra.mxu0 0.0
  %2080 = vmatprep.subr.mxu0 0.0
  %2081 = vmatpush2.msra.mxu0 0.0
  %2082 = vmatprep.subr.mxu0 0.0
  %2083 = vmatpush2.msra.mxu0 0.0
  %2084 = vmatprep.mubr.f32.mxu0 0.0
  %2085 = vmatmul.mubr.f32.gmra.mxu0 %v1948
  %v2086 = vpop.f32.mrf.mxu0
  %v2087 = vadd.f32 %v500, %v2086
  %v2088 = vpop.f32.mrf.mxu0
  %2089 = vdwg.mxu0
  %2090 = vmatprep.subr.mxu0 0.0
  %2091 = vmatpush1.msra.mxu0 0.0
  %2092 = vmatprep.subr.mxu0 0.0
  %2093 = vmatpush1.msra.mxu0 0.0
  %2094 = vmatprep.subr.mxu0 0.0
  %2095 = vmatpush1.msra.mxu0 0.0
  %2096 = vmatprep.subr.mxu0 0.0
  %2097 = vmatpush1.msra.mxu0 0.0
  %2098 = vmatprep.subr.mxu0 0.0
  %2099 = vmatpush1.msra.mxu0 0.0
  %2100 = vmatprep.subr.mxu0 0.0
  %2101 = vmatpush1.msra.mxu0 0.0
  %2102 = vmatprep.subr.mxu0 0.0
  %2103 = vmatpush1.msra.mxu0 0.0
  %2104 = vmatprep.subr.mxu0 0.0
  %2105 = vmatpush1.msra.mxu0 0.0
  %2106 = vmatprep.subr.mxu0 0.0
  %2107 = vmatpush1.msra.mxu0 0.0
  %2108 = vmatprep.subr.mxu0 0.0
  %2109 = vmatpush1.msra.mxu0 0.0
  %2110 = vmatprep.subr.mxu0 0.0
  %2111 = vmatpush1.msra.mxu0 0.0
  %2112 = vmatprep.subr.mxu0 0.0
  %2113 = vmatpush1.msra.mxu0 0.0
  %2114 = vmatprep.subr.mxu0 0.0
  %2115 = vmatpush1.msra.mxu0 %v109
  %2116 = vmatprep.subr.mxu0 0.0
  %2117 = vmatpush1.msra.mxu0 %v108
  %2118 = vmatprep.subr.mxu0 0.0
  %2119 = vmatpush1.msra.mxu0 %v107
  %2120 = vmatprep.subr.mxu0 0.0
  %2121 = vmatpush1.msra.mxu0 %v106
  %2122 = vmatprep.subr.mxu0 0.0
  %2123 = vmatpush2.msra.mxu0 0.0
  %2124 = vmatprep.subr.mxu0 0.0
  %2125 = vmatpush2.msra.mxu0 0.0
  %2126 = vmatprep.subr.mxu0 0.0
  %2127 = vmatpush2.msra.mxu0 0.0
  %2128 = vmatprep.subr.mxu0 0.0
  %2129 = vmatpush2.msra.mxu0 0.0
  %2130 = vmatprep.subr.mxu0 0.0
  %2131 = vmatpush2.msra.mxu0 0.0
  %2132 = vmatprep.subr.mxu0 0.0
  %2133 = vmatpush2.msra.mxu0 0.0
  %2134 = vmatprep.subr.mxu0 0.0
  %2135 = vmatpush2.msra.mxu0 0.0
  %2136 = vmatprep.subr.mxu0 0.0
  %2137 = vmatpush2.msra.mxu0 0.0
  %2138 = vmatprep.subr.mxu0 0.0
  %2139 = vmatpush2.msra.mxu0 0.0
  %2140 = vmatprep.subr.mxu0 0.0
  %2141 = vmatpush2.msra.mxu0 0.0
  %2142 = vmatprep.subr.mxu0 0.0
  %2143 = vmatpush2.msra.mxu0 0.0
  %2144 = vmatprep.subr.mxu0 0.0
  %2145 = vmatpush2.msra.mxu0 0.0
  %2146 = vmatprep.subr.mxu0 0.0
  %2147 = vmatpush2.msra.mxu0 0.0
  %2148 = vmatprep.subr.mxu0 0.0
  %2149 = vmatpush2.msra.mxu0 0.0
  %2150 = vmatprep.subr.mxu0 0.0
  %2151 = vmatpush2.msra.mxu0 0.0
  %2152 = vmatprep.subr.mxu0 0.0
  %2153 = vmatpush2.msra.mxu0 0.0
  %2154 = vmatprep.mubr.f32.mxu0 0.0
  %2155 = vmatmul.mubr.f32.gmra.mxu0 %v1948
  %v2156 = vpop.f32.mrf.mxu0
  %v2157 = vadd.f32 %v576, %v2156
  %v2158 = vpop.f32.mrf.mxu0
  %2159 = vdwg.mxu0
  %v2160 = vsel %vm130, %v1646, 0
  %2162 = vmatprep.subr.mxu0 0.0
  %2163 = vmatpush1.msra.mxu0 0.0
  %2164 = vmatprep.subr.mxu0 0.0
  %2165 = vmatpush1.msra.mxu0 0.0
  %2166 = vmatprep.subr.mxu0 0.0
  %2167 = vmatpush1.msra.mxu0 0.0
  %2168 = vmatprep.subr.mxu0 0.0
  %2169 = vmatpush1.msra.mxu0 0.0
  %2170 = vmatprep.subr.mxu0 0.0
  %2171 = vmatpush1.msra.mxu0 0.0
  %2172 = vmatprep.subr.mxu0 0.0
  %2173 = vmatpush1.msra.mxu0 0.0
  %2174 = vmatprep.subr.mxu0 0.0
  %2175 = vmatpush1.msra.mxu0 0.0
  %2176 = vmatprep.subr.mxu0 0.0
  %2177 = vmatpush1.msra.mxu0 0.0
  %2178 = vmatprep.subr.mxu0 0.0
  %2179 = vmatpush1.msra.mxu0 0.0
  %2180 = vmatprep.subr.mxu0 0.0
  %2181 = vmatpush1.msra.mxu0 0.0
  %2182 = vmatprep.subr.mxu0 0.0
  %2183 = vmatpush1.msra.mxu0 0.0
  %2184 = vmatprep.subr.mxu0 0.0
  %2185 = vmatpush1.msra.mxu0 0.0
  %2186 = vmatprep.subr.mxu0 0.0
  %2187 = vmatpush1.msra.mxu0 %v75
  %2188 = vmatprep.subr.mxu0 0.0
  %2189 = vmatpush1.msra.mxu0 %v74
  %2190 = vmatprep.subr.mxu0 0.0
  %2191 = vmatpush1.msra.mxu0 %v73
  %2192 = vmatprep.subr.mxu0 0.0
  %2193 = vmatpush1.msra.mxu0 %v72
  %2194 = vmatprep.subr.mxu0 0.0
  %2195 = vmatpush2.msra.mxu0 0.0
  %2196 = vmatprep.subr.mxu0 0.0
  %2197 = vmatpush2.msra.mxu0 0.0
  %2198 = vmatprep.subr.mxu0 0.0
  %2199 = vmatpush2.msra.mxu0 0.0
  %2200 = vmatprep.subr.mxu0 0.0
  %2201 = vmatpush2.msra.mxu0 0.0
  %2202 = vmatprep.subr.mxu0 0.0
  %2203 = vmatpush2.msra.mxu0 0.0
  %2204 = vmatprep.subr.mxu0 0.0
  %2205 = vmatpush2.msra.mxu0 0.0
  %2206 = vmatprep.subr.mxu0 0.0
  %2207 = vmatpush2.msra.mxu0 0.0
  %2208 = vmatprep.subr.mxu0 0.0
  %2209 = vmatpush2.msra.mxu0 0.0
  %2210 = vmatprep.subr.mxu0 0.0
  %2211 = vmatpush2.msra.mxu0 0.0
  %2212 = vmatprep.subr.mxu0 0.0
  %2213 = vmatpush2.msra.mxu0 0.0
  %2214 = vmatprep.subr.mxu0 0.0
  %2215 = vmatpush2.msra.mxu0 0.0
  %2216 = vmatprep.subr.mxu0 0.0
  %2217 = vmatpush2.msra.mxu0 0.0
  %2218 = vmatprep.subr.mxu0 0.0
  %2219 = vmatpush2.msra.mxu0 0.0
  %2220 = vmatprep.subr.mxu0 0.0
  %2221 = vmatpush2.msra.mxu0 0.0
  %2222 = vmatprep.subr.mxu0 0.0
  %2223 = vmatpush2.msra.mxu0 0.0
  %2224 = vmatprep.subr.mxu0 0.0
  %2225 = vmatpush2.msra.mxu0 0.0
  %2226 = vmatprep.mubr.f32.mxu0 0.0
  %2227 = vmatmul.mubr.f32.gmra.mxu0 %v2160
  %v2228 = vpop.f32.mrf.mxu0
  %v2229 = vadd.f32 %v652, %v2228
  %v2230 = vpop.f32.mrf.mxu0
  %2231 = vdwg.mxu0
  %2232 = vmatprep.subr.mxu0 0.0
  %2233 = vmatpush1.msra.mxu0 0.0
  %2234 = vmatprep.subr.mxu0 0.0
  %2235 = vmatpush1.msra.mxu0 0.0
  %2236 = vmatprep.subr.mxu0 0.0
  %2237 = vmatpush1.msra.mxu0 0.0
  %2238 = vmatprep.subr.mxu0 0.0
  %2239 = vmatpush1.msra.mxu0 0.0
  %2240 = vmatprep.subr.mxu0 0.0
  %2241 = vmatpush1.msra.mxu0 0.0
  %2242 = vmatprep.subr.mxu0 0.0
  %2243 = vmatpush1.msra.mxu0 0.0
  %2244 = vmatprep.subr.mxu0 0.0
  %2245 = vmatpush1.msra.mxu0 0.0
  %2246 = vmatprep.subr.mxu0 0.0
  %2247 = vmatpush1.msra.mxu0 0.0
  %2248 = vmatprep.subr.mxu0 0.0
  %2249 = vmatpush1.msra.mxu0 0.0
  %2250 = vmatprep.subr.mxu0 0.0
  %2251 = vmatpush1.msra.mxu0 0.0
  %2252 = vmatprep.subr.mxu0 0.0
  %2253 = vmatpush1.msra.mxu0 0.0
  %2254 = vmatprep.subr.mxu0 0.0
  %2255 = vmatpush1.msra.mxu0 0.0
  %2256 = vmatprep.subr.mxu0 0.0
  %2257 = vmatpush1.msra.mxu0 %v80
  %2258 = vmatprep.subr.mxu0 0.0
  %2259 = vmatpush1.msra.mxu0 %v79
  %2260 = vmatprep.subr.mxu0 0.0
  %2261 = vmatpush1.msra.mxu0 %v78
  %2262 = vmatprep.subr.mxu0 0.0
  %2263 = vmatpush1.msra.mxu0 %v77
  %2264 = vmatprep.subr.mxu0 0.0
  %2265 = vmatpush2.msra.mxu0 0.0
  %2266 = vmatprep.subr.mxu0 0.0
  %2267 = vmatpush2.msra.mxu0 0.0
  %2268 = vmatprep.subr.mxu0 0.0
  %2269 = vmatpush2.msra.mxu0 0.0
  %2270 = vmatprep.subr.mxu0 0.0
  %2271 = vmatpush2.msra.mxu0 0.0
  %2272 = vmatprep.subr.mxu0 0.0
  %2273 = vmatpush2.msra.mxu0 0.0
  %2274 = vmatprep.subr.mxu0 0.0
  %2275 = vmatpush2.msra.mxu0 0.0
  %2276 = vmatprep.subr.mxu0 0.0
  %2277 = vmatpush2.msra.mxu0 0.0
  %2278 = vmatprep.subr.mxu0 0.0
  %2279 = vmatpush2.msra.mxu0 0.0
  %2280 = vmatprep.subr.mxu0 0.0
  %2281 = vmatpush2.msra.mxu0 0.0
  %2282 = vmatprep.subr.mxu0 0.0
  %2283 = vmatpush2.msra.mxu0 0.0
  %2284 = vmatprep.subr.mxu0 0.0
  %2285 = vmatpush2.msra.mxu0 0.0
  %2286 = vmatprep.subr.mxu0 0.0
  %2287 = vmatpush2.msra.mxu0 0.0
  %2288 = vmatprep.subr.mxu0 0.0
  %2289 = vmatpush2.msra.mxu0 0.0
  %2290 = vmatprep.subr.mxu0 0.0
  %2291 = vmatpush2.msra.mxu0 0.0
  %2292 = vmatprep.subr.mxu0 0.0
  %2293 = vmatpush2.msra.mxu0 0.0
  %2294 = vmatprep.subr.mxu0 0.0
  %2295 = vmatpush2.msra.mxu0 0.0
  %2296 = vmatprep.mubr.f32.mxu0 0.0
  %2297 = vmatmul.mubr.f32.gmra.mxu0 %v2160
  %v2298 = vpop.f32.mrf.mxu0
  %v2299 = vadd.f32 %v731, %v2298
  %v2300 = vpop.f32.mrf.mxu0
  %2301 = vdwg.mxu0
  %2302 = vmatprep.subr.mxu0 0.0
  %2303 = vmatpush1.msra.mxu0 0.0
  %2304 = vmatprep.subr.mxu0 0.0
  %2305 = vmatpush1.msra.mxu0 0.0
  %2306 = vmatprep.subr.mxu0 0.0
  %2307 = vmatpush1.msra.mxu0 0.0
  %2308 = vmatprep.subr.mxu0 0.0
  %2309 = vmatpush1.msra.mxu0 0.0
  %2310 = vmatprep.subr.mxu0 0.0
  %2311 = vmatpush1.msra.mxu0 0.0
  %2312 = vmatprep.subr.mxu0 0.0
  %2313 = vmatpush1.msra.mxu0 0.0
  %2314 = vmatprep.subr.mxu0 0.0
  %2315 = vmatpush1.msra.mxu0 0.0
  %2316 = vmatprep.subr.mxu0 0.0
  %2317 = vmatpush1.msra.mxu0 0.0
  %2318 = vmatprep.subr.mxu0 0.0
  %2319 = vmatpush1.msra.mxu0 0.0
  %2320 = vmatprep.subr.mxu0 0.0
  %2321 = vmatpush1.msra.mxu0 0.0
  %2322 = vmatprep.subr.mxu0 0.0
  %2323 = vmatpush1.msra.mxu0 0.0
  %2324 = vmatprep.subr.mxu0 0.0
  %2325 = vmatpush1.msra.mxu0 0.0
  %2326 = vmatprep.subr.mxu0 0.0
  %2327 = vmatpush1.msra.mxu0 %v85
  %2328 = vmatprep.subr.mxu0 0.0
  %2329 = vmatpush1.msra.mxu0 %v84
  %2330 = vmatprep.subr.mxu0 0.0
  %2331 = vmatpush1.msra.mxu0 %v83
  %2332 = vmatprep.subr.mxu0 0.0
  %2333 = vmatpush1.msra.mxu0 %v82
  %2334 = vmatprep.subr.mxu0 0.0
  %2335 = vmatpush2.msra.mxu0 0.0
  %2336 = vmatprep.subr.mxu0 0.0
  %2337 = vmatpush2.msra.mxu0 0.0
  %2338 = vmatprep.subr.mxu0 0.0
  %2339 = vmatpush2.msra.mxu0 0.0
  %2340 = vmatprep.subr.mxu0 0.0
  %2341 = vmatpush2.msra.mxu0 0.0
  %2342 = vmatprep.subr.mxu0 0.0
  %2343 = vmatpush2.msra.mxu0 0.0
  %2344 = vmatprep.subr.mxu0 0.0
  %2345 = vmatpush2.msra.mxu0 0.0
  %2346 = vmatprep.subr.mxu0 0.0
  %2347 = vmatpush2.msra.mxu0 0.0
  %2348 = vmatprep.subr.mxu0 0.0
  %2349 = vmatpush2.msra.mxu0 0.0
  %2350 = vmatprep.subr.mxu0 0.0
  %2351 = vmatpush2.msra.mxu0 0.0
  %2352 = vmatprep.subr.mxu0 0.0
  %2353 = vmatpush2.msra.mxu0 0.0
  %2354 = vmatprep.subr.mxu0 0.0
  %2355 = vmatpush2.msra.mxu0 0.0
  %2356 = vmatprep.subr.mxu0 0.0
  %2357 = vmatpush2.msra.mxu0 0.0
  %2358 = vmatprep.subr.mxu0 0.0
  %2359 = vmatpush2.msra.mxu0 0.0
  %2360 = vmatprep.subr.mxu0 0.0
  %2361 = vmatpush2.msra.mxu0 0.0
  %2362 = vmatprep.subr.mxu0 0.0
  %2363 = vmatpush2.msra.mxu0 0.0
  %2364 = vmatprep.subr.mxu0 0.0
  %2365 = vmatpush2.msra.mxu0 0.0
  %2366 = vmatprep.mubr.f32.mxu0 0.0
  %2367 = vmatmul.mubr.f32.gmra.mxu0 %v2160
  %v2368 = vpop.f32.mrf.mxu0
  %v2369 = vadd.f32 %v807, %v2368
  %v2370 = vpop.f32.mrf.mxu0
  %2371 = vdwg.mxu0
  %v2372 = vadd.f32 %v2017, %v2229
  %v2373 = vxor.u32 %v2372, 2147483648
  %v2374 = vmul.f32 %v2373, 1.442695
  %v2375 = vpow.pop %v2374
  %v2376 = vadd.f32 %v2375, 1.0
  %v2377 = vrcp.pop %v2376
  %v2378 = vmul.f32 1.0, %v2377
  %v2379 = vadd.f32 %v2087, %v2299
  %v2380 = vxor.u32 %v2379, 2147483648
  %v2381 = vmul.f32 %v2380, 1.442695
  %v2382 = vpow.pop %v2381
  %v2383 = vadd.f32 %v2382, 1.0
  %v2384 = vrcp.pop %v2383
  %v2385 = vmul.f32 1.0, %v2384
  %v2386 = vmul.f32 %v2378, %v2369
  %v2387 = vadd.f32 %v2157, %v2386
  %v2388 = vtanh.pop %v2387
  %v2389 = vsub.f32 1.0, %v2385
  %v2390 = vmul.f32 %v2389, %v2388
  %v2391 = vmul.f32 %v2385, %v1646
  %v2392 = vadd.f32 %v2390, %v2391
  %v2395 = vunpack.c.l.s4 1966171168
  %v2396 = vunpack.c.0.s8 %v2395
  %v2397 = vlaneseq
  %v2398 = vshrl.u32 %v2397, 7
  %v2399 = vsub.s32 %v2396, %v2398
  %v2400 = vrot.slane %v2392, %v2399
  %v2401 = vcombine.high %v2400, %v2400
  %v2403 = vunpack.c.l.s4 1966171168
  %v2404 = vunpack.c.0.s8 %v2403
  %v2405 = vlaneseq
  %v2406 = vshrl.u32 %v2405, 7
  %v2407 = vsub.s32 %v2404, %v2406
  %v2408 = vrot.slane %v2400, %v2407
  %v2410 = vunpack.c.l.s4 1966171168
  %v2411 = vunpack.c.0.s8 %v2410
  %v2412 = vlaneseq
  %v2413 = vshrl.u32 %v2412, 7
  %v2414 = vsub.s32 %v2411, %v2413
  %v2415 = vrot.slane %v2401, %v2414
  %2418 = vst.msk [vmem:[%s10 + $0x2] sm:$0x1] %vm925, %v2408
  %2419 = vst.msk [vmem:[%s10 + $0xa] sm:$0x1] %vm925, %v2415
  %v2420 = vld [vmem:[%s0 + $0x3] sm:$0x1]
  %v2421 = vld [vmem:[%s0 + $0xb] sm:$0x1]
  %v2422 = vld [vmem:[%s1 + $0x3] sm:$0x1]
  %v2423 = vld [vmem:[%s1 + $0xb] sm:$0x1]
  %v2424 = vld [vmem:[%s2 + $0x3] sm:$0x1]
  %v2425 = vld [vmem:[%s2 + $0xb] sm:$0x1]
  %2426 = vmatprep.subr.mxu0 0.0
  %2427 = vmatpush1.msra.mxu0 0.0
  %2428 = vmatprep.subr.mxu0 0.0
  %2429 = vmatpush1.msra.mxu0 0.0
  %2430 = vmatprep.subr.mxu0 0.0
  %2431 = vmatpush1.msra.mxu0 0.0
  %2432 = vmatprep.subr.mxu0 0.0
  %2433 = vmatpush1.msra.mxu0 0.0
  %2434 = vmatprep.subr.mxu0 0.0
  %2435 = vmatpush1.msra.mxu0 0.0
  %2436 = vmatprep.subr.mxu0 0.0
  %2437 = vmatpush1.msra.mxu0 0.0
  %2438 = vmatprep.subr.mxu0 0.0
  %2439 = vmatpush1.msra.mxu0 0.0
  %2440 = vmatprep.subr.mxu0 0.0
  %2441 = vmatpush1.msra.mxu0 0.0
  %2442 = vmatprep.subr.mxu0 0.0
  %2443 = vmatpush1.msra.mxu0 0.0
  %2444 = vmatprep.subr.mxu0 0.0
  %2445 = vmatpush1.msra.mxu0 0.0
  %2446 = vmatprep.subr.mxu0 0.0
  %2447 = vmatpush1.msra.mxu0 0.0
  %2448 = vmatprep.subr.mxu0 0.0
  %2449 = vmatpush1.msra.mxu0 0.0
  %2450 = vmatprep.subr.mxu0 0.0
  %2451 = vmatpush1.msra.mxu0 %v61
  %2452 = vmatprep.subr.mxu0 0.0
  %2453 = vmatpush1.msra.mxu0 %v60
  %2454 = vmatprep.subr.mxu0 0.0
  %2455 = vmatpush1.msra.mxu0 %v59
  %2456 = vmatprep.subr.mxu0 0.0
  %2457 = vmatpush1.msra.mxu0 %v58
  %2458 = vmatprep.subr.mxu0 0.0
  %2459 = vmatpush2.msra.mxu0 0.0
  %2460 = vmatprep.subr.mxu0 0.0
  %2461 = vmatpush2.msra.mxu0 0.0
  %2462 = vmatprep.subr.mxu0 0.0
  %2463 = vmatpush2.msra.mxu0 0.0
  %2464 = vmatprep.subr.mxu0 0.0
  %2465 = vmatpush2.msra.mxu0 0.0
  %2466 = vmatprep.subr.mxu0 0.0
  %2467 = vmatpush2.msra.mxu0 0.0
  %2468 = vmatprep.subr.mxu0 0.0
  %2469 = vmatpush2.msra.mxu0 0.0
  %2470 = vmatprep.subr.mxu0 0.0
  %2471 = vmatpush2.msra.mxu0 0.0
  %2472 = vmatprep.subr.mxu0 0.0
  %2473 = vmatpush2.msra.mxu0 0.0
  %2474 = vmatprep.subr.mxu0 0.0
  %2475 = vmatpush2.msra.mxu0 0.0
  %2476 = vmatprep.subr.mxu0 0.0
  %2477 = vmatpush2.msra.mxu0 0.0
  %2478 = vmatprep.subr.mxu0 0.0
  %2479 = vmatpush2.msra.mxu0 0.0
  %2480 = vmatprep.subr.mxu0 0.0
  %2481 = vmatpush2.msra.mxu0 0.0
  %2482 = vmatprep.subr.mxu0 0.0
  %2483 = vmatpush2.msra.mxu0 0.0
  %2484 = vmatprep.subr.mxu0 0.0
  %2485 = vmatpush2.msra.mxu0 0.0
  %2486 = vmatprep.subr.mxu0 0.0
  %2487 = vmatpush2.msra.mxu0 0.0
  %2488 = vmatprep.subr.mxu0 0.0
  %2489 = vmatpush2.msra.mxu0 0.0
  %2490 = vmatprep.mubr.f32.mxu0 0.0
  %2491 = vmatmul.mubr.f32.gmra.mxu0 %v1948
  %v2492 = vpop.f32.mrf.mxu0
  %v2493 = vadd.f32 %v128, %v2492
  %v2494 = vpop.f32.mrf.mxu0
  %2495 = vdwg.mxu0
  %2496 = vmatprep.subr.mxu0 0.0
  %2497 = vmatpush1.msra.mxu0 0.0
  %2498 = vmatprep.subr.mxu0 0.0
  %2499 = vmatpush1.msra.mxu0 0.0
  %2500 = vmatprep.subr.mxu0 0.0
  %2501 = vmatpush1.msra.mxu0 0.0
  %2502 = vmatprep.subr.mxu0 0.0
  %2503 = vmatpush1.msra.mxu0 0.0
  %2504 = vmatprep.subr.mxu0 0.0
  %2505 = vmatpush1.msra.mxu0 0.0
  %2506 = vmatprep.subr.mxu0 0.0
  %2507 = vmatpush1.msra.mxu0 0.0
  %2508 = vmatprep.subr.mxu0 0.0
  %2509 = vmatpush1.msra.mxu0 0.0
  %2510 = vmatprep.subr.mxu0 0.0
  %2511 = vmatpush1.msra.mxu0 0.0
  %2512 = vmatprep.subr.mxu0 0.0
  %2513 = vmatpush1.msra.mxu0 0.0
  %2514 = vmatprep.subr.mxu0 0.0
  %2515 = vmatpush1.msra.mxu0 0.0
  %2516 = vmatprep.subr.mxu0 0.0
  %2517 = vmatpush1.msra.mxu0 0.0
  %2518 = vmatprep.subr.mxu0 0.0
  %2519 = vmatpush1.msra.mxu0 0.0
  %2520 = vmatprep.subr.mxu0 0.0
  %2521 = vmatpush1.msra.mxu0 %v66
  %2522 = vmatprep.subr.mxu0 0.0
  %2523 = vmatpush1.msra.mxu0 %v65
  %2524 = vmatprep.subr.mxu0 0.0
  %2525 = vmatpush1.msra.mxu0 %v64
  %2526 = vmatprep.subr.mxu0 0.0
  %2527 = vmatpush1.msra.mxu0 %v63
  %2528 = vmatprep.subr.mxu0 0.0
  %2529 = vmatpush2.msra.mxu0 0.0
  %2530 = vmatprep.subr.mxu0 0.0
  %2531 = vmatpush2.msra.mxu0 0.0
  %2532 = vmatprep.subr.mxu0 0.0
  %2533 = vmatpush2.msra.mxu0 0.0
  %2534 = vmatprep.subr.mxu0 0.0
  %2535 = vmatpush2.msra.mxu0 0.0
  %2536 = vmatprep.subr.mxu0 0.0
  %2537 = vmatpush2.msra.mxu0 0.0
  %2538 = vmatprep.subr.mxu0 0.0
  %2539 = vmatpush2.msra.mxu0 0.0
  %2540 = vmatprep.subr.mxu0 0.0
  %2541 = vmatpush2.msra.mxu0 0.0
  %2542 = vmatprep.subr.mxu0 0.0
  %2543 = vmatpush2.msra.mxu0 0.0
  %2544 = vmatprep.subr.mxu0 0.0
  %2545 = vmatpush2.msra.mxu0 0.0
  %2546 = vmatprep.subr.mxu0 0.0
  %2547 = vmatpush2.msra.mxu0 0.0
  %2548 = vmatprep.subr.mxu0 0.0
  %2549 = vmatpush2.msra.mxu0 0.0
  %2550 = vmatprep.subr.mxu0 0.0
  %2551 = vmatpush2.msra.mxu0 0.0
  %2552 = vmatprep.subr.mxu0 0.0
  %2553 = vmatpush2.msra.mxu0 0.0
  %2554 = vmatprep.subr.mxu0 0.0
  %2555 = vmatpush2.msra.mxu0 0.0
  %2556 = vmatprep.subr.mxu0 0.0
  %2557 = vmatpush2.msra.mxu0 0.0
  %2558 = vmatprep.subr.mxu0 0.0
  %2559 = vmatpush2.msra.mxu0 0.0
  %2560 = vmatprep.mubr.f32.mxu0 0.0
  %2561 = vmatmul.mubr.f32.gmra.mxu0 %v1948
  %v2562 = vpop.f32.mrf.mxu0
  %v2563 = vadd.f32 %v208, %v2562
  %v2564 = vpop.f32.mrf.mxu0
  %2565 = vdwg.mxu0
  %2566 = vmatprep.subr.mxu0 0.0
  %2567 = vmatpush1.msra.mxu0 0.0
  %2568 = vmatprep.subr.mxu0 0.0
  %2569 = vmatpush1.msra.mxu0 0.0
  %2570 = vmatprep.subr.mxu0 0.0
  %2571 = vmatpush1.msra.mxu0 0.0
  %2572 = vmatprep.subr.mxu0 0.0
  %2573 = vmatpush1.msra.mxu0 0.0
  %2574 = vmatprep.subr.mxu0 0.0
  %2575 = vmatpush1.msra.mxu0 0.0
  %2576 = vmatprep.subr.mxu0 0.0
  %2577 = vmatpush1.msra.mxu0 0.0
  %2578 = vmatprep.subr.mxu0 0.0
  %2579 = vmatpush1.msra.mxu0 0.0
  %2580 = vmatprep.subr.mxu0 0.0
  %2581 = vmatpush1.msra.mxu0 0.0
  %2582 = vmatprep.subr.mxu0 0.0
  %2583 = vmatpush1.msra.mxu0 0.0
  %2584 = vmatprep.subr.mxu0 0.0
  %2585 = vmatpush1.msra.mxu0 0.0
  %2586 = vmatprep.subr.mxu0 0.0
  %2587 = vmatpush1.msra.mxu0 0.0
  %2588 = vmatprep.subr.mxu0 0.0
  %2589 = vmatpush1.msra.mxu0 0.0
  %2590 = vmatprep.subr.mxu0 0.0
  %2591 = vmatpush1.msra.mxu0 %v71
  %2592 = vmatprep.subr.mxu0 0.0
  %2593 = vmatpush1.msra.mxu0 %v70
  %2594 = vmatprep.subr.mxu0 0.0
  %2595 = vmatpush1.msra.mxu0 %v69
  %2596 = vmatprep.subr.mxu0 0.0
  %2597 = vmatpush1.msra.mxu0 %v68
  %2598 = vmatprep.subr.mxu0 0.0
  %2599 = vmatpush2.msra.mxu0 0.0
  %2600 = vmatprep.subr.mxu0 0.0
  %2601 = vmatpush2.msra.mxu0 0.0
  %2602 = vmatprep.subr.mxu0 0.0
  %2603 = vmatpush2.msra.mxu0 0.0
  %2604 = vmatprep.subr.mxu0 0.0
  %2605 = vmatpush2.msra.mxu0 0.0
  %2606 = vmatprep.subr.mxu0 0.0
  %2607 = vmatpush2.msra.mxu0 0.0
  %2608 = vmatprep.subr.mxu0 0.0
  %2609 = vmatpush2.msra.mxu0 0.0
  %2610 = vmatprep.subr.mxu0 0.0
  %2611 = vmatpush2.msra.mxu0 0.0
  %2612 = vmatprep.subr.mxu0 0.0
  %2613 = vmatpush2.msra.mxu0 0.0
  %2614 = vmatprep.subr.mxu0 0.0
  %2615 = vmatpush2.msra.mxu0 0.0
  %2616 = vmatprep.subr.mxu0 0.0
  %2617 = vmatpush2.msra.mxu0 0.0
  %2618 = vmatprep.subr.mxu0 0.0
  %2619 = vmatpush2.msra.mxu0 0.0
  %2620 = vmatprep.subr.mxu0 0.0
  %2621 = vmatpush2.msra.mxu0 0.0
  %2622 = vmatprep.subr.mxu0 0.0
  %2623 = vmatpush2.msra.mxu0 0.0
  %2624 = vmatprep.subr.mxu0 0.0
  %2625 = vmatpush2.msra.mxu0 0.0
  %2626 = vmatprep.subr.mxu0 0.0
  %2627 = vmatpush2.msra.mxu0 0.0
  %2628 = vmatprep.subr.mxu0 0.0
  %2629 = vmatpush2.msra.mxu0 0.0
  %2630 = vmatprep.mubr.f32.mxu0 0.0
  %2631 = vmatmul.mubr.f32.gmra.mxu0 %v1948
  %v2632 = vpop.f32.mrf.mxu0
  %v2633 = vadd.f32 %v284, %v2632
  %v2634 = vpop.f32.mrf.mxu0
  %2635 = vdwg.mxu0
  %v2637 = vrot.slane %v2493, 1
  %v2640 = vadd.f32 %v2420, %v2493
  %v2641 = vadd.f32 %v2421, %v2637
  %v2642 = vxor.u32 %v2640, 2147483648
  %v2643 = vxor.u32 %v2641, 2147483648
  %v2644 = vmul.f32 %v2642, 1.442695
  %v2645 = vpow.pop %v2644
  %v2646 = vmul.f32 %v2643, 1.442695
  %v2647 = vpow.pop %v2646
  %v2648 = vadd.f32 %v2645, 1.0
  %v2649 = vadd.f32 %v2647, 1.0
  %v2650 = vrcp.pop %v2648
  %v2651 = vmul.f32 1.0, %v2650
  %v2652 = vrcp.pop %v2649
  %v2653 = vmul.f32 1.0, %v2652
  %v2655 = vrot.slane %v2563, 1
  %v2658 = vadd.f32 %v2422, %v2563
  %v2659 = vadd.f32 %v2423, %v2655
  %v2660 = vxor.u32 %v2658, 2147483648
  %v2661 = vxor.u32 %v2659, 2147483648
  %v2662 = vmul.f32 %v2660, 1.442695
  %v2663 = vpow.pop %v2662
  %v2664 = vmul.f32 %v2661, 1.442695
  %v2665 = vpow.pop %v2664
  %v2666 = vadd.f32 %v2663, 1.0
  %v2667 = vadd.f32 %v2665, 1.0
  %v2668 = vrcp.pop %v2666
  %v2669 = vmul.f32 1.0, %v2668
  %v2670 = vrcp.pop %v2667
  %v2671 = vmul.f32 1.0, %v2670
  %v2673 = vrot.slane %v2633, 1
  %v2676 = vmul.f32 %v2651, %v2633
  %v2677 = vmul.f32 %v2653, %v2673
  %v2678 = vadd.f32 %v2424, %v2676
  %v2679 = vadd.f32 %v2425, %v2677
  %v2680 = vtanh.pop %v2678
  %v2681 = vtanh.pop %v2679
  %v2682 = vsub.f32 1.0, %v2669
  %v2683 = vsub.f32 1.0, %v2671
  %v2684 = vmul.f32 %v2682, %v2680
  %v2685 = vmul.f32 %v2683, %v2681
  %v2686 = vmul.f32 %v2669, %v1942
  %v2687 = vmul.f32 %v2671, %v1943
  %v2688 = vadd.f32 %v2684, %v2686
  %v2689 = vadd.f32 %v2685, %v2687
  %v2692 = vrot.slane %v2689, 7
  %v2693 = vsel %vm422, %v2692, %v2688
  %v2694 = vsel %vm130, %v2693, 0
  %2696 = vmatprep.subr.mxu0 0.0
  %2697 = vmatpush1.msra.mxu0 0.0
  %2698 = vmatprep.subr.mxu0 0.0
  %2699 = vmatpush1.msra.mxu0 0.0
  %2700 = vmatprep.subr.mxu0 0.0
  %2701 = vmatpush1.msra.mxu0 0.0
  %2702 = vmatprep.subr.mxu0 0.0
  %2703 = vmatpush1.msra.mxu0 0.0
  %2704 = vmatprep.subr.mxu0 0.0
  %2705 = vmatpush1.msra.mxu0 0.0
  %2706 = vmatprep.subr.mxu0 0.0
  %2707 = vmatpush1.msra.mxu0 0.0
  %2708 = vmatprep.subr.mxu0 0.0
  %2709 = vmatpush1.msra.mxu0 0.0
  %2710 = vmatprep.subr.mxu0 0.0
  %2711 = vmatpush1.msra.mxu0 0.0
  %2712 = vmatprep.subr.mxu0 0.0
  %2713 = vmatpush1.msra.mxu0 0.0
  %2714 = vmatprep.subr.mxu0 0.0
  %2715 = vmatpush1.msra.mxu0 0.0
  %2716 = vmatprep.subr.mxu0 0.0
  %2717 = vmatpush1.msra.mxu0 0.0
  %2718 = vmatprep.subr.mxu0 0.0
  %2719 = vmatpush1.msra.mxu0 0.0
  %2720 = vmatprep.subr.mxu0 0.0
  %2721 = vmatpush1.msra.mxu0 %v99
  %2722 = vmatprep.subr.mxu0 0.0
  %2723 = vmatpush1.msra.mxu0 %v98
  %2724 = vmatprep.subr.mxu0 0.0
  %2725 = vmatpush1.msra.mxu0 %v97
  %2726 = vmatprep.subr.mxu0 0.0
  %2727 = vmatpush1.msra.mxu0 %v96
  %2728 = vmatprep.subr.mxu0 0.0
  %2729 = vmatpush2.msra.mxu0 0.0
  %2730 = vmatprep.subr.mxu0 0.0
  %2731 = vmatpush2.msra.mxu0 0.0
  %2732 = vmatprep.subr.mxu0 0.0
  %2733 = vmatpush2.msra.mxu0 0.0
  %2734 = vmatprep.subr.mxu0 0.0
  %2735 = vmatpush2.msra.mxu0 0.0
  %2736 = vmatprep.subr.mxu0 0.0
  %2737 = vmatpush2.msra.mxu0 0.0
  %2738 = vmatprep.subr.mxu0 0.0
  %2739 = vmatpush2.msra.mxu0 0.0
  %2740 = vmatprep.subr.mxu0 0.0
  %2741 = vmatpush2.msra.mxu0 0.0
  %2742 = vmatprep.subr.mxu0 0.0
  %2743 = vmatpush2.msra.mxu0 0.0
  %2744 = vmatprep.subr.mxu0 0.0
  %2745 = vmatpush2.msra.mxu0 0.0
  %2746 = vmatprep.subr.mxu0 0.0
  %2747 = vmatpush2.msra.mxu0 0.0
  %2748 = vmatprep.subr.mxu0 0.0
  %2749 = vmatpush2.msra.mxu0 0.0
  %2750 = vmatprep.subr.mxu0 0.0
  %2751 = vmatpush2.msra.mxu0 0.0
  %2752 = vmatprep.subr.mxu0 0.0
  %2753 = vmatpush2.msra.mxu0 0.0
  %2754 = vmatprep.subr.mxu0 0.0
  %2755 = vmatpush2.msra.mxu0 0.0
  %2756 = vmatprep.subr.mxu0 0.0
  %2757 = vmatpush2.msra.mxu0 0.0
  %2758 = vmatprep.subr.mxu0 0.0
  %2759 = vmatpush2.msra.mxu0 0.0
  %2760 = vmatprep.mubr.f32.mxu0 0.0
  %2761 = vmatmul.mubr.f32.gmra.mxu0 %v2694
  %v2762 = vpop.f32.mrf.mxu0
  %v2763 = vadd.f32 %v417, %v2762
  %v2764 = vpop.f32.mrf.mxu0
  %2765 = vdwg.mxu0
  %2766 = vmatprep.subr.mxu0 0.0
  %2767 = vmatpush1.msra.mxu0 0.0
  %2768 = vmatprep.subr.mxu0 0.0
  %2769 = vmatpush1.msra.mxu0 0.0
  %2770 = vmatprep.subr.mxu0 0.0
  %2771 = vmatpush1.msra.mxu0 0.0
  %2772 = vmatprep.subr.mxu0 0.0
  %2773 = vmatpush1.msra.mxu0 0.0
  %2774 = vmatprep.subr.mxu0 0.0
  %2775 = vmatpush1.msra.mxu0 0.0
  %2776 = vmatprep.subr.mxu0 0.0
  %2777 = vmatpush1.msra.mxu0 0.0
  %2778 = vmatprep.subr.mxu0 0.0
  %2779 = vmatpush1.msra.mxu0 0.0
  %2780 = vmatprep.subr.mxu0 0.0
  %2781 = vmatpush1.msra.mxu0 0.0
  %2782 = vmatprep.subr.mxu0 0.0
  %2783 = vmatpush1.msra.mxu0 0.0
  %2784 = vmatprep.subr.mxu0 0.0
  %2785 = vmatpush1.msra.mxu0 0.0
  %2786 = vmatprep.subr.mxu0 0.0
  %2787 = vmatpush1.msra.mxu0 0.0
  %2788 = vmatprep.subr.mxu0 0.0
  %2789 = vmatpush1.msra.mxu0 0.0
  %2790 = vmatprep.subr.mxu0 0.0
  %2791 = vmatpush1.msra.mxu0 %v104
  %2792 = vmatprep.subr.mxu0 0.0
  %2793 = vmatpush1.msra.mxu0 %v103
  %2794 = vmatprep.subr.mxu0 0.0
  %2795 = vmatpush1.msra.mxu0 %v102
  %2796 = vmatprep.subr.mxu0 0.0
  %2797 = vmatpush1.msra.mxu0 %v101
  %2798 = vmatprep.subr.mxu0 0.0
  %2799 = vmatpush2.msra.mxu0 0.0
  %2800 = vmatprep.subr.mxu0 0.0
  %2801 = vmatpush2.msra.mxu0 0.0
  %2802 = vmatprep.subr.mxu0 0.0
  %2803 = vmatpush2.msra.mxu0 0.0
  %2804 = vmatprep.subr.mxu0 0.0
  %2805 = vmatpush2.msra.mxu0 0.0
  %2806 = vmatprep.subr.mxu0 0.0
  %2807 = vmatpush2.msra.mxu0 0.0
  %2808 = vmatprep.subr.mxu0 0.0
  %2809 = vmatpush2.msra.mxu0 0.0
  %2810 = vmatprep.subr.mxu0 0.0
  %2811 = vmatpush2.msra.mxu0 0.0
  %2812 = vmatprep.subr.mxu0 0.0
  %2813 = vmatpush2.msra.mxu0 0.0
  %2814 = vmatprep.subr.mxu0 0.0
  %2815 = vmatpush2.msra.mxu0 0.0
  %2816 = vmatprep.subr.mxu0 0.0
  %2817 = vmatpush2.msra.mxu0 0.0
  %2818 = vmatprep.subr.mxu0 0.0
  %2819 = vmatpush2.msra.mxu0 0.0
  %2820 = vmatprep.subr.mxu0 0.0
  %2821 = vmatpush2.msra.mxu0 0.0
  %2822 = vmatprep.subr.mxu0 0.0
  %2823 = vmatpush2.msra.mxu0 0.0
  %2824 = vmatprep.subr.mxu0 0.0
  %2825 = vmatpush2.msra.mxu0 0.0
  %2826 = vmatprep.subr.mxu0 0.0
  %2827 = vmatpush2.msra.mxu0 0.0
  %2828 = vmatprep.subr.mxu0 0.0
  %2829 = vmatpush2.msra.mxu0 0.0
  %2830 = vmatprep.mubr.f32.mxu0 0.0
  %2831 = vmatmul.mubr.f32.gmra.mxu0 %v2694
  %v2832 = vpop.f32.mrf.mxu0
  %v2833 = vadd.f32 %v500, %v2832
  %v2834 = vpop.f32.mrf.mxu0
  %2835 = vdwg.mxu0
  %2836 = vmatprep.subr.mxu0 0.0
  %2837 = vmatpush1.msra.mxu0 0.0
  %2838 = vmatprep.subr.mxu0 0.0
  %2839 = vmatpush1.msra.mxu0 0.0
  %2840 = vmatprep.subr.mxu0 0.0
  %2841 = vmatpush1.msra.mxu0 0.0
  %2842 = vmatprep.subr.mxu0 0.0
  %2843 = vmatpush1.msra.mxu0 0.0
  %2844 = vmatprep.subr.mxu0 0.0
  %2845 = vmatpush1.msra.mxu0 0.0
  %2846 = vmatprep.subr.mxu0 0.0
  %2847 = vmatpush1.msra.mxu0 0.0
  %2848 = vmatprep.subr.mxu0 0.0
  %2849 = vmatpush1.msra.mxu0 0.0
  %2850 = vmatprep.subr.mxu0 0.0
  %2851 = vmatpush1.msra.mxu0 0.0
  %2852 = vmatprep.subr.mxu0 0.0
  %2853 = vmatpush1.msra.mxu0 0.0
  %2854 = vmatprep.subr.mxu0 0.0
  %2855 = vmatpush1.msra.mxu0 0.0
  %2856 = vmatprep.subr.mxu0 0.0
  %2857 = vmatpush1.msra.mxu0 0.0
  %2858 = vmatprep.subr.mxu0 0.0
  %2859 = vmatpush1.msra.mxu0 0.0
  %2860 = vmatprep.subr.mxu0 0.0
  %2861 = vmatpush1.msra.mxu0 %v109
  %2862 = vmatprep.subr.mxu0 0.0
  %2863 = vmatpush1.msra.mxu0 %v108
  %2864 = vmatprep.subr.mxu0 0.0
  %2865 = vmatpush1.msra.mxu0 %v107
  %2866 = vmatprep.subr.mxu0 0.0
  %2867 = vmatpush1.msra.mxu0 %v106
  %2868 = vmatprep.subr.mxu0 0.0
  %2869 = vmatpush2.msra.mxu0 0.0
  %2870 = vmatprep.subr.mxu0 0.0
  %2871 = vmatpush2.msra.mxu0 0.0
  %2872 = vmatprep.subr.mxu0 0.0
  %2873 = vmatpush2.msra.mxu0 0.0
  %2874 = vmatprep.subr.mxu0 0.0
  %2875 = vmatpush2.msra.mxu0 0.0
  %2876 = vmatprep.subr.mxu0 0.0
  %2877 = vmatpush2.msra.mxu0 0.0
  %2878 = vmatprep.subr.mxu0 0.0
  %2879 = vmatpush2.msra.mxu0 0.0
  %2880 = vmatprep.subr.mxu0 0.0
  %2881 = vmatpush2.msra.mxu0 0.0
  %2882 = vmatprep.subr.mxu0 0.0
  %2883 = vmatpush2.msra.mxu0 0.0
  %2884 = vmatprep.subr.mxu0 0.0
  %2885 = vmatpush2.msra.mxu0 0.0
  %2886 = vmatprep.subr.mxu0 0.0
  %2887 = vmatpush2.msra.mxu0 0.0
  %2888 = vmatprep.subr.mxu0 0.0
  %2889 = vmatpush2.msra.mxu0 0.0
  %2890 = vmatprep.subr.mxu0 0.0
  %2891 = vmatpush2.msra.mxu0 0.0
  %2892 = vmatprep.subr.mxu0 0.0
  %2893 = vmatpush2.msra.mxu0 0.0
  %2894 = vmatprep.subr.mxu0 0.0
  %2895 = vmatpush2.msra.mxu0 0.0
  %2896 = vmatprep.subr.mxu0 0.0
  %2897 = vmatpush2.msra.mxu0 0.0
  %2898 = vmatprep.subr.mxu0 0.0
  %2899 = vmatpush2.msra.mxu0 0.0
  %2900 = vmatprep.mubr.f32.mxu0 0.0
  %2901 = vmatmul.mubr.f32.gmra.mxu0 %v2694
  %v2902 = vpop.f32.mrf.mxu0
  %v2903 = vadd.f32 %v576, %v2902
  %v2904 = vpop.f32.mrf.mxu0
  %2905 = vdwg.mxu0
  %v2906 = vsel %vm130, %v2392, 0
  %2908 = vmatprep.subr.mxu0 0.0
  %2909 = vmatpush1.msra.mxu0 0.0
  %2910 = vmatprep.subr.mxu0 0.0
  %2911 = vmatpush1.msra.mxu0 0.0
  %2912 = vmatprep.subr.mxu0 0.0
  %2913 = vmatpush1.msra.mxu0 0.0
  %2914 = vmatprep.subr.mxu0 0.0
  %2915 = vmatpush1.msra.mxu0 0.0
  %2916 = vmatprep.subr.mxu0 0.0
  %2917 = vmatpush1.msra.mxu0 0.0
  %2918 = vmatprep.subr.mxu0 0.0
  %2919 = vmatpush1.msra.mxu0 0.0
  %2920 = vmatprep.subr.mxu0 0.0
  %2921 = vmatpush1.msra.mxu0 0.0
  %2922 = vmatprep.subr.mxu0 0.0
  %2923 = vmatpush1.msra.mxu0 0.0
  %2924 = vmatprep.subr.mxu0 0.0
  %2925 = vmatpush1.msra.mxu0 0.0
  %2926 = vmatprep.subr.mxu0 0.0
  %2927 = vmatpush1.msra.mxu0 0.0
  %2928 = vmatprep.subr.mxu0 0.0
  %2929 = vmatpush1.msra.mxu0 0.0
  %2930 = vmatprep.subr.mxu0 0.0
  %2931 = vmatpush1.msra.mxu0 0.0
  %2932 = vmatprep.subr.mxu0 0.0
  %2933 = vmatpush1.msra.mxu0 %v75
  %2934 = vmatprep.subr.mxu0 0.0
  %2935 = vmatpush1.msra.mxu0 %v74
  %2936 = vmatprep.subr.mxu0 0.0
  %2937 = vmatpush1.msra.mxu0 %v73
  %2938 = vmatprep.subr.mxu0 0.0
  %2939 = vmatpush1.msra.mxu0 %v72
  %2940 = vmatprep.subr.mxu0 0.0
  %2941 = vmatpush2.msra.mxu0 0.0
  %2942 = vmatprep.subr.mxu0 0.0
  %2943 = vmatpush2.msra.mxu0 0.0
  %2944 = vmatprep.subr.mxu0 0.0
  %2945 = vmatpush2.msra.mxu0 0.0
  %2946 = vmatprep.subr.mxu0 0.0
  %2947 = vmatpush2.msra.mxu0 0.0
  %2948 = vmatprep.subr.mxu0 0.0
  %2949 = vmatpush2.msra.mxu0 0.0
  %2950 = vmatprep.subr.mxu0 0.0
  %2951 = vmatpush2.msra.mxu0 0.0
  %2952 = vmatprep.subr.mxu0 0.0
  %2953 = vmatpush2.msra.mxu0 0.0
  %2954 = vmatprep.subr.mxu0 0.0
  %2955 = vmatpush2.msra.mxu0 0.0
  %2956 = vmatprep.subr.mxu0 0.0
  %2957 = vmatpush2.msra.mxu0 0.0
  %2958 = vmatprep.subr.mxu0 0.0
  %2959 = vmatpush2.msra.mxu0 0.0
  %2960 = vmatprep.subr.mxu0 0.0
  %2961 = vmatpush2.msra.mxu0 0.0
  %2962 = vmatprep.subr.mxu0 0.0
  %2963 = vmatpush2.msra.mxu0 0.0
  %2964 = vmatprep.subr.mxu0 0.0
  %2965 = vmatpush2.msra.mxu0 0.0
  %2966 = vmatprep.subr.mxu0 0.0
  %2967 = vmatpush2.msra.mxu0 0.0
  %2968 = vmatprep.subr.mxu0 0.0
  %2969 = vmatpush2.msra.mxu0 0.0
  %2970 = vmatprep.subr.mxu0 0.0
  %2971 = vmatpush2.msra.mxu0 0.0
  %2972 = vmatprep.mubr.f32.mxu0 0.0
  %2973 = vmatmul.mubr.f32.gmra.mxu0 %v2906
  %v2974 = vpop.f32.mrf.mxu0
  %v2975 = vadd.f32 %v652, %v2974
  %v2976 = vpop.f32.mrf.mxu0
  %2977 = vdwg.mxu0
  %2978 = vmatprep.subr.mxu0 0.0
  %2979 = vmatpush1.msra.mxu0 0.0
  %2980 = vmatprep.subr.mxu0 0.0
  %2981 = vmatpush1.msra.mxu0 0.0
  %2982 = vmatprep.subr.mxu0 0.0
  %2983 = vmatpush1.msra.mxu0 0.0
  %2984 = vmatprep.subr.mxu0 0.0
  %2985 = vmatpush1.msra.mxu0 0.0
  %2986 = vmatprep.subr.mxu0 0.0
  %2987 = vmatpush1.msra.mxu0 0.0
  %2988 = vmatprep.subr.mxu0 0.0
  %2989 = vmatpush1.msra.mxu0 0.0
  %2990 = vmatprep.subr.mxu0 0.0
  %2991 = vmatpush1.msra.mxu0 0.0
  %2992 = vmatprep.subr.mxu0 0.0
  %2993 = vmatpush1.msra.mxu0 0.0
  %2994 = vmatprep.subr.mxu0 0.0
  %2995 = vmatpush1.msra.mxu0 0.0
  %2996 = vmatprep.subr.mxu0 0.0
  %2997 = vmatpush1.msra.mxu0 0.0
  %2998 = vmatprep.subr.mxu0 0.0
  %2999 = vmatpush1.msra.mxu0 0.0
  %3000 = vmatprep.subr.mxu0 0.0
  %3001 = vmatpush1.msra.mxu0 0.0
  %3002 = vmatprep.subr.mxu0 0.0
  %3003 = vmatpush1.msra.mxu0 %v80
  %3004 = vmatprep.subr.mxu0 0.0
  %3005 = vmatpush1.msra.mxu0 %v79
  %3006 = vmatprep.subr.mxu0 0.0
  %3007 = vmatpush1.msra.mxu0 %v78
  %3008 = vmatprep.subr.mxu0 0.0
  %3009 = vmatpush1.msra.mxu0 %v77
  %3010 = vmatprep.subr.mxu0 0.0
  %3011 = vmatpush2.msra.mxu0 0.0
  %3012 = vmatprep.subr.mxu0 0.0
  %3013 = vmatpush2.msra.mxu0 0.0
  %3014 = vmatprep.subr.mxu0 0.0
  %3015 = vmatpush2.msra.mxu0 0.0
  %3016 = vmatprep.subr.mxu0 0.0
  %3017 = vmatpush2.msra.mxu0 0.0
  %3018 = vmatprep.subr.mxu0 0.0
  %3019 = vmatpush2.msra.mxu0 0.0
  %3020 = vmatprep.subr.mxu0 0.0
  %3021 = vmatpush2.msra.mxu0 0.0
  %3022 = vmatprep.subr.mxu0 0.0
  %3023 = vmatpush2.msra.mxu0 0.0
  %3024 = vmatprep.subr.mxu0 0.0
  %3025 = vmatpush2.msra.mxu0 0.0
  %3026 = vmatprep.subr.mxu0 0.0
  %3027 = vmatpush2.msra.mxu0 0.0
  %3028 = vmatprep.subr.mxu0 0.0
  %3029 = vmatpush2.msra.mxu0 0.0
  %3030 = vmatprep.subr.mxu0 0.0
  %3031 = vmatpush2.msra.mxu0 0.0
  %3032 = vmatprep.subr.mxu0 0.0
  %3033 = vmatpush2.msra.mxu0 0.0
  %3034 = vmatprep.subr.mxu0 0.0
  %3035 = vmatpush2.msra.mxu0 0.0
  %3036 = vmatprep.subr.mxu0 0.0
  %3037 = vmatpush2.msra.mxu0 0.0
  %3038 = vmatprep.subr.mxu0 0.0
  %3039 = vmatpush2.msra.mxu0 0.0
  %3040 = vmatprep.subr.mxu0 0.0
  %3041 = vmatpush2.msra.mxu0 0.0
  %3042 = vmatprep.mubr.f32.mxu0 0.0
  %3043 = vmatmul.mubr.f32.gmra.mxu0 %v2906
  %v3044 = vpop.f32.mrf.mxu0
  %v3045 = vadd.f32 %v731, %v3044
  %v3046 = vpop.f32.mrf.mxu0
  %3047 = vdwg.mxu0
  %3048 = vmatprep.subr.mxu0 0.0
  %3049 = vmatpush1.msra.mxu0 0.0
  %3050 = vmatprep.subr.mxu0 0.0
  %3051 = vmatpush1.msra.mxu0 0.0
  %3052 = vmatprep.subr.mxu0 0.0
  %3053 = vmatpush1.msra.mxu0 0.0
  %3054 = vmatprep.subr.mxu0 0.0
  %3055 = vmatpush1.msra.mxu0 0.0
  %3056 = vmatprep.subr.mxu0 0.0
  %3057 = vmatpush1.msra.mxu0 0.0
  %3058 = vmatprep.subr.mxu0 0.0
  %3059 = vmatpush1.msra.mxu0 0.0
  %3060 = vmatprep.subr.mxu0 0.0
  %3061 = vmatpush1.msra.mxu0 0.0
  %3062 = vmatprep.subr.mxu0 0.0
  %3063 = vmatpush1.msra.mxu0 0.0
  %3064 = vmatprep.subr.mxu0 0.0
  %3065 = vmatpush1.msra.mxu0 0.0
  %3066 = vmatprep.subr.mxu0 0.0
  %3067 = vmatpush1.msra.mxu0 0.0
  %3068 = vmatprep.subr.mxu0 0.0
  %3069 = vmatpush1.msra.mxu0 0.0
  %3070 = vmatprep.subr.mxu0 0.0
  %3071 = vmatpush1.msra.mxu0 0.0
  %3072 = vmatprep.subr.mxu0 0.0
  %3073 = vmatpush1.msra.mxu0 %v85
  %3074 = vmatprep.subr.mxu0 0.0
  %3075 = vmatpush1.msra.mxu0 %v84
  %3076 = vmatprep.subr.mxu0 0.0
  %3077 = vmatpush1.msra.mxu0 %v83
  %3078 = vmatprep.subr.mxu0 0.0
  %3079 = vmatpush1.msra.mxu0 %v82
  %3080 = vmatprep.subr.mxu0 0.0
  %3081 = vmatpush2.msra.mxu0 0.0
  %3082 = vmatprep.subr.mxu0 0.0
  %3083 = vmatpush2.msra.mxu0 0.0
  %3084 = vmatprep.subr.mxu0 0.0
  %3085 = vmatpush2.msra.mxu0 0.0
  %3086 = vmatprep.subr.mxu0 0.0
  %3087 = vmatpush2.msra.mxu0 0.0
  %3088 = vmatprep.subr.mxu0 0.0
  %3089 = vmatpush2.msra.mxu0 0.0
  %3090 = vmatprep.subr.mxu0 0.0
  %3091 = vmatpush2.msra.mxu0 0.0
  %3092 = vmatprep.subr.mxu0 0.0
  %3093 = vmatpush2.msra.mxu0 0.0
  %3094 = vmatprep.subr.mxu0 0.0
  %3095 = vmatpush2.msra.mxu0 0.0
  %3096 = vmatprep.subr.mxu0 0.0
  %3097 = vmatpush2.msra.mxu0 0.0
  %3098 = vmatprep.subr.mxu0 0.0
  %3099 = vmatpush2.msra.mxu0 0.0
  %3100 = vmatprep.subr.mxu0 0.0
  %3101 = vmatpush2.msra.mxu0 0.0
  %3102 = vmatprep.subr.mxu0 0.0
  %3103 = vmatpush2.msra.mxu0 0.0
  %3104 = vmatprep.subr.mxu0 0.0
  %3105 = vmatpush2.msra.mxu0 0.0
  %3106 = vmatprep.subr.mxu0 0.0
  %3107 = vmatpush2.msra.mxu0 0.0
  %3108 = vmatprep.subr.mxu0 0.0
  %3109 = vmatpush2.msra.mxu0 0.0
  %3110 = vmatprep.subr.mxu0 0.0
  %3111 = vmatpush2.msra.mxu0 0.0
  %3112 = vmatprep.mubr.f32.mxu0 0.0
  %3113 = vmatmul.mubr.f32.gmra.mxu0 %v2906
  %v3114 = vpop.f32.mrf.mxu0
  %v3115 = vadd.f32 %v807, %v3114
  %v3116 = vpop.f32.mrf.mxu0
  %3117 = vdwg.mxu0
  %v3118 = vadd.f32 %v2763, %v2975
  %v3119 = vxor.u32 %v3118, 2147483648
  %v3120 = vmul.f32 %v3119, 1.442695
  %v3121 = vpow.pop %v3120
  %v3122 = vadd.f32 %v3121, 1.0
  %v3123 = vrcp.pop %v3122
  %v3124 = vmul.f32 1.0, %v3123
  %v3125 = vadd.f32 %v2833, %v3045
  %v3126 = vxor.u32 %v3125, 2147483648
  %v3127 = vmul.f32 %v3126, 1.442695
  %v3128 = vpow.pop %v3127
  %v3129 = vadd.f32 %v3128, 1.0
  %v3130 = vrcp.pop %v3129
  %v3131 = vmul.f32 1.0, %v3130
  %v3132 = vmul.f32 %v3124, %v3115
  %v3133 = vadd.f32 %v2903, %v3132
  %v3134 = vtanh.pop %v3133
  %v3135 = vsub.f32 1.0, %v3131
  %v3136 = vmul.f32 %v3135, %v3134
  %v3137 = vmul.f32 %v3131, %v2392
  %v3138 = vadd.f32 %v3136, %v3137
  %v3141 = vunpack.c.l.s4 1966171168
  %v3142 = vunpack.c.0.s8 %v3141
  %v3143 = vlaneseq
  %v3144 = vshrl.u32 %v3143, 7
  %v3145 = vsub.s32 %v3142, %v3144
  %v3146 = vrot.slane %v3138, %v3145
  %v3147 = vcombine.high %v3146, %v3146
  %v3149 = vunpack.c.l.s4 1966171168
  %v3150 = vunpack.c.0.s8 %v3149
  %v3151 = vlaneseq
  %v3152 = vshrl.u32 %v3151, 7
  %v3153 = vsub.s32 %v3150, %v3152
  %v3154 = vrot.slane %v3146, %v3153
  %v3156 = vunpack.c.l.s4 1966171168
  %v3157 = vunpack.c.0.s8 %v3156
  %v3158 = vlaneseq
  %v3159 = vshrl.u32 %v3158, 7
  %v3160 = vsub.s32 %v3157, %v3159
  %v3161 = vrot.slane %v3147, %v3160
  %3164 = vst.msk [vmem:[%s10 + $0x3] sm:$0x1] %vm925, %v3154
  %3165 = vst.msk [vmem:[%s10 + $0xb] sm:$0x1] %vm925, %v3161
  %v3166 = vld [vmem:[%s0 + $0x4] sm:$0x1]
  %v3167 = vld [vmem:[%s0 + $0xc] sm:$0x1]
  %v3168 = vld [vmem:[%s1 + $0x4] sm:$0x1]
  %v3169 = vld [vmem:[%s1 + $0xc] sm:$0x1]
  %v3170 = vld [vmem:[%s2 + $0x4] sm:$0x1]
  %v3171 = vld [vmem:[%s2 + $0xc] sm:$0x1]
  %3172 = vmatprep.subr.mxu0 0.0
  %3173 = vmatpush1.msra.mxu0 0.0
  %3174 = vmatprep.subr.mxu0 0.0
  %3175 = vmatpush1.msra.mxu0 0.0
  %3176 = vmatprep.subr.mxu0 0.0
  %3177 = vmatpush1.msra.mxu0 0.0
  %3178 = vmatprep.subr.mxu0 0.0
  %3179 = vmatpush1.msra.mxu0 0.0
  %3180 = vmatprep.subr.mxu0 0.0
  %3181 = vmatpush1.msra.mxu0 0.0
  %3182 = vmatprep.subr.mxu0 0.0
  %3183 = vmatpush1.msra.mxu0 0.0
  %3184 = vmatprep.subr.mxu0 0.0
  %3185 = vmatpush1.msra.mxu0 0.0
  %3186 = vmatprep.subr.mxu0 0.0
  %3187 = vmatpush1.msra.mxu0 0.0
  %3188 = vmatprep.subr.mxu0 0.0
  %3189 = vmatpush1.msra.mxu0 0.0
  %3190 = vmatprep.subr.mxu0 0.0
  %3191 = vmatpush1.msra.mxu0 0.0
  %3192 = vmatprep.subr.mxu0 0.0
  %3193 = vmatpush1.msra.mxu0 0.0
  %3194 = vmatprep.subr.mxu0 0.0
  %3195 = vmatpush1.msra.mxu0 0.0
  %3196 = vmatprep.subr.mxu0 0.0
  %3197 = vmatpush1.msra.mxu0 %v61
  %3198 = vmatprep.subr.mxu0 0.0
  %3199 = vmatpush1.msra.mxu0 %v60
  %3200 = vmatprep.subr.mxu0 0.0
  %3201 = vmatpush1.msra.mxu0 %v59
  %3202 = vmatprep.subr.mxu0 0.0
  %3203 = vmatpush1.msra.mxu0 %v58
  %3204 = vmatprep.subr.mxu0 0.0
  %3205 = vmatpush2.msra.mxu0 0.0
  %3206 = vmatprep.subr.mxu0 0.0
  %3207 = vmatpush2.msra.mxu0 0.0
  %3208 = vmatprep.subr.mxu0 0.0
  %3209 = vmatpush2.msra.mxu0 0.0
  %3210 = vmatprep.subr.mxu0 0.0
  %3211 = vmatpush2.msra.mxu0 0.0
  %3212 = vmatprep.subr.mxu0 0.0
  %3213 = vmatpush2.msra.mxu0 0.0
  %3214 = vmatprep.subr.mxu0 0.0
  %3215 = vmatpush2.msra.mxu0 0.0
  %3216 = vmatprep.subr.mxu0 0.0
  %3217 = vmatpush2.msra.mxu0 0.0
  %3218 = vmatprep.subr.mxu0 0.0
  %3219 = vmatpush2.msra.mxu0 0.0
  %3220 = vmatprep.subr.mxu0 0.0
  %3221 = vmatpush2.msra.mxu0 0.0
  %3222 = vmatprep.subr.mxu0 0.0
  %3223 = vmatpush2.msra.mxu0 0.0
  %3224 = vmatprep.subr.mxu0 0.0
  %3225 = vmatpush2.msra.mxu0 0.0
  %3226 = vmatprep.subr.mxu0 0.0
  %3227 = vmatpush2.msra.mxu0 0.0
  %3228 = vmatprep.subr.mxu0 0.0
  %3229 = vmatpush2.msra.mxu0 0.0
  %3230 = vmatprep.subr.mxu0 0.0
  %3231 = vmatpush2.msra.mxu0 0.0
  %3232 = vmatprep.subr.mxu0 0.0
  %3233 = vmatpush2.msra.mxu0 0.0
  %3234 = vmatprep.subr.mxu0 0.0
  %3235 = vmatpush2.msra.mxu0 0.0
  %3236 = vmatprep.mubr.f32.mxu0 0.0
  %3237 = vmatmul.mubr.f32.gmra.mxu0 %v2694
  %v3238 = vpop.f32.mrf.mxu0
  %v3239 = vadd.f32 %v128, %v3238
  %v3240 = vpop.f32.mrf.mxu0
  %3241 = vdwg.mxu0
  %3242 = vmatprep.subr.mxu0 0.0
  %3243 = vmatpush1.msra.mxu0 0.0
  %3244 = vmatprep.subr.mxu0 0.0
  %3245 = vmatpush1.msra.mxu0 0.0
  %3246 = vmatprep.subr.mxu0 0.0
  %3247 = vmatpush1.msra.mxu0 0.0
  %3248 = vmatprep.subr.mxu0 0.0
  %3249 = vmatpush1.msra.mxu0 0.0
  %3250 = vmatprep.subr.mxu0 0.0
  %3251 = vmatpush1.msra.mxu0 0.0
  %3252 = vmatprep.subr.mxu0 0.0
  %3253 = vmatpush1.msra.mxu0 0.0
  %3254 = vmatprep.subr.mxu0 0.0
  %3255 = vmatpush1.msra.mxu0 0.0
  %3256 = vmatprep.subr.mxu0 0.0
  %3257 = vmatpush1.msra.mxu0 0.0
  %3258 = vmatprep.subr.mxu0 0.0
  %3259 = vmatpush1.msra.mxu0 0.0
  %3260 = vmatprep.subr.mxu0 0.0
  %3261 = vmatpush1.msra.mxu0 0.0
  %3262 = vmatprep.subr.mxu0 0.0
  %3263 = vmatpush1.msra.mxu0 0.0
  %3264 = vmatprep.subr.mxu0 0.0
  %3265 = vmatpush1.msra.mxu0 0.0
  %3266 = vmatprep.subr.mxu0 0.0
  %3267 = vmatpush1.msra.mxu0 %v66
  %3268 = vmatprep.subr.mxu0 0.0
  %3269 = vmatpush1.msra.mxu0 %v65
  %3270 = vmatprep.subr.mxu0 0.0
  %3271 = vmatpush1.msra.mxu0 %v64
  %3272 = vmatprep.subr.mxu0 0.0
  %3273 = vmatpush1.msra.mxu0 %v63
  %3274 = vmatprep.subr.mxu0 0.0
  %3275 = vmatpush2.msra.mxu0 0.0
  %3276 = vmatprep.subr.mxu0 0.0
  %3277 = vmatpush2.msra.mxu0 0.0
  %3278 = vmatprep.subr.mxu0 0.0
  %3279 = vmatpush2.msra.mxu0 0.0
  %3280 = vmatprep.subr.mxu0 0.0
  %3281 = vmatpush2.msra.mxu0 0.0
  %3282 = vmatprep.subr.mxu0 0.0
  %3283 = vmatpush2.msra.mxu0 0.0
  %3284 = vmatprep.subr.mxu0 0.0
  %3285 = vmatpush2.msra.mxu0 0.0
  %3286 = vmatprep.subr.mxu0 0.0
  %3287 = vmatpush2.msra.mxu0 0.0
  %3288 = vmatprep.subr.mxu0 0.0
  %3289 = vmatpush2.msra.mxu0 0.0
  %3290 = vmatprep.subr.mxu0 0.0
  %3291 = vmatpush2.msra.mxu0 0.0
  %3292 = vmatprep.subr.mxu0 0.0
  %3293 = vmatpush2.msra.mxu0 0.0
  %3294 = vmatprep.subr.mxu0 0.0
  %3295 = vmatpush2.msra.mxu0 0.0
  %3296 = vmatprep.subr.mxu0 0.0
  %3297 = vmatpush2.msra.mxu0 0.0
  %3298 = vmatprep.subr.mxu0 0.0
  %3299 = vmatpush2.msra.mxu0 0.0
  %3300 = vmatprep.subr.mxu0 0.0
  %3301 = vmatpush2.msra.mxu0 0.0
  %3302 = vmatprep.subr.mxu0 0.0
  %3303 = vmatpush2.msra.mxu0 0.0
  %3304 = vmatprep.subr.mxu0 0.0
  %3305 = vmatpush2.msra.mxu0 0.0
  %3306 = vmatprep.mubr.f32.mxu0 0.0
  %3307 = vmatmul.mubr.f32.gmra.mxu0 %v2694
  %v3308 = vpop.f32.mrf.mxu0
  %v3309 = vadd.f32 %v208, %v3308
  %v3310 = vpop.f32.mrf.mxu0
  %3311 = vdwg.mxu0
  %3312 = vmatprep.subr.mxu0 0.0
  %3313 = vmatpush1.msra.mxu0 0.0
  %3314 = vmatprep.subr.mxu0 0.0
  %3315 = vmatpush1.msra.mxu0 0.0
  %3316 = vmatprep.subr.mxu0 0.0
  %3317 = vmatpush1.msra.mxu0 0.0
  %3318 = vmatprep.subr.mxu0 0.0
  %3319 = vmatpush1.msra.mxu0 0.0
  %3320 = vmatprep.subr.mxu0 0.0
  %3321 = vmatpush1.msra.mxu0 0.0
  %3322 = vmatprep.subr.mxu0 0.0
  %3323 = vmatpush1.msra.mxu0 0.0
  %3324 = vmatprep.subr.mxu0 0.0
  %3325 = vmatpush1.msra.mxu0 0.0
  %3326 = vmatprep.subr.mxu0 0.0
  %3327 = vmatpush1.msra.mxu0 0.0
  %3328 = vmatprep.subr.mxu0 0.0
  %3329 = vmatpush1.msra.mxu0 0.0
  %3330 = vmatprep.subr.mxu0 0.0
  %3331 = vmatpush1.msra.mxu0 0.0
  %3332 = vmatprep.subr.mxu0 0.0
  %3333 = vmatpush1.msra.mxu0 0.0
  %3334 = vmatprep.subr.mxu0 0.0
  %3335 = vmatpush1.msra.mxu0 0.0
  %3336 = vmatprep.subr.mxu0 0.0
  %3337 = vmatpush1.msra.mxu0 %v71
  %3338 = vmatprep.subr.mxu0 0.0
  %3339 = vmatpush1.msra.mxu0 %v70
  %3340 = vmatprep.subr.mxu0 0.0
  %3341 = vmatpush1.msra.mxu0 %v69
  %3342 = vmatprep.subr.mxu0 0.0
  %3343 = vmatpush1.msra.mxu0 %v68
  %3344 = vmatprep.subr.mxu0 0.0
  %3345 = vmatpush2.msra.mxu0 0.0
  %3346 = vmatprep.subr.mxu0 0.0
  %3347 = vmatpush2.msra.mxu0 0.0
  %3348 = vmatprep.subr.mxu0 0.0
  %3349 = vmatpush2.msra.mxu0 0.0
  %3350 = vmatprep.subr.mxu0 0.0
  %3351 = vmatpush2.msra.mxu0 0.0
  %3352 = vmatprep.subr.mxu0 0.0
  %3353 = vmatpush2.msra.mxu0 0.0
  %3354 = vmatprep.subr.mxu0 0.0
  %3355 = vmatpush2.msra.mxu0 0.0
  %3356 = vmatprep.subr.mxu0 0.0
  %3357 = vmatpush2.msra.mxu0 0.0
  %3358 = vmatprep.subr.mxu0 0.0
  %3359 = vmatpush2.msra.mxu0 0.0
  %3360 = vmatprep.subr.mxu0 0.0
  %3361 = vmatpush2.msra.mxu0 0.0
  %3362 = vmatprep.subr.mxu0 0.0
  %3363 = vmatpush2.msra.mxu0 0.0
  %3364 = vmatprep.subr.mxu0 0.0
  %3365 = vmatpush2.msra.mxu0 0.0
  %3366 = vmatprep.subr.mxu0 0.0
  %3367 = vmatpush2.msra.mxu0 0.0
  %3368 = vmatprep.subr.mxu0 0.0
  %3369 = vmatpush2.msra.mxu0 0.0
  %3370 = vmatprep.subr.mxu0 0.0
  %3371 = vmatpush2.msra.mxu0 0.0
  %3372 = vmatprep.subr.mxu0 0.0
  %3373 = vmatpush2.msra.mxu0 0.0
  %3374 = vmatprep.subr.mxu0 0.0
  %3375 = vmatpush2.msra.mxu0 0.0
  %3376 = vmatprep.mubr.f32.mxu0 0.0
  %3377 = vmatmul.mubr.f32.gmra.mxu0 %v2694
  %v3378 = vpop.f32.mrf.mxu0
  %v3379 = vadd.f32 %v284, %v3378
  %v3380 = vpop.f32.mrf.mxu0
  %3381 = vdwg.mxu0
  %v3383 = vrot.slane %v3239, 1
  %v3386 = vadd.f32 %v3166, %v3239
  %v3387 = vadd.f32 %v3167, %v3383
  %v3388 = vxor.u32 %v3386, 2147483648
  %v3389 = vxor.u32 %v3387, 2147483648
  %v3390 = vmul.f32 %v3388, 1.442695
  %v3391 = vpow.pop %v3390
  %v3392 = vmul.f32 %v3389, 1.442695
  %v3393 = vpow.pop %v3392
  %v3394 = vadd.f32 %v3391, 1.0
  %v3395 = vadd.f32 %v3393, 1.0
  %v3396 = vrcp.pop %v3394
  %v3397 = vmul.f32 1.0, %v3396
  %v3398 = vrcp.pop %v3395
  %v3399 = vmul.f32 1.0, %v3398
  %v3401 = vrot.slane %v3309, 1
  %v3404 = vadd.f32 %v3168, %v3309
  %v3405 = vadd.f32 %v3169, %v3401
  %v3406 = vxor.u32 %v3404, 2147483648
  %v3407 = vxor.u32 %v3405, 2147483648
  %v3408 = vmul.f32 %v3406, 1.442695
  %v3409 = vpow.pop %v3408
  %v3410 = vmul.f32 %v3407, 1.442695
  %v3411 = vpow.pop %v3410
  %v3412 = vadd.f32 %v3409, 1.0
  %v3413 = vadd.f32 %v3411, 1.0
  %v3414 = vrcp.pop %v3412
  %v3415 = vmul.f32 1.0, %v3414
  %v3416 = vrcp.pop %v3413
  %v3417 = vmul.f32 1.0, %v3416
  %v3419 = vrot.slane %v3379, 1
  %v3422 = vmul.f32 %v3397, %v3379
  %v3423 = vmul.f32 %v3399, %v3419
  %v3424 = vadd.f32 %v3170, %v3422
  %v3425 = vadd.f32 %v3171, %v3423
  %v3426 = vtanh.pop %v3424
  %v3427 = vtanh.pop %v3425
  %v3428 = vsub.f32 1.0, %v3415
  %v3429 = vsub.f32 1.0, %v3417
  %v3430 = vmul.f32 %v3428, %v3426
  %v3431 = vmul.f32 %v3429, %v3427
  %v3432 = vmul.f32 %v3415, %v2688
  %v3433 = vmul.f32 %v3417, %v2689
  %v3434 = vadd.f32 %v3430, %v3432
  %v3435 = vadd.f32 %v3431, %v3433
  %v3438 = vrot.slane %v3435, 7
  %v3439 = vsel %vm422, %v3438, %v3434
  %v3440 = vsel %vm130, %v3439, 0
  %3442 = vmatprep.subr.mxu0 0.0
  %3443 = vmatpush1.msra.mxu0 0.0
  %3444 = vmatprep.subr.mxu0 0.0
  %3445 = vmatpush1.msra.mxu0 0.0
  %3446 = vmatprep.subr.mxu0 0.0
  %3447 = vmatpush1.msra.mxu0 0.0
  %3448 = vmatprep.subr.mxu0 0.0
  %3449 = vmatpush1.msra.mxu0 0.0
  %3450 = vmatprep.subr.mxu0 0.0
  %3451 = vmatpush1.msra.mxu0 0.0
  %3452 = vmatprep.subr.mxu0 0.0
  %3453 = vmatpush1.msra.mxu0 0.0
  %3454 = vmatprep.subr.mxu0 0.0
  %3455 = vmatpush1.msra.mxu0 0.0
  %3456 = vmatprep.subr.mxu0 0.0
  %3457 = vmatpush1.msra.mxu0 0.0
  %3458 = vmatprep.subr.mxu0 0.0
  %3459 = vmatpush1.msra.mxu0 0.0
  %3460 = vmatprep.subr.mxu0 0.0
  %3461 = vmatpush1.msra.mxu0 0.0
  %3462 = vmatprep.subr.mxu0 0.0
  %3463 = vmatpush1.msra.mxu0 0.0
  %3464 = vmatprep.subr.mxu0 0.0
  %3465 = vmatpush1.msra.mxu0 0.0
  %3466 = vmatprep.subr.mxu0 0.0
  %3467 = vmatpush1.msra.mxu0 %v99
  %3468 = vmatprep.subr.mxu0 0.0
  %3469 = vmatpush1.msra.mxu0 %v98
  %3470 = vmatprep.subr.mxu0 0.0
  %3471 = vmatpush1.msra.mxu0 %v97
  %3472 = vmatprep.subr.mxu0 0.0
  %3473 = vmatpush1.msra.mxu0 %v96
  %3474 = vmatprep.subr.mxu0 0.0
  %3475 = vmatpush2.msra.mxu0 0.0
  %3476 = vmatprep.subr.mxu0 0.0
  %3477 = vmatpush2.msra.mxu0 0.0
  %3478 = vmatprep.subr.mxu0 0.0
  %3479 = vmatpush2.msra.mxu0 0.0
  %3480 = vmatprep.subr.mxu0 0.0
  %3481 = vmatpush2.msra.mxu0 0.0
  %3482 = vmatprep.subr.mxu0 0.0
  %3483 = vmatpush2.msra.mxu0 0.0
  %3484 = vmatprep.subr.mxu0 0.0
  %3485 = vmatpush2.msra.mxu0 0.0
  %3486 = vmatprep.subr.mxu0 0.0
  %3487 = vmatpush2.msra.mxu0 0.0
  %3488 = vmatprep.subr.mxu0 0.0
  %3489 = vmatpush2.msra.mxu0 0.0
  %3490 = vmatprep.subr.mxu0 0.0
  %3491 = vmatpush2.msra.mxu0 0.0
  %3492 = vmatprep.subr.mxu0 0.0
  %3493 = vmatpush2.msra.mxu0 0.0
  %3494 = vmatprep.subr.mxu0 0.0
  %3495 = vmatpush2.msra.mxu0 0.0
  %3496 = vmatprep.subr.mxu0 0.0
  %3497 = vmatpush2.msra.mxu0 0.0
  %3498 = vmatprep.subr.mxu0 0.0
  %3499 = vmatpush2.msra.mxu0 0.0
  %3500 = vmatprep.subr.mxu0 0.0
  %3501 = vmatpush2.msra.mxu0 0.0
  %3502 = vmatprep.subr.mxu0 0.0
  %3503 = vmatpush2.msra.mxu0 0.0
  %3504 = vmatprep.subr.mxu0 0.0
  %3505 = vmatpush2.msra.mxu0 0.0
  %3506 = vmatprep.mubr.f32.mxu0 0.0
  %3507 = vmatmul.mubr.f32.gmra.mxu0 %v3440
  %v3508 = vpop.f32.mrf.mxu0
  %v3509 = vadd.f32 %v417, %v3508
  %v3510 = vpop.f32.mrf.mxu0
  %3511 = vdwg.mxu0
  %3512 = vmatprep.subr.mxu0 0.0
  %3513 = vmatpush1.msra.mxu0 0.0
  %3514 = vmatprep.subr.mxu0 0.0
  %3515 = vmatpush1.msra.mxu0 0.0
  %3516 = vmatprep.subr.mxu0 0.0
  %3517 = vmatpush1.msra.mxu0 0.0
  %3518 = vmatprep.subr.mxu0 0.0
  %3519 = vmatpush1.msra.mxu0 0.0
  %3520 = vmatprep.subr.mxu0 0.0
  %3521 = vmatpush1.msra.mxu0 0.0
  %3522 = vmatprep.subr.mxu0 0.0
  %3523 = vmatpush1.msra.mxu0 0.0
  %3524 = vmatprep.subr.mxu0 0.0
  %3525 = vmatpush1.msra.mxu0 0.0
  %3526 = vmatprep.subr.mxu0 0.0
  %3527 = vmatpush1.msra.mxu0 0.0
  %3528 = vmatprep.subr.mxu0 0.0
  %3529 = vmatpush1.msra.mxu0 0.0
  %3530 = vmatprep.subr.mxu0 0.0
  %3531 = vmatpush1.msra.mxu0 0.0
  %3532 = vmatprep.subr.mxu0 0.0
  %3533 = vmatpush1.msra.mxu0 0.0
  %3534 = vmatprep.subr.mxu0 0.0
  %3535 = vmatpush1.msra.mxu0 0.0
  %3536 = vmatprep.subr.mxu0 0.0
  %3537 = vmatpush1.msra.mxu0 %v104
  %3538 = vmatprep.subr.mxu0 0.0
  %3539 = vmatpush1.msra.mxu0 %v103
  %3540 = vmatprep.subr.mxu0 0.0
  %3541 = vmatpush1.msra.mxu0 %v102
  %3542 = vmatprep.subr.mxu0 0.0
  %3543 = vmatpush1.msra.mxu0 %v101
  %3544 = vmatprep.subr.mxu0 0.0
  %3545 = vmatpush2.msra.mxu0 0.0
  %3546 = vmatprep.subr.mxu0 0.0
  %3547 = vmatpush2.msra.mxu0 0.0
  %3548 = vmatprep.subr.mxu0 0.0
  %3549 = vmatpush2.msra.mxu0 0.0
  %3550 = vmatprep.subr.mxu0 0.0
  %3551 = vmatpush2.msra.mxu0 0.0
  %3552 = vmatprep.subr.mxu0 0.0
  %3553 = vmatpush2.msra.mxu0 0.0
  %3554 = vmatprep.subr.mxu0 0.0
  %3555 = vmatpush2.msra.mxu0 0.0
  %3556 = vmatprep.subr.mxu0 0.0
  %3557 = vmatpush2.msra.mxu0 0.0
  %3558 = vmatprep.subr.mxu0 0.0
  %3559 = vmatpush2.msra.mxu0 0.0
  %3560 = vmatprep.subr.mxu0 0.0
  %3561 = vmatpush2.msra.mxu0 0.0
  %3562 = vmatprep.subr.mxu0 0.0
  %3563 = vmatpush2.msra.mxu0 0.0
  %3564 = vmatprep.subr.mxu0 0.0
  %3565 = vmatpush2.msra.mxu0 0.0
  %3566 = vmatprep.subr.mxu0 0.0
  %3567 = vmatpush2.msra.mxu0 0.0
  %3568 = vmatprep.subr.mxu0 0.0
  %3569 = vmatpush2.msra.mxu0 0.0
  %3570 = vmatprep.subr.mxu0 0.0
  %3571 = vmatpush2.msra.mxu0 0.0
  %3572 = vmatprep.subr.mxu0 0.0
  %3573 = vmatpush2.msra.mxu0 0.0
  %3574 = vmatprep.subr.mxu0 0.0
  %3575 = vmatpush2.msra.mxu0 0.0
  %3576 = vmatprep.mubr.f32.mxu0 0.0
  %3577 = vmatmul.mubr.f32.gmra.mxu0 %v3440
  %v3578 = vpop.f32.mrf.mxu0
  %v3579 = vadd.f32 %v500, %v3578
  %v3580 = vpop.f32.mrf.mxu0
  %3581 = vdwg.mxu0
  %3582 = vmatprep.subr.mxu0 0.0
  %3583 = vmatpush1.msra.mxu0 0.0
  %3584 = vmatprep.subr.mxu0 0.0
  %3585 = vmatpush1.msra.mxu0 0.0
  %3586 = vmatprep.subr.mxu0 0.0
  %3587 = vmatpush1.msra.mxu0 0.0
  %3588 = vmatprep.subr.mxu0 0.0
  %3589 = vmatpush1.msra.mxu0 0.0
  %3590 = vmatprep.subr.mxu0 0.0
  %3591 = vmatpush1.msra.mxu0 0.0
  %3592 = vmatprep.subr.mxu0 0.0
  %3593 = vmatpush1.msra.mxu0 0.0
  %3594 = vmatprep.subr.mxu0 0.0
  %3595 = vmatpush1.msra.mxu0 0.0
  %3596 = vmatprep.subr.mxu0 0.0
  %3597 = vmatpush1.msra.mxu0 0.0
  %3598 = vmatprep.subr.mxu0 0.0
  %3599 = vmatpush1.msra.mxu0 0.0
  %3600 = vmatprep.subr.mxu0 0.0
  %3601 = vmatpush1.msra.mxu0 0.0
  %3602 = vmatprep.subr.mxu0 0.0
  %3603 = vmatpush1.msra.mxu0 0.0
  %3604 = vmatprep.subr.mxu0 0.0
  %3605 = vmatpush1.msra.mxu0 0.0
  %3606 = vmatprep.subr.mxu0 0.0
  %3607 = vmatpush1.msra.mxu0 %v109
  %3608 = vmatprep.subr.mxu0 0.0
  %3609 = vmatpush1.msra.mxu0 %v108
  %3610 = vmatprep.subr.mxu0 0.0
  %3611 = vmatpush1.msra.mxu0 %v107
  %3612 = vmatprep.subr.mxu0 0.0
  %3613 = vmatpush1.msra.mxu0 %v106
  %3614 = vmatprep.subr.mxu0 0.0
  %3615 = vmatpush2.msra.mxu0 0.0
  %3616 = vmatprep.subr.mxu0 0.0
  %3617 = vmatpush2.msra.mxu0 0.0
  %3618 = vmatprep.subr.mxu0 0.0
  %3619 = vmatpush2.msra.mxu0 0.0
  %3620 = vmatprep.subr.mxu0 0.0
  %3621 = vmatpush2.msra.mxu0 0.0
  %3622 = vmatprep.subr.mxu0 0.0
  %3623 = vmatpush2.msra.mxu0 0.0
  %3624 = vmatprep.subr.mxu0 0.0
  %3625 = vmatpush2.msra.mxu0 0.0
  %3626 = vmatprep.subr.mxu0 0.0
  %3627 = vmatpush2.msra.mxu0 0.0
  %3628 = vmatprep.subr.mxu0 0.0
  %3629 = vmatpush2.msra.mxu0 0.0
  %3630 = vmatprep.subr.mxu0 0.0
  %3631 = vmatpush2.msra.mxu0 0.0
  %3632 = vmatprep.subr.mxu0 0.0
  %3633 = vmatpush2.msra.mxu0 0.0
  %3634 = vmatprep.subr.mxu0 0.0
  %3635 = vmatpush2.msra.mxu0 0.0
  %3636 = vmatprep.subr.mxu0 0.0
  %3637 = vmatpush2.msra.mxu0 0.0
  %3638 = vmatprep.subr.mxu0 0.0
  %3639 = vmatpush2.msra.mxu0 0.0
  %3640 = vmatprep.subr.mxu0 0.0
  %3641 = vmatpush2.msra.mxu0 0.0
  %3642 = vmatprep.subr.mxu0 0.0
  %3643 = vmatpush2.msra.mxu0 0.0
  %3644 = vmatprep.subr.mxu0 0.0
  %3645 = vmatpush2.msra.mxu0 0.0
  %3646 = vmatprep.mubr.f32.mxu0 0.0
  %3647 = vmatmul.mubr.f32.gmra.mxu0 %v3440
  %v3648 = vpop.f32.mrf.mxu0
  %v3649 = vadd.f32 %v576, %v3648
  %v3650 = vpop.f32.mrf.mxu0
  %3651 = vdwg.mxu0
  %v3652 = vsel %vm130, %v3138, 0
  %3654 = vmatprep.subr.mxu0 0.0
  %3655 = vmatpush1.msra.mxu0 0.0
  %3656 = vmatprep.subr.mxu0 0.0
  %3657 = vmatpush1.msra.mxu0 0.0
  %3658 = vmatprep.subr.mxu0 0.0
  %3659 = vmatpush1.msra.mxu0 0.0
  %3660 = vmatprep.subr.mxu0 0.0
  %3661 = vmatpush1.msra.mxu0 0.0
  %3662 = vmatprep.subr.mxu0 0.0
  %3663 = vmatpush1.msra.mxu0 0.0
  %3664 = vmatprep.subr.mxu0 0.0
  %3665 = vmatpush1.msra.mxu0 0.0
  %3666 = vmatprep.subr.mxu0 0.0
  %3667 = vmatpush1.msra.mxu0 0.0
  %3668 = vmatprep.subr.mxu0 0.0
  %3669 = vmatpush1.msra.mxu0 0.0
  %3670 = vmatprep.subr.mxu0 0.0
  %3671 = vmatpush1.msra.mxu0 0.0
  %3672 = vmatprep.subr.mxu0 0.0
  %3673 = vmatpush1.msra.mxu0 0.0
  %3674 = vmatprep.subr.mxu0 0.0
  %3675 = vmatpush1.msra.mxu0 0.0
  %3676 = vmatprep.subr.mxu0 0.0
  %3677 = vmatpush1.msra.mxu0 0.0
  %3678 = vmatprep.subr.mxu0 0.0
  %3679 = vmatpush1.msra.mxu0 %v75
  %3680 = vmatprep.subr.mxu0 0.0
  %3681 = vmatpush1.msra.mxu0 %v74
  %3682 = vmatprep.subr.mxu0 0.0
  %3683 = vmatpush1.msra.mxu0 %v73
  %3684 = vmatprep.subr.mxu0 0.0
  %3685 = vmatpush1.msra.mxu0 %v72
  %3686 = vmatprep.subr.mxu0 0.0
  %3687 = vmatpush2.msra.mxu0 0.0
  %3688 = vmatprep.subr.mxu0 0.0
  %3689 = vmatpush2.msra.mxu0 0.0
  %3690 = vmatprep.subr.mxu0 0.0
  %3691 = vmatpush2.msra.mxu0 0.0
  %3692 = vmatprep.subr.mxu0 0.0
  %3693 = vmatpush2.msra.mxu0 0.0
  %3694 = vmatprep.subr.mxu0 0.0
  %3695 = vmatpush2.msra.mxu0 0.0
  %3696 = vmatprep.subr.mxu0 0.0
  %3697 = vmatpush2.msra.mxu0 0.0
  %3698 = vmatprep.subr.mxu0 0.0
  %3699 = vmatpush2.msra.mxu0 0.0
  %3700 = vmatprep.subr.mxu0 0.0
  %3701 = vmatpush2.msra.mxu0 0.0
  %3702 = vmatprep.subr.mxu0 0.0
  %3703 = vmatpush2.msra.mxu0 0.0
  %3704 = vmatprep.subr.mxu0 0.0
  %3705 = vmatpush2.msra.mxu0 0.0
  %3706 = vmatprep.subr.mxu0 0.0
  %3707 = vmatpush2.msra.mxu0 0.0
  %3708 = vmatprep.subr.mxu0 0.0
  %3709 = vmatpush2.msra.mxu0 0.0
  %3710 = vmatprep.subr.mxu0 0.0
  %3711 = vmatpush2.msra.mxu0 0.0
  %3712 = vmatprep.subr.mxu0 0.0
  %3713 = vmatpush2.msra.mxu0 0.0
  %3714 = vmatprep.subr.mxu0 0.0
  %3715 = vmatpush2.msra.mxu0 0.0
  %3716 = vmatprep.subr.mxu0 0.0
  %3717 = vmatpush2.msra.mxu0 0.0
  %3718 = vmatprep.mubr.f32.mxu0 0.0
  %3719 = vmatmul.mubr.f32.gmra.mxu0 %v3652
  %v3720 = vpop.f32.mrf.mxu0
  %v3721 = vadd.f32 %v652, %v3720
  %v3722 = vpop.f32.mrf.mxu0
  %3723 = vdwg.mxu0
  %3724 = vmatprep.subr.mxu0 0.0
  %3725 = vmatpush1.msra.mxu0 0.0
  %3726 = vmatprep.subr.mxu0 0.0
  %3727 = vmatpush1.msra.mxu0 0.0
  %3728 = vmatprep.subr.mxu0 0.0
  %3729 = vmatpush1.msra.mxu0 0.0
  %3730 = vmatprep.subr.mxu0 0.0
  %3731 = vmatpush1.msra.mxu0 0.0
  %3732 = vmatprep.subr.mxu0 0.0
  %3733 = vmatpush1.msra.mxu0 0.0
  %3734 = vmatprep.subr.mxu0 0.0
  %3735 = vmatpush1.msra.mxu0 0.0
  %3736 = vmatprep.subr.mxu0 0.0
  %3737 = vmatpush1.msra.mxu0 0.0
  %3738 = vmatprep.subr.mxu0 0.0
  %3739 = vmatpush1.msra.mxu0 0.0
  %3740 = vmatprep.subr.mxu0 0.0
  %3741 = vmatpush1.msra.mxu0 0.0
  %3742 = vmatprep.subr.mxu0 0.0
  %3743 = vmatpush1.msra.mxu0 0.0
  %3744 = vmatprep.subr.mxu0 0.0
  %3745 = vmatpush1.msra.mxu0 0.0
  %3746 = vmatprep.subr.mxu0 0.0
  %3747 = vmatpush1.msra.mxu0 0.0
  %3748 = vmatprep.subr.mxu0 0.0
  %3749 = vmatpush1.msra.mxu0 %v80
  %3750 = vmatprep.subr.mxu0 0.0
  %3751 = vmatpush1.msra.mxu0 %v79
  %3752 = vmatprep.subr.mxu0 0.0
  %3753 = vmatpush1.msra.mxu0 %v78
  %3754 = vmatprep.subr.mxu0 0.0
  %3755 = vmatpush1.msra.mxu0 %v77
  %3756 = vmatprep.subr.mxu0 0.0
  %3757 = vmatpush2.msra.mxu0 0.0
  %3758 = vmatprep.subr.mxu0 0.0
  %3759 = vmatpush2.msra.mxu0 0.0
  %3760 = vmatprep.subr.mxu0 0.0
  %3761 = vmatpush2.msra.mxu0 0.0
  %3762 = vmatprep.subr.mxu0 0.0
  %3763 = vmatpush2.msra.mxu0 0.0
  %3764 = vmatprep.subr.mxu0 0.0
  %3765 = vmatpush2.msra.mxu0 0.0
  %3766 = vmatprep.subr.mxu0 0.0
  %3767 = vmatpush2.msra.mxu0 0.0
  %3768 = vmatprep.subr.mxu0 0.0
  %3769 = vmatpush2.msra.mxu0 0.0
  %3770 = vmatprep.subr.mxu0 0.0
  %3771 = vmatpush2.msra.mxu0 0.0
  %3772 = vmatprep.subr.mxu0 0.0
  %3773 = vmatpush2.msra.mxu0 0.0
  %3774 = vmatprep.subr.mxu0 0.0
  %3775 = vmatpush2.msra.mxu0 0.0
  %3776 = vmatprep.subr.mxu0 0.0
  %3777 = vmatpush2.msra.mxu0 0.0
  %3778 = vmatprep.subr.mxu0 0.0
  %3779 = vmatpush2.msra.mxu0 0.0
  %3780 = vmatprep.subr.mxu0 0.0
  %3781 = vmatpush2.msra.mxu0 0.0
  %3782 = vmatprep.subr.mxu0 0.0
  %3783 = vmatpush2.msra.mxu0 0.0
  %3784 = vmatprep.subr.mxu0 0.0
  %3785 = vmatpush2.msra.mxu0 0.0
  %3786 = vmatprep.subr.mxu0 0.0
  %3787 = vmatpush2.msra.mxu0 0.0
  %3788 = vmatprep.mubr.f32.mxu0 0.0
  %3789 = vmatmul.mubr.f32.gmra.mxu0 %v3652
  %v3790 = vpop.f32.mrf.mxu0
  %v3791 = vadd.f32 %v731, %v3790
  %v3792 = vpop.f32.mrf.mxu0
  %3793 = vdwg.mxu0
  %3794 = vmatprep.subr.mxu0 0.0
  %3795 = vmatpush1.msra.mxu0 0.0
  %3796 = vmatprep.subr.mxu0 0.0
  %3797 = vmatpush1.msra.mxu0 0.0
  %3798 = vmatprep.subr.mxu0 0.0
  %3799 = vmatpush1.msra.mxu0 0.0
  %3800 = vmatprep.subr.mxu0 0.0
  %3801 = vmatpush1.msra.mxu0 0.0
  %3802 = vmatprep.subr.mxu0 0.0
  %3803 = vmatpush1.msra.mxu0 0.0
  %3804 = vmatprep.subr.mxu0 0.0
  %3805 = vmatpush1.msra.mxu0 0.0
  %3806 = vmatprep.subr.mxu0 0.0
  %3807 = vmatpush1.msra.mxu0 0.0
  %3808 = vmatprep.subr.mxu0 0.0
  %3809 = vmatpush1.msra.mxu0 0.0
  %3810 = vmatprep.subr.mxu0 0.0
  %3811 = vmatpush1.msra.mxu0 0.0
  %3812 = vmatprep.subr.mxu0 0.0
  %3813 = vmatpush1.msra.mxu0 0.0
  %3814 = vmatprep.subr.mxu0 0.0
  %3815 = vmatpush1.msra.mxu0 0.0
  %3816 = vmatprep.subr.mxu0 0.0
  %3817 = vmatpush1.msra.mxu0 0.0
  %3818 = vmatprep.subr.mxu0 0.0
  %3819 = vmatpush1.msra.mxu0 %v85
  %3820 = vmatprep.subr.mxu0 0.0
  %3821 = vmatpush1.msra.mxu0 %v84
  %3822 = vmatprep.subr.mxu0 0.0
  %3823 = vmatpush1.msra.mxu0 %v83
  %3824 = vmatprep.subr.mxu0 0.0
  %3825 = vmatpush1.msra.mxu0 %v82
  %3826 = vmatprep.subr.mxu0 0.0
  %3827 = vmatpush2.msra.mxu0 0.0
  %3828 = vmatprep.subr.mxu0 0.0
  %3829 = vmatpush2.msra.mxu0 0.0
  %3830 = vmatprep.subr.mxu0 0.0
  %3831 = vmatpush2.msra.mxu0 0.0
  %3832 = vmatprep.subr.mxu0 0.0
  %3833 = vmatpush2.msra.mxu0 0.0
  %3834 = vmatprep.subr.mxu0 0.0
  %3835 = vmatpush2.msra.mxu0 0.0
  %3836 = vmatprep.subr.mxu0 0.0
  %3837 = vmatpush2.msra.mxu0 0.0
  %3838 = vmatprep.subr.mxu0 0.0
  %3839 = vmatpush2.msra.mxu0 0.0
  %3840 = vmatprep.subr.mxu0 0.0
  %3841 = vmatpush2.msra.mxu0 0.0
  %3842 = vmatprep.subr.mxu0 0.0
  %3843 = vmatpush2.msra.mxu0 0.0
  %3844 = vmatprep.subr.mxu0 0.0
  %3845 = vmatpush2.msra.mxu0 0.0
  %3846 = vmatprep.subr.mxu0 0.0
  %3847 = vmatpush2.msra.mxu0 0.0
  %3848 = vmatprep.subr.mxu0 0.0
  %3849 = vmatpush2.msra.mxu0 0.0
  %3850 = vmatprep.subr.mxu0 0.0
  %3851 = vmatpush2.msra.mxu0 0.0
  %3852 = vmatprep.subr.mxu0 0.0
  %3853 = vmatpush2.msra.mxu0 0.0
  %3854 = vmatprep.subr.mxu0 0.0
  %3855 = vmatpush2.msra.mxu0 0.0
  %3856 = vmatprep.subr.mxu0 0.0
  %3857 = vmatpush2.msra.mxu0 0.0
  %3858 = vmatprep.mubr.f32.mxu0 0.0
  %3859 = vmatmul.mubr.f32.gmra.mxu0 %v3652
  %v3860 = vpop.f32.mrf.mxu0
  %v3861 = vadd.f32 %v807, %v3860
  %v3862 = vpop.f32.mrf.mxu0
  %3863 = vdwg.mxu0
  %v3864 = vadd.f32 %v3509, %v3721
  %v3865 = vxor.u32 %v3864, 2147483648
  %v3866 = vmul.f32 %v3865, 1.442695
  %v3867 = vpow.pop %v3866
  %v3868 = vadd.f32 %v3867, 1.0
  %v3869 = vrcp.pop %v3868
  %v3870 = vmul.f32 1.0, %v3869
  %v3871 = vadd.f32 %v3579, %v3791
  %v3872 = vxor.u32 %v3871, 2147483648
  %v3873 = vmul.f32 %v3872, 1.442695
  %v3874 = vpow.pop %v3873
  %v3875 = vadd.f32 %v3874, 1.0
  %v3876 = vrcp.pop %v3875
  %v3877 = vmul.f32 1.0, %v3876
  %v3878 = vmul.f32 %v3870, %v3861
  %v3879 = vadd.f32 %v3649, %v3878
  %v3880 = vtanh.pop %v3879
  %v3881 = vsub.f32 1.0, %v3877
  %v3882 = vmul.f32 %v3881, %v3880
  %v3883 = vmul.f32 %v3877, %v3138
  %v3884 = vadd.f32 %v3882, %v3883
  %v3887 = vunpack.c.l.s4 1966171168
  %v3888 = vunpack.c.0.s8 %v3887
  %v3889 = vlaneseq
  %v3890 = vshrl.u32 %v3889, 7
  %v3891 = vsub.s32 %v3888, %v3890
  %v3892 = vrot.slane %v3884, %v3891
  %v3893 = vcombine.high %v3892, %v3892
  %v3895 = vunpack.c.l.s4 1966171168
  %v3896 = vunpack.c.0.s8 %v3895
  %v3897 = vlaneseq
  %v3898 = vshrl.u32 %v3897, 7
  %v3899 = vsub.s32 %v3896, %v3898
  %v3900 = vrot.slane %v3892, %v3899
  %v3902 = vunpack.c.l.s4 1966171168
  %v3903 = vunpack.c.0.s8 %v3902
  %v3904 = vlaneseq
  %v3905 = vshrl.u32 %v3904, 7
  %v3906 = vsub.s32 %v3903, %v3905
  %v3907 = vrot.slane %v3893, %v3906
  %3910 = vst.msk [vmem:[%s10 + $0x4] sm:$0x1] %vm925, %v3900
  %3911 = vst.msk [vmem:[%s10 + $0xc] sm:$0x1] %vm925, %v3907
  %v3912 = vld [vmem:[%s0 + $0x5] sm:$0x1]
  %v3913 = vld [vmem:[%s0 + $0xd] sm:$0x1]
  %v3914 = vld [vmem:[%s1 + $0x5] sm:$0x1]
  %v3915 = vld [vmem:[%s1 + $0xd] sm:$0x1]
  %v3916 = vld [vmem:[%s2 + $0x5] sm:$0x1]
  %v3917 = vld [vmem:[%s2 + $0xd] sm:$0x1]
  %3918 = vmatprep.subr.mxu0 0.0
  %3919 = vmatpush1.msra.mxu0 0.0
  %3920 = vmatprep.subr.mxu0 0.0
  %3921 = vmatpush1.msra.mxu0 0.0
  %3922 = vmatprep.subr.mxu0 0.0
  %3923 = vmatpush1.msra.mxu0 0.0
  %3924 = vmatprep.subr.mxu0 0.0
  %3925 = vmatpush1.msra.mxu0 0.0
  %3926 = vmatprep.subr.mxu0 0.0
  %3927 = vmatpush1.msra.mxu0 0.0
  %3928 = vmatprep.subr.mxu0 0.0
  %3929 = vmatpush1.msra.mxu0 0.0
  %3930 = vmatprep.subr.mxu0 0.0
  %3931 = vmatpush1.msra.mxu0 0.0
  %3932 = vmatprep.subr.mxu0 0.0
  %3933 = vmatpush1.msra.mxu0 0.0
  %3934 = vmatprep.subr.mxu0 0.0
  %3935 = vmatpush1.msra.mxu0 0.0
  %3936 = vmatprep.subr.mxu0 0.0
  %3937 = vmatpush1.msra.mxu0 0.0
  %3938 = vmatprep.subr.mxu0 0.0
  %3939 = vmatpush1.msra.mxu0 0.0
  %3940 = vmatprep.subr.mxu0 0.0
  %3941 = vmatpush1.msra.mxu0 0.0
  %3942 = vmatprep.subr.mxu0 0.0
  %3943 = vmatpush1.msra.mxu0 %v61
  %3944 = vmatprep.subr.mxu0 0.0
  %3945 = vmatpush1.msra.mxu0 %v60
  %3946 = vmatprep.subr.mxu0 0.0
  %3947 = vmatpush1.msra.mxu0 %v59
  %3948 = vmatprep.subr.mxu0 0.0
  %3949 = vmatpush1.msra.mxu0 %v58
  %3950 = vmatprep.subr.mxu0 0.0
  %3951 = vmatpush2.msra.mxu0 0.0
  %3952 = vmatprep.subr.mxu0 0.0
  %3953 = vmatpush2.msra.mxu0 0.0
  %3954 = vmatprep.subr.mxu0 0.0
  %3955 = vmatpush2.msra.mxu0 0.0
  %3956 = vmatprep.subr.mxu0 0.0
  %3957 = vmatpush2.msra.mxu0 0.0
  %3958 = vmatprep.subr.mxu0 0.0
  %3959 = vmatpush2.msra.mxu0 0.0
  %3960 = vmatprep.subr.mxu0 0.0
  %3961 = vmatpush2.msra.mxu0 0.0
  %3962 = vmatprep.subr.mxu0 0.0
  %3963 = vmatpush2.msra.mxu0 0.0
  %3964 = vmatprep.subr.mxu0 0.0
  %3965 = vmatpush2.msra.mxu0 0.0
  %3966 = vmatprep.subr.mxu0 0.0
  %3967 = vmatpush2.msra.mxu0 0.0
  %3968 = vmatprep.subr.mxu0 0.0
  %3969 = vmatpush2.msra.mxu0 0.0
  %3970 = vmatprep.subr.mxu0 0.0
  %3971 = vmatpush2.msra.mxu0 0.0
  %3972 = vmatprep.subr.mxu0 0.0
  %3973 = vmatpush2.msra.mxu0 0.0
  %3974 = vmatprep.subr.mxu0 0.0
  %3975 = vmatpush2.msra.mxu0 0.0
  %3976 = vmatprep.subr.mxu0 0.0
  %3977 = vmatpush2.msra.mxu0 0.0
  %3978 = vmatprep.subr.mxu0 0.0
  %3979 = vmatpush2.msra.mxu0 0.0
  %3980 = vmatprep.subr.mxu0 0.0
  %3981 = vmatpush2.msra.mxu0 0.0
  %3982 = vmatprep.mubr.f32.mxu0 0.0
  %3983 = vmatmul.mubr.f32.gmra.mxu0 %v3440
  %v3984 = vpop.f32.mrf.mxu0
  %v3985 = vadd.f32 %v128, %v3984
  %v3986 = vpop.f32.mrf.mxu0
  %3987 = vdwg.mxu0
  %3988 = vmatprep.subr.mxu0 0.0
  %3989 = vmatpush1.msra.mxu0 0.0
  %3990 = vmatprep.subr.mxu0 0.0
  %3991 = vmatpush1.msra.mxu0 0.0
  %3992 = vmatprep.subr.mxu0 0.0
  %3993 = vmatpush1.msra.mxu0 0.0
  %3994 = vmatprep.subr.mxu0 0.0
  %3995 = vmatpush1.msra.mxu0 0.0
  %3996 = vmatprep.subr.mxu0 0.0
  %3997 = vmatpush1.msra.mxu0 0.0
  %3998 = vmatprep.subr.mxu0 0.0
  %3999 = vmatpush1.msra.mxu0 0.0
  %4000 = vmatprep.subr.mxu0 0.0
  %4001 = vmatpush1.msra.mxu0 0.0
  %4002 = vmatprep.subr.mxu0 0.0
  %4003 = vmatpush1.msra.mxu0 0.0
  %4004 = vmatprep.subr.mxu0 0.0
  %4005 = vmatpush1.msra.mxu0 0.0
  %4006 = vmatprep.subr.mxu0 0.0
  %4007 = vmatpush1.msra.mxu0 0.0
  %4008 = vmatprep.subr.mxu0 0.0
  %4009 = vmatpush1.msra.mxu0 0.0
  %4010 = vmatprep.subr.mxu0 0.0
  %4011 = vmatpush1.msra.mxu0 0.0
  %4012 = vmatprep.subr.mxu0 0.0
  %4013 = vmatpush1.msra.mxu0 %v66
  %4014 = vmatprep.subr.mxu0 0.0
  %4015 = vmatpush1.msra.mxu0 %v65
  %4016 = vmatprep.subr.mxu0 0.0
  %4017 = vmatpush1.msra.mxu0 %v64
  %4018 = vmatprep.subr.mxu0 0.0
  %4019 = vmatpush1.msra.mxu0 %v63
  %4020 = vmatprep.subr.mxu0 0.0
  %4021 = vmatpush2.msra.mxu0 0.0
  %4022 = vmatprep.subr.mxu0 0.0
  %4023 = vmatpush2.msra.mxu0 0.0
  %4024 = vmatprep.subr.mxu0 0.0
  %4025 = vmatpush2.msra.mxu0 0.0
  %4026 = vmatprep.subr.mxu0 0.0
  %4027 = vmatpush2.msra.mxu0 0.0
  %4028 = vmatprep.subr.mxu0 0.0
  %4029 = vmatpush2.msra.mxu0 0.0
  %4030 = vmatprep.subr.mxu0 0.0
  %4031 = vmatpush2.msra.mxu0 0.0
  %4032 = vmatprep.subr.mxu0 0.0
  %4033 = vmatpush2.msra.mxu0 0.0
  %4034 = vmatprep.subr.mxu0 0.0
  %4035 = vmatpush2.msra.mxu0 0.0
  %4036 = vmatprep.subr.mxu0 0.0
  %4037 = vmatpush2.msra.mxu0 0.0
  %4038 = vmatprep.subr.mxu0 0.0
  %4039 = vmatpush2.msra.mxu0 0.0
  %4040 = vmatprep.subr.mxu0 0.0
  %4041 = vmatpush2.msra.mxu0 0.0
  %4042 = vmatprep.subr.mxu0 0.0
  %4043 = vmatpush2.msra.mxu0 0.0
  %4044 = vmatprep.subr.mxu0 0.0
  %4045 = vmatpush2.msra.mxu0 0.0
  %4046 = vmatprep.subr.mxu0 0.0
  %4047 = vmatpush2.msra.mxu0 0.0
  %4048 = vmatprep.subr.mxu0 0.0
  %4049 = vmatpush2.msra.mxu0 0.0
  %4050 = vmatprep.subr.mxu0 0.0
  %4051 = vmatpush2.msra.mxu0 0.0
  %4052 = vmatprep.mubr.f32.mxu0 0.0
  %4053 = vmatmul.mubr.f32.gmra.mxu0 %v3440
  %v4054 = vpop.f32.mrf.mxu0
  %v4055 = vadd.f32 %v208, %v4054
  %v4056 = vpop.f32.mrf.mxu0
  %4057 = vdwg.mxu0
  %4058 = vmatprep.subr.mxu0 0.0
  %4059 = vmatpush1.msra.mxu0 0.0
  %4060 = vmatprep.subr.mxu0 0.0
  %4061 = vmatpush1.msra.mxu0 0.0
  %4062 = vmatprep.subr.mxu0 0.0
  %4063 = vmatpush1.msra.mxu0 0.0
  %4064 = vmatprep.subr.mxu0 0.0
  %4065 = vmatpush1.msra.mxu0 0.0
  %4066 = vmatprep.subr.mxu0 0.0
  %4067 = vmatpush1.msra.mxu0 0.0
  %4068 = vmatprep.subr.mxu0 0.0
  %4069 = vmatpush1.msra.mxu0 0.0
  %4070 = vmatprep.subr.mxu0 0.0
  %4071 = vmatpush1.msra.mxu0 0.0
  %4072 = vmatprep.subr.mxu0 0.0
  %4073 = vmatpush1.msra.mxu0 0.0
  %4074 = vmatprep.subr.mxu0 0.0
  %4075 = vmatpush1.msra.mxu0 0.0
  %4076 = vmatprep.subr.mxu0 0.0
  %4077 = vmatpush1.msra.mxu0 0.0
  %4078 = vmatprep.subr.mxu0 0.0
  %4079 = vmatpush1.msra.mxu0 0.0
  %4080 = vmatprep.subr.mxu0 0.0
  %4081 = vmatpush1.msra.mxu0 0.0
  %4082 = vmatprep.subr.mxu0 0.0
  %4083 = vmatpush1.msra.mxu0 %v71
  %4084 = vmatprep.subr.mxu0 0.0
  %4085 = vmatpush1.msra.mxu0 %v70
  %4086 = vmatprep.subr.mxu0 0.0
  %4087 = vmatpush1.msra.mxu0 %v69
  %4088 = vmatprep.subr.mxu0 0.0
  %4089 = vmatpush1.msra.mxu0 %v68
  %4090 = vmatprep.subr.mxu0 0.0
  %4091 = vmatpush2.msra.mxu0 0.0
  %4092 = vmatprep.subr.mxu0 0.0
  %4093 = vmatpush2.msra.mxu0 0.0
  %4094 = vmatprep.subr.mxu0 0.0
  %4095 = vmatpush2.msra.mxu0 0.0
  %4096 = vmatprep.subr.mxu0 0.0
  %4097 = vmatpush2.msra.mxu0 0.0
  %4098 = vmatprep.subr.mxu0 0.0
  %4099 = vmatpush2.msra.mxu0 0.0
  %4100 = vmatprep.subr.mxu0 0.0
  %4101 = vmatpush2.msra.mxu0 0.0
  %4102 = vmatprep.subr.mxu0 0.0
  %4103 = vmatpush2.msra.mxu0 0.0
  %4104 = vmatprep.subr.mxu0 0.0
  %4105 = vmatpush2.msra.mxu0 0.0
  %4106 = vmatprep.subr.mxu0 0.0
  %4107 = vmatpush2.msra.mxu0 0.0
  %4108 = vmatprep.subr.mxu0 0.0
  %4109 = vmatpush2.msra.mxu0 0.0
  %4110 = vmatprep.subr.mxu0 0.0
  %4111 = vmatpush2.msra.mxu0 0.0
  %4112 = vmatprep.subr.mxu0 0.0
  %4113 = vmatpush2.msra.mxu0 0.0
  %4114 = vmatprep.subr.mxu0 0.0
  %4115 = vmatpush2.msra.mxu0 0.0
  %4116 = vmatprep.subr.mxu0 0.0
  %4117 = vmatpush2.msra.mxu0 0.0
  %4118 = vmatprep.subr.mxu0 0.0
  %4119 = vmatpush2.msra.mxu0 0.0
  %4120 = vmatprep.subr.mxu0 0.0
  %4121 = vmatpush2.msra.mxu0 0.0
  %4122 = vmatprep.mubr.f32.mxu0 0.0
  %4123 = vmatmul.mubr.f32.gmra.mxu0 %v3440
  %v4124 = vpop.f32.mrf.mxu0
  %v4125 = vadd.f32 %v284, %v4124
  %v4126 = vpop.f32.mrf.mxu0
  %4127 = vdwg.mxu0
  %v4129 = vrot.slane %v3985, 1
  %v4132 = vadd.f32 %v3912, %v3985
  %v4133 = vadd.f32 %v3913, %v4129
  %v4134 = vxor.u32 %v4132, 2147483648
  %v4135 = vxor.u32 %v4133, 2147483648
  %v4136 = vmul.f32 %v4134, 1.442695
  %v4137 = vpow.pop %v4136
  %v4138 = vmul.f32 %v4135, 1.442695
  %v4139 = vpow.pop %v4138
  %v4140 = vadd.f32 %v4137, 1.0
  %v4141 = vadd.f32 %v4139, 1.0
  %v4142 = vrcp.pop %v4140
  %v4143 = vmul.f32 1.0, %v4142
  %v4144 = vrcp.pop %v4141
  %v4145 = vmul.f32 1.0, %v4144
  %v4147 = vrot.slane %v4055, 1
  %v4150 = vadd.f32 %v3914, %v4055
  %v4151 = vadd.f32 %v3915, %v4147
  %v4152 = vxor.u32 %v4150, 2147483648
  %v4153 = vxor.u32 %v4151, 2147483648
  %v4154 = vmul.f32 %v4152, 1.442695
  %v4155 = vpow.pop %v4154
  %v4156 = vmul.f32 %v4153, 1.442695
  %v4157 = vpow.pop %v4156
  %v4158 = vadd.f32 %v4155, 1.0
  %v4159 = vadd.f32 %v4157, 1.0
  %v4160 = vrcp.pop %v4158
  %v4161 = vmul.f32 1.0, %v4160
  %v4162 = vrcp.pop %v4159
  %v4163 = vmul.f32 1.0, %v4162
  %v4165 = vrot.slane %v4125, 1
  %v4168 = vmul.f32 %v4143, %v4125
  %v4169 = vmul.f32 %v4145, %v4165
  %v4170 = vadd.f32 %v3916, %v4168
  %v4171 = vadd.f32 %v3917, %v4169
  %v4172 = vtanh.pop %v4170
  %v4173 = vtanh.pop %v4171
  %v4174 = vsub.f32 1.0, %v4161
  %v4175 = vsub.f32 1.0, %v4163
  %v4176 = vmul.f32 %v4174, %v4172
  %v4177 = vmul.f32 %v4175, %v4173
  %v4178 = vmul.f32 %v4161, %v3434
  %v4179 = vmul.f32 %v4163, %v3435
  %v4180 = vadd.f32 %v4176, %v4178
  %v4181 = vadd.f32 %v4177, %v4179
  %v4184 = vrot.slane %v4181, 7
  %v4185 = vsel %vm422, %v4184, %v4180
  %v4186 = vsel %vm130, %v4185, 0
  %4188 = vmatprep.subr.mxu0 0.0
  %4189 = vmatpush1.msra.mxu0 0.0
  %4190 = vmatprep.subr.mxu0 0.0
  %4191 = vmatpush1.msra.mxu0 0.0
  %4192 = vmatprep.subr.mxu0 0.0
  %4193 = vmatpush1.msra.mxu0 0.0
  %4194 = vmatprep.subr.mxu0 0.0
  %4195 = vmatpush1.msra.mxu0 0.0
  %4196 = vmatprep.subr.mxu0 0.0
  %4197 = vmatpush1.msra.mxu0 0.0
  %4198 = vmatprep.subr.mxu0 0.0
  %4199 = vmatpush1.msra.mxu0 0.0
  %4200 = vmatprep.subr.mxu0 0.0
  %4201 = vmatpush1.msra.mxu0 0.0
  %4202 = vmatprep.subr.mxu0 0.0
  %4203 = vmatpush1.msra.mxu0 0.0
  %4204 = vmatprep.subr.mxu0 0.0
  %4205 = vmatpush1.msra.mxu0 0.0
  %4206 = vmatprep.subr.mxu0 0.0
  %4207 = vmatpush1.msra.mxu0 0.0
  %4208 = vmatprep.subr.mxu0 0.0
  %4209 = vmatpush1.msra.mxu0 0.0
  %4210 = vmatprep.subr.mxu0 0.0
  %4211 = vmatpush1.msra.mxu0 0.0
  %4212 = vmatprep.subr.mxu0 0.0
  %4213 = vmatpush1.msra.mxu0 %v99
  %4214 = vmatprep.subr.mxu0 0.0
  %4215 = vmatpush1.msra.mxu0 %v98
  %4216 = vmatprep.subr.mxu0 0.0
  %4217 = vmatpush1.msra.mxu0 %v97
  %4218 = vmatprep.subr.mxu0 0.0
  %4219 = vmatpush1.msra.mxu0 %v96
  %4220 = vmatprep.subr.mxu0 0.0
  %4221 = vmatpush2.msra.mxu0 0.0
  %4222 = vmatprep.subr.mxu0 0.0
  %4223 = vmatpush2.msra.mxu0 0.0
  %4224 = vmatprep.subr.mxu0 0.0
  %4225 = vmatpush2.msra.mxu0 0.0
  %4226 = vmatprep.subr.mxu0 0.0
  %4227 = vmatpush2.msra.mxu0 0.0
  %4228 = vmatprep.subr.mxu0 0.0
  %4229 = vmatpush2.msra.mxu0 0.0
  %4230 = vmatprep.subr.mxu0 0.0
  %4231 = vmatpush2.msra.mxu0 0.0
  %4232 = vmatprep.subr.mxu0 0.0
  %4233 = vmatpush2.msra.mxu0 0.0
  %4234 = vmatprep.subr.mxu0 0.0
  %4235 = vmatpush2.msra.mxu0 0.0
  %4236 = vmatprep.subr.mxu0 0.0
  %4237 = vmatpush2.msra.mxu0 0.0
  %4238 = vmatprep.subr.mxu0 0.0
  %4239 = vmatpush2.msra.mxu0 0.0
  %4240 = vmatprep.subr.mxu0 0.0
  %4241 = vmatpush2.msra.mxu0 0.0
  %4242 = vmatprep.subr.mxu0 0.0
  %4243 = vmatpush2.msra.mxu0 0.0
  %4244 = vmatprep.subr.mxu0 0.0
  %4245 = vmatpush2.msra.mxu0 0.0
  %4246 = vmatprep.subr.mxu0 0.0
  %4247 = vmatpush2.msra.mxu0 0.0
  %4248 = vmatprep.subr.mxu0 0.0
  %4249 = vmatpush2.msra.mxu0 0.0
  %4250 = vmatprep.subr.mxu0 0.0
  %4251 = vmatpush2.msra.mxu0 0.0
  %4252 = vmatprep.mubr.f32.mxu0 0.0
  %4253 = vmatmul.mubr.f32.gmra.mxu0 %v4186
  %v4254 = vpop.f32.mrf.mxu0
  %v4255 = vadd.f32 %v417, %v4254
  %v4256 = vpop.f32.mrf.mxu0
  %4257 = vdwg.mxu0
  %4258 = vmatprep.subr.mxu0 0.0
  %4259 = vmatpush1.msra.mxu0 0.0
  %4260 = vmatprep.subr.mxu0 0.0
  %4261 = vmatpush1.msra.mxu0 0.0
  %4262 = vmatprep.subr.mxu0 0.0
  %4263 = vmatpush1.msra.mxu0 0.0
  %4264 = vmatprep.subr.mxu0 0.0
  %4265 = vmatpush1.msra.mxu0 0.0
  %4266 = vmatprep.subr.mxu0 0.0
  %4267 = vmatpush1.msra.mxu0 0.0
  %4268 = vmatprep.subr.mxu0 0.0
  %4269 = vmatpush1.msra.mxu0 0.0
  %4270 = vmatprep.subr.mxu0 0.0
  %4271 = vmatpush1.msra.mxu0 0.0
  %4272 = vmatprep.subr.mxu0 0.0
  %4273 = vmatpush1.msra.mxu0 0.0
  %4274 = vmatprep.subr.mxu0 0.0
  %4275 = vmatpush1.msra.mxu0 0.0
  %4276 = vmatprep.subr.mxu0 0.0
  %4277 = vmatpush1.msra.mxu0 0.0
  %4278 = vmatprep.subr.mxu0 0.0
  %4279 = vmatpush1.msra.mxu0 0.0
  %4280 = vmatprep.subr.mxu0 0.0
  %4281 = vmatpush1.msra.mxu0 0.0
  %4282 = vmatprep.subr.mxu0 0.0
  %4283 = vmatpush1.msra.mxu0 %v104
  %4284 = vmatprep.subr.mxu0 0.0
  %4285 = vmatpush1.msra.mxu0 %v103
  %4286 = vmatprep.subr.mxu0 0.0
  %4287 = vmatpush1.msra.mxu0 %v102
  %4288 = vmatprep.subr.mxu0 0.0
  %4289 = vmatpush1.msra.mxu0 %v101
  %4290 = vmatprep.subr.mxu0 0.0
  %4291 = vmatpush2.msra.mxu0 0.0
  %4292 = vmatprep.subr.mxu0 0.0
  %4293 = vmatpush2.msra.mxu0 0.0
  %4294 = vmatprep.subr.mxu0 0.0
  %4295 = vmatpush2.msra.mxu0 0.0
  %4296 = vmatprep.subr.mxu0 0.0
  %4297 = vmatpush2.msra.mxu0 0.0
  %4298 = vmatprep.subr.mxu0 0.0
  %4299 = vmatpush2.msra.mxu0 0.0
  %4300 = vmatprep.subr.mxu0 0.0
  %4301 = vmatpush2.msra.mxu0 0.0
  %4302 = vmatprep.subr.mxu0 0.0
  %4303 = vmatpush2.msra.mxu0 0.0
  %4304 = vmatprep.subr.mxu0 0.0
  %4305 = vmatpush2.msra.mxu0 0.0
  %4306 = vmatprep.subr.mxu0 0.0
  %4307 = vmatpush2.msra.mxu0 0.0
  %4308 = vmatprep.subr.mxu0 0.0
  %4309 = vmatpush2.msra.mxu0 0.0
  %4310 = vmatprep.subr.mxu0 0.0
  %4311 = vmatpush2.msra.mxu0 0.0
  %4312 = vmatprep.subr.mxu0 0.0
  %4313 = vmatpush2.msra.mxu0 0.0
  %4314 = vmatprep.subr.mxu0 0.0
  %4315 = vmatpush2.msra.mxu0 0.0
  %4316 = vmatprep.subr.mxu0 0.0
  %4317 = vmatpush2.msra.mxu0 0.0
  %4318 = vmatprep.subr.mxu0 0.0
  %4319 = vmatpush2.msra.mxu0 0.0
  %4320 = vmatprep.subr.mxu0 0.0
  %4321 = vmatpush2.msra.mxu0 0.0
  %4322 = vmatprep.mubr.f32.mxu0 0.0
  %4323 = vmatmul.mubr.f32.gmra.mxu0 %v4186
  %v4324 = vpop.f32.mrf.mxu0
  %v4325 = vadd.f32 %v500, %v4324
  %v4326 = vpop.f32.mrf.mxu0
  %4327 = vdwg.mxu0
  %4328 = vmatprep.subr.mxu0 0.0
  %4329 = vmatpush1.msra.mxu0 0.0
  %4330 = vmatprep.subr.mxu0 0.0
  %4331 = vmatpush1.msra.mxu0 0.0
  %4332 = vmatprep.subr.mxu0 0.0
  %4333 = vmatpush1.msra.mxu0 0.0
  %4334 = vmatprep.subr.mxu0 0.0
  %4335 = vmatpush1.msra.mxu0 0.0
  %4336 = vmatprep.subr.mxu0 0.0
  %4337 = vmatpush1.msra.mxu0 0.0
  %4338 = vmatprep.subr.mxu0 0.0
  %4339 = vmatpush1.msra.mxu0 0.0
  %4340 = vmatprep.subr.mxu0 0.0
  %4341 = vmatpush1.msra.mxu0 0.0
  %4342 = vmatprep.subr.mxu0 0.0
  %4343 = vmatpush1.msra.mxu0 0.0
  %4344 = vmatprep.subr.mxu0 0.0
  %4345 = vmatpush1.msra.mxu0 0.0
  %4346 = vmatprep.subr.mxu0 0.0
  %4347 = vmatpush1.msra.mxu0 0.0
  %4348 = vmatprep.subr.mxu0 0.0
  %4349 = vmatpush1.msra.mxu0 0.0
  %4350 = vmatprep.subr.mxu0 0.0
  %4351 = vmatpush1.msra.mxu0 0.0
  %4352 = vmatprep.subr.mxu0 0.0
  %4353 = vmatpush1.msra.mxu0 %v109
  %4354 = vmatprep.subr.mxu0 0.0
  %4355 = vmatpush1.msra.mxu0 %v108
  %4356 = vmatprep.subr.mxu0 0.0
  %4357 = vmatpush1.msra.mxu0 %v107
  %4358 = vmatprep.subr.mxu0 0.0
  %4359 = vmatpush1.msra.mxu0 %v106
  %4360 = vmatprep.subr.mxu0 0.0
  %4361 = vmatpush2.msra.mxu0 0.0
  %4362 = vmatprep.subr.mxu0 0.0
  %4363 = vmatpush2.msra.mxu0 0.0
  %4364 = vmatprep.subr.mxu0 0.0
  %4365 = vmatpush2.msra.mxu0 0.0
  %4366 = vmatprep.subr.mxu0 0.0
  %4367 = vmatpush2.msra.mxu0 0.0
  %4368 = vmatprep.subr.mxu0 0.0
  %4369 = vmatpush2.msra.mxu0 0.0
  %4370 = vmatprep.subr.mxu0 0.0
  %4371 = vmatpush2.msra.mxu0 0.0
  %4372 = vmatprep.subr.mxu0 0.0
  %4373 = vmatpush2.msra.mxu0 0.0
  %4374 = vmatprep.subr.mxu0 0.0
  %4375 = vmatpush2.msra.mxu0 0.0
  %4376 = vmatprep.subr.mxu0 0.0
  %4377 = vmatpush2.msra.mxu0 0.0
  %4378 = vmatprep.subr.mxu0 0.0
  %4379 = vmatpush2.msra.mxu0 0.0
  %4380 = vmatprep.subr.mxu0 0.0
  %4381 = vmatpush2.msra.mxu0 0.0
  %4382 = vmatprep.subr.mxu0 0.0
  %4383 = vmatpush2.msra.mxu0 0.0
  %4384 = vmatprep.subr.mxu0 0.0
  %4385 = vmatpush2.msra.mxu0 0.0
  %4386 = vmatprep.subr.mxu0 0.0
  %4387 = vmatpush2.msra.mxu0 0.0
  %4388 = vmatprep.subr.mxu0 0.0
  %4389 = vmatpush2.msra.mxu0 0.0
  %4390 = vmatprep.subr.mxu0 0.0
  %4391 = vmatpush2.msra.mxu0 0.0
  %4392 = vmatprep.mubr.f32.mxu0 0.0
  %4393 = vmatmul.mubr.f32.gmra.mxu0 %v4186
  %v4394 = vpop.f32.mrf.mxu0
  %v4395 = vadd.f32 %v576, %v4394
  %v4396 = vpop.f32.mrf.mxu0
  %4397 = vdwg.mxu0
  %v4398 = vsel %vm130, %v3884, 0
  %4400 = vmatprep.subr.mxu0 0.0
  %4401 = vmatpush1.msra.mxu0 0.0
  %4402 = vmatprep.subr.mxu0 0.0
  %4403 = vmatpush1.msra.mxu0 0.0
  %4404 = vmatprep.subr.mxu0 0.0
  %4405 = vmatpush1.msra.mxu0 0.0
  %4406 = vmatprep.subr.mxu0 0.0
  %4407 = vmatpush1.msra.mxu0 0.0
  %4408 = vmatprep.subr.mxu0 0.0
  %4409 = vmatpush1.msra.mxu0 0.0
  %4410 = vmatprep.subr.mxu0 0.0
  %4411 = vmatpush1.msra.mxu0 0.0
  %4412 = vmatprep.subr.mxu0 0.0
  %4413 = vmatpush1.msra.mxu0 0.0
  %4414 = vmatprep.subr.mxu0 0.0
  %4415 = vmatpush1.msra.mxu0 0.0
  %4416 = vmatprep.subr.mxu0 0.0
  %4417 = vmatpush1.msra.mxu0 0.0
  %4418 = vmatprep.subr.mxu0 0.0
  %4419 = vmatpush1.msra.mxu0 0.0
  %4420 = vmatprep.subr.mxu0 0.0
  %4421 = vmatpush1.msra.mxu0 0.0
  %4422 = vmatprep.subr.mxu0 0.0
  %4423 = vmatpush1.msra.mxu0 0.0
  %4424 = vmatprep.subr.mxu0 0.0
  %4425 = vmatpush1.msra.mxu0 %v75
  %4426 = vmatprep.subr.mxu0 0.0
  %4427 = vmatpush1.msra.mxu0 %v74
  %4428 = vmatprep.subr.mxu0 0.0
  %4429 = vmatpush1.msra.mxu0 %v73
  %4430 = vmatprep.subr.mxu0 0.0
  %4431 = vmatpush1.msra.mxu0 %v72
  %4432 = vmatprep.subr.mxu0 0.0
  %4433 = vmatpush2.msra.mxu0 0.0
  %4434 = vmatprep.subr.mxu0 0.0
  %4435 = vmatpush2.msra.mxu0 0.0
  %4436 = vmatprep.subr.mxu0 0.0
  %4437 = vmatpush2.msra.mxu0 0.0
  %4438 = vmatprep.subr.mxu0 0.0
  %4439 = vmatpush2.msra.mxu0 0.0
  %4440 = vmatprep.subr.mxu0 0.0
  %4441 = vmatpush2.msra.mxu0 0.0
  %4442 = vmatprep.subr.mxu0 0.0
  %4443 = vmatpush2.msra.mxu0 0.0
  %4444 = vmatprep.subr.mxu0 0.0
  %4445 = vmatpush2.msra.mxu0 0.0
  %4446 = vmatprep.subr.mxu0 0.0
  %4447 = vmatpush2.msra.mxu0 0.0
  %4448 = vmatprep.subr.mxu0 0.0
  %4449 = vmatpush2.msra.mxu0 0.0
  %4450 = vmatprep.subr.mxu0 0.0
  %4451 = vmatpush2.msra.mxu0 0.0
  %4452 = vmatprep.subr.mxu0 0.0
  %4453 = vmatpush2.msra.mxu0 0.0
  %4454 = vmatprep.subr.mxu0 0.0
  %4455 = vmatpush2.msra.mxu0 0.0
  %4456 = vmatprep.subr.mxu0 0.0
  %4457 = vmatpush2.msra.mxu0 0.0
  %4458 = vmatprep.subr.mxu0 0.0
  %4459 = vmatpush2.msra.mxu0 0.0
  %4460 = vmatprep.subr.mxu0 0.0
  %4461 = vmatpush2.msra.mxu0 0.0
  %4462 = vmatprep.subr.mxu0 0.0
  %4463 = vmatpush2.msra.mxu0 0.0
  %4464 = vmatprep.mubr.f32.mxu0 0.0
  %4465 = vmatmul.mubr.f32.gmra.mxu0 %v4398
  %v4466 = vpop.f32.mrf.mxu0
  %v4467 = vadd.f32 %v652, %v4466
  %v4468 = vpop.f32.mrf.mxu0
  %4469 = vdwg.mxu0
  %4470 = vmatprep.subr.mxu0 0.0
  %4471 = vmatpush1.msra.mxu0 0.0
  %4472 = vmatprep.subr.mxu0 0.0
  %4473 = vmatpush1.msra.mxu0 0.0
  %4474 = vmatprep.subr.mxu0 0.0
  %4475 = vmatpush1.msra.mxu0 0.0
  %4476 = vmatprep.subr.mxu0 0.0
  %4477 = vmatpush1.msra.mxu0 0.0
  %4478 = vmatprep.subr.mxu0 0.0
  %4479 = vmatpush1.msra.mxu0 0.0
  %4480 = vmatprep.subr.mxu0 0.0
  %4481 = vmatpush1.msra.mxu0 0.0
  %4482 = vmatprep.subr.mxu0 0.0
  %4483 = vmatpush1.msra.mxu0 0.0
  %4484 = vmatprep.subr.mxu0 0.0
  %4485 = vmatpush1.msra.mxu0 0.0
  %4486 = vmatprep.subr.mxu0 0.0
  %4487 = vmatpush1.msra.mxu0 0.0
  %4488 = vmatprep.subr.mxu0 0.0
  %4489 = vmatpush1.msra.mxu0 0.0
  %4490 = vmatprep.subr.mxu0 0.0
  %4491 = vmatpush1.msra.mxu0 0.0
  %4492 = vmatprep.subr.mxu0 0.0
  %4493 = vmatpush1.msra.mxu0 0.0
  %4494 = vmatprep.subr.mxu0 0.0
  %4495 = vmatpush1.msra.mxu0 %v80
  %4496 = vmatprep.subr.mxu0 0.0
  %4497 = vmatpush1.msra.mxu0 %v79
  %4498 = vmatprep.subr.mxu0 0.0
  %4499 = vmatpush1.msra.mxu0 %v78
  %4500 = vmatprep.subr.mxu0 0.0
  %4501 = vmatpush1.msra.mxu0 %v77
  %4502 = vmatprep.subr.mxu0 0.0
  %4503 = vmatpush2.msra.mxu0 0.0
  %4504 = vmatprep.subr.mxu0 0.0
  %4505 = vmatpush2.msra.mxu0 0.0
  %4506 = vmatprep.subr.mxu0 0.0
  %4507 = vmatpush2.msra.mxu0 0.0
  %4508 = vmatprep.subr.mxu0 0.0
  %4509 = vmatpush2.msra.mxu0 0.0
  %4510 = vmatprep.subr.mxu0 0.0
  %4511 = vmatpush2.msra.mxu0 0.0
  %4512 = vmatprep.subr.mxu0 0.0
  %4513 = vmatpush2.msra.mxu0 0.0
  %4514 = vmatprep.subr.mxu0 0.0
  %4515 = vmatpush2.msra.mxu0 0.0
  %4516 = vmatprep.subr.mxu0 0.0
  %4517 = vmatpush2.msra.mxu0 0.0
  %4518 = vmatprep.subr.mxu0 0.0
  %4519 = vmatpush2.msra.mxu0 0.0
  %4520 = vmatprep.subr.mxu0 0.0
  %4521 = vmatpush2.msra.mxu0 0.0
  %4522 = vmatprep.subr.mxu0 0.0
  %4523 = vmatpush2.msra.mxu0 0.0
  %4524 = vmatprep.subr.mxu0 0.0
  %4525 = vmatpush2.msra.mxu0 0.0
  %4526 = vmatprep.subr.mxu0 0.0
  %4527 = vmatpush2.msra.mxu0 0.0
  %4528 = vmatprep.subr.mxu0 0.0
  %4529 = vmatpush2.msra.mxu0 0.0
  %4530 = vmatprep.subr.mxu0 0.0
  %4531 = vmatpush2.msra.mxu0 0.0
  %4532 = vmatprep.subr.mxu0 0.0
  %4533 = vmatpush2.msra.mxu0 0.0
  %4534 = vmatprep.mubr.f32.mxu0 0.0
  %4535 = vmatmul.mubr.f32.gmra.mxu0 %v4398
  %v4536 = vpop.f32.mrf.mxu0
  %v4537 = vadd.f32 %v731, %v4536
  %v4538 = vpop.f32.mrf.mxu0
  %4539 = vdwg.mxu0
  %4540 = vmatprep.subr.mxu0 0.0
  %4541 = vmatpush1.msra.mxu0 0.0
  %4542 = vmatprep.subr.mxu0 0.0
  %4543 = vmatpush1.msra.mxu0 0.0
  %4544 = vmatprep.subr.mxu0 0.0
  %4545 = vmatpush1.msra.mxu0 0.0
  %4546 = vmatprep.subr.mxu0 0.0
  %4547 = vmatpush1.msra.mxu0 0.0
  %4548 = vmatprep.subr.mxu0 0.0
  %4549 = vmatpush1.msra.mxu0 0.0
  %4550 = vmatprep.subr.mxu0 0.0
  %4551 = vmatpush1.msra.mxu0 0.0
  %4552 = vmatprep.subr.mxu0 0.0
  %4553 = vmatpush1.msra.mxu0 0.0
  %4554 = vmatprep.subr.mxu0 0.0
  %4555 = vmatpush1.msra.mxu0 0.0
  %4556 = vmatprep.subr.mxu0 0.0
  %4557 = vmatpush1.msra.mxu0 0.0
  %4558 = vmatprep.subr.mxu0 0.0
  %4559 = vmatpush1.msra.mxu0 0.0
  %4560 = vmatprep.subr.mxu0 0.0
  %4561 = vmatpush1.msra.mxu0 0.0
  %4562 = vmatprep.subr.mxu0 0.0
  %4563 = vmatpush1.msra.mxu0 0.0
  %4564 = vmatprep.subr.mxu0 0.0
  %4565 = vmatpush1.msra.mxu0 %v85
  %4566 = vmatprep.subr.mxu0 0.0
  %4567 = vmatpush1.msra.mxu0 %v84
  %4568 = vmatprep.subr.mxu0 0.0
  %4569 = vmatpush1.msra.mxu0 %v83
  %4570 = vmatprep.subr.mxu0 0.0
  %4571 = vmatpush1.msra.mxu0 %v82
  %4572 = vmatprep.subr.mxu0 0.0
  %4573 = vmatpush2.msra.mxu0 0.0
  %4574 = vmatprep.subr.mxu0 0.0
  %4575 = vmatpush2.msra.mxu0 0.0
  %4576 = vmatprep.subr.mxu0 0.0
  %4577 = vmatpush2.msra.mxu0 0.0
  %4578 = vmatprep.subr.mxu0 0.0
  %4579 = vmatpush2.msra.mxu0 0.0
  %4580 = vmatprep.subr.mxu0 0.0
  %4581 = vmatpush2.msra.mxu0 0.0
  %4582 = vmatprep.subr.mxu0 0.0
  %4583 = vmatpush2.msra.mxu0 0.0
  %4584 = vmatprep.subr.mxu0 0.0
  %4585 = vmatpush2.msra.mxu0 0.0
  %4586 = vmatprep.subr.mxu0 0.0
  %4587 = vmatpush2.msra.mxu0 0.0
  %4588 = vmatprep.subr.mxu0 0.0
  %4589 = vmatpush2.msra.mxu0 0.0
  %4590 = vmatprep.subr.mxu0 0.0
  %4591 = vmatpush2.msra.mxu0 0.0
  %4592 = vmatprep.subr.mxu0 0.0
  %4593 = vmatpush2.msra.mxu0 0.0
  %4594 = vmatprep.subr.mxu0 0.0
  %4595 = vmatpush2.msra.mxu0 0.0
  %4596 = vmatprep.subr.mxu0 0.0
  %4597 = vmatpush2.msra.mxu0 0.0
  %4598 = vmatprep.subr.mxu0 0.0
  %4599 = vmatpush2.msra.mxu0 0.0
  %4600 = vmatprep.subr.mxu0 0.0
  %4601 = vmatpush2.msra.mxu0 0.0
  %4602 = vmatprep.subr.mxu0 0.0
  %4603 = vmatpush2.msra.mxu0 0.0
  %4604 = vmatprep.mubr.f32.mxu0 0.0
  %4605 = vmatmul.mubr.f32.gmra.mxu0 %v4398
  %v4606 = vpop.f32.mrf.mxu0
  %v4607 = vadd.f32 %v807, %v4606
  %v4608 = vpop.f32.mrf.mxu0
  %4609 = vdwg.mxu0
  %v4610 = vadd.f32 %v4255, %v4467
  %v4611 = vxor.u32 %v4610, 2147483648
  %v4612 = vmul.f32 %v4611, 1.442695
  %v4613 = vpow.pop %v4612
  %v4614 = vadd.f32 %v4613, 1.0
  %v4615 = vrcp.pop %v4614
  %v4616 = vmul.f32 1.0, %v4615
  %v4617 = vadd.f32 %v4325, %v4537
  %v4618 = vxor.u32 %v4617, 2147483648
  %v4619 = vmul.f32 %v4618, 1.442695
  %v4620 = vpow.pop %v4619
  %v4621 = vadd.f32 %v4620, 1.0
  %v4622 = vrcp.pop %v4621
  %v4623 = vmul.f32 1.0, %v4622
  %v4624 = vmul.f32 %v4616, %v4607
  %v4625 = vadd.f32 %v4395, %v4624
  %v4626 = vtanh.pop %v4625
  %v4627 = vsub.f32 1.0, %v4623
  %v4628 = vmul.f32 %v4627, %v4626
  %v4629 = vmul.f32 %v4623, %v3884
  %v4630 = vadd.f32 %v4628, %v4629
  %v4633 = vunpack.c.l.s4 1966171168
  %v4634 = vunpack.c.0.s8 %v4633
  %v4635 = vlaneseq
  %v4636 = vshrl.u32 %v4635, 7
  %v4637 = vsub.s32 %v4634, %v4636
  %v4638 = vrot.slane %v4630, %v4637
  %v4639 = vcombine.high %v4638, %v4638
  %v4641 = vunpack.c.l.s4 1966171168
  %v4642 = vunpack.c.0.s8 %v4641
  %v4643 = vlaneseq
  %v4644 = vshrl.u32 %v4643, 7
  %v4645 = vsub.s32 %v4642, %v4644
  %v4646 = vrot.slane %v4638, %v4645
  %v4648 = vunpack.c.l.s4 1966171168
  %v4649 = vunpack.c.0.s8 %v4648
  %v4650 = vlaneseq
  %v4651 = vshrl.u32 %v4650, 7
  %v4652 = vsub.s32 %v4649, %v4651
  %v4653 = vrot.slane %v4639, %v4652
  %4656 = vst.msk [vmem:[%s10 + $0x5] sm:$0x1] %vm925, %v4646
  %4657 = vst.msk [vmem:[%s10 + $0xd] sm:$0x1] %vm925, %v4653
  %v4658 = vld [vmem:[%s0 + $0x6] sm:$0x1]
  %v4659 = vld [vmem:[%s0 + $0xe] sm:$0x1]
  %v4660 = vld [vmem:[%s1 + $0x6] sm:$0x1]
  %v4661 = vld [vmem:[%s1 + $0xe] sm:$0x1]
  %v4662 = vld [vmem:[%s2 + $0x6] sm:$0x1]
  %v4663 = vld [vmem:[%s2 + $0xe] sm:$0x1]
  %4664 = vmatprep.subr.mxu0 0.0
  %4665 = vmatpush1.msra.mxu0 0.0
  %4666 = vmatprep.subr.mxu0 0.0
  %4667 = vmatpush1.msra.mxu0 0.0
  %4668 = vmatprep.subr.mxu0 0.0
  %4669 = vmatpush1.msra.mxu0 0.0
  %4670 = vmatprep.subr.mxu0 0.0
  %4671 = vmatpush1.msra.mxu0 0.0
  %4672 = vmatprep.subr.mxu0 0.0
  %4673 = vmatpush1.msra.mxu0 0.0
  %4674 = vmatprep.subr.mxu0 0.0
  %4675 = vmatpush1.msra.mxu0 0.0
  %4676 = vmatprep.subr.mxu0 0.0
  %4677 = vmatpush1.msra.mxu0 0.0
  %4678 = vmatprep.subr.mxu0 0.0
  %4679 = vmatpush1.msra.mxu0 0.0
  %4680 = vmatprep.subr.mxu0 0.0
  %4681 = vmatpush1.msra.mxu0 0.0
  %4682 = vmatprep.subr.mxu0 0.0
  %4683 = vmatpush1.msra.mxu0 0.0
  %4684 = vmatprep.subr.mxu0 0.0
  %4685 = vmatpush1.msra.mxu0 0.0
  %4686 = vmatprep.subr.mxu0 0.0
  %4687 = vmatpush1.msra.mxu0 0.0
  %4688 = vmatprep.subr.mxu0 0.0
  %4689 = vmatpush1.msra.mxu0 %v61
  %4690 = vmatprep.subr.mxu0 0.0
  %4691 = vmatpush1.msra.mxu0 %v60
  %4692 = vmatprep.subr.mxu0 0.0
  %4693 = vmatpush1.msra.mxu0 %v59
  %4694 = vmatprep.subr.mxu0 0.0
  %4695 = vmatpush1.msra.mxu0 %v58
  %4696 = vmatprep.subr.mxu0 0.0
  %4697 = vmatpush2.msra.mxu0 0.0
  %4698 = vmatprep.subr.mxu0 0.0
  %4699 = vmatpush2.msra.mxu0 0.0
  %4700 = vmatprep.subr.mxu0 0.0
  %4701 = vmatpush2.msra.mxu0 0.0
  %4702 = vmatprep.subr.mxu0 0.0
  %4703 = vmatpush2.msra.mxu0 0.0
  %4704 = vmatprep.subr.mxu0 0.0
  %4705 = vmatpush2.msra.mxu0 0.0
  %4706 = vmatprep.subr.mxu0 0.0
  %4707 = vmatpush2.msra.mxu0 0.0
  %4708 = vmatprep.subr.mxu0 0.0
  %4709 = vmatpush2.msra.mxu0 0.0
  %4710 = vmatprep.subr.mxu0 0.0
  %4711 = vmatpush2.msra.mxu0 0.0
  %4712 = vmatprep.subr.mxu0 0.0
  %4713 = vmatpush2.msra.mxu0 0.0
  %4714 = vmatprep.subr.mxu0 0.0
  %4715 = vmatpush2.msra.mxu0 0.0
  %4716 = vmatprep.subr.mxu0 0.0
  %4717 = vmatpush2.msra.mxu0 0.0
  %4718 = vmatprep.subr.mxu0 0.0
  %4719 = vmatpush2.msra.mxu0 0.0
  %4720 = vmatprep.subr.mxu0 0.0
  %4721 = vmatpush2.msra.mxu0 0.0
  %4722 = vmatprep.subr.mxu0 0.0
  %4723 = vmatpush2.msra.mxu0 0.0
  %4724 = vmatprep.subr.mxu0 0.0
  %4725 = vmatpush2.msra.mxu0 0.0
  %4726 = vmatprep.subr.mxu0 0.0
  %4727 = vmatpush2.msra.mxu0 0.0
  %4728 = vmatprep.mubr.f32.mxu0 0.0
  %4729 = vmatmul.mubr.f32.gmra.mxu0 %v4186
  %v4730 = vpop.f32.mrf.mxu0
  %v4731 = vadd.f32 %v128, %v4730
  %v4732 = vpop.f32.mrf.mxu0
  %4733 = vdwg.mxu0
  %4734 = vmatprep.subr.mxu0 0.0
  %4735 = vmatpush1.msra.mxu0 0.0
  %4736 = vmatprep.subr.mxu0 0.0
  %4737 = vmatpush1.msra.mxu0 0.0
  %4738 = vmatprep.subr.mxu0 0.0
  %4739 = vmatpush1.msra.mxu0 0.0
  %4740 = vmatprep.subr.mxu0 0.0
  %4741 = vmatpush1.msra.mxu0 0.0
  %4742 = vmatprep.subr.mxu0 0.0
  %4743 = vmatpush1.msra.mxu0 0.0
  %4744 = vmatprep.subr.mxu0 0.0
  %4745 = vmatpush1.msra.mxu0 0.0
  %4746 = vmatprep.subr.mxu0 0.0
  %4747 = vmatpush1.msra.mxu0 0.0
  %4748 = vmatprep.subr.mxu0 0.0
  %4749 = vmatpush1.msra.mxu0 0.0
  %4750 = vmatprep.subr.mxu0 0.0
  %4751 = vmatpush1.msra.mxu0 0.0
  %4752 = vmatprep.subr.mxu0 0.0
  %4753 = vmatpush1.msra.mxu0 0.0
  %4754 = vmatprep.subr.mxu0 0.0
  %4755 = vmatpush1.msra.mxu0 0.0
  %4756 = vmatprep.subr.mxu0 0.0
  %4757 = vmatpush1.msra.mxu0 0.0
  %4758 = vmatprep.subr.mxu0 0.0
  %4759 = vmatpush1.msra.mxu0 %v66
  %4760 = vmatprep.subr.mxu0 0.0
  %4761 = vmatpush1.msra.mxu0 %v65
  %4762 = vmatprep.subr.mxu0 0.0
  %4763 = vmatpush1.msra.mxu0 %v64
  %4764 = vmatprep.subr.mxu0 0.0
  %4765 = vmatpush1.msra.mxu0 %v63
  %4766 = vmatprep.subr.mxu0 0.0
  %4767 = vmatpush2.msra.mxu0 0.0
  %4768 = vmatprep.subr.mxu0 0.0
  %4769 = vmatpush2.msra.mxu0 0.0
  %4770 = vmatprep.subr.mxu0 0.0
  %4771 = vmatpush2.msra.mxu0 0.0
  %4772 = vmatprep.subr.mxu0 0.0
  %4773 = vmatpush2.msra.mxu0 0.0
  %4774 = vmatprep.subr.mxu0 0.0
  %4775 = vmatpush2.msra.mxu0 0.0
  %4776 = vmatprep.subr.mxu0 0.0
  %4777 = vmatpush2.msra.mxu0 0.0
  %4778 = vmatprep.subr.mxu0 0.0
  %4779 = vmatpush2.msra.mxu0 0.0
  %4780 = vmatprep.subr.mxu0 0.0
  %4781 = vmatpush2.msra.mxu0 0.0
  %4782 = vmatprep.subr.mxu0 0.0
  %4783 = vmatpush2.msra.mxu0 0.0
  %4784 = vmatprep.subr.mxu0 0.0
  %4785 = vmatpush2.msra.mxu0 0.0
  %4786 = vmatprep.subr.mxu0 0.0
  %4787 = vmatpush2.msra.mxu0 0.0
  %4788 = vmatprep.subr.mxu0 0.0
  %4789 = vmatpush2.msra.mxu0 0.0
  %4790 = vmatprep.subr.mxu0 0.0
  %4791 = vmatpush2.msra.mxu0 0.0
  %4792 = vmatprep.subr.mxu0 0.0
  %4793 = vmatpush2.msra.mxu0 0.0
  %4794 = vmatprep.subr.mxu0 0.0
  %4795 = vmatpush2.msra.mxu0 0.0
  %4796 = vmatprep.subr.mxu0 0.0
  %4797 = vmatpush2.msra.mxu0 0.0
  %4798 = vmatprep.mubr.f32.mxu0 0.0
  %4799 = vmatmul.mubr.f32.gmra.mxu0 %v4186
  %v4800 = vpop.f32.mrf.mxu0
  %v4801 = vadd.f32 %v208, %v4800
  %v4802 = vpop.f32.mrf.mxu0
  %4803 = vdwg.mxu0
  %4804 = vmatprep.subr.mxu0 0.0
  %4805 = vmatpush1.msra.mxu0 0.0
  %4806 = vmatprep.subr.mxu0 0.0
  %4807 = vmatpush1.msra.mxu0 0.0
  %4808 = vmatprep.subr.mxu0 0.0
  %4809 = vmatpush1.msra.mxu0 0.0
  %4810 = vmatprep.subr.mxu0 0.0
  %4811 = vmatpush1.msra.mxu0 0.0
  %4812 = vmatprep.subr.mxu0 0.0
  %4813 = vmatpush1.msra.mxu0 0.0
  %4814 = vmatprep.subr.mxu0 0.0
  %4815 = vmatpush1.msra.mxu0 0.0
  %4816 = vmatprep.subr.mxu0 0.0
  %4817 = vmatpush1.msra.mxu0 0.0
  %4818 = vmatprep.subr.mxu0 0.0
  %4819 = vmatpush1.msra.mxu0 0.0
  %4820 = vmatprep.subr.mxu0 0.0
  %4821 = vmatpush1.msra.mxu0 0.0
  %4822 = vmatprep.subr.mxu0 0.0
  %4823 = vmatpush1.msra.mxu0 0.0
  %4824 = vmatprep.subr.mxu0 0.0
  %4825 = vmatpush1.msra.mxu0 0.0
  %4826 = vmatprep.subr.mxu0 0.0
  %4827 = vmatpush1.msra.mxu0 0.0
  %4828 = vmatprep.subr.mxu0 0.0
  %4829 = vmatpush1.msra.mxu0 %v71
  %4830 = vmatprep.subr.mxu0 0.0
  %4831 = vmatpush1.msra.mxu0 %v70
  %4832 = vmatprep.subr.mxu0 0.0
  %4833 = vmatpush1.msra.mxu0 %v69
  %4834 = vmatprep.subr.mxu0 0.0
  %4835 = vmatpush1.msra.mxu0 %v68
  %4836 = vmatprep.subr.mxu0 0.0
  %4837 = vmatpush2.msra.mxu0 0.0
  %4838 = vmatprep.subr.mxu0 0.0
  %4839 = vmatpush2.msra.mxu0 0.0
  %4840 = vmatprep.subr.mxu0 0.0
  %4841 = vmatpush2.msra.mxu0 0.0
  %4842 = vmatprep.subr.mxu0 0.0
  %4843 = vmatpush2.msra.mxu0 0.0
  %4844 = vmatprep.subr.mxu0 0.0
  %4845 = vmatpush2.msra.mxu0 0.0
  %4846 = vmatprep.subr.mxu0 0.0
  %4847 = vmatpush2.msra.mxu0 0.0
  %4848 = vmatprep.subr.mxu0 0.0
  %4849 = vmatpush2.msra.mxu0 0.0
  %4850 = vmatprep.subr.mxu0 0.0
  %4851 = vmatpush2.msra.mxu0 0.0
  %4852 = vmatprep.subr.mxu0 0.0
  %4853 = vmatpush2.msra.mxu0 0.0
  %4854 = vmatprep.subr.mxu0 0.0
  %4855 = vmatpush2.msra.mxu0 0.0
  %4856 = vmatprep.subr.mxu0 0.0
  %4857 = vmatpush2.msra.mxu0 0.0
  %4858 = vmatprep.subr.mxu0 0.0
  %4859 = vmatpush2.msra.mxu0 0.0
  %4860 = vmatprep.subr.mxu0 0.0
  %4861 = vmatpush2.msra.mxu0 0.0
  %4862 = vmatprep.subr.mxu0 0.0
  %4863 = vmatpush2.msra.mxu0 0.0
  %4864 = vmatprep.subr.mxu0 0.0
  %4865 = vmatpush2.msra.mxu0 0.0
  %4866 = vmatprep.subr.mxu0 0.0
  %4867 = vmatpush2.msra.mxu0 0.0
  %4868 = vmatprep.mubr.f32.mxu0 0.0
  %4869 = vmatmul.mubr.f32.gmra.mxu0 %v4186
  %v4870 = vpop.f32.mrf.mxu0
  %v4871 = vadd.f32 %v284, %v4870
  %v4872 = vpop.f32.mrf.mxu0
  %4873 = vdwg.mxu0
  %v4875 = vrot.slane %v4731, 1
  %v4878 = vadd.f32 %v4658, %v4731
  %v4879 = vadd.f32 %v4659, %v4875
  %v4880 = vxor.u32 %v4878, 2147483648
  %v4881 = vxor.u32 %v4879, 2147483648
  %v4882 = vmul.f32 %v4880, 1.442695
  %v4883 = vpow.pop %v4882
  %v4884 = vmul.f32 %v4881, 1.442695
  %v4885 = vpow.pop %v4884
  %v4886 = vadd.f32 %v4883, 1.0
  %v4887 = vadd.f32 %v4885, 1.0
  %v4888 = vrcp.pop %v4886
  %v4889 = vmul.f32 1.0, %v4888
  %v4890 = vrcp.pop %v4887
  %v4891 = vmul.f32 1.0, %v4890
  %v4893 = vrot.slane %v4801, 1
  %v4896 = vadd.f32 %v4660, %v4801
  %v4897 = vadd.f32 %v4661, %v4893
  %v4898 = vxor.u32 %v4896, 2147483648
  %v4899 = vxor.u32 %v4897, 2147483648
  %v4900 = vmul.f32 %v4898, 1.442695
  %v4901 = vpow.pop %v4900
  %v4902 = vmul.f32 %v4899, 1.442695
  %v4903 = vpow.pop %v4902
  %v4904 = vadd.f32 %v4901, 1.0
  %v4905 = vadd.f32 %v4903, 1.0
  %v4906 = vrcp.pop %v4904
  %v4907 = vmul.f32 1.0, %v4906
  %v4908 = vrcp.pop %v4905
  %v4909 = vmul.f32 1.0, %v4908
  %v4911 = vrot.slane %v4871, 1
  %v4914 = vmul.f32 %v4889, %v4871
  %v4915 = vmul.f32 %v4891, %v4911
  %v4916 = vadd.f32 %v4662, %v4914
  %v4917 = vadd.f32 %v4663, %v4915
  %v4918 = vtanh.pop %v4916
  %v4919 = vtanh.pop %v4917
  %v4920 = vsub.f32 1.0, %v4907
  %v4921 = vsub.f32 1.0, %v4909
  %v4922 = vmul.f32 %v4920, %v4918
  %v4923 = vmul.f32 %v4921, %v4919
  %v4924 = vmul.f32 %v4907, %v4180
  %v4925 = vmul.f32 %v4909, %v4181
  %v4926 = vadd.f32 %v4922, %v4924
  %v4927 = vadd.f32 %v4923, %v4925
  %v4930 = vrot.slane %v4927, 7
  %v4931 = vsel %vm422, %v4930, %v4926
  %v4932 = vsel %vm130, %v4931, 0
  %4934 = vmatprep.subr.mxu0 0.0
  %4935 = vmatpush1.msra.mxu0 0.0
  %4936 = vmatprep.subr.mxu0 0.0
  %4937 = vmatpush1.msra.mxu0 0.0
  %4938 = vmatprep.subr.mxu0 0.0
  %4939 = vmatpush1.msra.mxu0 0.0
  %4940 = vmatprep.subr.mxu0 0.0
  %4941 = vmatpush1.msra.mxu0 0.0
  %4942 = vmatprep.subr.mxu0 0.0
  %4943 = vmatpush1.msra.mxu0 0.0
  %4944 = vmatprep.subr.mxu0 0.0
  %4945 = vmatpush1.msra.mxu0 0.0
  %4946 = vmatprep.subr.mxu0 0.0
  %4947 = vmatpush1.msra.mxu0 0.0
  %4948 = vmatprep.subr.mxu0 0.0
  %4949 = vmatpush1.msra.mxu0 0.0
  %4950 = vmatprep.subr.mxu0 0.0
  %4951 = vmatpush1.msra.mxu0 0.0
  %4952 = vmatprep.subr.mxu0 0.0
  %4953 = vmatpush1.msra.mxu0 0.0
  %4954 = vmatprep.subr.mxu0 0.0
  %4955 = vmatpush1.msra.mxu0 0.0
  %4956 = vmatprep.subr.mxu0 0.0
  %4957 = vmatpush1.msra.mxu0 0.0
  %4958 = vmatprep.subr.mxu0 0.0
  %4959 = vmatpush1.msra.mxu0 %v99
  %4960 = vmatprep.subr.mxu0 0.0
  %4961 = vmatpush1.msra.mxu0 %v98
  %4962 = vmatprep.subr.mxu0 0.0
  %4963 = vmatpush1.msra.mxu0 %v97
  %4964 = vmatprep.subr.mxu0 0.0
  %4965 = vmatpush1.msra.mxu0 %v96
  %4966 = vmatprep.subr.mxu0 0.0
  %4967 = vmatpush2.msra.mxu0 0.0
  %4968 = vmatprep.subr.mxu0 0.0
  %4969 = vmatpush2.msra.mxu0 0.0
  %4970 = vmatprep.subr.mxu0 0.0
  %4971 = vmatpush2.msra.mxu0 0.0
  %4972 = vmatprep.subr.mxu0 0.0
  %4973 = vmatpush2.msra.mxu0 0.0
  %4974 = vmatprep.subr.mxu0 0.0
  %4975 = vmatpush2.msra.mxu0 0.0
  %4976 = vmatprep.subr.mxu0 0.0
  %4977 = vmatpush2.msra.mxu0 0.0
  %4978 = vmatprep.subr.mxu0 0.0
  %4979 = vmatpush2.msra.mxu0 0.0
  %4980 = vmatprep.subr.mxu0 0.0
  %4981 = vmatpush2.msra.mxu0 0.0
  %4982 = vmatprep.subr.mxu0 0.0
  %4983 = vmatpush2.msra.mxu0 0.0
  %4984 = vmatprep.subr.mxu0 0.0
  %4985 = vmatpush2.msra.mxu0 0.0
  %4986 = vmatprep.subr.mxu0 0.0
  %4987 = vmatpush2.msra.mxu0 0.0
  %4988 = vmatprep.subr.mxu0 0.0
  %4989 = vmatpush2.msra.mxu0 0.0
  %4990 = vmatprep.subr.mxu0 0.0
  %4991 = vmatpush2.msra.mxu0 0.0
  %4992 = vmatprep.subr.mxu0 0.0
  %4993 = vmatpush2.msra.mxu0 0.0
  %4994 = vmatprep.subr.mxu0 0.0
  %4995 = vmatpush2.msra.mxu0 0.0
  %4996 = vmatprep.subr.mxu0 0.0
  %4997 = vmatpush2.msra.mxu0 0.0
  %4998 = vmatprep.mubr.f32.mxu0 0.0
  %4999 = vmatmul.mubr.f32.gmra.mxu0 %v4932
  %v5000 = vpop.f32.mrf.mxu0
  %v5001 = vadd.f32 %v417, %v5000
  %v5002 = vpop.f32.mrf.mxu0
  %5003 = vdwg.mxu0
  %5004 = vmatprep.subr.mxu0 0.0
  %5005 = vmatpush1.msra.mxu0 0.0
  %5006 = vmatprep.subr.mxu0 0.0
  %5007 = vmatpush1.msra.mxu0 0.0
  %5008 = vmatprep.subr.mxu0 0.0
  %5009 = vmatpush1.msra.mxu0 0.0
  %5010 = vmatprep.subr.mxu0 0.0
  %5011 = vmatpush1.msra.mxu0 0.0
  %5012 = vmatprep.subr.mxu0 0.0
  %5013 = vmatpush1.msra.mxu0 0.0
  %5014 = vmatprep.subr.mxu0 0.0
  %5015 = vmatpush1.msra.mxu0 0.0
  %5016 = vmatprep.subr.mxu0 0.0
  %5017 = vmatpush1.msra.mxu0 0.0
  %5018 = vmatprep.subr.mxu0 0.0
  %5019 = vmatpush1.msra.mxu0 0.0
  %5020 = vmatprep.subr.mxu0 0.0
  %5021 = vmatpush1.msra.mxu0 0.0
  %5022 = vmatprep.subr.mxu0 0.0
  %5023 = vmatpush1.msra.mxu0 0.0
  %5024 = vmatprep.subr.mxu0 0.0
  %5025 = vmatpush1.msra.mxu0 0.0
  %5026 = vmatprep.subr.mxu0 0.0
  %5027 = vmatpush1.msra.mxu0 0.0
  %5028 = vmatprep.subr.mxu0 0.0
  %5029 = vmatpush1.msra.mxu0 %v104
  %5030 = vmatprep.subr.mxu0 0.0
  %5031 = vmatpush1.msra.mxu0 %v103
  %5032 = vmatprep.subr.mxu0 0.0
  %5033 = vmatpush1.msra.mxu0 %v102
  %5034 = vmatprep.subr.mxu0 0.0
  %5035 = vmatpush1.msra.mxu0 %v101
  %5036 = vmatprep.subr.mxu0 0.0
  %5037 = vmatpush2.msra.mxu0 0.0
  %5038 = vmatprep.subr.mxu0 0.0
  %5039 = vmatpush2.msra.mxu0 0.0
  %5040 = vmatprep.subr.mxu0 0.0
  %5041 = vmatpush2.msra.mxu0 0.0
  %5042 = vmatprep.subr.mxu0 0.0
  %5043 = vmatpush2.msra.mxu0 0.0
  %5044 = vmatprep.subr.mxu0 0.0
  %5045 = vmatpush2.msra.mxu0 0.0
  %5046 = vmatprep.subr.mxu0 0.0
  %5047 = vmatpush2.msra.mxu0 0.0
  %5048 = vmatprep.subr.mxu0 0.0
  %5049 = vmatpush2.msra.mxu0 0.0
  %5050 = vmatprep.subr.mxu0 0.0
  %5051 = vmatpush2.msra.mxu0 0.0
  %5052 = vmatprep.subr.mxu0 0.0
  %5053 = vmatpush2.msra.mxu0 0.0
  %5054 = vmatprep.subr.mxu0 0.0
  %5055 = vmatpush2.msra.mxu0 0.0
  %5056 = vmatprep.subr.mxu0 0.0
  %5057 = vmatpush2.msra.mxu0 0.0
  %5058 = vmatprep.subr.mxu0 0.0
  %5059 = vmatpush2.msra.mxu0 0.0
  %5060 = vmatprep.subr.mxu0 0.0
  %5061 = vmatpush2.msra.mxu0 0.0
  %5062 = vmatprep.subr.mxu0 0.0
  %5063 = vmatpush2.msra.mxu0 0.0
  %5064 = vmatprep.subr.mxu0 0.0
  %5065 = vmatpush2.msra.mxu0 0.0
  %5066 = vmatprep.subr.mxu0 0.0
  %5067 = vmatpush2.msra.mxu0 0.0
  %5068 = vmatprep.mubr.f32.mxu0 0.0
  %5069 = vmatmul.mubr.f32.gmra.mxu0 %v4932
  %v5070 = vpop.f32.mrf.mxu0
  %v5071 = vadd.f32 %v500, %v5070
  %v5072 = vpop.f32.mrf.mxu0
  %5073 = vdwg.mxu0
  %5074 = vmatprep.subr.mxu0 0.0
  %5075 = vmatpush1.msra.mxu0 0.0
  %5076 = vmatprep.subr.mxu0 0.0
  %5077 = vmatpush1.msra.mxu0 0.0
  %5078 = vmatprep.subr.mxu0 0.0
  %5079 = vmatpush1.msra.mxu0 0.0
  %5080 = vmatprep.subr.mxu0 0.0
  %5081 = vmatpush1.msra.mxu0 0.0
  %5082 = vmatprep.subr.mxu0 0.0
  %5083 = vmatpush1.msra.mxu0 0.0
  %5084 = vmatprep.subr.mxu0 0.0
  %5085 = vmatpush1.msra.mxu0 0.0
  %5086 = vmatprep.subr.mxu0 0.0
  %5087 = vmatpush1.msra.mxu0 0.0
  %5088 = vmatprep.subr.mxu0 0.0
  %5089 = vmatpush1.msra.mxu0 0.0
  %5090 = vmatprep.subr.mxu0 0.0
  %5091 = vmatpush1.msra.mxu0 0.0
  %5092 = vmatprep.subr.mxu0 0.0
  %5093 = vmatpush1.msra.mxu0 0.0
  %5094 = vmatprep.subr.mxu0 0.0
  %5095 = vmatpush1.msra.mxu0 0.0
  %5096 = vmatprep.subr.mxu0 0.0
  %5097 = vmatpush1.msra.mxu0 0.0
  %5098 = vmatprep.subr.mxu0 0.0
  %5099 = vmatpush1.msra.mxu0 %v109
  %5100 = vmatprep.subr.mxu0 0.0
  %5101 = vmatpush1.msra.mxu0 %v108
  %5102 = vmatprep.subr.mxu0 0.0
  %5103 = vmatpush1.msra.mxu0 %v107
  %5104 = vmatprep.subr.mxu0 0.0
  %5105 = vmatpush1.msra.mxu0 %v106
  %5106 = vmatprep.subr.mxu0 0.0
  %5107 = vmatpush2.msra.mxu0 0.0
  %5108 = vmatprep.subr.mxu0 0.0
  %5109 = vmatpush2.msra.mxu0 0.0
  %5110 = vmatprep.subr.mxu0 0.0
  %5111 = vmatpush2.msra.mxu0 0.0
  %5112 = vmatprep.subr.mxu0 0.0
  %5113 = vmatpush2.msra.mxu0 0.0
  %5114 = vmatprep.subr.mxu0 0.0
  %5115 = vmatpush2.msra.mxu0 0.0
  %5116 = vmatprep.subr.mxu0 0.0
  %5117 = vmatpush2.msra.mxu0 0.0
  %5118 = vmatprep.subr.mxu0 0.0
  %5119 = vmatpush2.msra.mxu0 0.0
  %5120 = vmatprep.subr.mxu0 0.0
  %5121 = vmatpush2.msra.mxu0 0.0
  %5122 = vmatprep.subr.mxu0 0.0
  %5123 = vmatpush2.msra.mxu0 0.0
  %5124 = vmatprep.subr.mxu0 0.0
  %5125 = vmatpush2.msra.mxu0 0.0
  %5126 = vmatprep.subr.mxu0 0.0
  %5127 = vmatpush2.msra.mxu0 0.0
  %5128 = vmatprep.subr.mxu0 0.0
  %5129 = vmatpush2.msra.mxu0 0.0
  %5130 = vmatprep.subr.mxu0 0.0
  %5131 = vmatpush2.msra.mxu0 0.0
  %5132 = vmatprep.subr.mxu0 0.0
  %5133 = vmatpush2.msra.mxu0 0.0
  %5134 = vmatprep.subr.mxu0 0.0
  %5135 = vmatpush2.msra.mxu0 0.0
  %5136 = vmatprep.subr.mxu0 0.0
  %5137 = vmatpush2.msra.mxu0 0.0
  %5138 = vmatprep.mubr.f32.mxu0 0.0
  %5139 = vmatmul.mubr.f32.gmra.mxu0 %v4932
  %v5140 = vpop.f32.mrf.mxu0
  %v5141 = vadd.f32 %v576, %v5140
  %v5142 = vpop.f32.mrf.mxu0
  %5143 = vdwg.mxu0
  %v5144 = vsel %vm130, %v4630, 0
  %5146 = vmatprep.subr.mxu0 0.0
  %5147 = vmatpush1.msra.mxu0 0.0
  %5148 = vmatprep.subr.mxu0 0.0
  %5149 = vmatpush1.msra.mxu0 0.0
  %5150 = vmatprep.subr.mxu0 0.0
  %5151 = vmatpush1.msra.mxu0 0.0
  %5152 = vmatprep.subr.mxu0 0.0
  %5153 = vmatpush1.msra.mxu0 0.0
  %5154 = vmatprep.subr.mxu0 0.0
  %5155 = vmatpush1.msra.mxu0 0.0
  %5156 = vmatprep.subr.mxu0 0.0
  %5157 = vmatpush1.msra.mxu0 0.0
  %5158 = vmatprep.subr.mxu0 0.0
  %5159 = vmatpush1.msra.mxu0 0.0
  %5160 = vmatprep.subr.mxu0 0.0
  %5161 = vmatpush1.msra.mxu0 0.0
  %5162 = vmatprep.subr.mxu0 0.0
  %5163 = vmatpush1.msra.mxu0 0.0
  %5164 = vmatprep.subr.mxu0 0.0
  %5165 = vmatpush1.msra.mxu0 0.0
  %5166 = vmatprep.subr.mxu0 0.0
  %5167 = vmatpush1.msra.mxu0 0.0
  %5168 = vmatprep.subr.mxu0 0.0
  %5169 = vmatpush1.msra.mxu0 0.0
  %5170 = vmatprep.subr.mxu0 0.0
  %5171 = vmatpush1.msra.mxu0 %v75
  %5172 = vmatprep.subr.mxu0 0.0
  %5173 = vmatpush1.msra.mxu0 %v74
  %5174 = vmatprep.subr.mxu0 0.0
  %5175 = vmatpush1.msra.mxu0 %v73
  %5176 = vmatprep.subr.mxu0 0.0
  %5177 = vmatpush1.msra.mxu0 %v72
  %5178 = vmatprep.subr.mxu0 0.0
  %5179 = vmatpush2.msra.mxu0 0.0
  %5180 = vmatprep.subr.mxu0 0.0
  %5181 = vmatpush2.msra.mxu0 0.0
  %5182 = vmatprep.subr.mxu0 0.0
  %5183 = vmatpush2.msra.mxu0 0.0
  %5184 = vmatprep.subr.mxu0 0.0
  %5185 = vmatpush2.msra.mxu0 0.0
  %5186 = vmatprep.subr.mxu0 0.0
  %5187 = vmatpush2.msra.mxu0 0.0
  %5188 = vmatprep.subr.mxu0 0.0
  %5189 = vmatpush2.msra.mxu0 0.0
  %5190 = vmatprep.subr.mxu0 0.0
  %5191 = vmatpush2.msra.mxu0 0.0
  %5192 = vmatprep.subr.mxu0 0.0
  %5193 = vmatpush2.msra.mxu0 0.0
  %5194 = vmatprep.subr.mxu0 0.0
  %5195 = vmatpush2.msra.mxu0 0.0
  %5196 = vmatprep.subr.mxu0 0.0
  %5197 = vmatpush2.msra.mxu0 0.0
  %5198 = vmatprep.subr.mxu0 0.0
  %5199 = vmatpush2.msra.mxu0 0.0
  %5200 = vmatprep.subr.mxu0 0.0
  %5201 = vmatpush2.msra.mxu0 0.0
  %5202 = vmatprep.subr.mxu0 0.0
  %5203 = vmatpush2.msra.mxu0 0.0
  %5204 = vmatprep.subr.mxu0 0.0
  %5205 = vmatpush2.msra.mxu0 0.0
  %5206 = vmatprep.subr.mxu0 0.0
  %5207 = vmatpush2.msra.mxu0 0.0
  %5208 = vmatprep.subr.mxu0 0.0
  %5209 = vmatpush2.msra.mxu0 0.0
  %5210 = vmatprep.mubr.f32.mxu0 0.0
  %5211 = vmatmul.mubr.f32.gmra.mxu0 %v5144
  %v5212 = vpop.f32.mrf.mxu0
  %v5213 = vadd.f32 %v652, %v5212
  %v5214 = vpop.f32.mrf.mxu0
  %5215 = vdwg.mxu0
  %5216 = vmatprep.subr.mxu0 0.0
  %5217 = vmatpush1.msra.mxu0 0.0
  %5218 = vmatprep.subr.mxu0 0.0
  %5219 = vmatpush1.msra.mxu0 0.0
  %5220 = vmatprep.subr.mxu0 0.0
  %5221 = vmatpush1.msra.mxu0 0.0
  %5222 = vmatprep.subr.mxu0 0.0
  %5223 = vmatpush1.msra.mxu0 0.0
  %5224 = vmatprep.subr.mxu0 0.0
  %5225 = vmatpush1.msra.mxu0 0.0
  %5226 = vmatprep.subr.mxu0 0.0
  %5227 = vmatpush1.msra.mxu0 0.0
  %5228 = vmatprep.subr.mxu0 0.0
  %5229 = vmatpush1.msra.mxu0 0.0
  %5230 = vmatprep.subr.mxu0 0.0
  %5231 = vmatpush1.msra.mxu0 0.0
  %5232 = vmatprep.subr.mxu0 0.0
  %5233 = vmatpush1.msra.mxu0 0.0
  %5234 = vmatprep.subr.mxu0 0.0
  %5235 = vmatpush1.msra.mxu0 0.0
  %5236 = vmatprep.subr.mxu0 0.0
  %5237 = vmatpush1.msra.mxu0 0.0
  %5238 = vmatprep.subr.mxu0 0.0
  %5239 = vmatpush1.msra.mxu0 0.0
  %5240 = vmatprep.subr.mxu0 0.0
  %5241 = vmatpush1.msra.mxu0 %v80
  %5242 = vmatprep.subr.mxu0 0.0
  %5243 = vmatpush1.msra.mxu0 %v79
  %5244 = vmatprep.subr.mxu0 0.0
  %5245 = vmatpush1.msra.mxu0 %v78
  %5246 = vmatprep.subr.mxu0 0.0
  %5247 = vmatpush1.msra.mxu0 %v77
  %5248 = vmatprep.subr.mxu0 0.0
  %5249 = vmatpush2.msra.mxu0 0.0
  %5250 = vmatprep.subr.mxu0 0.0
  %5251 = vmatpush2.msra.mxu0 0.0
  %5252 = vmatprep.subr.mxu0 0.0
  %5253 = vmatpush2.msra.mxu0 0.0
  %5254 = vmatprep.subr.mxu0 0.0
  %5255 = vmatpush2.msra.mxu0 0.0
  %5256 = vmatprep.subr.mxu0 0.0
  %5257 = vmatpush2.msra.mxu0 0.0
  %5258 = vmatprep.subr.mxu0 0.0
  %5259 = vmatpush2.msra.mxu0 0.0
  %5260 = vmatprep.subr.mxu0 0.0
  %5261 = vmatpush2.msra.mxu0 0.0
  %5262 = vmatprep.subr.mxu0 0.0
  %5263 = vmatpush2.msra.mxu0 0.0
  %5264 = vmatprep.subr.mxu0 0.0
  %5265 = vmatpush2.msra.mxu0 0.0
  %5266 = vmatprep.subr.mxu0 0.0
  %5267 = vmatpush2.msra.mxu0 0.0
  %5268 = vmatprep.subr.mxu0 0.0
  %5269 = vmatpush2.msra.mxu0 0.0
  %5270 = vmatprep.subr.mxu0 0.0
  %5271 = vmatpush2.msra.mxu0 0.0
  %5272 = vmatprep.subr.mxu0 0.0
  %5273 = vmatpush2.msra.mxu0 0.0
  %5274 = vmatprep.subr.mxu0 0.0
  %5275 = vmatpush2.msra.mxu0 0.0
  %5276 = vmatprep.subr.mxu0 0.0
  %5277 = vmatpush2.msra.mxu0 0.0
  %5278 = vmatprep.subr.mxu0 0.0
  %5279 = vmatpush2.msra.mxu0 0.0
  %5280 = vmatprep.mubr.f32.mxu0 0.0
  %5281 = vmatmul.mubr.f32.gmra.mxu0 %v5144
  %v5282 = vpop.f32.mrf.mxu0
  %v5283 = vadd.f32 %v731, %v5282
  %v5284 = vpop.f32.mrf.mxu0
  %5285 = vdwg.mxu0
  %5286 = vmatprep.subr.mxu0 0.0
  %5287 = vmatpush1.msra.mxu0 0.0
  %5288 = vmatprep.subr.mxu0 0.0
  %5289 = vmatpush1.msra.mxu0 0.0
  %5290 = vmatprep.subr.mxu0 0.0
  %5291 = vmatpush1.msra.mxu0 0.0
  %5292 = vmatprep.subr.mxu0 0.0
  %5293 = vmatpush1.msra.mxu0 0.0
  %5294 = vmatprep.subr.mxu0 0.0
  %5295 = vmatpush1.msra.mxu0 0.0
  %5296 = vmatprep.subr.mxu0 0.0
  %5297 = vmatpush1.msra.mxu0 0.0
  %5298 = vmatprep.subr.mxu0 0.0
  %5299 = vmatpush1.msra.mxu0 0.0
  %5300 = vmatprep.subr.mxu0 0.0
  %5301 = vmatpush1.msra.mxu0 0.0
  %5302 = vmatprep.subr.mxu0 0.0
  %5303 = vmatpush1.msra.mxu0 0.0
  %5304 = vmatprep.subr.mxu0 0.0
  %5305 = vmatpush1.msra.mxu0 0.0
  %5306 = vmatprep.subr.mxu0 0.0
  %5307 = vmatpush1.msra.mxu0 0.0
  %5308 = vmatprep.subr.mxu0 0.0
  %5309 = vmatpush1.msra.mxu0 0.0
  %5310 = vmatprep.subr.mxu0 0.0
  %5311 = vmatpush1.msra.mxu0 %v85
  %5312 = vmatprep.subr.mxu0 0.0
  %5313 = vmatpush1.msra.mxu0 %v84
  %5314 = vmatprep.subr.mxu0 0.0
  %5315 = vmatpush1.msra.mxu0 %v83
  %5316 = vmatprep.subr.mxu0 0.0
  %5317 = vmatpush1.msra.mxu0 %v82
  %5318 = vmatprep.subr.mxu0 0.0
  %5319 = vmatpush2.msra.mxu0 0.0
  %5320 = vmatprep.subr.mxu0 0.0
  %5321 = vmatpush2.msra.mxu0 0.0
  %5322 = vmatprep.subr.mxu0 0.0
  %5323 = vmatpush2.msra.mxu0 0.0
  %5324 = vmatprep.subr.mxu0 0.0
  %5325 = vmatpush2.msra.mxu0 0.0
  %5326 = vmatprep.subr.mxu0 0.0
  %5327 = vmatpush2.msra.mxu0 0.0
  %5328 = vmatprep.subr.mxu0 0.0
  %5329 = vmatpush2.msra.mxu0 0.0
  %5330 = vmatprep.subr.mxu0 0.0
  %5331 = vmatpush2.msra.mxu0 0.0
  %5332 = vmatprep.subr.mxu0 0.0
  %5333 = vmatpush2.msra.mxu0 0.0
  %5334 = vmatprep.subr.mxu0 0.0
  %5335 = vmatpush2.msra.mxu0 0.0
  %5336 = vmatprep.subr.mxu0 0.0
  %5337 = vmatpush2.msra.mxu0 0.0
  %5338 = vmatprep.subr.mxu0 0.0
  %5339 = vmatpush2.msra.mxu0 0.0
  %5340 = vmatprep.subr.mxu0 0.0
  %5341 = vmatpush2.msra.mxu0 0.0
  %5342 = vmatprep.subr.mxu0 0.0
  %5343 = vmatpush2.msra.mxu0 0.0
  %5344 = vmatprep.subr.mxu0 0.0
  %5345 = vmatpush2.msra.mxu0 0.0
  %5346 = vmatprep.subr.mxu0 0.0
  %5347 = vmatpush2.msra.mxu0 0.0
  %5348 = vmatprep.subr.mxu0 0.0
  %5349 = vmatpush2.msra.mxu0 0.0
  %5350 = vmatprep.mubr.f32.mxu0 0.0
  %5351 = vmatmul.mubr.f32.gmra.mxu0 %v5144
  %v5352 = vpop.f32.mrf.mxu0
  %v5353 = vadd.f32 %v807, %v5352
  %v5354 = vpop.f32.mrf.mxu0
  %5355 = vdwg.mxu0
  %v5356 = vadd.f32 %v5001, %v5213
  %v5357 = vxor.u32 %v5356, 2147483648
  %v5358 = vmul.f32 %v5357, 1.442695
  %v5359 = vpow.pop %v5358
  %v5360 = vadd.f32 %v5359, 1.0
  %v5361 = vrcp.pop %v5360
  %v5362 = vmul.f32 1.0, %v5361
  %v5363 = vadd.f32 %v5071, %v5283
  %v5364 = vxor.u32 %v5363, 2147483648
  %v5365 = vmul.f32 %v5364, 1.442695
  %v5366 = vpow.pop %v5365
  %v5367 = vadd.f32 %v5366, 1.0
  %v5368 = vrcp.pop %v5367
  %v5369 = vmul.f32 1.0, %v5368
  %v5370 = vmul.f32 %v5362, %v5353
  %v5371 = vadd.f32 %v5141, %v5370
  %v5372 = vtanh.pop %v5371
  %v5373 = vsub.f32 1.0, %v5369
  %v5374 = vmul.f32 %v5373, %v5372
  %v5375 = vmul.f32 %v5369, %v4630
  %v5376 = vadd.f32 %v5374, %v5375
  %v5379 = vunpack.c.l.s4 1966171168
  %v5380 = vunpack.c.0.s8 %v5379
  %v5381 = vlaneseq
  %v5382 = vshrl.u32 %v5381, 7
  %v5383 = vsub.s32 %v5380, %v5382
  %v5384 = vrot.slane %v5376, %v5383
  %v5385 = vcombine.high %v5384, %v5384
  %v5387 = vunpack.c.l.s4 1966171168
  %v5388 = vunpack.c.0.s8 %v5387
  %v5389 = vlaneseq
  %v5390 = vshrl.u32 %v5389, 7
  %v5391 = vsub.s32 %v5388, %v5390
  %v5392 = vrot.slane %v5384, %v5391
  %v5394 = vunpack.c.l.s4 1966171168
  %v5395 = vunpack.c.0.s8 %v5394
  %v5396 = vlaneseq
  %v5397 = vshrl.u32 %v5396, 7
  %v5398 = vsub.s32 %v5395, %v5397
  %v5399 = vrot.slane %v5385, %v5398
  %5402 = vst.msk [vmem:[%s10 + $0x6] sm:$0x1] %vm925, %v5392
  %5403 = vst.msk [vmem:[%s10 + $0xe] sm:$0x1] %vm925, %v5399
  %v5404 = vld [vmem:[%s0 + $0x7] sm:$0x1]
  %v5405 = vld [vmem:[%s0 + $0xf] sm:$0x1]
  %v5406 = vld [vmem:[%s1 + $0x7] sm:$0x1]
  %v5407 = vld [vmem:[%s1 + $0xf] sm:$0x1]
  %v5408 = vld [vmem:[%s2 + $0x7] sm:$0x1]
  %v5409 = vld [vmem:[%s2 + $0xf] sm:$0x1]
  %5410 = vmatprep.subr.mxu0 0.0
  %5411 = vmatpush1.msra.mxu0 0.0
  %5412 = vmatprep.subr.mxu0 0.0
  %5413 = vmatpush1.msra.mxu0 0.0
  %5414 = vmatprep.subr.mxu0 0.0
  %5415 = vmatpush1.msra.mxu0 0.0
  %5416 = vmatprep.subr.mxu0 0.0
  %5417 = vmatpush1.msra.mxu0 0.0
  %5418 = vmatprep.subr.mxu0 0.0
  %5419 = vmatpush1.msra.mxu0 0.0
  %5420 = vmatprep.subr.mxu0 0.0
  %5421 = vmatpush1.msra.mxu0 0.0
  %5422 = vmatprep.subr.mxu0 0.0
  %5423 = vmatpush1.msra.mxu0 0.0
  %5424 = vmatprep.subr.mxu0 0.0
  %5425 = vmatpush1.msra.mxu0 0.0
  %5426 = vmatprep.subr.mxu0 0.0
  %5427 = vmatpush1.msra.mxu0 0.0
  %5428 = vmatprep.subr.mxu0 0.0
  %5429 = vmatpush1.msra.mxu0 0.0
  %5430 = vmatprep.subr.mxu0 0.0
  %5431 = vmatpush1.msra.mxu0 0.0
  %5432 = vmatprep.subr.mxu0 0.0
  %5433 = vmatpush1.msra.mxu0 0.0
  %5434 = vmatprep.subr.mxu0 0.0
  %5435 = vmatpush1.msra.mxu0 %v61
  %5436 = vmatprep.subr.mxu0 0.0
  %5437 = vmatpush1.msra.mxu0 %v60
  %5438 = vmatprep.subr.mxu0 0.0
  %5439 = vmatpush1.msra.mxu0 %v59
  %5440 = vmatprep.subr.mxu0 0.0
  %5441 = vmatpush1.msra.mxu0 %v58
  %5442 = vmatprep.subr.mxu0 0.0
  %5443 = vmatpush2.msra.mxu0 0.0
  %5444 = vmatprep.subr.mxu0 0.0
  %5445 = vmatpush2.msra.mxu0 0.0
  %5446 = vmatprep.subr.mxu0 0.0
  %5447 = vmatpush2.msra.mxu0 0.0
  %5448 = vmatprep.subr.mxu0 0.0
  %5449 = vmatpush2.msra.mxu0 0.0
  %5450 = vmatprep.subr.mxu0 0.0
  %5451 = vmatpush2.msra.mxu0 0.0
  %5452 = vmatprep.subr.mxu0 0.0
  %5453 = vmatpush2.msra.mxu0 0.0
  %5454 = vmatprep.subr.mxu0 0.0
  %5455 = vmatpush2.msra.mxu0 0.0
  %5456 = vmatprep.subr.mxu0 0.0
  %5457 = vmatpush2.msra.mxu0 0.0
  %5458 = vmatprep.subr.mxu0 0.0
  %5459 = vmatpush2.msra.mxu0 0.0
  %5460 = vmatprep.subr.mxu0 0.0
  %5461 = vmatpush2.msra.mxu0 0.0
  %5462 = vmatprep.subr.mxu0 0.0
  %5463 = vmatpush2.msra.mxu0 0.0
  %5464 = vmatprep.subr.mxu0 0.0
  %5465 = vmatpush2.msra.mxu0 0.0
  %5466 = vmatprep.subr.mxu0 0.0
  %5467 = vmatpush2.msra.mxu0 0.0
  %5468 = vmatprep.subr.mxu0 0.0
  %5469 = vmatpush2.msra.mxu0 0.0
  %5470 = vmatprep.subr.mxu0 0.0
  %5471 = vmatpush2.msra.mxu0 0.0
  %5472 = vmatprep.subr.mxu0 0.0
  %5473 = vmatpush2.msra.mxu0 0.0
  %5474 = vmatprep.mubr.f32.mxu0 0.0
  %5475 = vmatmul.mubr.f32.gmra.mxu0 %v4932
  %v5476 = vpop.f32.mrf.mxu0
  %v5477 = vadd.f32 %v128, %v5476
  %v5478 = vpop.f32.mrf.mxu0
  %5479 = vdwg.mxu0
  %5480 = vmatprep.subr.mxu0 0.0
  %5481 = vmatpush1.msra.mxu0 0.0
  %5482 = vmatprep.subr.mxu0 0.0
  %5483 = vmatpush1.msra.mxu0 0.0
  %5484 = vmatprep.subr.mxu0 0.0
  %5485 = vmatpush1.msra.mxu0 0.0
  %5486 = vmatprep.subr.mxu0 0.0
  %5487 = vmatpush1.msra.mxu0 0.0
  %5488 = vmatprep.subr.mxu0 0.0
  %5489 = vmatpush1.msra.mxu0 0.0
  %5490 = vmatprep.subr.mxu0 0.0
  %5491 = vmatpush1.msra.mxu0 0.0
  %5492 = vmatprep.subr.mxu0 0.0
  %5493 = vmatpush1.msra.mxu0 0.0
  %5494 = vmatprep.subr.mxu0 0.0
  %5495 = vmatpush1.msra.mxu0 0.0
  %5496 = vmatprep.subr.mxu0 0.0
  %5497 = vmatpush1.msra.mxu0 0.0
  %5498 = vmatprep.subr.mxu0 0.0
  %5499 = vmatpush1.msra.mxu0 0.0
  %5500 = vmatprep.subr.mxu0 0.0
  %5501 = vmatpush1.msra.mxu0 0.0
  %5502 = vmatprep.subr.mxu0 0.0
  %5503 = vmatpush1.msra.mxu0 0.0
  %5504 = vmatprep.subr.mxu0 0.0
  %5505 = vmatpush1.msra.mxu0 %v66
  %5506 = vmatprep.subr.mxu0 0.0
  %5507 = vmatpush1.msra.mxu0 %v65
  %5508 = vmatprep.subr.mxu0 0.0
  %5509 = vmatpush1.msra.mxu0 %v64
  %5510 = vmatprep.subr.mxu0 0.0
  %5511 = vmatpush1.msra.mxu0 %v63
  %5512 = vmatprep.subr.mxu0 0.0
  %5513 = vmatpush2.msra.mxu0 0.0
  %5514 = vmatprep.subr.mxu0 0.0
  %5515 = vmatpush2.msra.mxu0 0.0
  %5516 = vmatprep.subr.mxu0 0.0
  %5517 = vmatpush2.msra.mxu0 0.0
  %5518 = vmatprep.subr.mxu0 0.0
  %5519 = vmatpush2.msra.mxu0 0.0
  %5520 = vmatprep.subr.mxu0 0.0
  %5521 = vmatpush2.msra.mxu0 0.0
  %5522 = vmatprep.subr.mxu0 0.0
  %5523 = vmatpush2.msra.mxu0 0.0
  %5524 = vmatprep.subr.mxu0 0.0
  %5525 = vmatpush2.msra.mxu0 0.0
  %5526 = vmatprep.subr.mxu0 0.0
  %5527 = vmatpush2.msra.mxu0 0.0
  %5528 = vmatprep.subr.mxu0 0.0
  %5529 = vmatpush2.msra.mxu0 0.0
  %5530 = vmatprep.subr.mxu0 0.0
  %5531 = vmatpush2.msra.mxu0 0.0
  %5532 = vmatprep.subr.mxu0 0.0
  %5533 = vmatpush2.msra.mxu0 0.0
  %5534 = vmatprep.subr.mxu0 0.0
  %5535 = vmatpush2.msra.mxu0 0.0
  %5536 = vmatprep.subr.mxu0 0.0
  %5537 = vmatpush2.msra.mxu0 0.0
  %5538 = vmatprep.subr.mxu0 0.0
  %5539 = vmatpush2.msra.mxu0 0.0
  %5540 = vmatprep.subr.mxu0 0.0
  %5541 = vmatpush2.msra.mxu0 0.0
  %5542 = vmatprep.subr.mxu0 0.0
  %5543 = vmatpush2.msra.mxu0 0.0
  %5544 = vmatprep.mubr.f32.mxu0 0.0
  %5545 = vmatmul.mubr.f32.gmra.mxu0 %v4932
  %v5546 = vpop.f32.mrf.mxu0
  %v5547 = vadd.f32 %v208, %v5546
  %v5548 = vpop.f32.mrf.mxu0
  %5549 = vdwg.mxu0
  %5550 = vmatprep.subr.mxu0 0.0
  %5551 = vmatpush1.msra.mxu0 0.0
  %5552 = vmatprep.subr.mxu0 0.0
  %5553 = vmatpush1.msra.mxu0 0.0
  %5554 = vmatprep.subr.mxu0 0.0
  %5555 = vmatpush1.msra.mxu0 0.0
  %5556 = vmatprep.subr.mxu0 0.0
  %5557 = vmatpush1.msra.mxu0 0.0
  %5558 = vmatprep.subr.mxu0 0.0
  %5559 = vmatpush1.msra.mxu0 0.0
  %5560 = vmatprep.subr.mxu0 0.0
  %5561 = vmatpush1.msra.mxu0 0.0
  %5562 = vmatprep.subr.mxu0 0.0
  %5563 = vmatpush1.msra.mxu0 0.0
  %5564 = vmatprep.subr.mxu0 0.0
  %5565 = vmatpush1.msra.mxu0 0.0
  %5566 = vmatprep.subr.mxu0 0.0
  %5567 = vmatpush1.msra.mxu0 0.0
  %5568 = vmatprep.subr.mxu0 0.0
  %5569 = vmatpush1.msra.mxu0 0.0
  %5570 = vmatprep.subr.mxu0 0.0
  %5571 = vmatpush1.msra.mxu0 0.0
  %5572 = vmatprep.subr.mxu0 0.0
  %5573 = vmatpush1.msra.mxu0 0.0
  %5574 = vmatprep.subr.mxu0 0.0
  %5575 = vmatpush1.msra.mxu0 %v71
  %5576 = vmatprep.subr.mxu0 0.0
  %5577 = vmatpush1.msra.mxu0 %v70
  %5578 = vmatprep.subr.mxu0 0.0
  %5579 = vmatpush1.msra.mxu0 %v69
  %5580 = vmatprep.subr.mxu0 0.0
  %5581 = vmatpush1.msra.mxu0 %v68
  %5582 = vmatprep.subr.mxu0 0.0
  %5583 = vmatpush2.msra.mxu0 0.0
  %5584 = vmatprep.subr.mxu0 0.0
  %5585 = vmatpush2.msra.mxu0 0.0
  %5586 = vmatprep.subr.mxu0 0.0
  %5587 = vmatpush2.msra.mxu0 0.0
  %5588 = vmatprep.subr.mxu0 0.0
  %5589 = vmatpush2.msra.mxu0 0.0
  %5590 = vmatprep.subr.mxu0 0.0
  %5591 = vmatpush2.msra.mxu0 0.0
  %5592 = vmatprep.subr.mxu0 0.0
  %5593 = vmatpush2.msra.mxu0 0.0
  %5594 = vmatprep.subr.mxu0 0.0
  %5595 = vmatpush2.msra.mxu0 0.0
  %5596 = vmatprep.subr.mxu0 0.0
  %5597 = vmatpush2.msra.mxu0 0.0
  %5598 = vmatprep.subr.mxu0 0.0
  %5599 = vmatpush2.msra.mxu0 0.0
  %5600 = vmatprep.subr.mxu0 0.0
  %5601 = vmatpush2.msra.mxu0 0.0
  %5602 = vmatprep.subr.mxu0 0.0
  %5603 = vmatpush2.msra.mxu0 0.0
  %5604 = vmatprep.subr.mxu0 0.0
  %5605 = vmatpush2.msra.mxu0 0.0
  %5606 = vmatprep.subr.mxu0 0.0
  %5607 = vmatpush2.msra.mxu0 0.0
  %5608 = vmatprep.subr.mxu0 0.0
  %5609 = vmatpush2.msra.mxu0 0.0
  %5610 = vmatprep.subr.mxu0 0.0
  %5611 = vmatpush2.msra.mxu0 0.0
  %5612 = vmatprep.subr.mxu0 0.0
  %5613 = vmatpush2.msra.mxu0 0.0
  %5614 = vmatprep.mubr.f32.mxu0 0.0
  %5615 = vmatmul.mubr.f32.gmra.mxu0 %v4932
  %v5616 = vpop.f32.mrf.mxu0
  %v5617 = vadd.f32 %v284, %v5616
  %v5618 = vpop.f32.mrf.mxu0
  %5619 = vdwg.mxu0
  %v5621 = vrot.slane %v5477, 1
  %v5624 = vadd.f32 %v5404, %v5477
  %v5625 = vadd.f32 %v5405, %v5621
  %v5626 = vxor.u32 %v5624, 2147483648
  %v5627 = vxor.u32 %v5625, 2147483648
  %v5628 = vmul.f32 %v5626, 1.442695
  %v5629 = vpow.pop %v5628
  %v5630 = vmul.f32 %v5627, 1.442695
  %v5631 = vpow.pop %v5630
  %v5632 = vadd.f32 %v5629, 1.0
  %v5633 = vadd.f32 %v5631, 1.0
  %v5634 = vrcp.pop %v5632
  %v5635 = vmul.f32 1.0, %v5634
  %v5636 = vrcp.pop %v5633
  %v5637 = vmul.f32 1.0, %v5636
  %v5639 = vrot.slane %v5547, 1
  %v5642 = vadd.f32 %v5406, %v5547
  %v5643 = vadd.f32 %v5407, %v5639
  %v5644 = vxor.u32 %v5642, 2147483648
  %v5645 = vxor.u32 %v5643, 2147483648
  %v5646 = vmul.f32 %v5644, 1.442695
  %v5647 = vpow.pop %v5646
  %v5648 = vmul.f32 %v5645, 1.442695
  %v5649 = vpow.pop %v5648
  %v5650 = vadd.f32 %v5647, 1.0
  %v5651 = vadd.f32 %v5649, 1.0
  %v5652 = vrcp.pop %v5650
  %v5653 = vmul.f32 1.0, %v5652
  %v5654 = vrcp.pop %v5651
  %v5655 = vmul.f32 1.0, %v5654
  %v5657 = vrot.slane %v5617, 1
  %v5660 = vmul.f32 %v5635, %v5617
  %v5661 = vmul.f32 %v5637, %v5657
  %v5662 = vadd.f32 %v5408, %v5660
  %v5663 = vadd.f32 %v5409, %v5661
  %v5664 = vtanh.pop %v5662
  %v5665 = vtanh.pop %v5663
  %v5666 = vsub.f32 1.0, %v5653
  %v5667 = vsub.f32 1.0, %v5655
  %v5668 = vmul.f32 %v5666, %v5664
  %v5669 = vmul.f32 %v5667, %v5665
  %v5670 = vmul.f32 %v5653, %v4926
  %v5671 = vmul.f32 %v5655, %v4927
  %v5672 = vadd.f32 %v5668, %v5670
  %v5673 = vadd.f32 %v5669, %v5671
  %v5676 = vrot.slane %v5673, 7
  %v5677 = vsel %vm422, %v5676, %v5672
  %v5678 = vsel %vm130, %v5677, 0
  %5680 = vmatprep.subr.mxu0 0.0
  %5681 = vmatpush1.msra.mxu0 0.0
  %5682 = vmatprep.subr.mxu0 0.0
  %5683 = vmatpush1.msra.mxu0 0.0
  %5684 = vmatprep.subr.mxu0 0.0
  %5685 = vmatpush1.msra.mxu0 0.0
  %5686 = vmatprep.subr.mxu0 0.0
  %5687 = vmatpush1.msra.mxu0 0.0
  %5688 = vmatprep.subr.mxu0 0.0
  %5689 = vmatpush1.msra.mxu0 0.0
  %5690 = vmatprep.subr.mxu0 0.0
  %5691 = vmatpush1.msra.mxu0 0.0
  %5692 = vmatprep.subr.mxu0 0.0
  %5693 = vmatpush1.msra.mxu0 0.0
  %5694 = vmatprep.subr.mxu0 0.0
  %5695 = vmatpush1.msra.mxu0 0.0
  %5696 = vmatprep.subr.mxu0 0.0
  %5697 = vmatpush1.msra.mxu0 0.0
  %5698 = vmatprep.subr.mxu0 0.0
  %5699 = vmatpush1.msra.mxu0 0.0
  %5700 = vmatprep.subr.mxu0 0.0
  %5701 = vmatpush1.msra.mxu0 0.0
  %5702 = vmatprep.subr.mxu0 0.0
  %5703 = vmatpush1.msra.mxu0 0.0
  %5704 = vmatprep.subr.mxu0 0.0
  %5705 = vmatpush1.msra.mxu0 %v99
  %5706 = vmatprep.subr.mxu0 0.0
  %5707 = vmatpush1.msra.mxu0 %v98
  %5708 = vmatprep.subr.mxu0 0.0
  %5709 = vmatpush1.msra.mxu0 %v97
  %5710 = vmatprep.subr.mxu0 0.0
  %5711 = vmatpush1.msra.mxu0 %v96
  %5712 = vmatprep.subr.mxu0 0.0
  %5713 = vmatpush2.msra.mxu0 0.0
  %5714 = vmatprep.subr.mxu0 0.0
  %5715 = vmatpush2.msra.mxu0 0.0
  %5716 = vmatprep.subr.mxu0 0.0
  %5717 = vmatpush2.msra.mxu0 0.0
  %5718 = vmatprep.subr.mxu0 0.0
  %5719 = vmatpush2.msra.mxu0 0.0
  %5720 = vmatprep.subr.mxu0 0.0
  %5721 = vmatpush2.msra.mxu0 0.0
  %5722 = vmatprep.subr.mxu0 0.0
  %5723 = vmatpush2.msra.mxu0 0.0
  %5724 = vmatprep.subr.mxu0 0.0
  %5725 = vmatpush2.msra.mxu0 0.0
  %5726 = vmatprep.subr.mxu0 0.0
  %5727 = vmatpush2.msra.mxu0 0.0
  %5728 = vmatprep.subr.mxu0 0.0
  %5729 = vmatpush2.msra.mxu0 0.0
  %5730 = vmatprep.subr.mxu0 0.0
  %5731 = vmatpush2.msra.mxu0 0.0
  %5732 = vmatprep.subr.mxu0 0.0
  %5733 = vmatpush2.msra.mxu0 0.0
  %5734 = vmatprep.subr.mxu0 0.0
  %5735 = vmatpush2.msra.mxu0 0.0
  %5736 = vmatprep.subr.mxu0 0.0
  %5737 = vmatpush2.msra.mxu0 0.0
  %5738 = vmatprep.subr.mxu0 0.0
  %5739 = vmatpush2.msra.mxu0 0.0
  %5740 = vmatprep.subr.mxu0 0.0
  %5741 = vmatpush2.msra.mxu0 0.0
  %5742 = vmatprep.subr.mxu0 0.0
  %5743 = vmatpush2.msra.mxu0 0.0
  %5744 = vmatprep.mubr.f32.mxu0 0.0
  %5745 = vmatmul.mubr.f32.gmra.mxu0 %v5678
  %v5746 = vpop.f32.mrf.mxu0
  %v5747 = vadd.f32 %v417, %v5746
  %v5748 = vpop.f32.mrf.mxu0
  %5749 = vdwg.mxu0
  %5750 = vmatprep.subr.mxu0 0.0
  %5751 = vmatpush1.msra.mxu0 0.0
  %5752 = vmatprep.subr.mxu0 0.0
  %5753 = vmatpush1.msra.mxu0 0.0
  %5754 = vmatprep.subr.mxu0 0.0
  %5755 = vmatpush1.msra.mxu0 0.0
  %5756 = vmatprep.subr.mxu0 0.0
  %5757 = vmatpush1.msra.mxu0 0.0
  %5758 = vmatprep.subr.mxu0 0.0
  %5759 = vmatpush1.msra.mxu0 0.0
  %5760 = vmatprep.subr.mxu0 0.0
  %5761 = vmatpush1.msra.mxu0 0.0
  %5762 = vmatprep.subr.mxu0 0.0
  %5763 = vmatpush1.msra.mxu0 0.0
  %5764 = vmatprep.subr.mxu0 0.0
  %5765 = vmatpush1.msra.mxu0 0.0
  %5766 = vmatprep.subr.mxu0 0.0
  %5767 = vmatpush1.msra.mxu0 0.0
  %5768 = vmatprep.subr.mxu0 0.0
  %5769 = vmatpush1.msra.mxu0 0.0
  %5770 = vmatprep.subr.mxu0 0.0
  %5771 = vmatpush1.msra.mxu0 0.0
  %5772 = vmatprep.subr.mxu0 0.0
  %5773 = vmatpush1.msra.mxu0 0.0
  %5774 = vmatprep.subr.mxu0 0.0
  %5775 = vmatpush1.msra.mxu0 %v104
  %5776 = vmatprep.subr.mxu0 0.0
  %5777 = vmatpush1.msra.mxu0 %v103
  %5778 = vmatprep.subr.mxu0 0.0
  %5779 = vmatpush1.msra.mxu0 %v102
  %5780 = vmatprep.subr.mxu0 0.0
  %5781 = vmatpush1.msra.mxu0 %v101
  %5782 = vmatprep.subr.mxu0 0.0
  %5783 = vmatpush2.msra.mxu0 0.0
  %5784 = vmatprep.subr.mxu0 0.0
  %5785 = vmatpush2.msra.mxu0 0.0
  %5786 = vmatprep.subr.mxu0 0.0
  %5787 = vmatpush2.msra.mxu0 0.0
  %5788 = vmatprep.subr.mxu0 0.0
  %5789 = vmatpush2.msra.mxu0 0.0
  %5790 = vmatprep.subr.mxu0 0.0
  %5791 = vmatpush2.msra.mxu0 0.0
  %5792 = vmatprep.subr.mxu0 0.0
  %5793 = vmatpush2.msra.mxu0 0.0
  %5794 = vmatprep.subr.mxu0 0.0
  %5795 = vmatpush2.msra.mxu0 0.0
  %5796 = vmatprep.subr.mxu0 0.0
  %5797 = vmatpush2.msra.mxu0 0.0
  %5798 = vmatprep.subr.mxu0 0.0
  %5799 = vmatpush2.msra.mxu0 0.0
  %5800 = vmatprep.subr.mxu0 0.0
  %5801 = vmatpush2.msra.mxu0 0.0
  %5802 = vmatprep.subr.mxu0 0.0
  %5803 = vmatpush2.msra.mxu0 0.0
  %5804 = vmatprep.subr.mxu0 0.0
  %5805 = vmatpush2.msra.mxu0 0.0
  %5806 = vmatprep.subr.mxu0 0.0
  %5807 = vmatpush2.msra.mxu0 0.0
  %5808 = vmatprep.subr.mxu0 0.0
  %5809 = vmatpush2.msra.mxu0 0.0
  %5810 = vmatprep.subr.mxu0 0.0
  %5811 = vmatpush2.msra.mxu0 0.0
  %5812 = vmatprep.subr.mxu0 0.0
  %5813 = vmatpush2.msra.mxu0 0.0
  %5814 = vmatprep.mubr.f32.mxu0 0.0
  %5815 = vmatmul.mubr.f32.gmra.mxu0 %v5678
  %v5816 = vpop.f32.mrf.mxu0
  %v5817 = vadd.f32 %v500, %v5816
  %v5818 = vpop.f32.mrf.mxu0
  %5819 = vdwg.mxu0
  %5820 = vmatprep.subr.mxu0 0.0
  %5821 = vmatpush1.msra.mxu0 0.0
  %5822 = vmatprep.subr.mxu0 0.0
  %5823 = vmatpush1.msra.mxu0 0.0
  %5824 = vmatprep.subr.mxu0 0.0
  %5825 = vmatpush1.msra.mxu0 0.0
  %5826 = vmatprep.subr.mxu0 0.0
  %5827 = vmatpush1.msra.mxu0 0.0
  %5828 = vmatprep.subr.mxu0 0.0
  %5829 = vmatpush1.msra.mxu0 0.0
  %5830 = vmatprep.subr.mxu0 0.0
  %5831 = vmatpush1.msra.mxu0 0.0
  %5832 = vmatprep.subr.mxu0 0.0
  %5833 = vmatpush1.msra.mxu0 0.0
  %5834 = vmatprep.subr.mxu0 0.0
  %5835 = vmatpush1.msra.mxu0 0.0
  %5836 = vmatprep.subr.mxu0 0.0
  %5837 = vmatpush1.msra.mxu0 0.0
  %5838 = vmatprep.subr.mxu0 0.0
  %5839 = vmatpush1.msra.mxu0 0.0
  %5840 = vmatprep.subr.mxu0 0.0
  %5841 = vmatpush1.msra.mxu0 0.0
  %5842 = vmatprep.subr.mxu0 0.0
  %5843 = vmatpush1.msra.mxu0 0.0
  %5844 = vmatprep.subr.mxu0 0.0
  %5845 = vmatpush1.msra.mxu0 %v109
  %5846 = vmatprep.subr.mxu0 0.0
  %5847 = vmatpush1.msra.mxu0 %v108
  %5848 = vmatprep.subr.mxu0 0.0
  %5849 = vmatpush1.msra.mxu0 %v107
  %5850 = vmatprep.subr.mxu0 0.0
  %5851 = vmatpush1.msra.mxu0 %v106
  %5852 = vmatprep.subr.mxu0 0.0
  %5853 = vmatpush2.msra.mxu0 0.0
  %5854 = vmatprep.subr.mxu0 0.0
  %5855 = vmatpush2.msra.mxu0 0.0
  %5856 = vmatprep.subr.mxu0 0.0
  %5857 = vmatpush2.msra.mxu0 0.0
  %5858 = vmatprep.subr.mxu0 0.0
  %5859 = vmatpush2.msra.mxu0 0.0
  %5860 = vmatprep.subr.mxu0 0.0
  %5861 = vmatpush2.msra.mxu0 0.0
  %5862 = vmatprep.subr.mxu0 0.0
  %5863 = vmatpush2.msra.mxu0 0.0
  %5864 = vmatprep.subr.mxu0 0.0
  %5865 = vmatpush2.msra.mxu0 0.0
  %5866 = vmatprep.subr.mxu0 0.0
  %5867 = vmatpush2.msra.mxu0 0.0
  %5868 = vmatprep.subr.mxu0 0.0
  %5869 = vmatpush2.msra.mxu0 0.0
  %5870 = vmatprep.subr.mxu0 0.0
  %5871 = vmatpush2.msra.mxu0 0.0
  %5872 = vmatprep.subr.mxu0 0.0
  %5873 = vmatpush2.msra.mxu0 0.0
  %5874 = vmatprep.subr.mxu0 0.0
  %5875 = vmatpush2.msra.mxu0 0.0
  %5876 = vmatprep.subr.mxu0 0.0
  %5877 = vmatpush2.msra.mxu0 0.0
  %5878 = vmatprep.subr.mxu0 0.0
  %5879 = vmatpush2.msra.mxu0 0.0
  %5880 = vmatprep.subr.mxu0 0.0
  %5881 = vmatpush2.msra.mxu0 0.0
  %5882 = vmatprep.subr.mxu0 0.0
  %5883 = vmatpush2.msra.mxu0 0.0
  %5884 = vmatprep.mubr.f32.mxu0 0.0
  %5885 = vmatmul.mubr.f32.gmra.mxu0 %v5678
  %v5886 = vpop.f32.mrf.mxu0
  %v5887 = vadd.f32 %v576, %v5886
  %v5888 = vpop.f32.mrf.mxu0
  %5889 = vdwg.mxu0
  %v5890 = vsel %vm130, %v5376, 0
  %5892 = vmatprep.subr.mxu0 0.0
  %5893 = vmatpush1.msra.mxu0 0.0
  %5894 = vmatprep.subr.mxu0 0.0
  %5895 = vmatpush1.msra.mxu0 0.0
  %5896 = vmatprep.subr.mxu0 0.0
  %5897 = vmatpush1.msra.mxu0 0.0
  %5898 = vmatprep.subr.mxu0 0.0
  %5899 = vmatpush1.msra.mxu0 0.0
  %5900 = vmatprep.subr.mxu0 0.0
  %5901 = vmatpush1.msra.mxu0 0.0
  %5902 = vmatprep.subr.mxu0 0.0
  %5903 = vmatpush1.msra.mxu0 0.0
  %5904 = vmatprep.subr.mxu0 0.0
  %5905 = vmatpush1.msra.mxu0 0.0
  %5906 = vmatprep.subr.mxu0 0.0
  %5907 = vmatpush1.msra.mxu0 0.0
  %5908 = vmatprep.subr.mxu0 0.0
  %5909 = vmatpush1.msra.mxu0 0.0
  %5910 = vmatprep.subr.mxu0 0.0
  %5911 = vmatpush1.msra.mxu0 0.0
  %5912 = vmatprep.subr.mxu0 0.0
  %5913 = vmatpush1.msra.mxu0 0.0
  %5914 = vmatprep.subr.mxu0 0.0
  %5915 = vmatpush1.msra.mxu0 0.0
  %5916 = vmatprep.subr.mxu0 0.0
  %5917 = vmatpush1.msra.mxu0 %v75
  %5918 = vmatprep.subr.mxu0 0.0
  %5919 = vmatpush1.msra.mxu0 %v74
  %5920 = vmatprep.subr.mxu0 0.0
  %5921 = vmatpush1.msra.mxu0 %v73
  %5922 = vmatprep.subr.mxu0 0.0
  %5923 = vmatpush1.msra.mxu0 %v72
  %5924 = vmatprep.subr.mxu0 0.0
  %5925 = vmatpush2.msra.mxu0 0.0
  %5926 = vmatprep.subr.mxu0 0.0
  %5927 = vmatpush2.msra.mxu0 0.0
  %5928 = vmatprep.subr.mxu0 0.0
  %5929 = vmatpush2.msra.mxu0 0.0
  %5930 = vmatprep.subr.mxu0 0.0
  %5931 = vmatpush2.msra.mxu0 0.0
  %5932 = vmatprep.subr.mxu0 0.0
  %5933 = vmatpush2.msra.mxu0 0.0
  %5934 = vmatprep.subr.mxu0 0.0
  %5935 = vmatpush2.msra.mxu0 0.0
  %5936 = vmatprep.subr.mxu0 0.0
  %5937 = vmatpush2.msra.mxu0 0.0
  %5938 = vmatprep.subr.mxu0 0.0
  %5939 = vmatpush2.msra.mxu0 0.0
  %5940 = vmatprep.subr.mxu0 0.0
  %5941 = vmatpush2.msra.mxu0 0.0
  %5942 = vmatprep.subr.mxu0 0.0
  %5943 = vmatpush2.msra.mxu0 0.0
  %5944 = vmatprep.subr.mxu0 0.0
  %5945 = vmatpush2.msra.mxu0 0.0
  %5946 = vmatprep.subr.mxu0 0.0
  %5947 = vmatpush2.msra.mxu0 0.0
  %5948 = vmatprep.subr.mxu0 0.0
  %5949 = vmatpush2.msra.mxu0 0.0
  %5950 = vmatprep.subr.mxu0 0.0
  %5951 = vmatpush2.msra.mxu0 0.0
  %5952 = vmatprep.subr.mxu0 0.0
  %5953 = vmatpush2.msra.mxu0 0.0
  %5954 = vmatprep.subr.mxu0 0.0
  %5955 = vmatpush2.msra.mxu0 0.0
  %5956 = vmatprep.mubr.f32.mxu0 0.0
  %5957 = vmatmul.mubr.f32.gmra.mxu0 %v5890
  %v5958 = vpop.f32.mrf.mxu0
  %v5959 = vadd.f32 %v652, %v5958
  %v5960 = vpop.f32.mrf.mxu0
  %5961 = vdwg.mxu0
  %5962 = vmatprep.subr.mxu0 0.0
  %5963 = vmatpush1.msra.mxu0 0.0
  %5964 = vmatprep.subr.mxu0 0.0
  %5965 = vmatpush1.msra.mxu0 0.0
  %5966 = vmatprep.subr.mxu0 0.0
  %5967 = vmatpush1.msra.mxu0 0.0
  %5968 = vmatprep.subr.mxu0 0.0
  %5969 = vmatpush1.msra.mxu0 0.0
  %5970 = vmatprep.subr.mxu0 0.0
  %5971 = vmatpush1.msra.mxu0 0.0
  %5972 = vmatprep.subr.mxu0 0.0
  %5973 = vmatpush1.msra.mxu0 0.0
  %5974 = vmatprep.subr.mxu0 0.0
  %5975 = vmatpush1.msra.mxu0 0.0
  %5976 = vmatprep.subr.mxu0 0.0
  %5977 = vmatpush1.msra.mxu0 0.0
  %5978 = vmatprep.subr.mxu0 0.0
  %5979 = vmatpush1.msra.mxu0 0.0
  %5980 = vmatprep.subr.mxu0 0.0
  %5981 = vmatpush1.msra.mxu0 0.0
  %5982 = vmatprep.subr.mxu0 0.0
  %5983 = vmatpush1.msra.mxu0 0.0
  %5984 = vmatprep.subr.mxu0 0.0
  %5985 = vmatpush1.msra.mxu0 0.0
  %5986 = vmatprep.subr.mxu0 0.0
  %5987 = vmatpush1.msra.mxu0 %v80
  %5988 = vmatprep.subr.mxu0 0.0
  %5989 = vmatpush1.msra.mxu0 %v79
  %5990 = vmatprep.subr.mxu0 0.0
  %5991 = vmatpush1.msra.mxu0 %v78
  %5992 = vmatprep.subr.mxu0 0.0
  %5993 = vmatpush1.msra.mxu0 %v77
  %5994 = vmatprep.subr.mxu0 0.0
  %5995 = vmatpush2.msra.mxu0 0.0
  %5996 = vmatprep.subr.mxu0 0.0
  %5997 = vmatpush2.msra.mxu0 0.0
  %5998 = vmatprep.subr.mxu0 0.0
  %5999 = vmatpush2.msra.mxu0 0.0
  %6000 = vmatprep.subr.mxu0 0.0
  %6001 = vmatpush2.msra.mxu0 0.0
  %6002 = vmatprep.subr.mxu0 0.0
  %6003 = vmatpush2.msra.mxu0 0.0
  %6004 = vmatprep.subr.mxu0 0.0
  %6005 = vmatpush2.msra.mxu0 0.0
  %6006 = vmatprep.subr.mxu0 0.0
  %6007 = vmatpush2.msra.mxu0 0.0
  %6008 = vmatprep.subr.mxu0 0.0
  %6009 = vmatpush2.msra.mxu0 0.0
  %6010 = vmatprep.subr.mxu0 0.0
  %6011 = vmatpush2.msra.mxu0 0.0
  %6012 = vmatprep.subr.mxu0 0.0
  %6013 = vmatpush2.msra.mxu0 0.0
  %6014 = vmatprep.subr.mxu0 0.0
  %6015 = vmatpush2.msra.mxu0 0.0
  %6016 = vmatprep.subr.mxu0 0.0
  %6017 = vmatpush2.msra.mxu0 0.0
  %6018 = vmatprep.subr.mxu0 0.0
  %6019 = vmatpush2.msra.mxu0 0.0
  %6020 = vmatprep.subr.mxu0 0.0
  %6021 = vmatpush2.msra.mxu0 0.0
  %6022 = vmatprep.subr.mxu0 0.0
  %6023 = vmatpush2.msra.mxu0 0.0
  %6024 = vmatprep.subr.mxu0 0.0
  %6025 = vmatpush2.msra.mxu0 0.0
  %6026 = vmatprep.mubr.f32.mxu0 0.0
  %6027 = vmatmul.mubr.f32.gmra.mxu0 %v5890
  %v6028 = vpop.f32.mrf.mxu0
  %v6029 = vadd.f32 %v731, %v6028
  %v6030 = vpop.f32.mrf.mxu0
  %6031 = vdwg.mxu0
  %6032 = vmatprep.subr.mxu0 0.0
  %6033 = vmatpush1.msra.mxu0 0.0
  %6034 = vmatprep.subr.mxu0 0.0
  %6035 = vmatpush1.msra.mxu0 0.0
  %6036 = vmatprep.subr.mxu0 0.0
  %6037 = vmatpush1.msra.mxu0 0.0
  %6038 = vmatprep.subr.mxu0 0.0
  %6039 = vmatpush1.msra.mxu0 0.0
  %6040 = vmatprep.subr.mxu0 0.0
  %6041 = vmatpush1.msra.mxu0 0.0
  %6042 = vmatprep.subr.mxu0 0.0
  %6043 = vmatpush1.msra.mxu0 0.0
  %6044 = vmatprep.subr.mxu0 0.0
  %6045 = vmatpush1.msra.mxu0 0.0
  %6046 = vmatprep.subr.mxu0 0.0
  %6047 = vmatpush1.msra.mxu0 0.0
  %6048 = vmatprep.subr.mxu0 0.0
  %6049 = vmatpush1.msra.mxu0 0.0
  %6050 = vmatprep.subr.mxu0 0.0
  %6051 = vmatpush1.msra.mxu0 0.0
  %6052 = vmatprep.subr.mxu0 0.0
  %6053 = vmatpush1.msra.mxu0 0.0
  %6054 = vmatprep.subr.mxu0 0.0
  %6055 = vmatpush1.msra.mxu0 0.0
  %6056 = vmatprep.subr.mxu0 0.0
  %6057 = vmatpush1.msra.mxu0 %v85
  %6058 = vmatprep.subr.mxu0 0.0
  %6059 = vmatpush1.msra.mxu0 %v84
  %6060 = vmatprep.subr.mxu0 0.0
  %6061 = vmatpush1.msra.mxu0 %v83
  %6062 = vmatprep.subr.mxu0 0.0
  %6063 = vmatpush1.msra.mxu0 %v82
  %6064 = vmatprep.subr.mxu0 0.0
  %6065 = vmatpush2.msra.mxu0 0.0
  %6066 = vmatprep.subr.mxu0 0.0
  %6067 = vmatpush2.msra.mxu0 0.0
  %6068 = vmatprep.subr.mxu0 0.0
  %6069 = vmatpush2.msra.mxu0 0.0
  %6070 = vmatprep.subr.mxu0 0.0
  %6071 = vmatpush2.msra.mxu0 0.0
  %6072 = vmatprep.subr.mxu0 0.0
  %6073 = vmatpush2.msra.mxu0 0.0
  %6074 = vmatprep.subr.mxu0 0.0
  %6075 = vmatpush2.msra.mxu0 0.0
  %6076 = vmatprep.subr.mxu0 0.0
  %6077 = vmatpush2.msra.mxu0 0.0
  %6078 = vmatprep.subr.mxu0 0.0
  %6079 = vmatpush2.msra.mxu0 0.0
  %6080 = vmatprep.subr.mxu0 0.0
  %6081 = vmatpush2.msra.mxu0 0.0
  %6082 = vmatprep.subr.mxu0 0.0
  %6083 = vmatpush2.msra.mxu0 0.0
  %6084 = vmatprep.subr.mxu0 0.0
  %6085 = vmatpush2.msra.mxu0 0.0
  %6086 = vmatprep.subr.mxu0 0.0
  %6087 = vmatpush2.msra.mxu0 0.0
  %6088 = vmatprep.subr.mxu0 0.0
  %6089 = vmatpush2.msra.mxu0 0.0
  %6090 = vmatprep.subr.mxu0 0.0
  %6091 = vmatpush2.msra.mxu0 0.0
  %6092 = vmatprep.subr.mxu0 0.0
  %6093 = vmatpush2.msra.mxu0 0.0
  %6094 = vmatprep.subr.mxu0 0.0
  %6095 = vmatpush2.msra.mxu0 0.0
  %6096 = vmatprep.mubr.f32.mxu0 0.0
  %6097 = vmatmul.mubr.f32.gmra.mxu0 %v5890
  %v6098 = vpop.f32.mrf.mxu0
  %v6099 = vadd.f32 %v807, %v6098
  %v6100 = vpop.f32.mrf.mxu0
  %6101 = vdwg.mxu0
  %v6102 = vadd.f32 %v5747, %v5959
  %v6103 = vxor.u32 %v6102, 2147483648
  %v6104 = vmul.f32 %v6103, 1.442695
  %v6105 = vpow.pop %v6104
  %v6106 = vadd.f32 %v6105, 1.0
  %v6107 = vrcp.pop %v6106
  %v6108 = vmul.f32 1.0, %v6107
  %v6109 = vadd.f32 %v5817, %v6029
  %v6110 = vxor.u32 %v6109, 2147483648
  %v6111 = vmul.f32 %v6110, 1.442695
  %v6112 = vpow.pop %v6111
  %v6113 = vadd.f32 %v6112, 1.0
  %v6114 = vrcp.pop %v6113
  %v6115 = vmul.f32 1.0, %v6114
  %v6116 = vmul.f32 %v6108, %v6099
  %v6117 = vadd.f32 %v5887, %v6116
  %v6118 = vtanh.pop %v6117
  %v6119 = vsub.f32 1.0, %v6115
  %v6120 = vmul.f32 %v6119, %v6118
  %v6121 = vmul.f32 %v6115, %v5376
  %v6122 = vadd.f32 %v6120, %v6121
  %v6125 = vunpack.c.l.s4 1966171168
  %v6126 = vunpack.c.0.s8 %v6125
  %v6127 = vlaneseq
  %v6128 = vshrl.u32 %v6127, 7
  %v6129 = vsub.s32 %v6126, %v6128
  %v6130 = vrot.slane %v6122, %v6129
  %v6131 = vcombine.high %v6130, %v6130
  %v6133 = vunpack.c.l.s4 1966171168
  %v6134 = vunpack.c.0.s8 %v6133
  %v6135 = vlaneseq
  %v6136 = vshrl.u32 %v6135, 7
  %v6137 = vsub.s32 %v6134, %v6136
  %v6138 = vrot.slane %v6130, %v6137
  %v6140 = vunpack.c.l.s4 1966171168
  %v6141 = vunpack.c.0.s8 %v6140
  %v6142 = vlaneseq
  %v6143 = vshrl.u32 %v6142, 7
  %v6144 = vsub.s32 %v6141, %v6143
  %v6145 = vrot.slane %v6131, %v6144
  %6148 = vst.msk [vmem:[%s10 + $0x7] sm:$0x1] %vm925, %v6138
  %6149 = vst.msk [vmem:[%s10 + $0xf] sm:$0x1] %vm925, %v6145
  %vm6151 = vcmask 254976
  %6152 = vst.msk [vmem:[#allocation2] sm:$0x3] %vm6151, %v5677
  %6153 = vst.msk [vmem:[%s116] sm:$0x3] %vm6151, %v6122
  // Predicated region
  $region46: #{decoder_forward.6} parent=0 // pred_check
    _
  $region47: #{decoder_forward.6} parent=0 // pred_check_branch
    %6155 = sbr.rel (0) target = $region49
  $region48: #{decoder_forward.6} parent=0 // pred_region
    _
  $region49: #{decoder_forward.6} parent=0 // pred_fallthru
    _
  // Predicated region
  $region50: #{decoder_forward.6} parent=0 // pred_check
    _
  $region51: #{decoder_forward.6} parent=0 // pred_check_branch
    %6157 = sbr.rel (0) target = $region53
  $region52: #{decoder_forward.6} parent=0 // pred_region
    _
  $region53: #{decoder_forward.6} parent=0 // pred_fallthru
    _

</llo_original>
